<compile_context>
chip_gen: v6e
topology: v6e:2x2x1
jax: 0.10.0
libtpu: 0.0.40
codegen_flags: <defaults>
</compile_context>

<pallas_src>
import functools
import math

import jax
import jax.numpy as jnp
from jax.experimental import pallas as pl
from jax.experimental.pallas import tpu as pltpu


# ----------------------------------------------------------------------------
# Fused kernel: embedding + all transformer blocks + avgpool/fc head.
# Grid = (batch_groups, num_blocks); Bb samples per step, one encoder block per
# k-step.  The (Bb, S, E) activation is resident in VMEM scratch across k.
# ----------------------------------------------------------------------------
def _fused_kernel(
    x_ref,                        # (Bb, S, C)  pre-transposed input chunk
    ew_ref, eb_ref,               # (C, E), (1, E)      conv1d(k=1), transposed
    ln1w_ref, ln1b_ref,           # [NB,] (S, E) x2
    wqkv_ref, bqkv_ref,           # [NB,] (E, 3E), (1, 3E)   q-scale folded in
    wo_ref, bo_ref,               # [NB,] (E, E), (1, E)
    ln2w_ref, ln2b_ref,           # [NB,] (S, E) x2
    wff1_ref, bff1_ref,           # [NB,] (E, FF), (1, FF)
    wff2_ref, bff2_ref,           # [NB,] (FF, E), (1, E)
    fcw_ref, fcb_ref,             # (S, 1), (1, 1)
    o_ref,                        # (Bb, 1, 1)  per-sample output
    act_ref,                      # VMEM (Bb, S, E) f32, persists across blocks
    qkv_ref,                      # VMEM (Bb, S, 3E) staged QKV (matmul dtype)
    ctx_ref,                      # VMEM (Bb, S, E)  staged per-head contexts
    h1_ref,                       # VMEM (Bb, S, FF) staged FFN intermediate
    *, num_heads, resident,
):
    blk = pl.program_id(1)
    nblk = pl.num_programs(1)
    Bb, S, E = act_ref.shape
    C = x_ref.shape[-1]
    FF = h1_ref.shape[-1]
    d = E // num_heads
    eps = 1e-6
    cdt = qkv_ref.dtype                       # matmul operand dtype (f32 or bf16)
    approx = cdt != jnp.float32

    def getw(ref):
        # per-block weight: dynamic block index when VMEM-resident (NB, ...)
        # stacks; plain read when the block slice is streamed by the BlockSpec.
        return ref[blk] if resident else ref[...]

    def mean_se(t):                           # per-sample mean over (S, E)
        return jnp.mean(jnp.mean(t, axis=2, keepdims=True), axis=1, keepdims=True)

    def layer_norm(t, w, b):                  # centered two-pass, eps=1e-6
        mu = mean_se(t)
        tc = t - mu
        var = mean_se(tc * tc)
        return tc * jax.lax.rsqrt(var + eps) * w + b

    # ---- embedding: Conv1d(chunk_size -> E, k=1) + ReLU, first block step only
    @pl.when(blk == 0)
    def _embed():
        xin = x_ref[...].astype(jnp.float32)                      # (Bb, S, C)
        if C == 1:
            y = xin * ew_ref[...]                                 # VPU broadcast
        else:
            y = jnp.dot(xin.reshape(Bb * S, C), ew_ref[...],
                        preferred_element_type=jnp.float32).reshape(Bb, S, E)
        act_ref[...] = jnp.maximum(y + eb_ref[...], 0.0)
        # positional encoding intentionally NOT added (dead code in reference)

    # ---- TransformerEncoder block `blk` ----
    xn = layer_norm(act_ref[...], getw(ln1w_ref), getw(ln1b_ref))

    # QKV projection (1/sqrt(head_dim) folded into Wq/bq host-side); stage in VMEM.
    qkv = jnp.dot(xn.reshape(Bb * S, E).astype(cdt), getw(wqkv_ref),
                  preferred_element_type=jnp.float32) + getw(bqkv_ref)
    qkv_ref[...] = qkv.reshape(Bb, S, 3 * E).astype(cdt)

    # Per-head attention.  Samples via pl.loop (bounded live ranges), heads
    # statically unrolled (static lane offsets into the staged qkv).  Each
    # head's context is written into its column slice of ctx scratch so the
    # output projection is ONE wide matmul.
    @pl.loop(0, Bb)
    def _attn(b):
        for h in range(num_heads):
            qh = qkv_ref[b, :, h * d:(h + 1) * d]                  # (S, d)
            kh = qkv_ref[b, :, E + h * d:E + (h + 1) * d]
            vh = qkv_ref[b, :, 2 * E + h * d:2 * E + (h + 1) * d]
            s = jax.lax.dot_general(qh, kh, (((1,), (1,)), ((), ())),
                                    preferred_element_type=jnp.float32)  # (S, S)
            s = s - jnp.max(s, axis=-1, keepdims=True)
            p = jnp.exp(s)
            rs = jnp.sum(p, axis=-1, keepdims=True)                # (S, 1)
            ctx = jnp.dot(p.astype(cdt), vh, preferred_element_type=jnp.float32)
            ctx = ctx * pl.reciprocal(rs, approx=approx)           # deferred norm
            ctx_ref[b, :, h * d:(h + 1) * d] = ctx.astype(cdt)

    # Output projection (single (Bb*S,E)@(E,E) matmul) + residual.
    attn = jnp.dot(ctx_ref[...].reshape(Bb * S, E), getw(wo_ref),
                   preferred_element_type=jnp.float32) + getw(bo_ref)
    res = attn.reshape(Bb, S, E) + act_ref[...]

    # LayerNorm2 + feed-forward (intermediate staged in VMEM).
    yn = layer_norm(res, getw(ln2w_ref), getw(ln2b_ref))
    act_ref[...] = res                                             # park residual
    h1 = jnp.dot(yn.reshape(Bb * S, E).astype(cdt), getw(wff1_ref),
                 preferred_element_type=jnp.float32) + getw(bff1_ref)
    h1_ref[...] = jnp.maximum(h1, 0.0).reshape(Bb, S, FF).astype(cdt)
    h2 = jnp.dot(h1_ref[...].reshape(Bb * S, FF), getw(wff2_ref),
                 preferred_element_type=jnp.float32) + getw(bff2_ref)
    act_ref[...] = act_ref[...] + h2.reshape(Bb, S, E)

    # ---- head: AdaptiveAvgPool1d(1) over embed + Linear(S, 1), last step only
    @pl.when(blk == nblk - 1)
    def _head():
        pooled = jnp.mean(act_ref[...], axis=-1, keepdims=True)    # (Bb, S, 1)
        out = jnp.sum(pooled * fcw_ref[...], axis=1, keepdims=True)
        o_ref[...] = out + fcb_ref[...]                            # (Bb, 1, 1)


def fused_forward(x_t, pp, *, num_heads, batch_block=None):
    """x_t: (B, S, C) pre-transposed chunked input; pp: packed/pre-transposed params."""
    B, S, C = x_t.shape
    NB, _, E = pp["ln1_w"].shape
    FF = pp["wff1"].shape[2]
    assert E % num_heads == 0
    cdt = pp["wqkv"].dtype

    # Batch block: largest divisor of B that is <= 8 (caps per-step VMEM/vregs,
    # leaves >= 1 group per core when B is larger).
    if batch_block is None:
        batch_block = max(bb for bb in range(1, min(B, 8) + 1) if B % bb == 0)
    Bb = batch_block
    assert B % Bb == 0
    G = B // Bb

    blk_names = ["ln1_w", "ln1_b", "wqkv", "bqkv", "wo", "bo",
                 "ln2_w", "ln2_b", "wff1", "bff1", "wff2", "bff2"]
    blk_bytes = sum(int(pp[n].size) * pp[n].dtype.itemsize for n in blk_names)
    resident = blk_bytes <= 10 * 1024 * 1024      # keep all block weights in VMEM

    def rep(arr):                                 # constant across the whole grid
        zeros = (0,) * arr.ndim
        return pl.BlockSpec(arr.shape, lambda g, k: zeros)

    def blockw(arr):                              # per-block weight
        if resident:
            return rep(arr)
        zeros = (0,) * (arr.ndim - 1)
        return pl.BlockSpec((None,) + arr.shape[1:], lambda g, k: (k,) + zeros)

    kernel = functools.partial(_fused_kernel, num_heads=num_heads, resident=resident)
    out = pl.pallas_call(
        kernel,
        out_shape=jax.ShapeDtypeStruct((B, 1, 1), jnp.float32),
        grid=(G, NB),
        in_specs=[
            pl.BlockSpec((Bb, S, C), lambda g, k: (g, 0, 0)),      # x (batch-blocked)
            rep(pp["embed_w_t"]), rep(pp["embed_b"]),              # embedding
            blockw(pp["ln1_w"]), blockw(pp["ln1_b"]),              # ln1
            blockw(pp["wqkv"]), blockw(pp["bqkv"]),                # qkv proj
            blockw(pp["wo"]), blockw(pp["bo"]),                    # out proj
            blockw(pp["ln2_w"]), blockw(pp["ln2_b"]),              # ln2
            blockw(pp["wff1"]), blockw(pp["bff1"]),                # ffn dense1
            blockw(pp["wff2"]), blockw(pp["bff2"]),                # ffn dense2
            rep(pp["fc_wt"]), rep(pp["fc_b"]),                     # fc head
        ],
        out_specs=pl.BlockSpec((Bb, 1, 1), lambda g, k: (g, 0, 0)),
        scratch_shapes=[
            pltpu.VMEM((Bb, S, E), jnp.float32),   # activation across blocks
            pltpu.VMEM((Bb, S, 3 * E), cdt),       # staged QKV
            pltpu.VMEM((Bb, S, E), cdt),           # staged per-head contexts
            pltpu.VMEM((Bb, S, FF), cdt),          # staged FFN intermediate
        ],
        compiler_params=pltpu.CompilerParams(
            dimension_semantics=("parallel", "arbitrary")),
    )(
        x_t,
        pp["embed_w_t"], pp["embed_b"],
        pp["ln1_w"], pp["ln1_b"],
        pp["wqkv"], pp["bqkv"],
        pp["wo"], pp["bo"],
        pp["ln2_w"], pp["ln2_b"],
        pp["wff1"], pp["bff1"],
        pp["wff2"], pp["bff2"],
        pp["fc_wt"], pp["fc_b"],
    )
    return out.reshape(B, 1)


# ----------------------------------------------------------------------------
# Full forward: torch-equivalent reshaping in the wrapper + one fused kernel.
# ----------------------------------------------------------------------------
def transformer_net_forward(x, packed, *, num_ifos, chunk_size, num_heads):
    # x.view(*x.shape[:-2], num_ifos * x.shape[-1])
    x = x.reshape(x.shape[:-2] + (num_ifos * x.shape[-1],))
    # x.squeeze(dim=-2) (torch only squeezes if that dim has size 1)
    if x.ndim >= 2 and x.shape[-2] == 1:
        x = jnp.squeeze(x, axis=-2)
    # torch.flatten(x, 1)
    x = x.reshape(x.shape[0], -1)
    # nn.Unflatten(1, (chunk_size, -1)) -> (B, C, S)
    x = x.reshape(x.shape[0], chunk_size, -1)
    # pre-transpose tokens-major for the kernel (one-time host-side layout)
    x_t = jnp.transpose(x, (0, 2, 1))                      # (B, S, C)
    return fused_forward(x_t, packed, num_heads=num_heads)


# ----------------------------------------------------------------------------
# Deterministic synthetic parameters in torch layout + host-side packing.
# ----------------------------------------------------------------------------
def init_params(key, *, num_ifos, input_size, chunk_size, head_size, num_heads,
                ff_dim, num_transformer_blocks):
    E = head_size * num_heads
    S = num_ifos * input_size // chunk_size

    def nrm(k, shape, scale=0.05):
        return scale * jax.random.normal(k, shape, jnp.float32)

    keys = jax.random.split(key, 4 + num_transformer_blocks)
    params = {
        "embed_w": nrm(keys[0], (E, chunk_size), 0.1),   # Conv1d weight (E, C, 1) squeezed
        "embed_b": nrm(keys[1], (1, E), 0.1),
        "fc_w": nrm(keys[2], (1, S), 0.1),
        "fc_b": nrm(keys[3], (1, 1), 0.1),
        "blocks": [],
    }
    for b in range(num_transformer_blocks):
        bk = jax.random.split(keys[4 + b], 12)
        params["blocks"].append({
            "ln1_w": 1.0 + nrm(bk[0], (S, E), 0.02),
            "ln1_b": nrm(bk[1], (S, E), 0.02),
            "inp_w": nrm(bk[2], (3 * E, E)),
            "inp_b": nrm(bk[3], (1, 3 * E)),
            "outp_w": nrm(bk[4], (E, E)),
            "outp_b": nrm(bk[5], (1, E)),
            "ln2_w": 1.0 + nrm(bk[6], (S, E), 0.02),
            "ln2_b": nrm(bk[7], (S, E), 0.02),
            "d1_w": nrm(bk[8], (ff_dim, E)),
            "d1_b": nrm(bk[9], (1, ff_dim)),
            "d2_w": nrm(bk[10], (E, ff_dim)),
            "d2_b": nrm(bk[11], (1, E)),
        })
    return params


def pack_params(params, *, num_heads, matmul_dtype=jnp.bfloat16):
    """One-time host-side re-layout: stack blocks, pre-transpose, fold q-scale,
    cast matmul operands to `matmul_dtype` (biases / LN params stay f32)."""
    E = params["embed_w"].shape[0]
    d = E // num_heads
    scale = 1.0 / math.sqrt(d)
    blocks = params["blocks"]

    def stack(name):
        return jnp.stack([blk[name] for blk in blocks], axis=0)

    wqkv = jnp.swapaxes(stack("inp_w"), 1, 2)            # (NB, E, 3E)
    bqkv = stack("inp_b")                                # (NB, 1, 3E)
    wqkv = wqkv.at[:, :, :E].multiply(scale)             # fold 1/sqrt(head_dim)
    bqkv = bqkv.at[:, :, :E].multiply(scale)
    wo = jnp.swapaxes(stack("outp_w"), 1, 2)             # (NB, E, E)

    return {
        "embed_w_t": params["embed_w"].T,                # (C, E)
        "embed_b": params["embed_b"],                    # (1, E)
        "ln1_w": stack("ln1_w"), "ln1_b": stack("ln1_b"),
        "wqkv": wqkv.astype(matmul_dtype), "bqkv": bqkv,
        "wo": wo.astype(matmul_dtype), "bo": stack("outp_b"),
        "ln2_w": stack("ln2_w"), "ln2_b": stack("ln2_b"),
        "wff1": jnp.swapaxes(stack("d1_w"), 1, 2).astype(matmul_dtype),
        "bff1": stack("d1_b"),
        "wff2": jnp.swapaxes(stack("d2_w"), 1, 2).astype(matmul_dtype),
        "bff2": stack("d2_b"),
        "fc_wt": params["fc_w"].T,                       # (S, 1)
        "fc_b": params["fc_b"],                          # (1, 1)
    }


# ----------------------------------------------------------------------------
# Pure-jnp reference (mirrors the PyTorch module) for a correctness check.
# ----------------------------------------------------------------------------
def reference_forward(x, params, *, num_ifos, chunk_size, num_heads):
    E = params["embed_w"].shape[0]
    d = E // num_heads
    x = x.reshape(x.shape[:-2] + (num_ifos * x.shape[-1],))
    if x.ndim >= 2 and x.shape[-2] == 1:
        x = jnp.squeeze(x, axis=-2)
    x = x.reshape(x.shape[0], -1)
    x = x.reshape(x.shape[0], chunk_size, -1)                            # (B, C, S)
    y = jnp.einsum("bcs,ec->bse", x, params["embed_w"]) + params["embed_b"]
    y = jnp.maximum(y, 0.0)
    B, S, _ = y.shape
    for blk in params["blocks"]:
        mu = jnp.mean(y, axis=(1, 2), keepdims=True)
        var = jnp.mean((y - mu) ** 2, axis=(1, 2), keepdims=True)
        xn = (y - mu) / jnp.sqrt(var + 1e-6) * blk["ln1_w"] + blk["ln1_b"]
        qkv = xn @ blk["inp_w"].T + blk["inp_b"]
        q = qkv[..., :E] / math.sqrt(d)
        k = qkv[..., E:2 * E]
        v = qkv[..., 2 * E:]
        qh = q.reshape(B, S, num_heads, d).transpose(0, 2, 1, 3)
        kh = k.reshape(B, S, num_heads, d).transpose(0, 2, 1, 3)
        vh = v.reshape(B, S, num_heads, d).transpose(0, 2, 1, 3)
        s = jnp.einsum("bhqd,bhkd->bhqk", qh, kh)
        p = jax.nn.softmax(s, axis=-1)
        ctx = jnp.einsum("bhqk,bhkd->bhqd", p, vh)
        ctx = ctx.transpose(0, 2, 1, 3).reshape(B, S, E)
        attn = ctx @ blk["outp_w"].T + blk["outp_b"]
        res = attn + y
        mu2 = jnp.mean(res, axis=(1, 2), keepdims=True)
        var2 = jnp.mean((res - mu2) ** 2, axis=(1, 2), keepdims=True)
        yn = (res - mu2) / jnp.sqrt(var2 + 1e-6) * blk["ln2_w"] + blk["ln2_b"]
        h1 = jnp.maximum(yn @ blk["d1_w"].T + blk["d1_b"], 0.0)
        h2 = h1 @ blk["d2_w"].T + blk["d2_b"]
        y = h2 + res
    pooled = jnp.mean(y, axis=-1)                                        # (B, S)
    return pooled @ params["fc_w"].T + params["fc_b"]


if __name__ == "__main__":
    # Module-consistent small shapes: S = num_ifos*input_size/chunk_size = 128, E = 64.
    batch, num_ifos, input_size = 2, 2, 64
    chunk_size = 1
    head_size, num_heads = 8, 8          # embedding_size = 64
    ff_dim = 128
    num_transformer_blocks = 2

    key = jax.random.PRNGKey(0)
    k_x, k_p = jax.random.split(key)
    x = jax.random.normal(k_x, (batch, num_ifos, input_size), jnp.float32)

    params = init_params(
        k_p,
        num_ifos=num_ifos, input_size=input_size, chunk_size=chunk_size,
        head_size=head_size, num_heads=num_heads, ff_dim=ff_dim,
        num_transformer_blocks=num_transformer_blocks,
    )
    ref = reference_forward(x, params, num_ifos=num_ifos,
                            chunk_size=chunk_size, num_heads=num_heads)

    fwd = jax.jit(functools.partial(
        transformer_net_forward,
        num_ifos=num_ifos, chunk_size=chunk_size, num_heads=num_heads))

    # 1) exact f32 configuration: validates the kernel math tightly.
    packed_f32 = pack_params(params, num_heads=num_heads, matmul_dtype=jnp.float32)
    out_f32 = jax.block_until_ready(fwd(x, packed_f32))
    assert out_f32.shape == (batch, 1), out_f32.shape
    assert bool(jnp.all(jnp.isfinite(out_f32)))
    assert bool(jnp.allclose(out_f32, ref, rtol=1e-3, atol=1e-3)), (out_f32, ref)

    # 2) bf16 MXU-operand configuration (f32 accumulation): performance setup.
    #    bf16 operands carry ~3 decimal digits, hence the looser tolerance.
    packed_bf16 = pack_params(params, num_heads=num_heads, matmul_dtype=jnp.bfloat16)
    out_bf16 = jax.block_until_ready(fwd(x, packed_bf16))
    assert out_bf16.shape == (batch, 1), out_bf16.shape
    assert bool(jnp.all(jnp.isfinite(out_bf16)))
    assert bool(jnp.allclose(out_bf16, ref, rtol=5e-2, atol=5e-2)), (out_bf16, ref)

    print("KERNEL_OK")
</pallas_src>

<mosaic_0001>
module attributes {stable_mosaic.version = 11 : i64} {
  func.func @_fused_kernel(%arg0: i32, %arg1: i32, %arg2: memref<2x128x1xf32, #tpu.memory_space<vmem>>, %arg3: memref<1x64xf32, #tpu.memory_space<vmem>>, %arg4: memref<1x64xf32, #tpu.memory_space<vmem>>, %arg5: memref<2x128x64xf32, #tpu.memory_space<vmem>>, %arg6: memref<2x128x64xf32, #tpu.memory_space<vmem>>, %arg7: memref<2x64x192xf32, #tpu.memory_space<vmem>>, %arg8: memref<2x1x192xf32, #tpu.memory_space<vmem>>, %arg9: memref<2x64x64xf32, #tpu.memory_space<vmem>>, %arg10: memref<2x1x64xf32, #tpu.memory_space<vmem>>, %arg11: memref<2x128x64xf32, #tpu.memory_space<vmem>>, %arg12: memref<2x128x64xf32, #tpu.memory_space<vmem>>, %arg13: memref<2x64x128xf32, #tpu.memory_space<vmem>>, %arg14: memref<2x1x128xf32, #tpu.memory_space<vmem>>, %arg15: memref<2x128x64xf32, #tpu.memory_space<vmem>>, %arg16: memref<2x1x64xf32, #tpu.memory_space<vmem>>, %arg17: memref<128x1xf32, #tpu.memory_space<vmem>>, %arg18: memref<1x1xf32, #tpu.memory_space<vmem>>, %arg19: memref<2x1x1xf32, #tpu.memory_space<vmem>>, %arg20: memref<2x128x64xf32, #tpu.memory_space<vmem>>, %arg21: memref<2x128x192xf32, #tpu.memory_space<vmem>>, %arg22: memref<2x128x64xf32, #tpu.memory_space<vmem>>, %arg23: memref<2x128x128xf32, #tpu.memory_space<vmem>>) attributes {dimension_semantics = [#tpu.dimension_semantics<parallel>, #tpu.dimension_semantics<arbitrary>], iteration_bounds = array<i64: 1, 2>, scalar_prefetch = 0 : i64, scratch_operands = 4 : i64, tpu.core_type = #tpu.core_type<tc>, window_params = [{transform_indices = @transform_0, window_bounds = array<i64: 2, 128, 1>}, {pipeline_mode = #tpu.pipeline_mode<synchronous>, transform_indices = @transform_1, window_bounds = array<i64: 1, 64>}, {pipeline_mode = #tpu.pipeline_mode<synchronous>, transform_indices = @transform_2, window_bounds = array<i64: 1, 64>}, {pipeline_mode = #tpu.pipeline_mode<synchronous>, transform_indices = @transform_3, window_bounds = array<i64: 2, 128, 64>}, {pipeline_mode = #tpu.pipeline_mode<synchronous>, transform_indices = @transform_4, window_bounds = array<i64: 2, 128, 64>}, {pipeline_mode = #tpu.pipeline_mode<synchronous>, transform_indices = @transform_5, window_bounds = array<i64: 2, 64, 192>}, {pipeline_mode = #tpu.pipeline_mode<synchronous>, transform_indices = @transform_6, window_bounds = array<i64: 2, 1, 192>}, {pipeline_mode = #tpu.pipeline_mode<synchronous>, transform_indices = @transform_7, window_bounds = array<i64: 2, 64, 64>}, {pipeline_mode = #tpu.pipeline_mode<synchronous>, transform_indices = @transform_8, window_bounds = array<i64: 2, 1, 64>}, {pipeline_mode = #tpu.pipeline_mode<synchronous>, transform_indices = @transform_9, window_bounds = array<i64: 2, 128, 64>}, {pipeline_mode = #tpu.pipeline_mode<synchronous>, transform_indices = @transform_10, window_bounds = array<i64: 2, 128, 64>}, {pipeline_mode = #tpu.pipeline_mode<synchronous>, transform_indices = @transform_11, window_bounds = array<i64: 2, 64, 128>}, {pipeline_mode = #tpu.pipeline_mode<synchronous>, transform_indices = @transform_12, window_bounds = array<i64: 2, 1, 128>}, {pipeline_mode = #tpu.pipeline_mode<synchronous>, transform_indices = @transform_13, window_bounds = array<i64: 2, 128, 64>}, {pipeline_mode = #tpu.pipeline_mode<synchronous>, transform_indices = @transform_14, window_bounds = array<i64: 2, 1, 64>}, {pipeline_mode = #tpu.pipeline_mode<synchronous>, transform_indices = @transform_15, window_bounds = array<i64: 128, 1>}, {pipeline_mode = #tpu.pipeline_mode<synchronous>, transform_indices = @transform_16, window_bounds = array<i64: 1, 1>}, {transform_indices = @transform_17, window_bounds = array<i64: 2, 1, 1>}]} {
    %c0_i32 = arith.constant 0 : i32
    %0 = arith.cmpi eq, %arg1, %c0_i32 : i32
    %1 = arith.extui %0 : i1 to i32
    %c0_i32_0 = arith.constant 0 : i32
    %2 = arith.cmpi ne, %1, %c0_i32_0 : i32
    scf.if %2 {
      %c0_77 = arith.constant 0 : index
      %c0_78 = arith.constant 0 : index
      %c0_79 = arith.constant 0 : index
      %136 = vector.load %arg2[%c0_77, %c0_78, %c0_79] : memref<2x128x1xf32, #tpu.memory_space<vmem>>, vector<2x128x1xf32>
      %c0_80 = arith.constant 0 : index
      %c0_81 = arith.constant 0 : index
      %137 = vector.load %arg3[%c0_80, %c0_81] : memref<1x64xf32, #tpu.memory_space<vmem>>, vector<1x64xf32>
      %138 = vector.shape_cast %137 : vector<1x64xf32> to vector<1x1x64xf32>
      %139 = vector.broadcast %136 : vector<2x128x1xf32> to vector<2x128x64xf32>
      %140 = vector.broadcast %138 : vector<1x1x64xf32> to vector<2x128x64xf32>
      %141 = arith.mulf %139, %140 : vector<2x128x64xf32>
      %c0_82 = arith.constant 0 : index
      %c0_83 = arith.constant 0 : index
      %142 = vector.load %arg4[%c0_82, %c0_83] : memref<1x64xf32, #tpu.memory_space<vmem>>, vector<1x64xf32>
      %143 = vector.shape_cast %142 : vector<1x64xf32> to vector<1x1x64xf32>
      %144 = vector.broadcast %143 : vector<1x1x64xf32> to vector<2x128x64xf32>
      %145 = arith.addf %141, %144 : vector<2x128x64xf32>
      %cst_84 = arith.constant 0.000000e+00 : f32
      %146 = vector.broadcast %cst_84 : f32 to vector<2x128x64xf32>
      %147 = arith.maximumf %145, %146 : vector<2x128x64xf32>
      %c0_85 = arith.constant 0 : index
      %c0_86 = arith.constant 0 : index
      %c0_87 = arith.constant 0 : index
      %148 = vector.load %arg20[%c0_85, %c0_86, %c0_87] : memref<2x128x64xf32, #tpu.memory_space<vmem>>, vector<2x128x64xf32>
      tpu.vector_store %arg20[%c0_85, %c0_86, %c0_87], %147 {strides = array<i32>} : memref<2x128x64xf32, #tpu.memory_space<vmem>>, vector<2x128x64xf32>,
    } else {
    }
    %c0 = arith.constant 0 : index
    %c0_1 = arith.constant 0 : index
    %c0_2 = arith.constant 0 : index
    %3 = vector.load %arg20[%c0, %c0_1, %c0_2] : memref<2x128x64xf32, #tpu.memory_space<vmem>>, vector<2x128x64xf32>
    %4 = arith.index_cast %arg1 : i32 to index
    %c0_3 = arith.constant 0 : index
    %c0_4 = arith.constant 0 : index
    %5 = vector.load %arg5[%4, %c0_3, %c0_4] : memref<2x128x64xf32, #tpu.memory_space<vmem>>, vector<1x128x64xf32>
    %6 = vector.shape_cast %5 : vector<1x128x64xf32> to vector<128x64xf32>
    %7 = arith.index_cast %arg1 : i32 to index
    %c0_5 = arith.constant 0 : index
    %c0_6 = arith.constant 0 : index
    %8 = vector.load %arg6[%7, %c0_5, %c0_6] : memref<2x128x64xf32, #tpu.memory_space<vmem>>, vector<1x128x64xf32>
    %9 = vector.shape_cast %8 : vector<1x128x64xf32> to vector<128x64xf32>
    %cst = arith.constant dense<0.000000e+00> : vector<2x128xf32>
    %10 = vector.multi_reduction <add>, %3, %cst [2] : vector<2x128x64xf32> to vector<2x128xf32>
    %11 = vector.shape_cast %10 : vector<2x128xf32> to vector<2x128x1xf32>
    %cst_7 = arith.constant 6.400000e+01 : f32
    %12 = vector.broadcast %cst_7 : f32 to vector<2x128x1xf32>
    %13 = arith.divf %11, %12 : vector<2x128x1xf32>
    %cst_8 = arith.constant dense<0.000000e+00> : vector<2x1xf32>
    %14 = vector.multi_reduction <add>, %13, %cst_8 [1] : vector<2x128x1xf32> to vector<2x1xf32>
    %15 = vector.shape_cast %14 : vector<2x1xf32> to vector<2x1x1xf32>
    %cst_9 = arith.constant 1.280000e+02 : f32
    %16 = vector.broadcast %cst_9 : f32 to vector<2x1x1xf32>
    %17 = arith.divf %15, %16 : vector<2x1x1xf32>
    %18 = vector.broadcast %17 : vector<2x1x1xf32> to vector<2x128x64xf32>
    %19 = arith.subf %3, %18 : vector<2x128x64xf32>
    %20 = arith.mulf %19, %19 : vector<2x128x64xf32>
    %cst_10 = arith.constant dense<0.000000e+00> : vector<2x128xf32>
    %21 = vector.multi_reduction <add>, %20, %cst_10 [2] : vector<2x128x64xf32> to vector<2x128xf32>
    %22 = vector.shape_cast %21 : vector<2x128xf32> to vector<2x128x1xf32>
    %cst_11 = arith.constant 6.400000e+01 : f32
    %23 = vector.broadcast %cst_11 : f32 to vector<2x128x1xf32>
    %24 = arith.divf %22, %23 : vector<2x128x1xf32>
    %cst_12 = arith.constant dense<0.000000e+00> : vector<2x1xf32>
    %25 = vector.multi_reduction <add>, %24, %cst_12 [1] : vector<2x128x1xf32> to vector<2x1xf32>
    %26 = vector.shape_cast %25 : vector<2x1xf32> to vector<2x1x1xf32>
    %cst_13 = arith.constant 1.280000e+02 : f32
    %27 = vector.broadcast %cst_13 : f32 to vector<2x1x1xf32>
    %28 = arith.divf %26, %27 : vector<2x1x1xf32>
    %cst_14 = arith.constant 9.99999997E-7 : f32
    %29 = vector.broadcast %cst_14 : f32 to vector<2x1x1xf32>
    %30 = arith.addf %28, %29 : vector<2x1x1xf32>
    %31 = math.rsqrt %30 : vector<2x1x1xf32>
    %32 = vector.broadcast %31 : vector<2x1x1xf32> to vector<2x128x64xf32>
    %33 = arith.mulf %19, %32 : vector<2x128x64xf32>
    %34 = vector.shape_cast %6 : vector<128x64xf32> to vector<1x128x64xf32>
    %35 = vector.broadcast %34 : vector<1x128x64xf32> to vector<2x128x64xf32>
    %36 = arith.mulf %33, %35 : vector<2x128x64xf32>
    %37 = vector.shape_cast %9 : vector<128x64xf32> to vector<1x128x64xf32>
    %38 = vector.broadcast %37 : vector<1x128x64xf32> to vector<2x128x64xf32>
    %39 = arith.addf %36, %38 : vector<2x128x64xf32>
    %40 = vector.shape_cast %39 : vector<2x128x64xf32> to vector<256x64xf32>
    %41 = arith.index_cast %arg1 : i32 to index
    %c0_15 = arith.constant 0 : index
    %c0_16 = arith.constant 0 : index
    %42 = vector.load %arg7[%41, %c0_15, %c0_16] : memref<2x64x192xf32, #tpu.memory_space<vmem>>, vector<1x64x192xf32>
    %43 = vector.shape_cast %42 : vector<1x64x192xf32> to vector<64x192xf32>
    %cst_17 = arith.constant dense<0.000000e+00> : vector<256x192xf32>
    %44 = tpu.matmul %40, %43, %cst_17 {dimension_numbers = #tpu.dot_dimension_numbers<[1], [0], [0], [1], [0, 0, 1, 1], [], []>} : vector<256x64xf32>, vector<64x192xf32>, vector<256x192xf32> -> vector<256x192xf32>
    %45 = arith.index_cast %arg1 : i32 to index
    %c0_18 = arith.constant 0 : index
    %c0_19 = arith.constant 0 : index
    %46 = vector.load %arg8[%45, %c0_18, %c0_19] : memref<2x1x192xf32, #tpu.memory_space<vmem>>, vector<1x1x192xf32>
    %47 = vector.shape_cast %46 : vector<1x1x192xf32> to vector<1x192xf32>
    %48 = vector.broadcast %47 : vector<1x192xf32> to vector<256x192xf32>
    %49 = arith.addf %44, %48 : vector<256x192xf32>
    %50 = vector.shape_cast %49 : vector<256x192xf32> to vector<2x128x192xf32>
    %c0_20 = arith.constant 0 : index
    %c0_21 = arith.constant 0 : index
    %c0_22 = arith.constant 0 : index
    %51 = vector.load %arg21[%c0_20, %c0_21, %c0_22] : memref<2x128x192xf32, #tpu.memory_space<vmem>>, vector<2x128x192xf32>
    tpu.vector_store %arg21[%c0_20, %c0_21, %c0_22], %50 {strides = array<i32>} : memref<2x128x192xf32, #tpu.memory_space<vmem>>, vector<2x128x192xf32>,
    %c0_i32_23 = arith.constant 0 : i32
    %c2_i32 = arith.constant 2 : i32
    %52 = arith.addi %c0_i32_23, %c2_i32 : i32
    %c1_i32 = arith.constant 1 : i32
    scf.for %arg24 = %c0_i32_23 to %52 step %c1_i32  : i32 {
      %c1_i32_77 = arith.constant 1 : i32
      %136 = arith.muli %arg24, %c1_i32_77 : i32
      %c0_i32_78 = arith.constant 0 : i32
      %137 = arith.addi %c0_i32_78, %136 : i32
      %138 = arith.index_cast %137 : i32 to index
      %c0_79 = arith.constant 0 : index
      %c0_80 = arith.constant 0 : index
      %139 = vector.load %arg21[%138, %c0_79, %c0_80] : memref<2x128x192xf32, #tpu.memory_space<vmem>>, vector<1x128x8xf32>
      %140 = vector.shape_cast %139 : vector<1x128x8xf32> to vector<128x8xf32>
      %141 = arith.index_cast %137 : i32 to index
      %c0_81 = arith.constant 0 : index
      %c64 = arith.constant 64 : index
      %142 = vector.load %arg21[%141, %c0_81, %c64] : memref<2x128x192xf32, #tpu.memory_space<vmem>>, vector<1x128x8xf32>
      %143 = vector.shape_cast %142 : vector<1x128x8xf32> to vector<128x8xf32>
      %144 = arith.index_cast %137 : i32 to index
      %c0_82 = arith.constant 0 : index
      %c128 = arith.constant 128 : index
      %145 = vector.load %arg21[%144, %c0_82, %c128] : memref<2x128x192xf32, #tpu.memory_space<vmem>>, vector<1x128x8xf32>
      %146 = vector.shape_cast %145 : vector<1x128x8xf32> to vector<128x8xf32>
      %cst_83 = arith.constant dense<0.000000e+00> : vector<128x128xf32>
      %147 = tpu.matmul %140, %143, %cst_83 {dimension_numbers = #tpu.dot_dimension_numbers<[1], [1], [0], [0], [0, 0, 1, 0], [], []>} : vector<128x8xf32>, vector<128x8xf32>, vector<128x128xf32> -> vector<128x128xf32>
      %cst_84 = arith.constant dense<0xFF800000> : vector<128xf32>
      %148 = vector.multi_reduction <maximumf>, %147, %cst_84 [1] : vector<128x128xf32> to vector<128xf32>
      %149 = vector.shape_cast %148 : vector<128xf32> to vector<128x1xf32>
      %150 = vector.broadcast %149 : vector<128x1xf32> to vector<128x128xf32>
      %151 = arith.subf %147, %150 : vector<128x128xf32>
      %152 = math.exp %151 : vector<128x128xf32>
      %cst_85 = arith.constant dense<0.000000e+00> : vector<128xf32>
      %153 = vector.multi_reduction <add>, %152, %cst_85 [1] : vector<128x128xf32> to vector<128xf32>
      %154 = vector.shape_cast %153 : vector<128xf32> to vector<128x1xf32>
      %cst_86 = arith.constant dense<0.000000e+00> : vector<128x8xf32>
      %155 = tpu.matmul %152, %146, %cst_86 {dimension_numbers = #tpu.dot_dimension_numbers<[1], [0], [0], [1], [0, 0, 1, 1], [], []>} : vector<128x128xf32>, vector<128x8xf32>, vector<128x8xf32> -> vector<128x8xf32>
      %156 = tpu.reciprocal %154 : vector<128x1xf32> -> vector<128x1xf32>
      %157 = vector.broadcast %156 : vector<128x1xf32> to vector<128x8xf32>
      %158 = arith.mulf %155, %157 : vector<128x8xf32>
      %159 = arith.index_cast %137 : i32 to index
      %c0_87 = arith.constant 0 : index
      %c0_88 = arith.constant 0 : index
      %160 = vector.load %arg22[%159, %c0_87, %c0_88] : memref<2x128x64xf32, #tpu.memory_space<vmem>>, vector<1x128x8xf32>
      %161 = vector.shape_cast %160 : vector<1x128x8xf32> to vector<128x8xf32>
      %162 = vector.shape_cast %158 : vector<128x8xf32> to vector<1x128x8xf32>
      tpu.vector_store %arg22[%159, %c0_87, %c0_88], %162 {strides = array<i32>} : memref<2x128x64xf32, #tpu.memory_space<vmem>>, vector<1x128x8xf32>,
      %163 = arith.index_cast %137 : i32 to index
      %c0_89 = arith.constant 0 : index
      %c8 = arith.constant 8 : index
      %164 = vector.load %arg21[%163, %c0_89, %c8] : memref<2x128x192xf32, #tpu.memory_space<vmem>>, vector<1x128x8xf32>
      %165 = vector.shape_cast %164 : vector<1x128x8xf32> to vector<128x8xf32>
      %166 = arith.index_cast %137 : i32 to index
      %c0_90 = arith.constant 0 : index
      %c72 = arith.constant 72 : index
      %167 = vector.load %arg21[%166, %c0_90, %c72] : memref<2x128x192xf32, #tpu.memory_space<vmem>>, vector<1x128x8xf32>
      %168 = vector.shape_cast %167 : vector<1x128x8xf32> to vector<128x8xf32>
      %169 = arith.index_cast %137 : i32 to index
      %c0_91 = arith.constant 0 : index
      %c136 = arith.constant 136 : index
      %170 = vector.load %arg21[%169, %c0_91, %c136] : memref<2x128x192xf32, #tpu.memory_space<vmem>>, vector<1x128x8xf32>
      %171 = vector.shape_cast %170 : vector<1x128x8xf32> to vector<128x8xf32>
      %cst_92 = arith.constant dense<0.000000e+00> : vector<128x128xf32>
      %172 = tpu.matmul %165, %168, %cst_92 {dimension_numbers = #tpu.dot_dimension_numbers<[1], [1], [0], [0], [0, 0, 1, 0], [], []>} : vector<128x8xf32>, vector<128x8xf32>, vector<128x128xf32> -> vector<128x128xf32>
      %cst_93 = arith.constant dense<0xFF800000> : vector<128xf32>
      %173 = vector.multi_reduction <maximumf>, %172, %cst_93 [1] : vector<128x128xf32> to vector<128xf32>
      %174 = vector.shape_cast %173 : vector<128xf32> to vector<128x1xf32>
      %175 = vector.broadcast %174 : vector<128x1xf32> to vector<128x128xf32>
      %176 = arith.subf %172, %175 : vector<128x128xf32>
      %177 = math.exp %176 : vector<128x128xf32>
      %cst_94 = arith.constant dense<0.000000e+00> : vector<128xf32>
      %178 = vector.multi_reduction <add>, %177, %cst_94 [1] : vector<128x128xf32> to vector<128xf32>
      %179 = vector.shape_cast %178 : vector<128xf32> to vector<128x1xf32>
      %cst_95 = arith.constant dense<0.000000e+00> : vector<128x8xf32>
      %180 = tpu.matmul %177, %171, %cst_95 {dimension_numbers = #tpu.dot_dimension_numbers<[1], [0], [0], [1], [0, 0, 1, 1], [], []>} : vector<128x128xf32>, vector<128x8xf32>, vector<128x8xf32> -> vector<128x8xf32>
      %181 = tpu.reciprocal %179 : vector<128x1xf32> -> vector<128x1xf32>
      %182 = vector.broadcast %181 : vector<128x1xf32> to vector<128x8xf32>
      %183 = arith.mulf %180, %182 : vector<128x8xf32>
      %184 = arith.index_cast %137 : i32 to index
      %c0_96 = arith.constant 0 : index
      %c8_97 = arith.constant 8 : index
      %185 = vector.load %arg22[%184, %c0_96, %c8_97] : memref<2x128x64xf32, #tpu.memory_space<vmem>>, vector<1x128x8xf32>
      %186 = vector.shape_cast %185 : vector<1x128x8xf32> to vector<128x8xf32>
      %187 = vector.shape_cast %183 : vector<128x8xf32> to vector<1x128x8xf32>
      tpu.vector_store %arg22[%184, %c0_96, %c8_97], %187 {strides = array<i32>} : memref<2x128x64xf32, #tpu.memory_space<vmem>>, vector<1x128x8xf32>,
      %188 = arith.index_cast %137 : i32 to index
      %c0_98 = arith.constant 0 : index
      %c16 = arith.constant 16 : index
      %189 = vector.load %arg21[%188, %c0_98, %c16] : memref<2x128x192xf32, #tpu.memory_space<vmem>>, vector<1x128x8xf32>
      %190 = vector.shape_cast %189 : vector<1x128x8xf32> to vector<128x8xf32>
      %191 = arith.index_cast %137 : i32 to index
      %c0_99 = arith.constant 0 : index
      %c80 = arith.constant 80 : index
      %192 = vector.load %arg21[%191, %c0_99, %c80] : memref<2x128x192xf32, #tpu.memory_space<vmem>>, vector<1x128x8xf32>
      %193 = vector.shape_cast %192 : vector<1x128x8xf32> to vector<128x8xf32>
      %194 = arith.index_cast %137 : i32 to index
      %c0_100 = arith.constant 0 : index
      %c144 = arith.constant 144 : index
      %195 = vector.load %arg21[%194, %c0_100, %c144] : memref<2x128x192xf32, #tpu.memory_space<vmem>>, vector<1x128x8xf32>
      %196 = vector.shape_cast %195 : vector<1x128x8xf32> to vector<128x8xf32>
      %cst_101 = arith.constant dense<0.000000e+00> : vector<128x128xf32>
      %197 = tpu.matmul %190, %193, %cst_101 {dimension_numbers = #tpu.dot_dimension_numbers<[1], [1], [0], [0], [0, 0, 1, 0], [], []>} : vector<128x8xf32>, vector<128x8xf32>, vector<128x128xf32> -> vector<128x128xf32>
      %cst_102 = arith.constant dense<0xFF800000> : vector<128xf32>
      %198 = vector.multi_reduction <maximumf>, %197, %cst_102 [1] : vector<128x128xf32> to vector<128xf32>
      %199 = vector.shape_cast %198 : vector<128xf32> to vector<128x1xf32>
      %200 = vector.broadcast %199 : vector<128x1xf32> to vector<128x128xf32>
      %201 = arith.subf %197, %200 : vector<128x128xf32>
      %202 = math.exp %201 : vector<128x128xf32>
      %cst_103 = arith.constant dense<0.000000e+00> : vector<128xf32>
      %203 = vector.multi_reduction <add>, %202, %cst_103 [1] : vector<128x128xf32> to vector<128xf32>
      %204 = vector.shape_cast %203 : vector<128xf32> to vector<128x1xf32>
      %cst_104 = arith.constant dense<0.000000e+00> : vector<128x8xf32>
      %205 = tpu.matmul %202, %196, %cst_104 {dimension_numbers = #tpu.dot_dimension_numbers<[1], [0], [0], [1], [0, 0, 1, 1], [], []>} : vector<128x128xf32>, vector<128x8xf32>, vector<128x8xf32> -> vector<128x8xf32>
      %206 = tpu.reciprocal %204 : vector<128x1xf32> -> vector<128x1xf32>
      %207 = vector.broadcast %206 : vector<128x1xf32> to vector<128x8xf32>
      %208 = arith.mulf %205, %207 : vector<128x8xf32>
      %209 = arith.index_cast %137 : i32 to index
      %c0_105 = arith.constant 0 : index
      %c16_106 = arith.constant 16 : index
      %210 = vector.load %arg22[%209, %c0_105, %c16_106] : memref<2x128x64xf32, #tpu.memory_space<vmem>>, vector<1x128x8xf32>
      %211 = vector.shape_cast %210 : vector<1x128x8xf32> to vector<128x8xf32>
      %212 = vector.shape_cast %208 : vector<128x8xf32> to vector<1x128x8xf32>
      tpu.vector_store %arg22[%209, %c0_105, %c16_106], %212 {strides = array<i32>} : memref<2x128x64xf32, #tpu.memory_space<vmem>>, vector<1x128x8xf32>,
      %213 = arith.index_cast %137 : i32 to index
      %c0_107 = arith.constant 0 : index
      %c24 = arith.constant 24 : index
      %214 = vector.load %arg21[%213, %c0_107, %c24] : memref<2x128x192xf32, #tpu.memory_space<vmem>>, vector<1x128x8xf32>
      %215 = vector.shape_cast %214 : vector<1x128x8xf32> to vector<128x8xf32>
      %216 = arith.index_cast %137 : i32 to index
      %c0_108 = arith.constant 0 : index
      %c88 = arith.constant 88 : index
      %217 = vector.load %arg21[%216, %c0_108, %c88] : memref<2x128x192xf32, #tpu.memory_space<vmem>>, vector<1x128x8xf32>
      %218 = vector.shape_cast %217 : vector<1x128x8xf32> to vector<128x8xf32>
      %219 = arith.index_cast %137 : i32 to index
      %c0_109 = arith.constant 0 : index
      %c152 = arith.constant 152 : index
      %220 = vector.load %arg21[%219, %c0_109, %c152] : memref<2x128x192xf32, #tpu.memory_space<vmem>>, vector<1x128x8xf32>
      %221 = vector.shape_cast %220 : vector<1x128x8xf32> to vector<128x8xf32>
      %cst_110 = arith.constant dense<0.000000e+00> : vector<128x128xf32>
      %222 = tpu.matmul %215, %218, %cst_110 {dimension_numbers = #tpu.dot_dimension_numbers<[1], [1], [0], [0], [0, 0, 1, 0], [], []>} : vector<128x8xf32>, vector<128x8xf32>, vector<128x128xf32> -> vector<128x128xf32>
      %cst_111 = arith.constant dense<0xFF800000> : vector<128xf32>
      %223 = vector.multi_reduction <maximumf>, %222, %cst_111 [1] : vector<128x128xf32> to vector<128xf32>
      %224 = vector.shape_cast %223 : vector<128xf32> to vector<128x1xf32>
      %225 = vector.broadcast %224 : vector<128x1xf32> to vector<128x128xf32>
      %226 = arith.subf %222, %225 : vector<128x128xf32>
      %227 = math.exp %226 : vector<128x128xf32>
      %cst_112 = arith.constant dense<0.000000e+00> : vector<128xf32>
      %228 = vector.multi_reduction <add>, %227, %cst_112 [1] : vector<128x128xf32> to vector<128xf32>
      %229 = vector.shape_cast %228 : vector<128xf32> to vector<128x1xf32>
      %cst_113 = arith.constant dense<0.000000e+00> : vector<128x8xf32>
      %230 = tpu.matmul %227, %221, %cst_113 {dimension_numbers = #tpu.dot_dimension_numbers<[1], [0], [0], [1], [0, 0, 1, 1], [], []>} : vector<128x128xf32>, vector<128x8xf32>, vector<128x8xf32> -> vector<128x8xf32>
      %231 = tpu.reciprocal %229 : vector<128x1xf32> -> vector<128x1xf32>
      %232 = vector.broadcast %231 : vector<128x1xf32> to vector<128x8xf32>
      %233 = arith.mulf %230, %232 : vector<128x8xf32>
      %234 = arith.index_cast %137 : i32 to index
      %c0_114 = arith.constant 0 : index
      %c24_115 = arith.constant 24 : index
      %235 = vector.load %arg22[%234, %c0_114, %c24_115] : memref<2x128x64xf32, #tpu.memory_space<vmem>>, vector<1x128x8xf32>
      %236 = vector.shape_cast %235 : vector<1x128x8xf32> to vector<128x8xf32>
      %237 = vector.shape_cast %233 : vector<128x8xf32> to vector<1x128x8xf32>
      tpu.vector_store %arg22[%234, %c0_114, %c24_115], %237 {strides = array<i32>} : memref<2x128x64xf32, #tpu.memory_space<vmem>>, vector<1x128x8xf32>,
      %238 = arith.index_cast %137 : i32 to index
      %c0_116 = arith.constant 0 : index
      %c32 = arith.constant 32 : index
      %239 = vector.load %arg21[%238, %c0_116, %c32] : memref<2x128x192xf32, #tpu.memory_space<vmem>>, vector<1x128x8xf32>
      %240 = vector.shape_cast %239 : vector<1x128x8xf32> to vector<128x8xf32>
      %241 = arith.index_cast %137 : i32 to index
      %c0_117 = arith.constant 0 : index
      %c96 = arith.constant 96 : index
      %242 = vector.load %arg21[%241, %c0_117, %c96] : memref<2x128x192xf32, #tpu.memory_space<vmem>>, vector<1x128x8xf32>
      %243 = vector.shape_cast %242 : vector<1x128x8xf32> to vector<128x8xf32>
      %244 = arith.index_cast %137 : i32 to index
      %c0_118 = arith.constant 0 : index
      %c160 = arith.constant 160 : index
      %245 = vector.load %arg21[%244, %c0_118, %c160] : memref<2x128x192xf32, #tpu.memory_space<vmem>>, vector<1x128x8xf32>
      %246 = vector.shape_cast %245 : vector<1x128x8xf32> to vector<128x8xf32>
      %cst_119 = arith.constant dense<0.000000e+00> : vector<128x128xf32>
      %247 = tpu.matmul %240, %243, %cst_119 {dimension_numbers = #tpu.dot_dimension_numbers<[1], [1], [0], [0], [0, 0, 1, 0], [], []>} : vector<128x8xf32>, vector<128x8xf32>, vector<128x128xf32> -> vector<128x128xf32>
      %cst_120 = arith.constant dense<0xFF800000> : vector<128xf32>
      %248 = vector.multi_reduction <maximumf>, %247, %cst_120 [1] : vector<128x128xf32> to vector<128xf32>
      %249 = vector.shape_cast %248 : vector<128xf32> to vector<128x1xf32>
      %250 = vector.broadcast %249 : vector<128x1xf32> to vector<128x128xf32>
      %251 = arith.subf %247, %250 : vector<128x128xf32>
      %252 = math.exp %251 : vector<128x128xf32>
      %cst_121 = arith.constant dense<0.000000e+00> : vector<128xf32>
      %253 = vector.multi_reduction <add>, %252, %cst_121 [1] : vector<128x128xf32> to vector<128xf32>
      %254 = vector.shape_cast %253 : vector<128xf32> to vector<128x1xf32>
      %cst_122 = arith.constant dense<0.000000e+00> : vector<128x8xf32>
      %255 = tpu.matmul %252, %246, %cst_122 {dimension_numbers = #tpu.dot_dimension_numbers<[1], [0], [0], [1], [0, 0, 1, 1], [], []>} : vector<128x128xf32>, vector<128x8xf32>, vector<128x8xf32> -> vector<128x8xf32>
      %256 = tpu.reciprocal %254 : vector<128x1xf32> -> vector<128x1xf32>
      %257 = vector.broadcast %256 : vector<128x1xf32> to vector<128x8xf32>
      %258 = arith.mulf %255, %257 : vector<128x8xf32>
      %259 = arith.index_cast %137 : i32 to index
      %c0_123 = arith.constant 0 : index
      %c32_124 = arith.constant 32 : index
      %260 = vector.load %arg22[%259, %c0_123, %c32_124] : memref<2x128x64xf32, #tpu.memory_space<vmem>>, vector<1x128x8xf32>
      %261 = vector.shape_cast %260 : vector<1x128x8xf32> to vector<128x8xf32>
      %262 = vector.shape_cast %258 : vector<128x8xf32> to vector<1x128x8xf32>
      tpu.vector_store %arg22[%259, %c0_123, %c32_124], %262 {strides = array<i32>} : memref<2x128x64xf32, #tpu.memory_space<vmem>>, vector<1x128x8xf32>,
      %263 = arith.index_cast %137 : i32 to index
      %c0_125 = arith.constant 0 : index
      %c40 = arith.constant 40 : index
      %264 = vector.load %arg21[%263, %c0_125, %c40] : memref<2x128x192xf32, #tpu.memory_space<vmem>>, vector<1x128x8xf32>
      %265 = vector.shape_cast %264 : vector<1x128x8xf32> to vector<128x8xf32>
      %266 = arith.index_cast %137 : i32 to index
      %c0_126 = arith.constant 0 : index
      %c104 = arith.constant 104 : index
      %267 = vector.load %arg21[%266, %c0_126, %c104] : memref<2x128x192xf32, #tpu.memory_space<vmem>>, vector<1x128x8xf32>
      %268 = vector.shape_cast %267 : vector<1x128x8xf32> to vector<128x8xf32>
      %269 = arith.index_cast %137 : i32 to index
      %c0_127 = arith.constant 0 : index
      %c168 = arith.constant 168 : index
      %270 = vector.load %arg21[%269, %c0_127, %c168] : memref<2x128x192xf32, #tpu.memory_space<vmem>>, vector<1x128x8xf32>
      %271 = vector.shape_cast %270 : vector<1x128x8xf32> to vector<128x8xf32>
      %cst_128 = arith.constant dense<0.000000e+00> : vector<128x128xf32>
      %272 = tpu.matmul %265, %268, %cst_128 {dimension_numbers = #tpu.dot_dimension_numbers<[1], [1], [0], [0], [0, 0, 1, 0], [], []>} : vector<128x8xf32>, vector<128x8xf32>, vector<128x128xf32> -> vector<128x128xf32>
      %cst_129 = arith.constant dense<0xFF800000> : vector<128xf32>
      %273 = vector.multi_reduction <maximumf>, %272, %cst_129 [1] : vector<128x128xf32> to vector<128xf32>
      %274 = vector.shape_cast %273 : vector<128xf32> to vector<128x1xf32>
      %275 = vector.broadcast %274 : vector<128x1xf32> to vector<128x128xf32>
      %276 = arith.subf %272, %275 : vector<128x128xf32>
      %277 = math.exp %276 : vector<128x128xf32>
      %cst_130 = arith.constant dense<0.000000e+00> : vector<128xf32>
      %278 = vector.multi_reduction <add>, %277, %cst_130 [1] : vector<128x128xf32> to vector<128xf32>
      %279 = vector.shape_cast %278 : vector<128xf32> to vector<128x1xf32>
      %cst_131 = arith.constant dense<0.000000e+00> : vector<128x8xf32>
      %280 = tpu.matmul %277, %271, %cst_131 {dimension_numbers = #tpu.dot_dimension_numbers<[1], [0], [0], [1], [0, 0, 1, 1], [], []>} : vector<128x128xf32>, vector<128x8xf32>, vector<128x8xf32> -> vector<128x8xf32>
      %281 = tpu.reciprocal %279 : vector<128x1xf32> -> vector<128x1xf32>
      %282 = vector.broadcast %281 : vector<128x1xf32> to vector<128x8xf32>
      %283 = arith.mulf %280, %282 : vector<128x8xf32>
      %284 = arith.index_cast %137 : i32 to index
      %c0_132 = arith.constant 0 : index
      %c40_133 = arith.constant 40 : index
      %285 = vector.load %arg22[%284, %c0_132, %c40_133] : memref<2x128x64xf32, #tpu.memory_space<vmem>>, vector<1x128x8xf32>
      %286 = vector.shape_cast %285 : vector<1x128x8xf32> to vector<128x8xf32>
      %287 = vector.shape_cast %283 : vector<128x8xf32> to vector<1x128x8xf32>
      tpu.vector_store %arg22[%284, %c0_132, %c40_133], %287 {strides = array<i32>} : memref<2x128x64xf32, #tpu.memory_space<vmem>>, vector<1x128x8xf32>,
      %288 = arith.index_cast %137 : i32 to index
      %c0_134 = arith.constant 0 : index
      %c48 = arith.constant 48 : index
      %289 = vector.load %arg21[%288, %c0_134, %c48] : memref<2x128x192xf32, #tpu.memory_space<vmem>>, vector<1x128x8xf32>
      %290 = vector.shape_cast %289 : vector<1x128x8xf32> to vector<128x8xf32>
      %291 = arith.index_cast %137 : i32 to index
      %c0_135 = arith.constant 0 : index
      %c112 = arith.constant 112 : index
      %292 = vector.load %arg21[%291, %c0_135, %c112] : memref<2x128x192xf32, #tpu.memory_space<vmem>>, vector<1x128x8xf32>
      %293 = vector.shape_cast %292 : vector<1x128x8xf32> to vector<128x8xf32>
      %294 = arith.index_cast %137 : i32 to index
      %c0_136 = arith.constant 0 : index
      %c176 = arith.constant 176 : index
      %295 = vector.load %arg21[%294, %c0_136, %c176] : memref<2x128x192xf32, #tpu.memory_space<vmem>>, vector<1x128x8xf32>
      %296 = vector.shape_cast %295 : vector<1x128x8xf32> to vector<128x8xf32>
      %cst_137 = arith.constant dense<0.000000e+00> : vector<128x128xf32>
      %297 = tpu.matmul %290, %293, %cst_137 {dimension_numbers = #tpu.dot_dimension_numbers<[1], [1], [0], [0], [0, 0, 1, 0], [], []>} : vector<128x8xf32>, vector<128x8xf32>, vector<128x128xf32> -> vector<128x128xf32>
      %cst_138 = arith.constant dense<0xFF800000> : vector<128xf32>
      %298 = vector.multi_reduction <maximumf>, %297, %cst_138 [1] : vector<128x128xf32> to vector<128xf32>
      %299 = vector.shape_cast %298 : vector<128xf32> to vector<128x1xf32>
      %300 = vector.broadcast %299 : vector<128x1xf32> to vector<128x128xf32>
      %301 = arith.subf %297, %300 : vector<128x128xf32>
      %302 = math.exp %301 : vector<128x128xf32>
      %cst_139 = arith.constant dense<0.000000e+00> : vector<128xf32>
      %303 = vector.multi_reduction <add>, %302, %cst_139 [1] : vector<128x128xf32> to vector<128xf32>
      %304 = vector.shape_cast %303 : vector<128xf32> to vector<128x1xf32>
      %cst_140 = arith.constant dense<0.000000e+00> : vector<128x8xf32>
      %305 = tpu.matmul %302, %296, %cst_140 {dimension_numbers = #tpu.dot_dimension_numbers<[1], [0], [0], [1], [0, 0, 1, 1], [], []>} : vector<128x128xf32>, vector<128x8xf32>, vector<128x8xf32> -> vector<128x8xf32>
      %306 = tpu.reciprocal %304 : vector<128x1xf32> -> vector<128x1xf32>
      %307 = vector.broadcast %306 : vector<128x1xf32> to vector<128x8xf32>
      %308 = arith.mulf %305, %307 : vector<128x8xf32>
      %309 = arith.index_cast %137 : i32 to index
      %c0_141 = arith.constant 0 : index
      %c48_142 = arith.constant 48 : index
      %310 = vector.load %arg22[%309, %c0_141, %c48_142] : memref<2x128x64xf32, #tpu.memory_space<vmem>>, vector<1x128x8xf32>
      %311 = vector.shape_cast %310 : vector<1x128x8xf32> to vector<128x8xf32>
      %312 = vector.shape_cast %308 : vector<128x8xf32> to vector<1x128x8xf32>
      tpu.vector_store %arg22[%309, %c0_141, %c48_142], %312 {strides = array<i32>} : memref<2x128x64xf32, #tpu.memory_space<vmem>>, vector<1x128x8xf32>,
      %313 = arith.index_cast %137 : i32 to index
      %c0_143 = arith.constant 0 : index
      %c56 = arith.constant 56 : index
      %314 = vector.load %arg21[%313, %c0_143, %c56] : memref<2x128x192xf32, #tpu.memory_space<vmem>>, vector<1x128x8xf32>
      %315 = vector.shape_cast %314 : vector<1x128x8xf32> to vector<128x8xf32>
      %316 = arith.index_cast %137 : i32 to index
      %c0_144 = arith.constant 0 : index
      %c120 = arith.constant 120 : index
      %317 = vector.load %arg21[%316, %c0_144, %c120] : memref<2x128x192xf32, #tpu.memory_space<vmem>>, vector<1x128x8xf32>
      %318 = vector.shape_cast %317 : vector<1x128x8xf32> to vector<128x8xf32>
      %319 = arith.index_cast %137 : i32 to index
      %c0_145 = arith.constant 0 : index
      %c184 = arith.constant 184 : index
      %320 = vector.load %arg21[%319, %c0_145, %c184] : memref<2x128x192xf32, #tpu.memory_space<vmem>>, vector<1x128x8xf32>
      %321 = vector.shape_cast %320 : vector<1x128x8xf32> to vector<128x8xf32>
      %cst_146 = arith.constant dense<0.000000e+00> : vector<128x128xf32>
      %322 = tpu.matmul %315, %318, %cst_146 {dimension_numbers = #tpu.dot_dimension_numbers<[1], [1], [0], [0], [0, 0, 1, 0], [], []>} : vector<128x8xf32>, vector<128x8xf32>, vector<128x128xf32> -> vector<128x128xf32>
      %cst_147 = arith.constant dense<0xFF800000> : vector<128xf32>
      %323 = vector.multi_reduction <maximumf>, %322, %cst_147 [1] : vector<128x128xf32> to vector<128xf32>
      %324 = vector.shape_cast %323 : vector<128xf32> to vector<128x1xf32>
      %325 = vector.broadcast %324 : vector<128x1xf32> to vector<128x128xf32>
      %326 = arith.subf %322, %325 : vector<128x128xf32>
      %327 = math.exp %326 : vector<128x128xf32>
      %cst_148 = arith.constant dense<0.000000e+00> : vector<128xf32>
      %328 = vector.multi_reduction <add>, %327, %cst_148 [1] : vector<128x128xf32> to vector<128xf32>
      %329 = vector.shape_cast %328 : vector<128xf32> to vector<128x1xf32>
      %cst_149 = arith.constant dense<0.000000e+00> : vector<128x8xf32>
      %330 = tpu.matmul %327, %321, %cst_149 {dimension_numbers = #tpu.dot_dimension_numbers<[1], [0], [0], [1], [0, 0, 1, 1], [], []>} : vector<128x128xf32>, vector<128x8xf32>, vector<128x8xf32> -> vector<128x8xf32>
      %331 = tpu.reciprocal %329 : vector<128x1xf32> -> vector<128x1xf32>
      %332 = vector.broadcast %331 : vector<128x1xf32> to vector<128x8xf32>
      %333 = arith.mulf %330, %332 : vector<128x8xf32>
      %334 = arith.index_cast %137 : i32 to index
      %c0_150 = arith.constant 0 : index
      %c56_151 = arith.constant 56 : index
      %335 = vector.load %arg22[%334, %c0_150, %c56_151] : memref<2x128x64xf32, #tpu.memory_space<vmem>>, vector<1x128x8xf32>
      %336 = vector.shape_cast %335 : vector<1x128x8xf32> to vector<128x8xf32>
      %337 = vector.shape_cast %333 : vector<128x8xf32> to vector<1x128x8xf32>
      tpu.vector_store %arg22[%334, %c0_150, %c56_151], %337 {strides = array<i32>} : memref<2x128x64xf32, #tpu.memory_space<vmem>>, vector<1x128x8xf32>,
    }
    %c2_i32_24 = arith.constant 2 : i32
    %c0_25 = arith.constant 0 : index
    %c0_26 = arith.constant 0 : index
    %c0_27 = arith.constant 0 : index
    %53 = vector.load %arg22[%c0_25, %c0_26, %c0_27] : memref<2x128x64xf32, #tpu.memory_space<vmem>>, vector<2x128x64xf32>
    %54 = vector.shape_cast %53 : vector<2x128x64xf32> to vector<256x64xf32>
    %55 = arith.index_cast %arg1 : i32 to index
    %c0_28 = arith.constant 0 : index
    %c0_29 = arith.constant 0 : index
    %56 = vector.load %arg9[%55, %c0_28, %c0_29] : memref<2x64x64xf32, #tpu.memory_space<vmem>>, vector<1x64x64xf32>
    %57 = vector.shape_cast %56 : vector<1x64x64xf32> to vector<64x64xf32>
    %cst_30 = arith.constant dense<0.000000e+00> : vector<256x64xf32>
    %58 = tpu.matmul %54, %57, %cst_30 {dimension_numbers = #tpu.dot_dimension_numbers<[1], [0], [0], [1], [0, 0, 1, 1], [], []>} : vector<256x64xf32>, vector<64x64xf32>, vector<256x64xf32> -> vector<256x64xf32>
    %59 = arith.index_cast %arg1 : i32 to index
    %c0_31 = arith.constant 0 : index
    %c0_32 = arith.constant 0 : index
    %60 = vector.load %arg10[%59, %c0_31, %c0_32] : memref<2x1x64xf32, #tpu.memory_space<vmem>>, vector<1x1x64xf32>
    %61 = vector.shape_cast %60 : vector<1x1x64xf32> to vector<1x64xf32>
    %62 = vector.broadcast %61 : vector<1x64xf32> to vector<256x64xf32>
    %63 = arith.addf %58, %62 : vector<256x64xf32>
    %64 = vector.shape_cast %63 : vector<256x64xf32> to vector<2x128x64xf32>
    %c0_33 = arith.constant 0 : index
    %c0_34 = arith.constant 0 : index
    %c0_35 = arith.constant 0 : index
    %65 = vector.load %arg20[%c0_33, %c0_34, %c0_35] : memref<2x128x64xf32, #tpu.memory_space<vmem>>, vector<2x128x64xf32>
    %66 = arith.addf %64, %65 : vector<2x128x64xf32>
    %67 = arith.index_cast %arg1 : i32 to index
    %c0_36 = arith.constant 0 : index
    %c0_37 = arith.constant 0 : index
    %68 = vector.load %arg11[%67, %c0_36, %c0_37] : memref<2x128x64xf32, #tpu.memory_space<vmem>>, vector<1x128x64xf32>
    %69 = vector.shape_cast %68 : vector<1x128x64xf32> to vector<128x64xf32>
    %70 = arith.index_cast %arg1 : i32 to index
    %c0_38 = arith.constant 0 : index
    %c0_39 = arith.constant 0 : index
    %71 = vector.load %arg12[%70, %c0_38, %c0_39] : memref<2x128x64xf32, #tpu.memory_space<vmem>>, vector<1x128x64xf32>
    %72 = vector.shape_cast %71 : vector<1x128x64xf32> to vector<128x64xf32>
    %cst_40 = arith.constant dense<0.000000e+00> : vector<2x128xf32>
    %73 = vector.multi_reduction <add>, %66, %cst_40 [2] : vector<2x128x64xf32> to vector<2x128xf32>
    %74 = vector.shape_cast %73 : vector<2x128xf32> to vector<2x128x1xf32>
    %cst_41 = arith.constant 6.400000e+01 : f32
    %75 = vector.broadcast %cst_41 : f32 to vector<2x128x1xf32>
    %76 = arith.divf %74, %75 : vector<2x128x1xf32>
    %cst_42 = arith.constant dense<0.000000e+00> : vector<2x1xf32>
    %77 = vector.multi_reduction <add>, %76, %cst_42 [1] : vector<2x128x1xf32> to vector<2x1xf32>
    %78 = vector.shape_cast %77 : vector<2x1xf32> to vector<2x1x1xf32>
    %cst_43 = arith.constant 1.280000e+02 : f32
    %79 = vector.broadcast %cst_43 : f32 to vector<2x1x1xf32>
    %80 = arith.divf %78, %79 : vector<2x1x1xf32>
    %81 = vector.broadcast %80 : vector<2x1x1xf32> to vector<2x128x64xf32>
    %82 = arith.subf %66, %81 : vector<2x128x64xf32>
    %83 = arith.mulf %82, %82 : vector<2x128x64xf32>
    %cst_44 = arith.constant dense<0.000000e+00> : vector<2x128xf32>
    %84 = vector.multi_reduction <add>, %83, %cst_44 [2] : vector<2x128x64xf32> to vector<2x128xf32>
    %85 = vector.shape_cast %84 : vector<2x128xf32> to vector<2x128x1xf32>
    %cst_45 = arith.constant 6.400000e+01 : f32
    %86 = vector.broadcast %cst_45 : f32 to vector<2x128x1xf32>
    %87 = arith.divf %85, %86 : vector<2x128x1xf32>
    %cst_46 = arith.constant dense<0.000000e+00> : vector<2x1xf32>
    %88 = vector.multi_reduction <add>, %87, %cst_46 [1] : vector<2x128x1xf32> to vector<2x1xf32>
    %89 = vector.shape_cast %88 : vector<2x1xf32> to vector<2x1x1xf32>
    %cst_47 = arith.constant 1.280000e+02 : f32
    %90 = vector.broadcast %cst_47 : f32 to vector<2x1x1xf32>
    %91 = arith.divf %89, %90 : vector<2x1x1xf32>
    %cst_48 = arith.constant 9.99999997E-7 : f32
    %92 = vector.broadcast %cst_48 : f32 to vector<2x1x1xf32>
    %93 = arith.addf %91, %92 : vector<2x1x1xf32>
    %94 = math.rsqrt %93 : vector<2x1x1xf32>
    %95 = vector.broadcast %94 : vector<2x1x1xf32> to vector<2x128x64xf32>
    %96 = arith.mulf %82, %95 : vector<2x128x64xf32>
    %97 = vector.shape_cast %69 : vector<128x64xf32> to vector<1x128x64xf32>
    %98 = vector.broadcast %97 : vector<1x128x64xf32> to vector<2x128x64xf32>
    %99 = arith.mulf %96, %98 : vector<2x128x64xf32>
    %100 = vector.shape_cast %72 : vector<128x64xf32> to vector<1x128x64xf32>
    %101 = vector.broadcast %100 : vector<1x128x64xf32> to vector<2x128x64xf32>
    %102 = arith.addf %99, %101 : vector<2x128x64xf32>
    %c0_49 = arith.constant 0 : index
    %c0_50 = arith.constant 0 : index
    %c0_51 = arith.constant 0 : index
    %103 = vector.load %arg20[%c0_49, %c0_50, %c0_51] : memref<2x128x64xf32, #tpu.memory_space<vmem>>, vector<2x128x64xf32>
    tpu.vector_store %arg20[%c0_49, %c0_50, %c0_51], %66 {strides = array<i32>} : memref<2x128x64xf32, #tpu.memory_space<vmem>>, vector<2x128x64xf32>,
    %104 = vector.shape_cast %102 : vector<2x128x64xf32> to vector<256x64xf32>
    %105 = arith.index_cast %arg1 : i32 to index
    %c0_52 = arith.constant 0 : index
    %c0_53 = arith.constant 0 : index
    %106 = vector.load %arg13[%105, %c0_52, %c0_53] : memref<2x64x128xf32, #tpu.memory_space<vmem>>, vector<1x64x128xf32>
    %107 = vector.shape_cast %106 : vector<1x64x128xf32> to vector<64x128xf32>
    %cst_54 = arith.constant dense<0.000000e+00> : vector<256x128xf32>
    %108 = tpu.matmul %104, %107, %cst_54 {dimension_numbers = #tpu.dot_dimension_numbers<[1], [0], [0], [1], [0, 0, 1, 1], [], []>} : vector<256x64xf32>, vector<64x128xf32>, vector<256x128xf32> -> vector<256x128xf32>
    %109 = arith.index_cast %arg1 : i32 to index
    %c0_55 = arith.constant 0 : index
    %c0_56 = arith.constant 0 : index
    %110 = vector.load %arg14[%109, %c0_55, %c0_56] : memref<2x1x128xf32, #tpu.memory_space<vmem>>, vector<1x1x128xf32>
    %111 = vector.shape_cast %110 : vector<1x1x128xf32> to vector<1x128xf32>
    %112 = vector.broadcast %111 : vector<1x128xf32> to vector<256x128xf32>
    %113 = arith.addf %108, %112 : vector<256x128xf32>
    %cst_57 = arith.constant 0.000000e+00 : f32
    %114 = vector.broadcast %cst_57 : f32 to vector<256x128xf32>
    %115 = arith.maximumf %113, %114 : vector<256x128xf32>
    %116 = vector.shape_cast %115 : vector<256x128xf32> to vector<2x128x128xf32>
    %c0_58 = arith.constant 0 : index
    %c0_59 = arith.constant 0 : index
    %c0_60 = arith.constant 0 : index
    %117 = vector.load %arg23[%c0_58, %c0_59, %c0_60] : memref<2x128x128xf32, #tpu.memory_space<vmem>>, vector<2x128x128xf32>
    tpu.vector_store %arg23[%c0_58, %c0_59, %c0_60], %116 {strides = array<i32>} : memref<2x128x128xf32, #tpu.memory_space<vmem>>, vector<2x128x128xf32>,
    %c0_61 = arith.constant 0 : index
    %c0_62 = arith.constant 0 : index
    %c0_63 = arith.constant 0 : index
    %118 = vector.load %arg23[%c0_61, %c0_62, %c0_63] : memref<2x128x128xf32, #tpu.memory_space<vmem>>, vector<2x128x128xf32>
    %119 = vector.shape_cast %118 : vector<2x128x128xf32> to vector<256x128xf32>
    %120 = arith.index_cast %arg1 : i32 to index
    %c0_64 = arith.constant 0 : index
    %c0_65 = arith.constant 0 : index
    %121 = vector.load %arg15[%120, %c0_64, %c0_65] : memref<2x128x64xf32, #tpu.memory_space<vmem>>, vector<1x128x64xf32>
    %122 = vector.shape_cast %121 : vector<1x128x64xf32> to vector<128x64xf32>
    %cst_66 = arith.constant dense<0.000000e+00> : vector<256x64xf32>
    %123 = tpu.matmul %119, %122, %cst_66 {dimension_numbers = #tpu.dot_dimension_numbers<[1], [0], [0], [1], [0, 0, 1, 1], [], []>} : vector<256x128xf32>, vector<128x64xf32>, vector<256x64xf32> -> vector<256x64xf32>
    %124 = arith.index_cast %arg1 : i32 to index
    %c0_67 = arith.constant 0 : index
    %c0_68 = arith.constant 0 : index
    %125 = vector.load %arg16[%124, %c0_67, %c0_68] : memref<2x1x64xf32, #tpu.memory_space<vmem>>, vector<1x1x64xf32>
    %126 = vector.shape_cast %125 : vector<1x1x64xf32> to vector<1x64xf32>
    %127 = vector.broadcast %126 : vector<1x64xf32> to vector<256x64xf32>
    %128 = arith.addf %123, %127 : vector<256x64xf32>
    %c0_69 = arith.constant 0 : index
    %c0_70 = arith.constant 0 : index
    %c0_71 = arith.constant 0 : index
    %129 = vector.load %arg20[%c0_69, %c0_70, %c0_71] : memref<2x128x64xf32, #tpu.memory_space<vmem>>, vector<2x128x64xf32>
    %130 = vector.shape_cast %128 : vector<256x64xf32> to vector<2x128x64xf32>
    %131 = arith.addf %129, %130 : vector<2x128x64xf32>
    %c0_72 = arith.constant 0 : index
    %c0_73 = arith.constant 0 : index
    %c0_74 = arith.constant 0 : index
    %132 = vector.load %arg20[%c0_72, %c0_73, %c0_74] : memref<2x128x64xf32, #tpu.memory_space<vmem>>, vector<2x128x64xf32>
    tpu.vector_store %arg20[%c0_72, %c0_73, %c0_74], %131 {strides = array<i32>} : memref<2x128x64xf32, #tpu.memory_space<vmem>>, vector<2x128x64xf32>,
    %c1_i32_75 = arith.constant 1 : i32
    %133 = arith.cmpi eq, %arg1, %c1_i32_75 : i32
    %134 = arith.extui %133 : i1 to i32
    %c0_i32_76 = arith.constant 0 : i32
    %135 = arith.cmpi ne, %134, %c0_i32_76 : i32
    scf.if %135 {
      %c0_77 = arith.constant 0 : index
      %c0_78 = arith.constant 0 : index
      %c0_79 = arith.constant 0 : index
      %136 = vector.load %arg20[%c0_77, %c0_78, %c0_79] : memref<2x128x64xf32, #tpu.memory_space<vmem>>, vector<2x128x64xf32>
      %cst_80 = arith.constant dense<0.000000e+00> : vector<2x128xf32>
      %137 = vector.multi_reduction <add>, %136, %cst_80 [2] : vector<2x128x64xf32> to vector<2x128xf32>
      %138 = vector.shape_cast %137 : vector<2x128xf32> to vector<2x128x1xf32>
      %cst_81 = arith.constant 6.400000e+01 : f32
      %139 = vector.broadcast %cst_81 : f32 to vector<2x128x1xf32>
      %140 = arith.divf %138, %139 : vector<2x128x1xf32>
      %c0_82 = arith.constant 0 : index
      %c0_83 = arith.constant 0 : index
      %141 = vector.load %arg17[%c0_82, %c0_83] : memref<128x1xf32, #tpu.memory_space<vmem>>, vector<128x1xf32>
      %142 = vector.shape_cast %141 : vector<128x1xf32> to vector<1x128x1xf32>
      %143 = vector.broadcast %142 : vector<1x128x1xf32> to vector<2x128x1xf32>
      %144 = arith.mulf %140, %143 : vector<2x128x1xf32>
      %cst_84 = arith.constant dense<0.000000e+00> : vector<2x1xf32>
      %145 = vector.multi_reduction <add>, %144, %cst_84 [1] : vector<2x128x1xf32> to vector<2x1xf32>
      %146 = vector.shape_cast %145 : vector<2x1xf32> to vector<2x1x1xf32>
      %c0_85 = arith.constant 0 : index
      %c0_86 = arith.constant 0 : index
      %147 = vector.load %arg18[%c0_85, %c0_86] : memref<1x1xf32, #tpu.memory_space<vmem>>, vector<1x1xf32>
      %148 = vector.shape_cast %147 : vector<1x1xf32> to vector<1x1x1xf32>
      %149 = vector.broadcast %148 : vector<1x1x1xf32> to vector<2x1x1xf32>
      %150 = arith.addf %146, %149 : vector<2x1x1xf32>
      %c0_87 = arith.constant 0 : index
      %c0_88 = arith.constant 0 : index
      %c0_89 = arith.constant 0 : index
      %151 = vector.load %arg19[%c0_87, %c0_88, %c0_89] : memref<2x1x1xf32, #tpu.memory_space<vmem>>, vector<2x1x1xf32>
      tpu.vector_store %arg19[%c0_87, %c0_88, %c0_89], %150 {strides = array<i32>} : memref<2x1x1xf32, #tpu.memory_space<vmem>>, vector<2x1x1xf32>,
    } else {
    }
    return
  }
  func.func @transform_0(%arg0: i32, %arg1: i32) -> (i32, i32, i32) {
    %c0_i32 = arith.constant 0 : i32
    %c0_i32_0 = arith.constant 0 : i32
    %c0_i32_1 = arith.constant 0 : i32
    return %arg0, %c0_i32, %c0_i32_0 : i32, i32, i32
  }
  func.func @transform_1(%arg0: i32, %arg1: i32) -> (i32, i32) {
    %c0_i32 = arith.constant 0 : i32
    %c0_i32_0 = arith.constant 0 : i32
    %c0_i32_1 = arith.constant 0 : i32
    return %c0_i32, %c0_i32_0 : i32, i32
  }
  func.func @transform_2(%arg0: i32, %arg1: i32) -> (i32, i32) {
    %c0_i32 = arith.constant 0 : i32
    %c0_i32_0 = arith.constant 0 : i32
    %c0_i32_1 = arith.constant 0 : i32
    return %c0_i32, %c0_i32_0 : i32, i32
  }
  func.func @transform_3(%arg0: i32, %arg1: i32) -> (i32, i32, i32) {
    %c0_i32 = arith.constant 0 : i32
    %c0_i32_0 = arith.constant 0 : i32
    %c0_i32_1 = arith.constant 0 : i32
    %c0_i32_2 = arith.constant 0 : i32
    return %c0_i32, %c0_i32_0, %c0_i32_1 : i32, i32, i32
  }
  func.func @transform_4(%arg0: i32, %arg1: i32) -> (i32, i32, i32) {
    %c0_i32 = arith.constant 0 : i32
    %c0_i32_0 = arith.constant 0 : i32
    %c0_i32_1 = arith.constant 0 : i32
    %c0_i32_2 = arith.constant 0 : i32
    return %c0_i32, %c0_i32_0, %c0_i32_1 : i32, i32, i32
  }
  func.func @transform_5(%arg0: i32, %arg1: i32) -> (i32, i32, i32) {
    %c0_i32 = arith.constant 0 : i32
    %c0_i32_0 = arith.constant 0 : i32
    %c0_i32_1 = arith.constant 0 : i32
    %c0_i32_2 = arith.constant 0 : i32
    return %c0_i32, %c0_i32_0, %c0_i32_1 : i32, i32, i32
  }
  func.func @transform_6(%arg0: i32, %arg1: i32) -> (i32, i32, i32) {
    %c0_i32 = arith.constant 0 : i32
    %c0_i32_0 = arith.constant 0 : i32
    %c0_i32_1 = arith.constant 0 : i32
    %c0_i32_2 = arith.constant 0 : i32
    return %c0_i32, %c0_i32_0, %c0_i32_1 : i32, i32, i32
  }
  func.func @transform_7(%arg0: i32, %arg1: i32) -> (i32, i32, i32) {
    %c0_i32 = arith.constant 0 : i32
    %c0_i32_0 = arith.constant 0 : i32
    %c0_i32_1 = arith.constant 0 : i32
    %c0_i32_2 = arith.constant 0 : i32
    return %c0_i32, %c0_i32_0, %c0_i32_1 : i32, i32, i32
  }
  func.func @transform_8(%arg0: i32, %arg1: i32) -> (i32, i32, i32) {
    %c0_i32 = arith.constant 0 : i32
    %c0_i32_0 = arith.constant 0 : i32
    %c0_i32_1 = arith.constant 0 : i32
    %c0_i32_2 = arith.constant 0 : i32
    return %c0_i32, %c0_i32_0, %c0_i32_1 : i32, i32, i32
  }
  func.func @transform_9(%arg0: i32, %arg1: i32) -> (i32, i32, i32) {
    %c0_i32 = arith.constant 0 : i32
    %c0_i32_0 = arith.constant 0 : i32
    %c0_i32_1 = arith.constant 0 : i32
    %c0_i32_2 = arith.constant 0 : i32
    return %c0_i32, %c0_i32_0, %c0_i32_1 : i32, i32, i32
  }
  func.func @transform_10(%arg0: i32, %arg1: i32) -> (i32, i32, i32) {
    %c0_i32 = arith.constant 0 : i32
    %c0_i32_0 = arith.constant 0 : i32
    %c0_i32_1 = arith.constant 0 : i32
    %c0_i32_2 = arith.constant 0 : i32
    return %c0_i32, %c0_i32_0, %c0_i32_1 : i32, i32, i32
  }
  func.func @transform_11(%arg0: i32, %arg1: i32) -> (i32, i32, i32) {
    %c0_i32 = arith.constant 0 : i32
    %c0_i32_0 = arith.constant 0 : i32
    %c0_i32_1 = arith.constant 0 : i32
    %c0_i32_2 = arith.constant 0 : i32
    return %c0_i32, %c0_i32_0, %c0_i32_1 : i32, i32, i32
  }
  func.func @transform_12(%arg0: i32, %arg1: i32) -> (i32, i32, i32) {
    %c0_i32 = arith.constant 0 : i32
    %c0_i32_0 = arith.constant 0 : i32
    %c0_i32_1 = arith.constant 0 : i32
    %c0_i32_2 = arith.constant 0 : i32
    return %c0_i32, %c0_i32_0, %c0_i32_1 : i32, i32, i32
  }
  func.func @transform_13(%arg0: i32, %arg1: i32) -> (i32, i32, i32) {
    %c0_i32 = arith.constant 0 : i32
    %c0_i32_0 = arith.constant 0 : i32
    %c0_i32_1 = arith.constant 0 : i32
    %c0_i32_2 = arith.constant 0 : i32
    return %c0_i32, %c0_i32_0, %c0_i32_1 : i32, i32, i32
  }
  func.func @transform_14(%arg0: i32, %arg1: i32) -> (i32, i32, i32) {
    %c0_i32 = arith.constant 0 : i32
    %c0_i32_0 = arith.constant 0 : i32
    %c0_i32_1 = arith.constant 0 : i32
    %c0_i32_2 = arith.constant 0 : i32
    return %c0_i32, %c0_i32_0, %c0_i32_1 : i32, i32, i32
  }
  func.func @transform_15(%arg0: i32, %arg1: i32) -> (i32, i32) {
    %c0_i32 = arith.constant 0 : i32
    %c0_i32_0 = arith.constant 0 : i32
    %c0_i32_1 = arith.constant 0 : i32
    return %c0_i32, %c0_i32_0 : i32, i32
  }
  func.func @transform_16(%arg0: i32, %arg1: i32) -> (i32, i32) {
    %c0_i32 = arith.constant 0 : i32
    %c0_i32_0 = arith.constant 0 : i32
    %c0_i32_1 = arith.constant 0 : i32
    return %c0_i32, %c0_i32_0 : i32, i32
  }
  func.func @transform_17(%arg0: i32, %arg1: i32) -> (i32, i32, i32) {
    %c0_i32 = arith.constant 0 : i32
    %c0_i32_0 = arith.constant 0 : i32
    %c0_i32_1 = arith.constant 0 : i32
    return %arg0, %c0_i32, %c0_i32_0 : i32, i32, i32
  }
}

</mosaic_0001>

<llo_original>
// kernel: transformer_net_forward.1
$region0: #{transformer_net_forward.1}
  #allocation0 [shape = 'u32[]', space=smem, size = 0x4, offset = 0x4, fixed_abs, tag = 'smem constant byte address 0x4 - core index']
  #allocation1 [shape = 'u32[144,128]{1,0:T(1,128)}', space=vmem, size = 0x12000, scoped, tag = 'internal scratch']
  #allocation2 [shape = 'f32[2,128,64]{2,1,0:T(8,128)}', space=vmem, size = 0x20000, scoped, tag = 'scratch operand']
  #allocation3 [shape = 'f32[2,128,192]{2,1,0:T(8,128)}', space=vmem, size = 0x40000, scoped, tag = 'scratch operand']
  #allocation4 [shape = 'f32[2,128,64]{2,1,0:T(8,128)}', space=vmem, size = 0x20000, scoped, tag = 'scratch operand']
  #allocation5 [shape = 'f32[2,128,128]{2,1,0:T(8,128)}', space=vmem, size = 0x20000, scoped, tag = 'scratch operand']
  #allocation6 [shape = 'f32[1,1]{1,0:T(1,128)S(1)}', space=vmem, size = 0x200, scoped, tag = 'scoped memory for transformer_net_forward.1']
  %s0 = inlined_call_operand.vmem [shape: f32[2,128,1], index: 0, kind: input, shape index: {}]
  %s1 = inlined_call_operand.vmem [shape: f32[1,64], index: 1, kind: input, shape index: {}]
  %s2 = inlined_call_operand.vmem [shape: f32[1,64], index: 2, kind: input, shape index: {}]
  %s3 = inlined_call_operand.vmem [shape: f32[2,128,64], index: 3, kind: input, shape index: {}]
  %s4 = inlined_call_operand.vmem [shape: f32[2,128,64], index: 4, kind: input, shape index: {}]
  %s5 = inlined_call_operand.vmem [shape: f32[2,64,192], index: 5, kind: input, shape index: {}]
  %s6 = inlined_call_operand.vmem [shape: f32[2,1,192], index: 6, kind: input, shape index: {}]
  %s7 = inlined_call_operand.vmem [shape: f32[2,64,64], index: 7, kind: input, shape index: {}]
  %s8 = inlined_call_operand.vmem [shape: f32[2,1,64], index: 8, kind: input, shape index: {}]
  %s9 = inlined_call_operand.vmem [shape: f32[2,128,64], index: 9, kind: input, shape index: {}]
  %s10 = inlined_call_operand.vmem [shape: f32[2,128,64], index: 10, kind: input, shape index: {}]
  %s11 = inlined_call_operand.vmem [shape: f32[2,64,128], index: 11, kind: input, shape index: {}]
  %s12 = inlined_call_operand.vmem [shape: f32[2,1,128], index: 12, kind: input, shape index: {}]
  %s13 = inlined_call_operand.vmem [shape: f32[2,128,64], index: 13, kind: input, shape index: {}]
  %s14 = inlined_call_operand.vmem [shape: f32[2,1,64], index: 14, kind: input, shape index: {}]
  %s15 = inlined_call_operand.vmem [shape: f32[128,1], index: 15, kind: input, shape index: {}]
  %s16 = inlined_call_operand.<no memory space> [shape: f32[1,1], index: 16, kind: input, shape index: {}]
  %s17 = inlined_call_operand.vmem [shape: f32[2,1,1], index: 17, kind: output, shape index: {}]
  %s18 = sld [smem:[#allocation0]]
  $region116: #{transformer_net_forward.1} parent=0
    _
  %s20 = ssub.s32 1, %s18
  %s21 = scalar_select 0, %s20, %s18
  %v22 = vstv %s16
  %23 = vst [vmem:[#allocation6] sm:$0x1] %v22
  loop: start=0, step=1, limit=4
  $region2: #{transformer_net_forward.1} parent=0 // loop_pre_header
    _
  $region3: #{transformer_net_forward.1} parent=0 // loop_header
    %s25 = sphi 0, %s29
    %p26 = scmp.ge.s32.totalorder %s25, 4
    %s32 = sphi 0, %s44
    %s33 = sphi 0, %s40
    %s34 = sphi 0, %s32
    %s35 = sphi 0, %s33
    %s36 = sphi 0, %s34
    %s37 = sphi 0, %s35
    %s47 = sphi 0, %s49
    %s50 = sphi 0, %s47
    %s51 = sphi 0, %s50
    %s67 = sphi 0, %s51
    %s71 = sphi 0, %s71
    %s73 = sphi 0, %s71
    %s74 = sphi 0, %s73
    %s88 = sphi 0, %s74
    %s92 = sphi 0, %s92
    %s94 = sphi 0, %s92
    %s95 = sphi 0, %s94
    %s109 = sphi 0, %s95
    %s113 = sphi 0, %s113
    %s115 = sphi 0, %s113
    %s116 = sphi 0, %s115
    %s130 = sphi 0, %s116
    %s134 = sphi 0, %s134
    %s136 = sphi 0, %s134
    %s137 = sphi 0, %s136
    %s151 = sphi 0, %s137
    %s155 = sphi 0, %s155
    %s157 = sphi 0, %s155
    %s158 = sphi 0, %s157
    %s172 = sphi 0, %s158
    %s176 = sphi 0, %s176
    %s178 = sphi 0, %s176
    %s179 = sphi 0, %s178
    %s193 = sphi 0, %s179
    %s197 = sphi 0, %s197
    %s199 = sphi 0, %s197
    %s200 = sphi 0, %s199
    %s214 = sphi 0, %s200
    %s218 = sphi 0, %s218
    %s220 = sphi 0, %s218
    %s221 = sphi 0, %s220
    %s235 = sphi 0, %s221
    %s239 = sphi 0, %s239
    %s241 = sphi 0, %s239
    %s242 = sphi 0, %s241
    %s256 = sphi 0, %s242
    %s260 = sphi 0, %s260
    %s262 = sphi 0, %s260
    %s263 = sphi 0, %s262
    %s277 = sphi 0, %s263
    %s281 = sphi 0, %s281
    %s283 = sphi 0, %s281
    %s284 = sphi 0, %s283
    %s298 = sphi 0, %s284
    %s302 = sphi 0, %s302
    %s304 = sphi 0, %s302
    %s305 = sphi 0, %s304
    %s319 = sphi 0, %s305
    %s323 = sphi 0, %s323
    %s325 = sphi 0, %s323
    %s326 = sphi 0, %s325
    %s340 = sphi 0, %s326
    %s344 = sphi 0, %s344
    %s346 = sphi 0, %s344
    %s347 = sphi 0, %s346
    %s361 = sphi 0, %s347
    %s365 = sphi 0, %s365
    %s367 = sphi 0, %s365
    %s368 = sphi 0, %s367
    %s382 = sphi 0, %s368
    %s386 = sphi 0, %s386
    %s388 = sphi 0, %s386
    %s389 = sphi 0, %s388
    %s403 = sphi 0, %s389
    %s409 = sphi 0, %s411
    %s412 = sphi 0, %s409
    %s413 = sphi 0, %s412
    %s429 = sphi 0, %s413
  $region4: #{transformer_net_forward.1} parent=0 // loop_header_branch
    %28 = sbr.rel (%p26) target = $region8
  $region5: #{transformer_net_forward.1} parent=0 // loop_body
    %s30 = ssub.s32 %s25, 1
    %s31 = ssub.s32 %s25, 2
    %s38 = sadd.s32 1, %s33
    %p39 = scmp.ge.s32.totalorder %s38, 2
    %s40 = scalar_select %p39, 0, %s38
    %s41 = sadd.s32 1, %s32
    %s42 = scalar_select %p39, %s41, %s32
    %p43 = scmp.ge.s32.totalorder %s42, 1
    %s44 = scalar_select %p43, 0, %s42
    %s45 = ssub.s32 %s32, %s44
    %p46 = scmp.eq.s32.totalorder %s45, 0
    %s48 = sadd.s32 %s47, 1
    %s49 = scalar_select %p46, %s47, %s48
    %p52 = pneg %p46
    %p53 = scmp.eq.s32.totalorder %s25, 1
    %p54 = por %p52, %p53
    %p55 = scmp.ne.s32.totalorder %s47, %s50
    %p56 = scmp.eq.s32.totalorder %s25, 0
    %p57 = por %p55, %p56
    %p58 = scmp.ne.s32.totalorder %s47, %s50
    %p59 = scmp.eq.s32.totalorder %s30, 1
    %p60 = por %p58, %p59
    %p61 = scmp.ne.s32.totalorder %s50, %s51
    %p62 = scmp.eq.s32.totalorder %s30, 0
    %p63 = por %p61, %p62
    %p64 = scmp.ne.s32.totalorder %s50, %s51
    %p65 = scmp.eq.s32.totalorder %s31, 1
    %p66 = por %p64, %p65
    %p68 = scmp.ne.s32.totalorder %s51, %s67
    %p69 = scmp.eq.s32.totalorder %s31, 0
    %p70 = por %p68, %p69
    %s72 = sadd.s32 %s71, 1
    %p75 = scmp.eq.s32.totalorder %s25, 1
    %p76 = scmp.ne.s32.totalorder %s71, %s73
    %p77 = scmp.eq.s32.totalorder %s25, 0
    %p78 = por %p76, %p77
    %p79 = scmp.ne.s32.totalorder %s71, %s73
    %p80 = scmp.eq.s32.totalorder %s30, 1
    %p81 = por %p79, %p80
    %p82 = scmp.ne.s32.totalorder %s73, %s74
    %p83 = scmp.eq.s32.totalorder %s30, 0
    %p84 = por %p82, %p83
    %p85 = scmp.ne.s32.totalorder %s73, %s74
    %p86 = scmp.eq.s32.totalorder %s31, 1
    %p87 = por %p85, %p86
    %p89 = scmp.ne.s32.totalorder %s74, %s88
    %p90 = scmp.eq.s32.totalorder %s31, 0
    %p91 = por %p89, %p90
    %s93 = sadd.s32 %s92, 1
    %p96 = scmp.eq.s32.totalorder %s25, 1
    %p97 = scmp.ne.s32.totalorder %s92, %s94
    %p98 = scmp.eq.s32.totalorder %s25, 0
    %p99 = por %p97, %p98
    %p100 = scmp.ne.s32.totalorder %s92, %s94
    %p101 = scmp.eq.s32.totalorder %s30, 1
    %p102 = por %p100, %p101
    %p103 = scmp.ne.s32.totalorder %s94, %s95
    %p104 = scmp.eq.s32.totalorder %s30, 0
    %p105 = por %p103, %p104
    %p106 = scmp.ne.s32.totalorder %s94, %s95
    %p107 = scmp.eq.s32.totalorder %s31, 1
    %p108 = por %p106, %p107
    %p110 = scmp.ne.s32.totalorder %s95, %s109
    %p111 = scmp.eq.s32.totalorder %s31, 0
    %p112 = por %p110, %p111
    %s114 = sadd.s32 %s113, 1
    %p117 = scmp.eq.s32.totalorder %s25, 1
    %p118 = scmp.ne.s32.totalorder %s113, %s115
    %p119 = scmp.eq.s32.totalorder %s25, 0
    %p120 = por %p118, %p119
    %p121 = scmp.ne.s32.totalorder %s113, %s115
    %p122 = scmp.eq.s32.totalorder %s30, 1
    %p123 = por %p121, %p122
    %p124 = scmp.ne.s32.totalorder %s115, %s116
    %p125 = scmp.eq.s32.totalorder %s30, 0
    %p126 = por %p124, %p125
    %p127 = scmp.ne.s32.totalorder %s115, %s116
    %p128 = scmp.eq.s32.totalorder %s31, 1
    %p129 = por %p127, %p128
    %p131 = scmp.ne.s32.totalorder %s116, %s130
    %p132 = scmp.eq.s32.totalorder %s31, 0
    %p133 = por %p131, %p132
    %s135 = sadd.s32 %s134, 1
    %p138 = scmp.eq.s32.totalorder %s25, 1
    %p139 = scmp.ne.s32.totalorder %s134, %s136
    %p140 = scmp.eq.s32.totalorder %s25, 0
    %p141 = por %p139, %p140
    %p142 = scmp.ne.s32.totalorder %s134, %s136
    %p143 = scmp.eq.s32.totalorder %s30, 1
    %p144 = por %p142, %p143
    %p145 = scmp.ne.s32.totalorder %s136, %s137
    %p146 = scmp.eq.s32.totalorder %s30, 0
    %p147 = por %p145, %p146
    %p148 = scmp.ne.s32.totalorder %s136, %s137
    %p149 = scmp.eq.s32.totalorder %s31, 1
    %p150 = por %p148, %p149
    %p152 = scmp.ne.s32.totalorder %s137, %s151
    %p153 = scmp.eq.s32.totalorder %s31, 0
    %p154 = por %p152, %p153
    %s156 = sadd.s32 %s155, 1
    %p159 = scmp.eq.s32.totalorder %s25, 1
    %p160 = scmp.ne.s32.totalorder %s155, %s157
    %p161 = scmp.eq.s32.totalorder %s25, 0
    %p162 = por %p160, %p161
    %p163 = scmp.ne.s32.totalorder %s155, %s157
    %p164 = scmp.eq.s32.totalorder %s30, 1
    %p165 = por %p163, %p164
    %p166 = scmp.ne.s32.totalorder %s157, %s158
    %p167 = scmp.eq.s32.totalorder %s30, 0
    %p168 = por %p166, %p167
    %p169 = scmp.ne.s32.totalorder %s157, %s158
    %p170 = scmp.eq.s32.totalorder %s31, 1
    %p171 = por %p169, %p170
    %p173 = scmp.ne.s32.totalorder %s158, %s172
    %p174 = scmp.eq.s32.totalorder %s31, 0
    %p175 = por %p173, %p174
    %s177 = sadd.s32 %s176, 1
    %p180 = scmp.eq.s32.totalorder %s25, 1
    %p181 = scmp.ne.s32.totalorder %s176, %s178
    %p182 = scmp.eq.s32.totalorder %s25, 0
    %p183 = por %p181, %p182
    %p184 = scmp.ne.s32.totalorder %s176, %s178
    %p185 = scmp.eq.s32.totalorder %s30, 1
    %p186 = por %p184, %p185
    %p187 = scmp.ne.s32.totalorder %s178, %s179
    %p188 = scmp.eq.s32.totalorder %s30, 0
    %p189 = por %p187, %p188
    %p190 = scmp.ne.s32.totalorder %s178, %s179
    %p191 = scmp.eq.s32.totalorder %s31, 1
    %p192 = por %p190, %p191
    %p194 = scmp.ne.s32.totalorder %s179, %s193
    %p195 = scmp.eq.s32.totalorder %s31, 0
    %p196 = por %p194, %p195
    %s198 = sadd.s32 %s197, 1
    %p201 = scmp.eq.s32.totalorder %s25, 1
    %p202 = scmp.ne.s32.totalorder %s197, %s199
    %p203 = scmp.eq.s32.totalorder %s25, 0
    %p204 = por %p202, %p203
    %p205 = scmp.ne.s32.totalorder %s197, %s199
    %p206 = scmp.eq.s32.totalorder %s30, 1
    %p207 = por %p205, %p206
    %p208 = scmp.ne.s32.totalorder %s199, %s200
    %p209 = scmp.eq.s32.totalorder %s30, 0
    %p210 = por %p208, %p209
    %p211 = scmp.ne.s32.totalorder %s199, %s200
    %p212 = scmp.eq.s32.totalorder %s31, 1
    %p213 = por %p211, %p212
    %p215 = scmp.ne.s32.totalorder %s200, %s214
    %p216 = scmp.eq.s32.totalorder %s31, 0
    %p217 = por %p215, %p216
    %s219 = sadd.s32 %s218, 1
    %p222 = scmp.eq.s32.totalorder %s25, 1
    %p223 = scmp.ne.s32.totalorder %s218, %s220
    %p224 = scmp.eq.s32.totalorder %s25, 0
    %p225 = por %p223, %p224
    %p226 = scmp.ne.s32.totalorder %s218, %s220
    %p227 = scmp.eq.s32.totalorder %s30, 1
    %p228 = por %p226, %p227
    %p229 = scmp.ne.s32.totalorder %s220, %s221
    %p230 = scmp.eq.s32.totalorder %s30, 0
    %p231 = por %p229, %p230
    %p232 = scmp.ne.s32.totalorder %s220, %s221
    %p233 = scmp.eq.s32.totalorder %s31, 1
    %p234 = por %p232, %p233
    %p236 = scmp.ne.s32.totalorder %s221, %s235
    %p237 = scmp.eq.s32.totalorder %s31, 0
    %p238 = por %p236, %p237
    %s240 = sadd.s32 %s239, 1
    %p243 = scmp.eq.s32.totalorder %s25, 1
    %p244 = scmp.ne.s32.totalorder %s239, %s241
    %p245 = scmp.eq.s32.totalorder %s25, 0
    %p246 = por %p244, %p245
    %p247 = scmp.ne.s32.totalorder %s239, %s241
    %p248 = scmp.eq.s32.totalorder %s30, 1
    %p249 = por %p247, %p248
    %p250 = scmp.ne.s32.totalorder %s241, %s242
    %p251 = scmp.eq.s32.totalorder %s30, 0
    %p252 = por %p250, %p251
    %p253 = scmp.ne.s32.totalorder %s241, %s242
    %p254 = scmp.eq.s32.totalorder %s31, 1
    %p255 = por %p253, %p254
    %p257 = scmp.ne.s32.totalorder %s242, %s256
    %p258 = scmp.eq.s32.totalorder %s31, 0
    %p259 = por %p257, %p258
    %s261 = sadd.s32 %s260, 1
    %p264 = scmp.eq.s32.totalorder %s25, 1
    %p265 = scmp.ne.s32.totalorder %s260, %s262
    %p266 = scmp.eq.s32.totalorder %s25, 0
    %p267 = por %p265, %p266
    %p268 = scmp.ne.s32.totalorder %s260, %s262
    %p269 = scmp.eq.s32.totalorder %s30, 1
    %p270 = por %p268, %p269
    %p271 = scmp.ne.s32.totalorder %s262, %s263
    %p272 = scmp.eq.s32.totalorder %s30, 0
    %p273 = por %p271, %p272
    %p274 = scmp.ne.s32.totalorder %s262, %s263
    %p275 = scmp.eq.s32.totalorder %s31, 1
    %p276 = por %p274, %p275
    %p278 = scmp.ne.s32.totalorder %s263, %s277
    %p279 = scmp.eq.s32.totalorder %s31, 0
    %p280 = por %p278, %p279
    %s282 = sadd.s32 %s281, 1
    %p285 = scmp.eq.s32.totalorder %s25, 1
    %p286 = scmp.ne.s32.totalorder %s281, %s283
    %p287 = scmp.eq.s32.totalorder %s25, 0
    %p288 = por %p286, %p287
    %p289 = scmp.ne.s32.totalorder %s281, %s283
    %p290 = scmp.eq.s32.totalorder %s30, 1
    %p291 = por %p289, %p290
    %p292 = scmp.ne.s32.totalorder %s283, %s284
    %p293 = scmp.eq.s32.totalorder %s30, 0
    %p294 = por %p292, %p293
    %p295 = scmp.ne.s32.totalorder %s283, %s284
    %p296 = scmp.eq.s32.totalorder %s31, 1
    %p297 = por %p295, %p296
    %p299 = scmp.ne.s32.totalorder %s284, %s298
    %p300 = scmp.eq.s32.totalorder %s31, 0
    %p301 = por %p299, %p300
    %s303 = sadd.s32 %s302, 1
    %p306 = scmp.eq.s32.totalorder %s25, 1
    %p307 = scmp.ne.s32.totalorder %s302, %s304
    %p308 = scmp.eq.s32.totalorder %s25, 0
    %p309 = por %p307, %p308
    %p310 = scmp.ne.s32.totalorder %s302, %s304
    %p311 = scmp.eq.s32.totalorder %s30, 1
    %p312 = por %p310, %p311
    %p313 = scmp.ne.s32.totalorder %s304, %s305
    %p314 = scmp.eq.s32.totalorder %s30, 0
    %p315 = por %p313, %p314
    %p316 = scmp.ne.s32.totalorder %s304, %s305
    %p317 = scmp.eq.s32.totalorder %s31, 1
    %p318 = por %p316, %p317
    %p320 = scmp.ne.s32.totalorder %s305, %s319
    %p321 = scmp.eq.s32.totalorder %s31, 0
    %p322 = por %p320, %p321
    %s324 = sadd.s32 %s323, 1
    %p327 = scmp.eq.s32.totalorder %s25, 1
    %p328 = scmp.ne.s32.totalorder %s323, %s325
    %p329 = scmp.eq.s32.totalorder %s25, 0
    %p330 = por %p328, %p329
    %p331 = scmp.ne.s32.totalorder %s323, %s325
    %p332 = scmp.eq.s32.totalorder %s30, 1
    %p333 = por %p331, %p332
    %p334 = scmp.ne.s32.totalorder %s325, %s326
    %p335 = scmp.eq.s32.totalorder %s30, 0
    %p336 = por %p334, %p335
    %p337 = scmp.ne.s32.totalorder %s325, %s326
    %p338 = scmp.eq.s32.totalorder %s31, 1
    %p339 = por %p337, %p338
    %p341 = scmp.ne.s32.totalorder %s326, %s340
    %p342 = scmp.eq.s32.totalorder %s31, 0
    %p343 = por %p341, %p342
    %s345 = sadd.s32 %s344, 1
    %p348 = scmp.eq.s32.totalorder %s25, 1
    %p349 = scmp.ne.s32.totalorder %s344, %s346
    %p350 = scmp.eq.s32.totalorder %s25, 0
    %p351 = por %p349, %p350
    %p352 = scmp.ne.s32.totalorder %s344, %s346
    %p353 = scmp.eq.s32.totalorder %s30, 1
    %p354 = por %p352, %p353
    %p355 = scmp.ne.s32.totalorder %s346, %s347
    %p356 = scmp.eq.s32.totalorder %s30, 0
    %p357 = por %p355, %p356
    %p358 = scmp.ne.s32.totalorder %s346, %s347
    %p359 = scmp.eq.s32.totalorder %s31, 1
    %p360 = por %p358, %p359
    %p362 = scmp.ne.s32.totalorder %s347, %s361
    %p363 = scmp.eq.s32.totalorder %s31, 0
    %p364 = por %p362, %p363
    %s366 = sadd.s32 %s365, 1
    %p369 = scmp.eq.s32.totalorder %s25, 1
    %p370 = scmp.ne.s32.totalorder %s365, %s367
    %p371 = scmp.eq.s32.totalorder %s25, 0
    %p372 = por %p370, %p371
    %p373 = scmp.ne.s32.totalorder %s365, %s367
    %p374 = scmp.eq.s32.totalorder %s30, 1
    %p375 = por %p373, %p374
    %p376 = scmp.ne.s32.totalorder %s367, %s368
    %p377 = scmp.eq.s32.totalorder %s30, 0
    %p378 = por %p376, %p377
    %p379 = scmp.ne.s32.totalorder %s367, %s368
    %p380 = scmp.eq.s32.totalorder %s31, 1
    %p381 = por %p379, %p380
    %p383 = scmp.ne.s32.totalorder %s368, %s382
    %p384 = scmp.eq.s32.totalorder %s31, 0
    %p385 = por %p383, %p384
    %s387 = sadd.s32 %s386, 1
    %p390 = scmp.eq.s32.totalorder %s25, 1
    %p391 = scmp.ne.s32.totalorder %s386, %s388
    %p392 = scmp.eq.s32.totalorder %s25, 0
    %p393 = por %p391, %p392
    %p394 = scmp.ne.s32.totalorder %s386, %s388
    %p395 = scmp.eq.s32.totalorder %s30, 1
    %p396 = por %p394, %p395
    %p397 = scmp.ne.s32.totalorder %s388, %s389
    %p398 = scmp.eq.s32.totalorder %s30, 0
    %p399 = por %p397, %p398
    %p400 = scmp.ne.s32.totalorder %s388, %s389
    %p401 = scmp.eq.s32.totalorder %s31, 1
    %p402 = por %p400, %p401
    %p404 = scmp.ne.s32.totalorder %s389, %s403
    %p405 = scmp.eq.s32.totalorder %s31, 0
    %p406 = por %p404, %p405
    %s407 = ssub.s32 %s32, %s44
    %p408 = scmp.eq.s32.totalorder %s407, 0
    %s410 = sadd.s32 %s409, 1
    %s411 = scalar_select %p408, %s409, %s410
    %p414 = pneg %p408
    %p415 = scmp.eq.s32.totalorder %s25, 1
    %p416 = por %p414, %p415
    %p417 = scmp.ne.s32.totalorder %s409, %s412
    %p418 = scmp.eq.s32.totalorder %s25, 0
    %p419 = por %p417, %p418
    %p420 = scmp.ne.s32.totalorder %s409, %s412
    %p421 = scmp.eq.s32.totalorder %s30, 1
    %p422 = por %p420, %p421
    %p423 = scmp.ne.s32.totalorder %s412, %s413
    %p424 = scmp.eq.s32.totalorder %s30, 0
    %p425 = por %p423, %p424
    %p426 = scmp.ne.s32.totalorder %s412, %s413
    %p427 = scmp.eq.s32.totalorder %s31, 1
    %p428 = por %p426, %p427
    %p430 = scmp.ne.s32.totalorder %s413, %s429
    %p431 = scmp.eq.s32.totalorder %s31, 0
    %p432 = por %p430, %p431
    %p433 = scmp.le.s32.totalorder 1, %s25
    %p434 = scmp.lt.s32.totalorder %s25, 3
    %p435 = pnand %p433, %p434
    %p436 = pneg %p435
    // Predicated region
    $region9: #{transformer_net_forward.1} parent=5 // pred_check
      _
    $region10: #{transformer_net_forward.1} parent=5 // pred_check_branch
      %438 = sbr.rel (%p435) target = $region12
    $region11: #{transformer_net_forward.1} parent=5 // pred_region
      %s439 = ssub.s32 %s25, 1
      // Predicated region
      $region13: #{transformer_net_forward.1} parent=11 // pred_check
        %p440 = pneg %p63
      $region14: #{transformer_net_forward.1} parent=11 // pred_check_branch
        %442 = sbr.rel (%p440) target = $region16
      $region15: #{transformer_net_forward.1} parent=11 // pred_region
        %s443 = smul.u32 2, %s34
        %p444 = scmp.lt.s32.totalorder %s443, 1
        %s445 = scalar_select %p444, %s443, 1
        %s446 = smul.addr %s445, 16
        %s447 = smul.addr %s446, 8
        %s448 = scalar_lea.vmem %s0, %s447
        %s449 = smul.u32 2, %s34
      $region16: #{transformer_net_forward.1} parent=11 // pred_fallthru
        _
      // Predicated region
      $region17: #{transformer_net_forward.1} parent=11 // pred_check
        %p450 = pneg %p84
      $region18: #{transformer_net_forward.1} parent=11 // pred_check_branch
        %452 = sbr.rel (%p450) target = $region20
      $region19: #{transformer_net_forward.1} parent=11 // pred_region
        _
      $region20: #{transformer_net_forward.1} parent=11 // pred_fallthru
        _
      // Predicated region
      $region21: #{transformer_net_forward.1} parent=11 // pred_check
        %p453 = pneg %p105
      $region22: #{transformer_net_forward.1} parent=11 // pred_check_branch
        %455 = sbr.rel (%p453) target = $region24
      $region23: #{transformer_net_forward.1} parent=11 // pred_region
        _
      $region24: #{transformer_net_forward.1} parent=11 // pred_fallthru
        _
      // Predicated region
      $region25: #{transformer_net_forward.1} parent=11 // pred_check
        %p456 = pneg %p126
      $region26: #{transformer_net_forward.1} parent=11 // pred_check_branch
        %458 = sbr.rel (%p456) target = $region28
      $region27: #{transformer_net_forward.1} parent=11 // pred_region
        _
      $region28: #{transformer_net_forward.1} parent=11 // pred_fallthru
        _
      // Predicated region
      $region29: #{transformer_net_forward.1} parent=11 // pred_check
        %p459 = pneg %p147
      $region30: #{transformer_net_forward.1} parent=11 // pred_check_branch
        %461 = sbr.rel (%p459) target = $region32
      $region31: #{transformer_net_forward.1} parent=11 // pred_region
        _
      $region32: #{transformer_net_forward.1} parent=11 // pred_fallthru
        _
      // Predicated region
      $region33: #{transformer_net_forward.1} parent=11 // pred_check
        %p462 = pneg %p168
      $region34: #{transformer_net_forward.1} parent=11 // pred_check_branch
        %464 = sbr.rel (%p462) target = $region36
      $region35: #{transformer_net_forward.1} parent=11 // pred_region
        _
      $region36: #{transformer_net_forward.1} parent=11 // pred_fallthru
        _
      // Predicated region
      $region37: #{transformer_net_forward.1} parent=11 // pred_check
        %p465 = pneg %p189
      $region38: #{transformer_net_forward.1} parent=11 // pred_check_branch
        %467 = sbr.rel (%p465) target = $region40
      $region39: #{transformer_net_forward.1} parent=11 // pred_region
        _
      $region40: #{transformer_net_forward.1} parent=11 // pred_fallthru
        _
      // Predicated region
      $region41: #{transformer_net_forward.1} parent=11 // pred_check
        %p468 = pneg %p210
      $region42: #{transformer_net_forward.1} parent=11 // pred_check_branch
        %470 = sbr.rel (%p468) target = $region44
      $region43: #{transformer_net_forward.1} parent=11 // pred_region
        _
      $region44: #{transformer_net_forward.1} parent=11 // pred_fallthru
        _
      // Predicated region
      $region45: #{transformer_net_forward.1} parent=11 // pred_check
        %p471 = pneg %p231
      $region46: #{transformer_net_forward.1} parent=11 // pred_check_branch
        %473 = sbr.rel (%p471) target = $region48
      $region47: #{transformer_net_forward.1} parent=11 // pred_region
        _
      $region48: #{transformer_net_forward.1} parent=11 // pred_fallthru
        _
      // Predicated region
      $region49: #{transformer_net_forward.1} parent=11 // pred_check
        %p474 = pneg %p252
      $region50: #{transformer_net_forward.1} parent=11 // pred_check_branch
        %476 = sbr.rel (%p474) target = $region52
      $region51: #{transformer_net_forward.1} parent=11 // pred_region
        _
      $region52: #{transformer_net_forward.1} parent=11 // pred_fallthru
        _
      // Predicated region
      $region53: #{transformer_net_forward.1} parent=11 // pred_check
        %p477 = pneg %p273
      $region54: #{transformer_net_forward.1} parent=11 // pred_check_branch
        %479 = sbr.rel (%p477) target = $region56
      $region55: #{transformer_net_forward.1} parent=11 // pred_region
        _
      $region56: #{transformer_net_forward.1} parent=11 // pred_fallthru
        _
      // Predicated region
      $region57: #{transformer_net_forward.1} parent=11 // pred_check
        %p480 = pneg %p294
      $region58: #{transformer_net_forward.1} parent=11 // pred_check_branch
        %482 = sbr.rel (%p480) target = $region60
      $region59: #{transformer_net_forward.1} parent=11 // pred_region
        _
      $region60: #{transformer_net_forward.1} parent=11 // pred_fallthru
        _
      // Predicated region
      $region61: #{transformer_net_forward.1} parent=11 // pred_check
        %p483 = pneg %p315
      $region62: #{transformer_net_forward.1} parent=11 // pred_check_branch
        %485 = sbr.rel (%p483) target = $region64
      $region63: #{transformer_net_forward.1} parent=11 // pred_region
        _
      $region64: #{transformer_net_forward.1} parent=11 // pred_fallthru
        _
      // Predicated region
      $region65: #{transformer_net_forward.1} parent=11 // pred_check
        %p486 = pneg %p336
      $region66: #{transformer_net_forward.1} parent=11 // pred_check_branch
        %488 = sbr.rel (%p486) target = $region68
      $region67: #{transformer_net_forward.1} parent=11 // pred_region
        _
      $region68: #{transformer_net_forward.1} parent=11 // pred_fallthru
        _
      // Predicated region
      $region69: #{transformer_net_forward.1} parent=11 // pred_check
        %p489 = pneg %p357
      $region70: #{transformer_net_forward.1} parent=11 // pred_check_branch
        %491 = sbr.rel (%p489) target = $region72
      $region71: #{transformer_net_forward.1} parent=11 // pred_region
        _
      $region72: #{transformer_net_forward.1} parent=11 // pred_fallthru
        _
      // Predicated region
      $region73: #{transformer_net_forward.1} parent=11 // pred_check
        %p492 = pneg %p378
      $region74: #{transformer_net_forward.1} parent=11 // pred_check_branch
        %494 = sbr.rel (%p492) target = $region76
      $region75: #{transformer_net_forward.1} parent=11 // pred_region
        _
      $region76: #{transformer_net_forward.1} parent=11 // pred_fallthru
        _
      // Predicated region
      $region77: #{transformer_net_forward.1} parent=11 // pred_check
        %p495 = pneg %p399
      $region78: #{transformer_net_forward.1} parent=11 // pred_check_branch
        %497 = sbr.rel (%p495) target = $region80
      $region79: #{transformer_net_forward.1} parent=11 // pred_region
        _
      $region80: #{transformer_net_forward.1} parent=11 // pred_fallthru
        _
    $region12: #{transformer_net_forward.1} parent=5 // pred_fallthru
      _
    %p498 = scmp.lt.s32.totalorder %s25, 2
    // Predicated region
    $region81: #{transformer_net_forward.1} parent=5 // pred_check
      %p499 = pneg %p498
    $region82: #{transformer_net_forward.1} parent=5 // pred_check_branch
      %501 = sbr.rel (%p499) target = $region84
    $region83: #{transformer_net_forward.1} parent=5 // pred_region
      _
    $region84: #{transformer_net_forward.1} parent=5 // pred_fallthru
      _
    %p502 = scmp.le.s32.totalorder 1, %s25
    %p503 = scmp.lt.s32.totalorder %s25, 3
    %p504 = pnand %p502, %p503
    %p505 = pneg %p504
    // Predicated region
    $region85: #{transformer_net_forward.1} parent=5 // pred_check
      _
    $region86: #{transformer_net_forward.1} parent=5 // pred_check_branch
      %507 = sbr.rel (%p504) target = $region88
    $region87: #{transformer_net_forward.1} parent=5 // pred_region
      %s508 = ssub.s32 %s25, 1
      %s509 = smul.u32 2, %s34
      %p510 = scmp.lt.s32.totalorder %s509, 1
      %s511 = scalar_select %p510, %s509, 1
      %s512 = smul.addr %s511, 16
      %s513 = smul.addr %s512, 8
      %s514 = scalar_lea.vmem %s0, %s513
      %p515 = pneg %p63
      %p516 = pneg %p60
      %p517 = pneg %p84
      %p518 = pneg %p81
      %p519 = pneg %p105
      %p520 = pneg %p102
      %p521 = pneg %p126
      %p522 = pneg %p123
      %p523 = pneg %p147
      %p524 = pneg %p144
      %p525 = pneg %p168
      %p526 = pneg %p165
      %p527 = pneg %p189
      %p528 = pneg %p186
      %p529 = pneg %p210
      %p530 = pneg %p207
      %p531 = pneg %p231
      %p532 = pneg %p228
      %p533 = pneg %p252
      %p534 = pneg %p249
      %p535 = pneg %p273
      %p536 = pneg %p270
      %p537 = pneg %p294
      %p538 = pneg %p291
      %p539 = pneg %p315
      %p540 = pneg %p312
      %p541 = pneg %p336
      %p542 = pneg %p333
      %p543 = pneg %p357
      %p544 = pneg %p354
      %p545 = pneg %p378
      %p546 = pneg %p375
      %p547 = pneg %p399
      %p548 = pneg %p396
      %p549 = pneg %p425
      %p550 = pneg %p422
      %s551 = smul.u32 2, %s34
      %p552 = scmp.lt.s32.totalorder %s551, 1
      %s553 = scalar_select %p552, %s551, 1
      %s554 = scalar_lea.vmem %s17, %s553
      %s555 = smul.u32 2, %s34
      %p556 = scmp.lt.s32.totalorder %s555, 1
      %s557 = scalar_select %p556, %s555, 1
      %s558 = smul.addr %s557, 16
      %s559 = smul.addr %s558, 8
      %s560 = scalar_lea.vmem %s0, %s559
      %s561 = smul.u32 2, %s34
      %s562 = smul.u32 2, %s34
      %p563 = scmp.lt.s32.totalorder %s562, 1
      %s564 = scalar_select %p563, %s562, 1
      %s565 = scalar_lea.vmem %s17, %s564
      %s566 = smul.u32 2, %s34
      %p567 = scmp.eq.s32.totalorder %s35, 0
      // Predicated region
      $region89: #{transformer_net_forward.1} parent=87 // pred_check
        %p568 = pneg %p567
      $region90: #{transformer_net_forward.1} parent=87 // pred_check_branch
        %570 = sbr.rel (%p568) target = $region92
      $region91: #{transformer_net_forward.1} parent=87 // pred_region
        %v571 = vld [vmem:[%s560] sm:$0xff]
        %v572 = vld [vmem:[%s560 + $0x8] sm:$0xff]
        %v573 = vld [vmem:[%s560 + $0x10] sm:$0xff]
        %v574 = vld [vmem:[%s560 + $0x18] sm:$0xff]
        %v575 = vld [vmem:[%s560 + $0x20] sm:$0xff]
        %v576 = vld [vmem:[%s560 + $0x28] sm:$0xff]
        %v577 = vld [vmem:[%s560 + $0x30] sm:$0xff]
        %v578 = vld [vmem:[%s560 + $0x38] sm:$0xff]
        %v579 = vld [vmem:[%s560 + $0x40] sm:$0xff]
        %v580 = vld [vmem:[%s560 + $0x48] sm:$0xff]
        %v581 = vld [vmem:[%s560 + $0x50] sm:$0xff]
        %v582 = vld [vmem:[%s560 + $0x58] sm:$0xff]
        %v583 = vld [vmem:[%s560 + $0x60] sm:$0xff]
        %v584 = vld [vmem:[%s560 + $0x68] sm:$0xff]
        %v585 = vld [vmem:[%s560 + $0x70] sm:$0xff]
        %v586 = vld [vmem:[%s560 + $0x78] sm:$0xff]
        %v587 = vld [vmem:[%s560 + $0x80] sm:$0xff]
        %v588 = vld [vmem:[%s560 + $0x88] sm:$0xff]
        %v589 = vld [vmem:[%s560 + $0x90] sm:$0xff]
        %v590 = vld [vmem:[%s560 + $0x98] sm:$0xff]
        %v591 = vld [vmem:[%s560 + $0xa0] sm:$0xff]
        %v592 = vld [vmem:[%s560 + $0xa8] sm:$0xff]
        %v593 = vld [vmem:[%s560 + $0xb0] sm:$0xff]
        %v594 = vld [vmem:[%s560 + $0xb8] sm:$0xff]
        %v595 = vld [vmem:[%s560 + $0xc0] sm:$0xff]
        %v596 = vld [vmem:[%s560 + $0xc8] sm:$0xff]
        %v597 = vld [vmem:[%s560 + $0xd0] sm:$0xff]
        %v598 = vld [vmem:[%s560 + $0xd8] sm:$0xff]
        %v599 = vld [vmem:[%s560 + $0xe0] sm:$0xff]
        %v600 = vld [vmem:[%s560 + $0xe8] sm:$0xff]
        %v601 = vld [vmem:[%s560 + $0xf0] sm:$0xff]
        %v602 = vld [vmem:[%s560 + $0xf8] sm:$0xff]
        %v603 = vld [vmem:[%s1] sm:$0x1]
        %605 = vset.pattern.permute.xlu0 0
        %606 = vperm.xlu0 %605, %v571
        %v607 = vpop.permute.xlu0 %606
        %610 = vset.pattern.permute.xlu0 0
        %611 = vperm.xlu0 %610, %v572
        %v612 = vpop.permute.xlu0 %611
        %615 = vset.pattern.permute.xlu0 0
        %616 = vperm.xlu0 %615, %v573
        %v617 = vpop.permute.xlu0 %616
        %620 = vset.pattern.permute.xlu0 0
        %621 = vperm.xlu0 %620, %v574
        %v622 = vpop.permute.xlu0 %621
        %625 = vset.pattern.permute.xlu0 0
        %626 = vperm.xlu0 %625, %v575
        %v627 = vpop.permute.xlu0 %626
        %630 = vset.pattern.permute.xlu0 0
        %631 = vperm.xlu0 %630, %v576
        %v632 = vpop.permute.xlu0 %631
        %635 = vset.pattern.permute.xlu0 0
        %636 = vperm.xlu0 %635, %v577
        %v637 = vpop.permute.xlu0 %636
        %640 = vset.pattern.permute.xlu0 0
        %641 = vperm.xlu0 %640, %v578
        %v642 = vpop.permute.xlu0 %641
        %645 = vset.pattern.permute.xlu0 0
        %646 = vperm.xlu0 %645, %v579
        %v647 = vpop.permute.xlu0 %646
        %650 = vset.pattern.permute.xlu0 0
        %651 = vperm.xlu0 %650, %v580
        %v652 = vpop.permute.xlu0 %651
        %655 = vset.pattern.permute.xlu0 0
        %656 = vperm.xlu0 %655, %v581
        %v657 = vpop.permute.xlu0 %656
        %660 = vset.pattern.permute.xlu0 0
        %661 = vperm.xlu0 %660, %v582
        %v662 = vpop.permute.xlu0 %661
        %665 = vset.pattern.permute.xlu0 0
        %666 = vperm.xlu0 %665, %v583
        %v667 = vpop.permute.xlu0 %666
        %670 = vset.pattern.permute.xlu0 0
        %671 = vperm.xlu0 %670, %v584
        %v672 = vpop.permute.xlu0 %671
        %675 = vset.pattern.permute.xlu0 0
        %676 = vperm.xlu0 %675, %v585
        %v677 = vpop.permute.xlu0 %676
        %680 = vset.pattern.permute.xlu0 0
        %681 = vperm.xlu0 %680, %v586
        %v682 = vpop.permute.xlu0 %681
        %685 = vset.pattern.permute.xlu0 0
        %686 = vperm.xlu0 %685, %v587
        %v687 = vpop.permute.xlu0 %686
        %690 = vset.pattern.permute.xlu0 0
        %691 = vperm.xlu0 %690, %v588
        %v692 = vpop.permute.xlu0 %691
        %695 = vset.pattern.permute.xlu0 0
        %696 = vperm.xlu0 %695, %v589
        %v697 = vpop.permute.xlu0 %696
        %700 = vset.pattern.permute.xlu0 0
        %701 = vperm.xlu0 %700, %v590
        %v702 = vpop.permute.xlu0 %701
        %705 = vset.pattern.permute.xlu0 0
        %706 = vperm.xlu0 %705, %v591
        %v707 = vpop.permute.xlu0 %706
        %710 = vset.pattern.permute.xlu0 0
        %711 = vperm.xlu0 %710, %v592
        %v712 = vpop.permute.xlu0 %711
        %715 = vset.pattern.permute.xlu0 0
        %716 = vperm.xlu0 %715, %v593
        %v717 = vpop.permute.xlu0 %716
        %720 = vset.pattern.permute.xlu0 0
        %721 = vperm.xlu0 %720, %v594
        %v722 = vpop.permute.xlu0 %721
        %725 = vset.pattern.permute.xlu0 0
        %726 = vperm.xlu0 %725, %v595
        %v727 = vpop.permute.xlu0 %726
        %730 = vset.pattern.permute.xlu0 0
        %731 = vperm.xlu0 %730, %v596
        %v732 = vpop.permute.xlu0 %731
        %735 = vset.pattern.permute.xlu0 0
        %736 = vperm.xlu0 %735, %v597
        %v737 = vpop.permute.xlu0 %736
        %740 = vset.pattern.permute.xlu0 0
        %741 = vperm.xlu0 %740, %v598
        %v742 = vpop.permute.xlu0 %741
        %745 = vset.pattern.permute.xlu0 0
        %746 = vperm.xlu0 %745, %v599
        %v747 = vpop.permute.xlu0 %746
        %750 = vset.pattern.permute.xlu0 0
        %751 = vperm.xlu0 %750, %v600
        %v752 = vpop.permute.xlu0 %751
        %755 = vset.pattern.permute.xlu0 0
        %756 = vperm.xlu0 %755, %v601
        %v757 = vpop.permute.xlu0 %756
        %760 = vset.pattern.permute.xlu0 0
        %761 = vperm.xlu0 %760, %v602
        %v762 = vpop.permute.xlu0 %761
        %v765 = vlaneseq
        %v766 = vshrl.u32 %v765, 7
        %v767 = vsub.s32 0, %v766
        %v768 = vrot.slane %v603, %v767
        %v770 = vmul.f32 %v607, %v768
        %v771 = vmul.f32 %v612, %v768
        %v772 = vmul.f32 %v617, %v768
        %v773 = vmul.f32 %v622, %v768
        %v774 = vmul.f32 %v627, %v768
        %v775 = vmul.f32 %v632, %v768
        %v776 = vmul.f32 %v637, %v768
        %v777 = vmul.f32 %v642, %v768
        %v778 = vmul.f32 %v647, %v768
        %v779 = vmul.f32 %v652, %v768
        %v780 = vmul.f32 %v657, %v768
        %v781 = vmul.f32 %v662, %v768
        %v782 = vmul.f32 %v667, %v768
        %v783 = vmul.f32 %v672, %v768
        %v784 = vmul.f32 %v677, %v768
        %v785 = vmul.f32 %v682, %v768
        %v786 = vmul.f32 %v687, %v768
        %v787 = vmul.f32 %v692, %v768
        %v788 = vmul.f32 %v697, %v768
        %v789 = vmul.f32 %v702, %v768
        %v790 = vmul.f32 %v707, %v768
        %v791 = vmul.f32 %v712, %v768
        %v792 = vmul.f32 %v717, %v768
        %v793 = vmul.f32 %v722, %v768
        %v794 = vmul.f32 %v727, %v768
        %v795 = vmul.f32 %v732, %v768
        %v796 = vmul.f32 %v737, %v768
        %v797 = vmul.f32 %v742, %v768
        %v798 = vmul.f32 %v747, %v768
        %v799 = vmul.f32 %v752, %v768
        %v800 = vmul.f32 %v757, %v768
        %v801 = vmul.f32 %v762, %v768
        %v802 = vld [vmem:[%s2] sm:$0x1]
        %v804 = vlaneseq
        %v805 = vshrl.u32 %v804, 7
        %v806 = vsub.s32 0, %v805
        %v807 = vrot.slane %v802, %v806
        %v809 = vadd.f32 %v770, %v807
        %v810 = vadd.f32 %v771, %v807
        %v811 = vadd.f32 %v772, %v807
        %v812 = vadd.f32 %v773, %v807
        %v813 = vadd.f32 %v774, %v807
        %v814 = vadd.f32 %v775, %v807
        %v815 = vadd.f32 %v776, %v807
        %v816 = vadd.f32 %v777, %v807
        %v817 = vadd.f32 %v778, %v807
        %v818 = vadd.f32 %v779, %v807
        %v819 = vadd.f32 %v780, %v807
        %v820 = vadd.f32 %v781, %v807
        %v821 = vadd.f32 %v782, %v807
        %v822 = vadd.f32 %v783, %v807
        %v823 = vadd.f32 %v784, %v807
        %v824 = vadd.f32 %v785, %v807
        %v825 = vadd.f32 %v786, %v807
        %v826 = vadd.f32 %v787, %v807
        %v827 = vadd.f32 %v788, %v807
        %v828 = vadd.f32 %v789, %v807
        %v829 = vadd.f32 %v790, %v807
        %v830 = vadd.f32 %v791, %v807
        %v831 = vadd.f32 %v792, %v807
        %v832 = vadd.f32 %v793, %v807
        %v833 = vadd.f32 %v794, %v807
        %v834 = vadd.f32 %v795, %v807
        %v835 = vadd.f32 %v796, %v807
        %v836 = vadd.f32 %v797, %v807
        %v837 = vadd.f32 %v798, %v807
        %v838 = vadd.f32 %v799, %v807
        %v839 = vadd.f32 %v800, %v807
        %v840 = vadd.f32 %v801, %v807
        %v841 = vmax.f32 %v809, 0.0
        %v842 = vmax.f32 %v810, 0.0
        %v843 = vmax.f32 %v811, 0.0
        %v844 = vmax.f32 %v812, 0.0
        %v845 = vmax.f32 %v813, 0.0
        %v846 = vmax.f32 %v814, 0.0
        %v847 = vmax.f32 %v815, 0.0
        %v848 = vmax.f32 %v816, 0.0
        %v849 = vmax.f32 %v817, 0.0
        %v850 = vmax.f32 %v818, 0.0
        %v851 = vmax.f32 %v819, 0.0
        %v852 = vmax.f32 %v820, 0.0
        %v853 = vmax.f32 %v821, 0.0
        %v854 = vmax.f32 %v822, 0.0
        %v855 = vmax.f32 %v823, 0.0
        %v856 = vmax.f32 %v824, 0.0
        %v857 = vmax.f32 %v825, 0.0
        %v858 = vmax.f32 %v826, 0.0
        %v859 = vmax.f32 %v827, 0.0
        %v860 = vmax.f32 %v828, 0.0
        %v861 = vmax.f32 %v829, 0.0
        %v862 = vmax.f32 %v830, 0.0
        %v863 = vmax.f32 %v831, 0.0
        %v864 = vmax.f32 %v832, 0.0
        %v865 = vmax.f32 %v833, 0.0
        %v866 = vmax.f32 %v834, 0.0
        %v867 = vmax.f32 %v835, 0.0
        %v868 = vmax.f32 %v836, 0.0
        %v869 = vmax.f32 %v837, 0.0
        %v870 = vmax.f32 %v838, 0.0
        %v871 = vmax.f32 %v839, 0.0
        %v872 = vmax.f32 %v840, 0.0
        %vm873 = vcmask 523264
        %874 = vst.msk [vmem:[#allocation2] sm:$0xff] %vm873, %v841
        %875 = vst.msk [vmem:[#allocation2 + $0x8] sm:$0xff] %vm873, %v842
        %876 = vst.msk [vmem:[#allocation2 + $0x10] sm:$0xff] %vm873, %v843
        %877 = vst.msk [vmem:[#allocation2 + $0x18] sm:$0xff] %vm873, %v844
        %878 = vst.msk [vmem:[#allocation2 + $0x20] sm:$0xff] %vm873, %v845
        %879 = vst.msk [vmem:[#allocation2 + $0x28] sm:$0xff] %vm873, %v846
        %880 = vst.msk [vmem:[#allocation2 + $0x30] sm:$0xff] %vm873, %v847
        %881 = vst.msk [vmem:[#allocation2 + $0x38] sm:$0xff] %vm873, %v848
        %882 = vst.msk [vmem:[#allocation2 + $0x40] sm:$0xff] %vm873, %v849
        %883 = vst.msk [vmem:[#allocation2 + $0x48] sm:$0xff] %vm873, %v850
        %884 = vst.msk [vmem:[#allocation2 + $0x50] sm:$0xff] %vm873, %v851
        %885 = vst.msk [vmem:[#allocation2 + $0x58] sm:$0xff] %vm873, %v852
        %886 = vst.msk [vmem:[#allocation2 + $0x60] sm:$0xff] %vm873, %v853
        %887 = vst.msk [vmem:[#allocation2 + $0x68] sm:$0xff] %vm873, %v854
        %888 = vst.msk [vmem:[#allocation2 + $0x70] sm:$0xff] %vm873, %v855
        %889 = vst.msk [vmem:[#allocation2 + $0x78] sm:$0xff] %vm873, %v856
        %890 = vst.msk [vmem:[#allocation2 + $0x80] sm:$0xff] %vm873, %v857
        %891 = vst.msk [vmem:[#allocation2 + $0x88] sm:$0xff] %vm873, %v858
        %892 = vst.msk [vmem:[#allocation2 + $0x90] sm:$0xff] %vm873, %v859
        %893 = vst.msk [vmem:[#allocation2 + $0x98] sm:$0xff] %vm873, %v860
        %894 = vst.msk [vmem:[#allocation2 + $0xa0] sm:$0xff] %vm873, %v861
        %895 = vst.msk [vmem:[#allocation2 + $0xa8] sm:$0xff] %vm873, %v862
        %896 = vst.msk [vmem:[#allocation2 + $0xb0] sm:$0xff] %vm873, %v863
        %897 = vst.msk [vmem:[#allocation2 + $0xb8] sm:$0xff] %vm873, %v864
        %898 = vst.msk [vmem:[#allocation2 + $0xc0] sm:$0xff] %vm873, %v865
        %899 = vst.msk [vmem:[#allocation2 + $0xc8] sm:$0xff] %vm873, %v866
        %900 = vst.msk [vmem:[#allocation2 + $0xd0] sm:$0xff] %vm873, %v867
        %901 = vst.msk [vmem:[#allocation2 + $0xd8] sm:$0xff] %vm873, %v868
        %902 = vst.msk [vmem:[#allocation2 + $0xe0] sm:$0xff] %vm873, %v869
        %903 = vst.msk [vmem:[#allocation2 + $0xe8] sm:$0xff] %vm873, %v870
        %904 = vst.msk [vmem:[#allocation2 + $0xf0] sm:$0xff] %vm873, %v871
        %905 = vst.msk [vmem:[#allocation2 + $0xf8] sm:$0xff] %vm873, %v872
      $region92: #{transformer_net_forward.1} parent=87 // pred_fallthru
        _
      %v906 = vld [vmem:[#allocation2] sm:$0xff]
      %v907 = vld [vmem:[#allocation2 + $0x8] sm:$0xff]
      %v908 = vld [vmem:[#allocation2 + $0x10] sm:$0xff]
      %v909 = vld [vmem:[#allocation2 + $0x18] sm:$0xff]
      %v910 = vld [vmem:[#allocation2 + $0x20] sm:$0xff]
      %v911 = vld [vmem:[#allocation2 + $0x28] sm:$0xff]
      %v912 = vld [vmem:[#allocation2 + $0x30] sm:$0xff]
      %v913 = vld [vmem:[#allocation2 + $0x38] sm:$0xff]
      %v914 = vld [vmem:[#allocation2 + $0x40] sm:$0xff]
      %v915 = vld [vmem:[#allocation2 + $0x48] sm:$0xff]
      %v916 = vld [vmem:[#allocation2 + $0x50] sm:$0xff]
      %v917 = vld [vmem:[#allocation2 + $0x58] sm:$0xff]
      %v918 = vld [vmem:[#allocation2 + $0x60] sm:$0xff]
      %v919 = vld [vmem:[#allocation2 + $0x68] sm:$0xff]
      %v920 = vld [vmem:[#allocation2 + $0x70] sm:$0xff]
      %v921 = vld [vmem:[#allocation2 + $0x78] sm:$0xff]
      %v922 = vld [vmem:[#allocation2 + $0x80] sm:$0xff]
      %v923 = vld [vmem:[#allocation2 + $0x88] sm:$0xff]
      %v924 = vld [vmem:[#allocation2 + $0x90] sm:$0xff]
      %v925 = vld [vmem:[#allocation2 + $0x98] sm:$0xff]
      %v926 = vld [vmem:[#allocation2 + $0xa0] sm:$0xff]
      %v927 = vld [vmem:[#allocation2 + $0xa8] sm:$0xff]
      %v928 = vld [vmem:[#allocation2 + $0xb0] sm:$0xff]
      %v929 = vld [vmem:[#allocation2 + $0xb8] sm:$0xff]
      %v930 = vld [vmem:[#allocation2 + $0xc0] sm:$0xff]
      %v931 = vld [vmem:[#allocation2 + $0xc8] sm:$0xff]
      %v932 = vld [vmem:[#allocation2 + $0xd0] sm:$0xff]
      %v933 = vld [vmem:[#allocation2 + $0xd8] sm:$0xff]
      %v934 = vld [vmem:[#allocation2 + $0xe0] sm:$0xff]
      %v935 = vld [vmem:[#allocation2 + $0xe8] sm:$0xff]
      %v936 = vld [vmem:[#allocation2 + $0xf0] sm:$0xff]
      %v937 = vld [vmem:[#allocation2 + $0xf8] sm:$0xff]
      %s938 = smul.u32 %s35, 128
      %s939 = scalar_lea.vmem %s3, %s938
      %v940 = vld [vmem:[%s939] sm:$0xff]
      %v941 = vld [vmem:[%s939 + $0x8] sm:$0xff]
      %v942 = vld [vmem:[%s939 + $0x10] sm:$0xff]
      %v943 = vld [vmem:[%s939 + $0x18] sm:$0xff]
      %v944 = vld [vmem:[%s939 + $0x20] sm:$0xff]
      %v945 = vld [vmem:[%s939 + $0x28] sm:$0xff]
      %v946 = vld [vmem:[%s939 + $0x30] sm:$0xff]
      %v947 = vld [vmem:[%s939 + $0x38] sm:$0xff]
      %v948 = vld [vmem:[%s939 + $0x40] sm:$0xff]
      %v949 = vld [vmem:[%s939 + $0x48] sm:$0xff]
      %v950 = vld [vmem:[%s939 + $0x50] sm:$0xff]
      %v951 = vld [vmem:[%s939 + $0x58] sm:$0xff]
      %v952 = vld [vmem:[%s939 + $0x60] sm:$0xff]
      %v953 = vld [vmem:[%s939 + $0x68] sm:$0xff]
      %v954 = vld [vmem:[%s939 + $0x70] sm:$0xff]
      %v955 = vld [vmem:[%s939 + $0x78] sm:$0xff]
      %s956 = scalar_lea.vmem %s4, %s938
      %v957 = vld [vmem:[%s956] sm:$0xff]
      %v958 = vld [vmem:[%s956 + $0x8] sm:$0xff]
      %v959 = vld [vmem:[%s956 + $0x10] sm:$0xff]
      %v960 = vld [vmem:[%s956 + $0x18] sm:$0xff]
      %v961 = vld [vmem:[%s956 + $0x20] sm:$0xff]
      %v962 = vld [vmem:[%s956 + $0x28] sm:$0xff]
      %v963 = vld [vmem:[%s956 + $0x30] sm:$0xff]
      %v964 = vld [vmem:[%s956 + $0x38] sm:$0xff]
      %v965 = vld [vmem:[%s956 + $0x40] sm:$0xff]
      %v966 = vld [vmem:[%s956 + $0x48] sm:$0xff]
      %v967 = vld [vmem:[%s956 + $0x50] sm:$0xff]
      %v968 = vld [vmem:[%s956 + $0x58] sm:$0xff]
      %v969 = vld [vmem:[%s956 + $0x60] sm:$0xff]
      %v970 = vld [vmem:[%s956 + $0x68] sm:$0xff]
      %v971 = vld [vmem:[%s956 + $0x70] sm:$0xff]
      %v972 = vld [vmem:[%s956 + $0x78] sm:$0xff]
      %vm973 = vcmask 523264
      %v974 = vsel %vm973, %v906, 0.0
      %975 = vadd.xlane.f32.xlu0 %v974
      %v976 = vpop.xlane.xlu0 %975
      %v977 = vsel %vm973, %v907, 0.0
      %978 = vadd.xlane.f32.xlu0 %v977
      %v979 = vpop.xlane.xlu0 %978
      %v980 = vsel %vm973, %v908, 0.0
      %981 = vadd.xlane.f32.xlu0 %v980
      %v982 = vpop.xlane.xlu0 %981
      %v983 = vsel %vm973, %v909, 0.0
      %984 = vadd.xlane.f32.xlu0 %v983
      %v985 = vpop.xlane.xlu0 %984
      %v986 = vsel %vm973, %v910, 0.0
      %987 = vadd.xlane.f32.xlu0 %v986
      %v988 = vpop.xlane.xlu0 %987
      %v989 = vsel %vm973, %v911, 0.0
      %990 = vadd.xlane.f32.xlu0 %v989
      %v991 = vpop.xlane.xlu0 %990
      %v992 = vsel %vm973, %v912, 0.0
      %993 = vadd.xlane.f32.xlu0 %v992
      %v994 = vpop.xlane.xlu0 %993
      %v995 = vsel %vm973, %v913, 0.0
      %996 = vadd.xlane.f32.xlu0 %v995
      %v997 = vpop.xlane.xlu0 %996
      %v998 = vsel %vm973, %v914, 0.0
      %999 = vadd.xlane.f32.xlu0 %v998
      %v1000 = vpop.xlane.xlu0 %999
      %v1001 = vsel %vm973, %v915, 0.0
      %1002 = vadd.xlane.f32.xlu0 %v1001
      %v1003 = vpop.xlane.xlu0 %1002
      %v1004 = vsel %vm973, %v916, 0.0
      %1005 = vadd.xlane.f32.xlu0 %v1004
      %v1006 = vpop.xlane.xlu0 %1005
      %v1007 = vsel %vm973, %v917, 0.0
      %1008 = vadd.xlane.f32.xlu0 %v1007
      %v1009 = vpop.xlane.xlu0 %1008
      %v1010 = vsel %vm973, %v918, 0.0
      %1011 = vadd.xlane.f32.xlu0 %v1010
      %v1012 = vpop.xlane.xlu0 %1011
      %v1013 = vsel %vm973, %v919, 0.0
      %1014 = vadd.xlane.f32.xlu0 %v1013
      %v1015 = vpop.xlane.xlu0 %1014
      %v1016 = vsel %vm973, %v920, 0.0
      %1017 = vadd.xlane.f32.xlu0 %v1016
      %v1018 = vpop.xlane.xlu0 %1017
      %v1019 = vsel %vm973, %v921, 0.0
      %1020 = vadd.xlane.f32.xlu0 %v1019
      %v1021 = vpop.xlane.xlu0 %1020
      %v1022 = vsel %vm973, %v922, 0.0
      %1023 = vadd.xlane.f32.xlu0 %v1022
      %v1024 = vpop.xlane.xlu0 %1023
      %v1025 = vsel %vm973, %v923, 0.0
      %1026 = vadd.xlane.f32.xlu0 %v1025
      %v1027 = vpop.xlane.xlu0 %1026
      %v1028 = vsel %vm973, %v924, 0.0
      %1029 = vadd.xlane.f32.xlu0 %v1028
      %v1030 = vpop.xlane.xlu0 %1029
      %v1031 = vsel %vm973, %v925, 0.0
      %1032 = vadd.xlane.f32.xlu0 %v1031
      %v1033 = vpop.xlane.xlu0 %1032
      %v1034 = vsel %vm973, %v926, 0.0
      %1035 = vadd.xlane.f32.xlu0 %v1034
      %v1036 = vpop.xlane.xlu0 %1035
      %v1037 = vsel %vm973, %v927, 0.0
      %1038 = vadd.xlane.f32.xlu0 %v1037
      %v1039 = vpop.xlane.xlu0 %1038
      %v1040 = vsel %vm973, %v928, 0.0
      %1041 = vadd.xlane.f32.xlu0 %v1040
      %v1042 = vpop.xlane.xlu0 %1041
      %v1043 = vsel %vm973, %v929, 0.0
      %1044 = vadd.xlane.f32.xlu0 %v1043
      %v1045 = vpop.xlane.xlu0 %1044
      %v1046 = vsel %vm973, %v930, 0.0
      %1047 = vadd.xlane.f32.xlu0 %v1046
      %v1048 = vpop.xlane.xlu0 %1047
      %v1049 = vsel %vm973, %v931, 0.0
      %1050 = vadd.xlane.f32.xlu0 %v1049
      %v1051 = vpop.xlane.xlu0 %1050
      %v1052 = vsel %vm973, %v932, 0.0
      %1053 = vadd.xlane.f32.xlu0 %v1052
      %v1054 = vpop.xlane.xlu0 %1053
      %v1055 = vsel %vm973, %v933, 0.0
      %1056 = vadd.xlane.f32.xlu0 %v1055
      %v1057 = vpop.xlane.xlu0 %1056
      %v1058 = vsel %vm973, %v934, 0.0
      %1059 = vadd.xlane.f32.xlu0 %v1058
      %v1060 = vpop.xlane.xlu0 %1059
      %v1061 = vsel %vm973, %v935, 0.0
      %1062 = vadd.xlane.f32.xlu0 %v1061
      %v1063 = vpop.xlane.xlu0 %1062
      %v1064 = vsel %vm973, %v936, 0.0
      %1065 = vadd.xlane.f32.xlu0 %v1064
      %v1066 = vpop.xlane.xlu0 %1065
      %v1067 = vsel %vm973, %v937, 0.0
      %1068 = vadd.xlane.f32.xlu0 %v1067
      %v1069 = vpop.xlane.xlu0 %1068
      %v1070 = vrcp.pop 64.0
      %v1071 = vmul.f32 %v976, %v1070
      %v1072 = vmul.f32 %v979, %v1070
      %v1073 = vmul.f32 %v982, %v1070
      %v1074 = vmul.f32 %v985, %v1070
      %v1075 = vmul.f32 %v988, %v1070
      %v1076 = vmul.f32 %v991, %v1070
      %v1077 = vmul.f32 %v994, %v1070
      %v1078 = vmul.f32 %v997, %v1070
      %v1079 = vmul.f32 %v1000, %v1070
      %v1080 = vmul.f32 %v1003, %v1070
      %v1081 = vmul.f32 %v1006, %v1070
      %v1082 = vmul.f32 %v1009, %v1070
      %v1083 = vmul.f32 %v1012, %v1070
      %v1084 = vmul.f32 %v1015, %v1070
      %v1085 = vmul.f32 %v1018, %v1070
      %v1086 = vmul.f32 %v1021, %v1070
      %v1087 = vmul.f32 %v1024, %v1070
      %v1088 = vmul.f32 %v1027, %v1070
      %v1089 = vmul.f32 %v1030, %v1070
      %v1090 = vmul.f32 %v1033, %v1070
      %v1091 = vmul.f32 %v1036, %v1070
      %v1092 = vmul.f32 %v1039, %v1070
      %v1093 = vmul.f32 %v1042, %v1070
      %v1094 = vmul.f32 %v1045, %v1070
      %v1095 = vmul.f32 %v1048, %v1070
      %v1096 = vmul.f32 %v1051, %v1070
      %v1097 = vmul.f32 %v1054, %v1070
      %v1098 = vmul.f32 %v1057, %v1070
      %v1099 = vmul.f32 %v1060, %v1070
      %v1100 = vmul.f32 %v1063, %v1070
      %v1101 = vmul.f32 %v1066, %v1070
      %v1102 = vmul.f32 %v1069, %v1070
      %v1103 = vadd.f32 %v1071, %v1072
      %v1104 = vadd.f32 %v1103, %v1073
      %v1105 = vadd.f32 %v1104, %v1074
      %v1106 = vadd.f32 %v1105, %v1075
      %v1107 = vadd.f32 %v1106, %v1076
      %v1108 = vadd.f32 %v1107, %v1077
      %v1109 = vadd.f32 %v1108, %v1078
      %v1110 = vadd.f32 %v1109, %v1079
      %v1111 = vadd.f32 %v1110, %v1080
      %v1112 = vadd.f32 %v1111, %v1081
      %v1113 = vadd.f32 %v1112, %v1082
      %v1114 = vadd.f32 %v1113, %v1083
      %v1115 = vadd.f32 %v1114, %v1084
      %v1116 = vadd.f32 %v1115, %v1085
      %v1117 = vadd.f32 %v1116, %v1086
      %v1118 = vrot.slane %v1117, 4
      %v1119 = vadd.f32 %v1117, %v1118
      %v1120 = vrot.slane %v1119, 2
      %v1121 = vadd.f32 %v1119, %v1120
      %v1122 = vrot.slane %v1121, 1
      %v1123 = vadd.f32 %v1121, %v1122
      %v1124 = vadd.f32 %v1087, %v1088
      %v1125 = vadd.f32 %v1124, %v1089
      %v1126 = vadd.f32 %v1125, %v1090
      %v1127 = vadd.f32 %v1126, %v1091
      %v1128 = vadd.f32 %v1127, %v1092
      %v1129 = vadd.f32 %v1128, %v1093
      %v1130 = vadd.f32 %v1129, %v1094
      %v1131 = vadd.f32 %v1130, %v1095
      %v1132 = vadd.f32 %v1131, %v1096
      %v1133 = vadd.f32 %v1132, %v1097
      %v1134 = vadd.f32 %v1133, %v1098
      %v1135 = vadd.f32 %v1134, %v1099
      %v1136 = vadd.f32 %v1135, %v1100
      %v1137 = vadd.f32 %v1136, %v1101
      %v1138 = vadd.f32 %v1137, %v1102
      %v1139 = vrot.slane %v1138, 4
      %v1140 = vadd.f32 %v1138, %v1139
      %v1141 = vrot.slane %v1140, 2
      %v1142 = vadd.f32 %v1140, %v1141
      %v1143 = vrot.slane %v1142, 1
      %v1144 = vadd.f32 %v1142, %v1143
      %v1145 = vrcp.pop 128.0
      %v1146 = vmul.f32 %v1123, %v1145
      %v1147 = vmul.f32 %v1144, %v1145
      %v1148 = vsub.f32 %v906, %v1146
      %v1149 = vsub.f32 %v907, %v1146
      %v1150 = vsub.f32 %v908, %v1146
      %v1151 = vsub.f32 %v909, %v1146
      %v1152 = vsub.f32 %v910, %v1146
      %v1153 = vsub.f32 %v911, %v1146
      %v1154 = vsub.f32 %v912, %v1146
      %v1155 = vsub.f32 %v913, %v1146
      %v1156 = vsub.f32 %v914, %v1146
      %v1157 = vsub.f32 %v915, %v1146
      %v1158 = vsub.f32 %v916, %v1146
      %v1159 = vsub.f32 %v917, %v1146
      %v1160 = vsub.f32 %v918, %v1146
      %v1161 = vsub.f32 %v919, %v1146
      %v1162 = vsub.f32 %v920, %v1146
      %v1163 = vsub.f32 %v921, %v1146
      %v1164 = vsub.f32 %v922, %v1147
      %v1165 = vsub.f32 %v923, %v1147
      %v1166 = vsub.f32 %v924, %v1147
      %v1167 = vsub.f32 %v925, %v1147
      %v1168 = vsub.f32 %v926, %v1147
      %v1169 = vsub.f32 %v927, %v1147
      %v1170 = vsub.f32 %v928, %v1147
      %v1171 = vsub.f32 %v929, %v1147
      %v1172 = vsub.f32 %v930, %v1147
      %v1173 = vsub.f32 %v931, %v1147
      %v1174 = vsub.f32 %v932, %v1147
      %v1175 = vsub.f32 %v933, %v1147
      %v1176 = vsub.f32 %v934, %v1147
      %v1177 = vsub.f32 %v935, %v1147
      %v1178 = vsub.f32 %v936, %v1147
      %v1179 = vsub.f32 %v937, %v1147
      %v1180 = vmul.f32 %v1148, %v1148
      %v1181 = vmul.f32 %v1149, %v1149
      %v1182 = vmul.f32 %v1150, %v1150
      %v1183 = vmul.f32 %v1151, %v1151
      %v1184 = vmul.f32 %v1152, %v1152
      %v1185 = vmul.f32 %v1153, %v1153
      %v1186 = vmul.f32 %v1154, %v1154
      %v1187 = vmul.f32 %v1155, %v1155
      %v1188 = vmul.f32 %v1156, %v1156
      %v1189 = vmul.f32 %v1157, %v1157
      %v1190 = vmul.f32 %v1158, %v1158
      %v1191 = vmul.f32 %v1159, %v1159
      %v1192 = vmul.f32 %v1160, %v1160
      %v1193 = vmul.f32 %v1161, %v1161
      %v1194 = vmul.f32 %v1162, %v1162
      %v1195 = vmul.f32 %v1163, %v1163
      %v1196 = vmul.f32 %v1164, %v1164
      %v1197 = vmul.f32 %v1165, %v1165
      %v1198 = vmul.f32 %v1166, %v1166
      %v1199 = vmul.f32 %v1167, %v1167
      %v1200 = vmul.f32 %v1168, %v1168
      %v1201 = vmul.f32 %v1169, %v1169
      %v1202 = vmul.f32 %v1170, %v1170
      %v1203 = vmul.f32 %v1171, %v1171
      %v1204 = vmul.f32 %v1172, %v1172
      %v1205 = vmul.f32 %v1173, %v1173
      %v1206 = vmul.f32 %v1174, %v1174
      %v1207 = vmul.f32 %v1175, %v1175
      %v1208 = vmul.f32 %v1176, %v1176
      %v1209 = vmul.f32 %v1177, %v1177
      %v1210 = vmul.f32 %v1178, %v1178
      %v1211 = vmul.f32 %v1179, %v1179
      %v1212 = vsel %vm973, %v1180, 0.0
      %1213 = vadd.xlane.f32.xlu0 %v1212
      %v1214 = vpop.xlane.xlu0 %1213
      %v1215 = vsel %vm973, %v1181, 0.0
      %1216 = vadd.xlane.f32.xlu0 %v1215
      %v1217 = vpop.xlane.xlu0 %1216
      %v1218 = vsel %vm973, %v1182, 0.0
      %1219 = vadd.xlane.f32.xlu0 %v1218
      %v1220 = vpop.xlane.xlu0 %1219
      %v1221 = vsel %vm973, %v1183, 0.0
      %1222 = vadd.xlane.f32.xlu0 %v1221
      %v1223 = vpop.xlane.xlu0 %1222
      %v1224 = vsel %vm973, %v1184, 0.0
      %1225 = vadd.xlane.f32.xlu0 %v1224
      %v1226 = vpop.xlane.xlu0 %1225
      %v1227 = vsel %vm973, %v1185, 0.0
      %1228 = vadd.xlane.f32.xlu0 %v1227
      %v1229 = vpop.xlane.xlu0 %1228
      %v1230 = vsel %vm973, %v1186, 0.0
      %1231 = vadd.xlane.f32.xlu0 %v1230
      %v1232 = vpop.xlane.xlu0 %1231
      %v1233 = vsel %vm973, %v1187, 0.0
      %1234 = vadd.xlane.f32.xlu0 %v1233
      %v1235 = vpop.xlane.xlu0 %1234
      %v1236 = vsel %vm973, %v1188, 0.0
      %1237 = vadd.xlane.f32.xlu0 %v1236
      %v1238 = vpop.xlane.xlu0 %1237
      %v1239 = vsel %vm973, %v1189, 0.0
      %1240 = vadd.xlane.f32.xlu0 %v1239
      %v1241 = vpop.xlane.xlu0 %1240
      %v1242 = vsel %vm973, %v1190, 0.0
      %1243 = vadd.xlane.f32.xlu0 %v1242
      %v1244 = vpop.xlane.xlu0 %1243
      %v1245 = vsel %vm973, %v1191, 0.0
      %1246 = vadd.xlane.f32.xlu0 %v1245
      %v1247 = vpop.xlane.xlu0 %1246
      %v1248 = vsel %vm973, %v1192, 0.0
      %1249 = vadd.xlane.f32.xlu0 %v1248
      %v1250 = vpop.xlane.xlu0 %1249
      %v1251 = vsel %vm973, %v1193, 0.0
      %1252 = vadd.xlane.f32.xlu0 %v1251
      %v1253 = vpop.xlane.xlu0 %1252
      %v1254 = vsel %vm973, %v1194, 0.0
      %1255 = vadd.xlane.f32.xlu0 %v1254
      %v1256 = vpop.xlane.xlu0 %1255
      %v1257 = vsel %vm973, %v1195, 0.0
      %1258 = vadd.xlane.f32.xlu0 %v1257
      %v1259 = vpop.xlane.xlu0 %1258
      %v1260 = vsel %vm973, %v1196, 0.0
      %1261 = vadd.xlane.f32.xlu0 %v1260
      %v1262 = vpop.xlane.xlu0 %1261
      %v1263 = vsel %vm973, %v1197, 0.0
      %1264 = vadd.xlane.f32.xlu0 %v1263
      %v1265 = vpop.xlane.xlu0 %1264
      %v1266 = vsel %vm973, %v1198, 0.0
      %1267 = vadd.xlane.f32.xlu0 %v1266
      %v1268 = vpop.xlane.xlu0 %1267
      %v1269 = vsel %vm973, %v1199, 0.0
      %1270 = vadd.xlane.f32.xlu0 %v1269
      %v1271 = vpop.xlane.xlu0 %1270
      %v1272 = vsel %vm973, %v1200, 0.0
      %1273 = vadd.xlane.f32.xlu0 %v1272
      %v1274 = vpop.xlane.xlu0 %1273
      %v1275 = vsel %vm973, %v1201, 0.0
      %1276 = vadd.xlane.f32.xlu0 %v1275
      %v1277 = vpop.xlane.xlu0 %1276
      %v1278 = vsel %vm973, %v1202, 0.0
      %1279 = vadd.xlane.f32.xlu0 %v1278
      %v1280 = vpop.xlane.xlu0 %1279
      %v1281 = vsel %vm973, %v1203, 0.0
      %1282 = vadd.xlane.f32.xlu0 %v1281
      %v1283 = vpop.xlane.xlu0 %1282
      %v1284 = vsel %vm973, %v1204, 0.0
      %1285 = vadd.xlane.f32.xlu0 %v1284
      %v1286 = vpop.xlane.xlu0 %1285
      %v1287 = vsel %vm973, %v1205, 0.0
      %1288 = vadd.xlane.f32.xlu0 %v1287
      %v1289 = vpop.xlane.xlu0 %1288
      %v1290 = vsel %vm973, %v1206, 0.0
      %1291 = vadd.xlane.f32.xlu0 %v1290
      %v1292 = vpop.xlane.xlu0 %1291
      %v1293 = vsel %vm973, %v1207, 0.0
      %1294 = vadd.xlane.f32.xlu0 %v1293
      %v1295 = vpop.xlane.xlu0 %1294
      %v1296 = vsel %vm973, %v1208, 0.0
      %1297 = vadd.xlane.f32.xlu0 %v1296
      %v1298 = vpop.xlane.xlu0 %1297
      %v1299 = vsel %vm973, %v1209, 0.0
      %1300 = vadd.xlane.f32.xlu0 %v1299
      %v1301 = vpop.xlane.xlu0 %1300
      %v1302 = vsel %vm973, %v1210, 0.0
      %1303 = vadd.xlane.f32.xlu0 %v1302
      %v1304 = vpop.xlane.xlu0 %1303
      %v1305 = vsel %vm973, %v1211, 0.0
      %1306 = vadd.xlane.f32.xlu0 %v1305
      %v1307 = vpop.xlane.xlu0 %1306
      %v1308 = vmul.f32 %v1214, %v1070
      %v1309 = vmul.f32 %v1217, %v1070
      %v1310 = vmul.f32 %v1220, %v1070
      %v1311 = vmul.f32 %v1223, %v1070
      %v1312 = vmul.f32 %v1226, %v1070
      %v1313 = vmul.f32 %v1229, %v1070
      %v1314 = vmul.f32 %v1232, %v1070
      %v1315 = vmul.f32 %v1235, %v1070
      %v1316 = vmul.f32 %v1238, %v1070
      %v1317 = vmul.f32 %v1241, %v1070
      %v1318 = vmul.f32 %v1244, %v1070
      %v1319 = vmul.f32 %v1247, %v1070
      %v1320 = vmul.f32 %v1250, %v1070
      %v1321 = vmul.f32 %v1253, %v1070
      %v1322 = vmul.f32 %v1256, %v1070
      %v1323 = vmul.f32 %v1259, %v1070
      %v1324 = vmul.f32 %v1262, %v1070
      %v1325 = vmul.f32 %v1265, %v1070
      %v1326 = vmul.f32 %v1268, %v1070
      %v1327 = vmul.f32 %v1271, %v1070
      %v1328 = vmul.f32 %v1274, %v1070
      %v1329 = vmul.f32 %v1277, %v1070
      %v1330 = vmul.f32 %v1280, %v1070
      %v1331 = vmul.f32 %v1283, %v1070
      %v1332 = vmul.f32 %v1286, %v1070
      %v1333 = vmul.f32 %v1289, %v1070
      %v1334 = vmul.f32 %v1292, %v1070
      %v1335 = vmul.f32 %v1295, %v1070
      %v1336 = vmul.f32 %v1298, %v1070
      %v1337 = vmul.f32 %v1301, %v1070
      %v1338 = vmul.f32 %v1304, %v1070
      %v1339 = vmul.f32 %v1307, %v1070
      %v1340 = vadd.f32 %v1308, %v1309
      %v1341 = vadd.f32 %v1340, %v1310
      %v1342 = vadd.f32 %v1341, %v1311
      %v1343 = vadd.f32 %v1342, %v1312
      %v1344 = vadd.f32 %v1343, %v1313
      %v1345 = vadd.f32 %v1344, %v1314
      %v1346 = vadd.f32 %v1345, %v1315
      %v1347 = vadd.f32 %v1346, %v1316
      %v1348 = vadd.f32 %v1347, %v1317
      %v1349 = vadd.f32 %v1348, %v1318
      %v1350 = vadd.f32 %v1349, %v1319
      %v1351 = vadd.f32 %v1350, %v1320
      %v1352 = vadd.f32 %v1351, %v1321
      %v1353 = vadd.f32 %v1352, %v1322
      %v1354 = vadd.f32 %v1353, %v1323
      %v1355 = vrot.slane %v1354, 4
      %v1356 = vadd.f32 %v1354, %v1355
      %v1357 = vrot.slane %v1356, 2
      %v1358 = vadd.f32 %v1356, %v1357
      %v1359 = vrot.slane %v1358, 1
      %v1360 = vadd.f32 %v1358, %v1359
      %v1361 = vadd.f32 %v1324, %v1325
      %v1362 = vadd.f32 %v1361, %v1326
      %v1363 = vadd.f32 %v1362, %v1327
      %v1364 = vadd.f32 %v1363, %v1328
      %v1365 = vadd.f32 %v1364, %v1329
      %v1366 = vadd.f32 %v1365, %v1330
      %v1367 = vadd.f32 %v1366, %v1331
      %v1368 = vadd.f32 %v1367, %v1332
      %v1369 = vadd.f32 %v1368, %v1333
      %v1370 = vadd.f32 %v1369, %v1334
      %v1371 = vadd.f32 %v1370, %v1335
      %v1372 = vadd.f32 %v1371, %v1336
      %v1373 = vadd.f32 %v1372, %v1337
      %v1374 = vadd.f32 %v1373, %v1338
      %v1375 = vadd.f32 %v1374, %v1339
      %v1376 = vrot.slane %v1375, 4
      %v1377 = vadd.f32 %v1375, %v1376
      %v1378 = vrot.slane %v1377, 2
      %v1379 = vadd.f32 %v1377, %v1378
      %v1380 = vrot.slane %v1379, 1
      %v1381 = vadd.f32 %v1379, %v1380
      %v1382 = vmul.f32 %v1360, %v1145
      %v1383 = vmul.f32 %v1381, %v1145
      %v1384 = vadd.f32 %v1382, 1e-06
      %v1385 = vadd.f32 %v1383, 1e-06
      %v1386 = vrsqrt.pop %v1384
      %v1387 = vrsqrt.pop %v1385
      %v1388 = vmul.f32 %v1148, %v1386
      %v1389 = vmul.f32 %v1149, %v1386
      %v1390 = vmul.f32 %v1150, %v1386
      %v1391 = vmul.f32 %v1151, %v1386
      %v1392 = vmul.f32 %v1152, %v1386
      %v1393 = vmul.f32 %v1153, %v1386
      %v1394 = vmul.f32 %v1154, %v1386
      %v1395 = vmul.f32 %v1155, %v1386
      %v1396 = vmul.f32 %v1156, %v1386
      %v1397 = vmul.f32 %v1157, %v1386
      %v1398 = vmul.f32 %v1158, %v1386
      %v1399 = vmul.f32 %v1159, %v1386
      %v1400 = vmul.f32 %v1160, %v1386
      %v1401 = vmul.f32 %v1161, %v1386
      %v1402 = vmul.f32 %v1162, %v1386
      %v1403 = vmul.f32 %v1163, %v1386
      %v1404 = vmul.f32 %v1164, %v1387
      %v1405 = vmul.f32 %v1165, %v1387
      %v1406 = vmul.f32 %v1166, %v1387
      %v1407 = vmul.f32 %v1167, %v1387
      %v1408 = vmul.f32 %v1168, %v1387
      %v1409 = vmul.f32 %v1169, %v1387
      %v1410 = vmul.f32 %v1170, %v1387
      %v1411 = vmul.f32 %v1171, %v1387
      %v1412 = vmul.f32 %v1172, %v1387
      %v1413 = vmul.f32 %v1173, %v1387
      %v1414 = vmul.f32 %v1174, %v1387
      %v1415 = vmul.f32 %v1175, %v1387
      %v1416 = vmul.f32 %v1176, %v1387
      %v1417 = vmul.f32 %v1177, %v1387
      %v1418 = vmul.f32 %v1178, %v1387
      %v1419 = vmul.f32 %v1179, %v1387
      %v1420 = vmul.f32 %v1388, %v940
      %v1421 = vmul.f32 %v1389, %v941
      %v1422 = vmul.f32 %v1390, %v942
      %v1423 = vmul.f32 %v1391, %v943
      %v1424 = vmul.f32 %v1392, %v944
      %v1425 = vmul.f32 %v1393, %v945
      %v1426 = vmul.f32 %v1394, %v946
      %v1427 = vmul.f32 %v1395, %v947
      %v1428 = vmul.f32 %v1396, %v948
      %v1429 = vmul.f32 %v1397, %v949
      %v1430 = vmul.f32 %v1398, %v950
      %v1431 = vmul.f32 %v1399, %v951
      %v1432 = vmul.f32 %v1400, %v952
      %v1433 = vmul.f32 %v1401, %v953
      %v1434 = vmul.f32 %v1402, %v954
      %v1435 = vmul.f32 %v1403, %v955
      %v1436 = vmul.f32 %v1404, %v940
      %v1437 = vmul.f32 %v1405, %v941
      %v1438 = vmul.f32 %v1406, %v942
      %v1439 = vmul.f32 %v1407, %v943
      %v1440 = vmul.f32 %v1408, %v944
      %v1441 = vmul.f32 %v1409, %v945
      %v1442 = vmul.f32 %v1410, %v946
      %v1443 = vmul.f32 %v1411, %v947
      %v1444 = vmul.f32 %v1412, %v948
      %v1445 = vmul.f32 %v1413, %v949
      %v1446 = vmul.f32 %v1414, %v950
      %v1447 = vmul.f32 %v1415, %v951
      %v1448 = vmul.f32 %v1416, %v952
      %v1449 = vmul.f32 %v1417, %v953
      %v1450 = vmul.f32 %v1418, %v954
      %v1451 = vmul.f32 %v1419, %v955
      %v1452 = vadd.f32 %v1420, %v957
      %v1453 = vadd.f32 %v1421, %v958
      %v1454 = vadd.f32 %v1422, %v959
      %v1455 = vadd.f32 %v1423, %v960
      %v1456 = vadd.f32 %v1424, %v961
      %v1457 = vadd.f32 %v1425, %v962
      %v1458 = vadd.f32 %v1426, %v963
      %v1459 = vadd.f32 %v1427, %v964
      %v1460 = vadd.f32 %v1428, %v965
      %v1461 = vadd.f32 %v1429, %v966
      %v1462 = vadd.f32 %v1430, %v967
      %v1463 = vadd.f32 %v1431, %v968
      %v1464 = vadd.f32 %v1432, %v969
      %v1465 = vadd.f32 %v1433, %v970
      %v1466 = vadd.f32 %v1434, %v971
      %v1467 = vadd.f32 %v1435, %v972
      %v1468 = vadd.f32 %v1436, %v957
      %v1469 = vadd.f32 %v1437, %v958
      %v1470 = vadd.f32 %v1438, %v959
      %v1471 = vadd.f32 %v1439, %v960
      %v1472 = vadd.f32 %v1440, %v961
      %v1473 = vadd.f32 %v1441, %v962
      %v1474 = vadd.f32 %v1442, %v963
      %v1475 = vadd.f32 %v1443, %v964
      %v1476 = vadd.f32 %v1444, %v965
      %v1477 = vadd.f32 %v1445, %v966
      %v1478 = vadd.f32 %v1446, %v967
      %v1479 = vadd.f32 %v1447, %v968
      %v1480 = vadd.f32 %v1448, %v969
      %v1481 = vadd.f32 %v1449, %v970
      %v1482 = vadd.f32 %v1450, %v971
      %v1483 = vadd.f32 %v1451, %v972
      %s1484 = smul.u32 %s35, 16
      %s1485 = smul.addr %s1484, 8
      %s1486 = scalar_lea.vmem %s5, %s1485
      %v1487 = vld [vmem:[%s1486] sm:$0xff]
      %v1488 = vld [vmem:[%s1486 + $0x8] sm:$0xff]
      %v1489 = vld [vmem:[%s1486 + $0x10] sm:$0xff]
      %v1490 = vld [vmem:[%s1486 + $0x18] sm:$0xff]
      %v1491 = vld [vmem:[%s1486 + $0x20] sm:$0xff]
      %v1492 = vld [vmem:[%s1486 + $0x28] sm:$0xff]
      %v1493 = vld [vmem:[%s1486 + $0x30] sm:$0xff]
      %v1494 = vld [vmem:[%s1486 + $0x38] sm:$0xff]
      %v1495 = vld [vmem:[%s1486 + $0x40] sm:$0xff]
      %v1496 = vld [vmem:[%s1486 + $0x48] sm:$0xff]
      %v1497 = vld [vmem:[%s1486 + $0x50] sm:$0xff]
      %v1498 = vld [vmem:[%s1486 + $0x58] sm:$0xff]
      %v1499 = vld [vmem:[%s1486 + $0x60] sm:$0xff]
      %v1500 = vld [vmem:[%s1486 + $0x68] sm:$0xff]
      %v1501 = vld [vmem:[%s1486 + $0x70] sm:$0xff]
      %v1502 = vld [vmem:[%s1486 + $0x78] sm:$0xff]
      %s1503 = smul.u32 %s35, 2
      %s1504 = scalar_lea.vmem %s6, %s1503
      %v1505 = vld [vmem:[%s1504] sm:$0x3]
      %v1507 = vlaneseq
      %v1508 = vshrl.u32 %v1507, 7
      %v1509 = vsub.s32 0, %v1508
      %v1510 = vrot.slane %v1505, %v1509
      %v1511 = vlaneseq
      %v1512 = vshrl.u32 %v1511, 7
      %v1513 = vsub.s32 1, %v1512
      %v1514 = vrot.slane %v1505, %v1513
      %v1518 = vsel %vm973, %v1452, 0
      %v1521 = vsel %vm973, %v1453, 0
      %v1524 = vsel %vm973, %v1454, 0
      %v1527 = vsel %vm973, %v1455, 0
      %v1530 = vsel %vm973, %v1456, 0
      %v1533 = vsel %vm973, %v1457, 0
      %v1536 = vsel %vm973, %v1458, 0
      %v1539 = vsel %vm973, %v1459, 0
      %v1542 = vsel %vm973, %v1460, 0
      %v1545 = vsel %vm973, %v1461, 0
      %v1548 = vsel %vm973, %v1462, 0
      %v1551 = vsel %vm973, %v1463, 0
      %v1554 = vsel %vm973, %v1464, 0
      %v1557 = vsel %vm973, %v1465, 0
      %v1560 = vsel %vm973, %v1466, 0
      %v1563 = vsel %vm973, %v1467, 0
      %v1566 = vsel %vm973, %v1468, 0
      %v1569 = vsel %vm973, %v1469, 0
      %v1572 = vsel %vm973, %v1470, 0
      %v1575 = vsel %vm973, %v1471, 0
      %v1578 = vsel %vm973, %v1472, 0
      %v1581 = vsel %vm973, %v1473, 0
      %v1584 = vsel %vm973, %v1474, 0
      %v1587 = vsel %vm973, %v1475, 0
      %v1590 = vsel %vm973, %v1476, 0
      %v1593 = vsel %vm973, %v1477, 0
      %v1596 = vsel %vm973, %v1478, 0
      %v1599 = vsel %vm973, %v1479, 0
      %v1602 = vsel %vm973, %v1480, 0
      %v1605 = vsel %vm973, %v1481, 0
      %v1608 = vsel %vm973, %v1482, 0
      %v1611 = vsel %vm973, %v1483, 0
      %1613 = vmatprep.subr.mxu0 0.0
      %1614 = vmatpush1.msra.mxu0 0.0
      %1615 = vmatprep.subr.mxu0 0.0
      %1616 = vmatpush1.msra.mxu0 0.0
      %1617 = vmatprep.subr.mxu0 0.0
      %1618 = vmatpush1.msra.mxu0 0.0
      %1619 = vmatprep.subr.mxu0 0.0
      %1620 = vmatpush1.msra.mxu0 0.0
      %1621 = vmatprep.subr.mxu0 0.0
      %1622 = vmatpush1.msra.mxu0 0.0
      %1623 = vmatprep.subr.mxu0 0.0
      %1624 = vmatpush1.msra.mxu0 0.0
      %1625 = vmatprep.subr.mxu0 0.0
      %1626 = vmatpush1.msra.mxu0 0.0
      %1627 = vmatprep.subr.mxu0 0.0
      %1628 = vmatpush1.msra.mxu0 0.0
      %1629 = vmatprep.subr.mxu0 %v1502
      %1630 = vmatpush1.msra.mxu0 %v1501
      %1631 = vmatprep.subr.mxu0 %v1500
      %1632 = vmatpush1.msra.mxu0 %v1499
      %1633 = vmatprep.subr.mxu0 %v1498
      %1634 = vmatpush1.msra.mxu0 %v1497
      %1635 = vmatprep.subr.mxu0 %v1496
      %1636 = vmatpush1.msra.mxu0 %v1495
      %1637 = vmatprep.subr.mxu0 %v1494
      %1638 = vmatpush1.msra.mxu0 %v1493
      %1639 = vmatprep.subr.mxu0 %v1492
      %1640 = vmatpush1.msra.mxu0 %v1491
      %1641 = vmatprep.subr.mxu0 %v1490
      %1642 = vmatpush1.msra.mxu0 %v1489
      %1643 = vmatprep.subr.mxu0 %v1488
      %1644 = vmatpush1.msra.mxu0 %v1487
      %1645 = vmatprep.subr.mxu0 0.0
      %1646 = vmatpush2.msra.mxu0 0.0
      %1647 = vmatprep.subr.mxu0 0.0
      %1648 = vmatpush2.msra.mxu0 0.0
      %1649 = vmatprep.subr.mxu0 0.0
      %1650 = vmatpush2.msra.mxu0 0.0
      %1651 = vmatprep.subr.mxu0 0.0
      %1652 = vmatpush2.msra.mxu0 0.0
      %1653 = vmatprep.subr.mxu0 0.0
      %1654 = vmatpush2.msra.mxu0 0.0
      %1655 = vmatprep.subr.mxu0 0.0
      %1656 = vmatpush2.msra.mxu0 0.0
      %1657 = vmatprep.subr.mxu0 0.0
      %1658 = vmatpush2.msra.mxu0 0.0
      %1659 = vmatprep.subr.mxu0 0.0
      %1660 = vmatpush2.msra.mxu0 0.0
      %1661 = vmatprep.subr.mxu0 0.0
      %1662 = vmatpush2.msra.mxu0 0.0
      %1663 = vmatprep.subr.mxu0 0.0
      %1664 = vmatpush2.msra.mxu0 0.0
      %1665 = vmatprep.subr.mxu0 0.0
      %1666 = vmatpush2.msra.mxu0 0.0
      %1667 = vmatprep.subr.mxu0 0.0
      %1668 = vmatpush2.msra.mxu0 0.0
      %1669 = vmatprep.subr.mxu0 0.0
      %1670 = vmatpush2.msra.mxu0 0.0
      %1671 = vmatprep.subr.mxu0 0.0
      %1672 = vmatpush2.msra.mxu0 0.0
      %1673 = vmatprep.subr.mxu0 0.0
      %1674 = vmatpush2.msra.mxu0 0.0
      %1675 = vmatprep.subr.mxu0 0.0
      %1676 = vmatpush2.msra.mxu0 0.0
      %1677 = vmatprep.mubr.f32.mxu0 0.0
      %1678 = vmatmul.mubr.f32.gmra.mxu0 %v1518
      %v1679 = vpop.f32.mrf.mxu0
      %v1680 = vadd.f32 %v1510, %v1679
      %v1681 = vpop.f32.mrf.mxu0
      %v1682 = vadd.f32 %v1514, %v1681
      %1683 = vmatprep.mubr.f32.mxu0 0.0
      %1684 = vmatmul.mubr.f32.gmra.mxu0 %v1521
      %v1685 = vpop.f32.mrf.mxu0
      %v1686 = vadd.f32 %v1510, %v1685
      %v1687 = vpop.f32.mrf.mxu0
      %v1688 = vadd.f32 %v1514, %v1687
      %1689 = vmatprep.mubr.f32.mxu0 0.0
      %1690 = vmatmul.mubr.f32.gmra.mxu0 %v1524
      %v1691 = vpop.f32.mrf.mxu0
      %v1692 = vadd.f32 %v1510, %v1691
      %v1693 = vpop.f32.mrf.mxu0
      %v1694 = vadd.f32 %v1514, %v1693
      %1695 = vmatprep.mubr.f32.mxu0 0.0
      %1696 = vmatmul.mubr.f32.gmra.mxu0 %v1527
      %v1697 = vpop.f32.mrf.mxu0
      %v1698 = vadd.f32 %v1510, %v1697
      %v1699 = vpop.f32.mrf.mxu0
      %v1700 = vadd.f32 %v1514, %v1699
      %1701 = vmatprep.mubr.f32.mxu0 0.0
      %1702 = vmatmul.mubr.f32.gmra.mxu0 %v1530
      %v1703 = vpop.f32.mrf.mxu0
      %v1704 = vadd.f32 %v1510, %v1703
      %v1705 = vpop.f32.mrf.mxu0
      %v1706 = vadd.f32 %v1514, %v1705
      %1707 = vmatprep.mubr.f32.mxu0 0.0
      %1708 = vmatmul.mubr.f32.gmra.mxu0 %v1533
      %v1709 = vpop.f32.mrf.mxu0
      %v1710 = vadd.f32 %v1510, %v1709
      %v1711 = vpop.f32.mrf.mxu0
      %v1712 = vadd.f32 %v1514, %v1711
      %1713 = vmatprep.mubr.f32.mxu0 0.0
      %1714 = vmatmul.mubr.f32.gmra.mxu0 %v1536
      %v1715 = vpop.f32.mrf.mxu0
      %v1716 = vadd.f32 %v1510, %v1715
      %v1717 = vpop.f32.mrf.mxu0
      %v1718 = vadd.f32 %v1514, %v1717
      %1719 = vmatprep.mubr.f32.mxu0 0.0
      %1720 = vmatmul.mubr.f32.gmra.mxu0 %v1539
      %v1721 = vpop.f32.mrf.mxu0
      %v1722 = vadd.f32 %v1510, %v1721
      %v1723 = vpop.f32.mrf.mxu0
      %v1724 = vadd.f32 %v1514, %v1723
      %1725 = vmatprep.mubr.f32.mxu0 0.0
      %1726 = vmatmul.mubr.f32.gmra.mxu0 %v1542
      %v1727 = vpop.f32.mrf.mxu0
      %v1728 = vadd.f32 %v1510, %v1727
      %v1729 = vpop.f32.mrf.mxu0
      %v1730 = vadd.f32 %v1514, %v1729
      %1731 = vmatprep.mubr.f32.mxu0 0.0
      %1732 = vmatmul.mubr.f32.gmra.mxu0 %v1545
      %v1733 = vpop.f32.mrf.mxu0
      %v1734 = vadd.f32 %v1510, %v1733
      %v1735 = vpop.f32.mrf.mxu0
      %v1736 = vadd.f32 %v1514, %v1735
      %1737 = vmatprep.mubr.f32.mxu0 0.0
      %1738 = vmatmul.mubr.f32.gmra.mxu0 %v1548
      %v1739 = vpop.f32.mrf.mxu0
      %v1740 = vadd.f32 %v1510, %v1739
      %v1741 = vpop.f32.mrf.mxu0
      %v1742 = vadd.f32 %v1514, %v1741
      %1743 = vmatprep.mubr.f32.mxu0 0.0
      %1744 = vmatmul.mubr.f32.gmra.mxu0 %v1551
      %v1745 = vpop.f32.mrf.mxu0
      %v1746 = vadd.f32 %v1510, %v1745
      %v1747 = vpop.f32.mrf.mxu0
      %v1748 = vadd.f32 %v1514, %v1747
      %1749 = vmatprep.mubr.f32.mxu0 0.0
      %1750 = vmatmul.mubr.f32.gmra.mxu0 %v1554
      %v1751 = vpop.f32.mrf.mxu0
      %v1752 = vadd.f32 %v1510, %v1751
      %v1753 = vpop.f32.mrf.mxu0
      %v1754 = vadd.f32 %v1514, %v1753
      %1755 = vmatprep.mubr.f32.mxu0 0.0
      %1756 = vmatmul.mubr.f32.gmra.mxu0 %v1557
      %v1757 = vpop.f32.mrf.mxu0
      %v1758 = vadd.f32 %v1510, %v1757
      %v1759 = vpop.f32.mrf.mxu0
      %v1760 = vadd.f32 %v1514, %v1759
      %1761 = vmatprep.mubr.f32.mxu0 0.0
      %1762 = vmatmul.mubr.f32.gmra.mxu0 %v1560
      %v1763 = vpop.f32.mrf.mxu0
      %v1764 = vadd.f32 %v1510, %v1763
      %v1765 = vpop.f32.mrf.mxu0
      %v1766 = vadd.f32 %v1514, %v1765
      %1767 = vmatprep.mubr.f32.mxu0 0.0
      %1768 = vmatmul.mubr.f32.gmra.mxu0 %v1563
      %v1769 = vpop.f32.mrf.mxu0
      %v1770 = vadd.f32 %v1510, %v1769
      %v1771 = vpop.f32.mrf.mxu0
      %v1772 = vadd.f32 %v1514, %v1771
      %1773 = vmatprep.mubr.f32.mxu0 0.0
      %1774 = vmatmul.mubr.f32.gmra.mxu0 %v1566
      %v1775 = vpop.f32.mrf.mxu0
      %v1776 = vadd.f32 %v1510, %v1775
      %v1777 = vpop.f32.mrf.mxu0
      %v1778 = vadd.f32 %v1514, %v1777
      %1779 = vmatprep.mubr.f32.mxu0 0.0
      %1780 = vmatmul.mubr.f32.gmra.mxu0 %v1569
      %v1781 = vpop.f32.mrf.mxu0
      %v1782 = vadd.f32 %v1510, %v1781
      %v1783 = vpop.f32.mrf.mxu0
      %v1784 = vadd.f32 %v1514, %v1783
      %1785 = vmatprep.mubr.f32.mxu0 0.0
      %1786 = vmatmul.mubr.f32.gmra.mxu0 %v1572
      %v1787 = vpop.f32.mrf.mxu0
      %v1788 = vadd.f32 %v1510, %v1787
      %v1789 = vpop.f32.mrf.mxu0
      %v1790 = vadd.f32 %v1514, %v1789
      %1791 = vmatprep.mubr.f32.mxu0 0.0
      %1792 = vmatmul.mubr.f32.gmra.mxu0 %v1575
      %v1793 = vpop.f32.mrf.mxu0
      %v1794 = vadd.f32 %v1510, %v1793
      %v1795 = vpop.f32.mrf.mxu0
      %v1796 = vadd.f32 %v1514, %v1795
      %1797 = vmatprep.mubr.f32.mxu0 0.0
      %1798 = vmatmul.mubr.f32.gmra.mxu0 %v1578
      %v1799 = vpop.f32.mrf.mxu0
      %v1800 = vadd.f32 %v1510, %v1799
      %v1801 = vpop.f32.mrf.mxu0
      %v1802 = vadd.f32 %v1514, %v1801
      %1803 = vmatprep.mubr.f32.mxu0 0.0
      %1804 = vmatmul.mubr.f32.gmra.mxu0 %v1581
      %v1805 = vpop.f32.mrf.mxu0
      %v1806 = vadd.f32 %v1510, %v1805
      %v1807 = vpop.f32.mrf.mxu0
      %v1808 = vadd.f32 %v1514, %v1807
      %1809 = vmatprep.mubr.f32.mxu0 0.0
      %1810 = vmatmul.mubr.f32.gmra.mxu0 %v1584
      %v1811 = vpop.f32.mrf.mxu0
      %v1812 = vadd.f32 %v1510, %v1811
      %v1813 = vpop.f32.mrf.mxu0
      %v1814 = vadd.f32 %v1514, %v1813
      %1815 = vmatprep.mubr.f32.mxu0 0.0
      %1816 = vmatmul.mubr.f32.gmra.mxu0 %v1587
      %v1817 = vpop.f32.mrf.mxu0
      %v1818 = vadd.f32 %v1510, %v1817
      %v1819 = vpop.f32.mrf.mxu0
      %v1820 = vadd.f32 %v1514, %v1819
      %1821 = vmatprep.mubr.f32.mxu0 0.0
      %1822 = vmatmul.mubr.f32.gmra.mxu0 %v1590
      %v1823 = vpop.f32.mrf.mxu0
      %v1824 = vadd.f32 %v1510, %v1823
      %v1825 = vpop.f32.mrf.mxu0
      %v1826 = vadd.f32 %v1514, %v1825
      %1827 = vmatprep.mubr.f32.mxu0 0.0
      %1828 = vmatmul.mubr.f32.gmra.mxu0 %v1593
      %v1829 = vpop.f32.mrf.mxu0
      %v1830 = vadd.f32 %v1510, %v1829
      %v1831 = vpop.f32.mrf.mxu0
      %v1832 = vadd.f32 %v1514, %v1831
      %1833 = vmatprep.mubr.f32.mxu0 0.0
      %1834 = vmatmul.mubr.f32.gmra.mxu0 %v1596
      %v1835 = vpop.f32.mrf.mxu0
      %v1836 = vadd.f32 %v1510, %v1835
      %v1837 = vpop.f32.mrf.mxu0
      %v1838 = vadd.f32 %v1514, %v1837
      %1839 = vmatprep.mubr.f32.mxu0 0.0
      %1840 = vmatmul.mubr.f32.gmra.mxu0 %v1599
      %v1841 = vpop.f32.mrf.mxu0
      %v1842 = vadd.f32 %v1510, %v1841
      %v1843 = vpop.f32.mrf.mxu0
      %v1844 = vadd.f32 %v1514, %v1843
      %1845 = vmatprep.mubr.f32.mxu0 0.0
      %1846 = vmatmul.mubr.f32.gmra.mxu0 %v1602
      %v1847 = vpop.f32.mrf.mxu0
      %v1848 = vadd.f32 %v1510, %v1847
      %v1849 = vpop.f32.mrf.mxu0
      %v1850 = vadd.f32 %v1514, %v1849
      %1851 = vmatprep.mubr.f32.mxu0 0.0
      %1852 = vmatmul.mubr.f32.gmra.mxu0 %v1605
      %v1853 = vpop.f32.mrf.mxu0
      %v1854 = vadd.f32 %v1510, %v1853
      %v1855 = vpop.f32.mrf.mxu0
      %v1856 = vadd.f32 %v1514, %v1855
      %1857 = vmatprep.mubr.f32.mxu0 0.0
      %1858 = vmatmul.mubr.f32.gmra.mxu0 %v1608
      %v1859 = vpop.f32.mrf.mxu0
      %v1860 = vadd.f32 %v1510, %v1859
      %v1861 = vpop.f32.mrf.mxu0
      %v1862 = vadd.f32 %v1514, %v1861
      %1863 = vmatprep.mubr.f32.mxu0 0.0
      %1864 = vmatmul.mubr.f32.gmra.mxu0 %v1611
      %v1865 = vpop.f32.mrf.mxu0
      %v1866 = vadd.f32 %v1510, %v1865
      %v1867 = vpop.f32.mrf.mxu0
      %v1868 = vadd.f32 %v1514, %v1867
      %1869 = vdwg.mxu0
      %1870 = vst [vmem:[#allocation3] sm:$0xff] %v1680
      %1871 = vst.msk [vmem:[#allocation3 + $0x8] sm:$0xff] %vm973, %v1682
      %1872 = vst [vmem:[#allocation3 + $0x10] sm:$0xff] %v1686
      %1873 = vst.msk [vmem:[#allocation3 + $0x18] sm:$0xff] %vm973, %v1688
      %1874 = vst [vmem:[#allocation3 + $0x20] sm:$0xff] %v1692
      %1875 = vst.msk [vmem:[#allocation3 + $0x28] sm:$0xff] %vm973, %v1694
      %1876 = vst [vmem:[#allocation3 + $0x30] sm:$0xff] %v1698
      %1877 = vst.msk [vmem:[#allocation3 + $0x38] sm:$0xff] %vm973, %v1700
      %1878 = vst [vmem:[#allocation3 + $0x40] sm:$0xff] %v1704
      %1879 = vst.msk [vmem:[#allocation3 + $0x48] sm:$0xff] %vm973, %v1706
      %1880 = vst [vmem:[#allocation3 + $0x50] sm:$0xff] %v1710
      %1881 = vst.msk [vmem:[#allocation3 + $0x58] sm:$0xff] %vm973, %v1712
      %1882 = vst [vmem:[#allocation3 + $0x60] sm:$0xff] %v1716
      %1883 = vst.msk [vmem:[#allocation3 + $0x68] sm:$0xff] %vm973, %v1718
      %1884 = vst [vmem:[#allocation3 + $0x70] sm:$0xff] %v1722
      %1885 = vst.msk [vmem:[#allocation3 + $0x78] sm:$0xff] %vm973, %v1724
      %1886 = vst [vmem:[#allocation3 + $0x80] sm:$0xff] %v1728
      %1887 = vst.msk [vmem:[#allocation3 + $0x88] sm:$0xff] %vm973, %v1730
      %1888 = vst [vmem:[#allocation3 + $0x90] sm:$0xff] %v1734
      %1889 = vst.msk [vmem:[#allocation3 + $0x98] sm:$0xff] %vm973, %v1736
      %1890 = vst [vmem:[#allocation3 + $0xa0] sm:$0xff] %v1740
      %1891 = vst.msk [vmem:[#allocation3 + $0xa8] sm:$0xff] %vm973, %v1742
      %1892 = vst [vmem:[#allocation3 + $0xb0] sm:$0xff] %v1746
      %1893 = vst.msk [vmem:[#allocation3 + $0xb8] sm:$0xff] %vm973, %v1748
      %1894 = vst [vmem:[#allocation3 + $0xc0] sm:$0xff] %v1752
      %1895 = vst.msk [vmem:[#allocation3 + $0xc8] sm:$0xff] %vm973, %v1754
      %1896 = vst [vmem:[#allocation3 + $0xd0] sm:$0xff] %v1758
      %1897 = vst.msk [vmem:[#allocation3 + $0xd8] sm:$0xff] %vm973, %v1760
      %1898 = vst [vmem:[#allocation3 + $0xe0] sm:$0xff] %v1764
      %1899 = vst.msk [vmem:[#allocation3 + $0xe8] sm:$0xff] %vm973, %v1766
      %1900 = vst [vmem:[#allocation3 + $0xf0] sm:$0xff] %v1770
      %1901 = vst.msk [vmem:[#allocation3 + $0xf8] sm:$0xff] %vm973, %v1772
      %1902 = vst [vmem:[#allocation3 + $0x100] sm:$0xff] %v1776
      %1903 = vst.msk [vmem:[#allocation3 + $0x108] sm:$0xff] %vm973, %v1778
      %1904 = vst [vmem:[#allocation3 + $0x110] sm:$0xff] %v1782
      %1905 = vst.msk [vmem:[#allocation3 + $0x118] sm:$0xff] %vm973, %v1784
      %1906 = vst [vmem:[#allocation3 + $0x120] sm:$0xff] %v1788
      %1907 = vst.msk [vmem:[#allocation3 + $0x128] sm:$0xff] %vm973, %v1790
      %1908 = vst [vmem:[#allocation3 + $0x130] sm:$0xff] %v1794
      %1909 = vst.msk [vmem:[#allocation3 + $0x138] sm:$0xff] %vm973, %v1796
      %1910 = vst [vmem:[#allocation3 + $0x140] sm:$0xff] %v1800
      %1911 = vst.msk [vmem:[#allocation3 + $0x148] sm:$0xff] %vm973, %v1802
      %1912 = vst [vmem:[#allocation3 + $0x150] sm:$0xff] %v1806
      %1913 = vst.msk [vmem:[#allocation3 + $0x158] sm:$0xff] %vm973, %v1808
      %1914 = vst [vmem:[#allocation3 + $0x160] sm:$0xff] %v1812
      %1915 = vst.msk [vmem:[#allocation3 + $0x168] sm:$0xff] %vm973, %v1814
      %1916 = vst [vmem:[#allocation3 + $0x170] sm:$0xff] %v1818
      %1917 = vst.msk [vmem:[#allocation3 + $0x178] sm:$0xff] %vm973, %v1820
      %1918 = vst [vmem:[#allocation3 + $0x180] sm:$0xff] %v1824
      %1919 = vst.msk [vmem:[#allocation3 + $0x188] sm:$0xff] %vm973, %v1826
      %1920 = vst [vmem:[#allocation3 + $0x190] sm:$0xff] %v1830
      %1921 = vst.msk [vmem:[#allocation3 + $0x198] sm:$0xff] %vm973, %v1832
      %1922 = vst [vmem:[#allocation3 + $0x1a0] sm:$0xff] %v1836
      %1923 = vst.msk [vmem:[#allocation3 + $0x1a8] sm:$0xff] %vm973, %v1838
      %1924 = vst [vmem:[#allocation3 + $0x1b0] sm:$0xff] %v1842
      %1925 = vst.msk [vmem:[#allocation3 + $0x1b8] sm:$0xff] %vm973, %v1844
      %1926 = vst [vmem:[#allocation3 + $0x1c0] sm:$0xff] %v1848
      %1927 = vst.msk [vmem:[#allocation3 + $0x1c8] sm:$0xff] %vm973, %v1850
      %1928 = vst [vmem:[#allocation3 + $0x1d0] sm:$0xff] %v1854
      %1929 = vst.msk [vmem:[#allocation3 + $0x1d8] sm:$0xff] %vm973, %v1856
      %1930 = vst [vmem:[#allocation3 + $0x1e0] sm:$0xff] %v1860
      %1931 = vst.msk [vmem:[#allocation3 + $0x1e8] sm:$0xff] %vm973, %v1862
      %1932 = vst [vmem:[#allocation3 + $0x1f0] sm:$0xff] %v1866
      %1933 = vst.msk [vmem:[#allocation3 + $0x1f8] sm:$0xff] %vm973, %v1868
      loop: start=0, step=1, limit=2
      $region93: #{transformer_net_forward.1} parent=87 // loop_pre_header
        _
      $region94: #{transformer_net_forward.1} parent=87 // loop_header
        %s1935 = sphi 0, %s1939
        %p1936 = scmp.ge.s32.totalorder %s1935, 2
      $region95: #{transformer_net_forward.1} parent=87 // loop_header_branch
        %1938 = sbr.rel (%p1936) target = $region99
      $region96: #{transformer_net_forward.1} parent=87 // loop_body
        %s1940 = smul.u32 %s1935, 32
        %s1941 = smul.addr %s1940, 8
        %s1942 = scalar_lea.vmem [#allocation3], %s1941
        %v1943 = vld [vmem:[%s1942] sm:$0xff]
        %v1944 = vld [vmem:[%s1942 + $0x10] sm:$0xff]
        %v1945 = vld [vmem:[%s1942 + $0x20] sm:$0xff]
        %v1946 = vld [vmem:[%s1942 + $0x30] sm:$0xff]
        %v1947 = vld [vmem:[%s1942 + $0x40] sm:$0xff]
        %v1948 = vld [vmem:[%s1942 + $0x50] sm:$0xff]
        %v1949 = vld [vmem:[%s1942 + $0x60] sm:$0xff]
        %v1950 = vld [vmem:[%s1942 + $0x70] sm:$0xff]
        %v1951 = vld [vmem:[%s1942 + $0x80] sm:$0xff]
        %v1952 = vld [vmem:[%s1942 + $0x90] sm:$0xff]
        %v1953 = vld [vmem:[%s1942 + $0xa0] sm:$0xff]
        %v1954 = vld [vmem:[%s1942 + $0xb0] sm:$0xff]
        %v1955 = vld [vmem:[%s1942 + $0xc0] sm:$0xff]
        %v1956 = vld [vmem:[%s1942 + $0xd0] sm:$0xff]
        %v1957 = vld [vmem:[%s1942 + $0xe0] sm:$0xff]
        %v1958 = vld [vmem:[%s1942 + $0xf0] sm:$0xff]
        %v1959 = vld [vmem:[%s1942 + $0x8] sm:$0xff]
        %v1960 = vld [vmem:[%s1942 + $0x18] sm:$0xff]
        %v1961 = vld [vmem:[%s1942 + $0x28] sm:$0xff]
        %v1962 = vld [vmem:[%s1942 + $0x38] sm:$0xff]
        %v1963 = vld [vmem:[%s1942 + $0x48] sm:$0xff]
        %v1964 = vld [vmem:[%s1942 + $0x58] sm:$0xff]
        %v1965 = vld [vmem:[%s1942 + $0x68] sm:$0xff]
        %v1966 = vld [vmem:[%s1942 + $0x78] sm:$0xff]
        %v1967 = vld [vmem:[%s1942 + $0x88] sm:$0xff]
        %v1968 = vld [vmem:[%s1942 + $0x98] sm:$0xff]
        %v1969 = vld [vmem:[%s1942 + $0xa8] sm:$0xff]
        %v1970 = vld [vmem:[%s1942 + $0xb8] sm:$0xff]
        %v1971 = vld [vmem:[%s1942 + $0xc8] sm:$0xff]
        %v1972 = vld [vmem:[%s1942 + $0xd8] sm:$0xff]
        %v1973 = vld [vmem:[%s1942 + $0xe8] sm:$0xff]
        %v1974 = vld [vmem:[%s1942 + $0xf8] sm:$0xff]
        %1991 = vrot.lane.b32.xlu0 %v1943, 64
        %v1992 = vpop.permute.xlu0 %1991
        %1993 = vrot.lane.b32.xlu0 %v1944, 64
        %v1994 = vpop.permute.xlu0 %1993
        %1995 = vrot.lane.b32.xlu0 %v1945, 64
        %v1996 = vpop.permute.xlu0 %1995
        %1997 = vrot.lane.b32.xlu0 %v1946, 64
        %v1998 = vpop.permute.xlu0 %1997
        %1999 = vrot.lane.b32.xlu0 %v1947, 64
        %v2000 = vpop.permute.xlu0 %1999
        %2001 = vrot.lane.b32.xlu0 %v1948, 64
        %v2002 = vpop.permute.xlu0 %2001
        %2003 = vrot.lane.b32.xlu0 %v1949, 64
        %v2004 = vpop.permute.xlu0 %2003
        %2005 = vrot.lane.b32.xlu0 %v1950, 64
        %v2006 = vpop.permute.xlu0 %2005
        %2007 = vrot.lane.b32.xlu0 %v1951, 64
        %v2008 = vpop.permute.xlu0 %2007
        %2009 = vrot.lane.b32.xlu0 %v1952, 64
        %v2010 = vpop.permute.xlu0 %2009
        %2011 = vrot.lane.b32.xlu0 %v1953, 64
        %v2012 = vpop.permute.xlu0 %2011
        %2013 = vrot.lane.b32.xlu0 %v1954, 64
        %v2014 = vpop.permute.xlu0 %2013
        %2015 = vrot.lane.b32.xlu0 %v1955, 64
        %v2016 = vpop.permute.xlu0 %2015
        %2017 = vrot.lane.b32.xlu0 %v1956, 64
        %v2018 = vpop.permute.xlu0 %2017
        %2019 = vrot.lane.b32.xlu0 %v1957, 64
        %v2020 = vpop.permute.xlu0 %2019
        %2021 = vrot.lane.b32.xlu0 %v1958, 64
        %v2022 = vpop.permute.xlu0 %2021
        %vm2023 = vcmask 64512
        %v2024 = vsel %vm2023, %v1943, 0
        %v2026 = vsel %vm2023, %v1944, 0
        %v2028 = vsel %vm2023, %v1945, 0
        %v2030 = vsel %vm2023, %v1946, 0
        %v2032 = vsel %vm2023, %v1947, 0
        %v2034 = vsel %vm2023, %v1948, 0
        %v2036 = vsel %vm2023, %v1949, 0
        %v2038 = vsel %vm2023, %v1950, 0
        %v2040 = vsel %vm2023, %v1951, 0
        %v2042 = vsel %vm2023, %v1952, 0
        %v2044 = vsel %vm2023, %v1953, 0
        %v2046 = vsel %vm2023, %v1954, 0
        %v2048 = vsel %vm2023, %v1955, 0
        %v2050 = vsel %vm2023, %v1956, 0
        %v2052 = vsel %vm2023, %v1957, 0
        %v2054 = vsel %vm2023, %v1958, 0
        %v2056 = vsel %vm2023, %v1992, 0
        %v2058 = vsel %vm2023, %v1994, 0
        %v2060 = vsel %vm2023, %v1996, 0
        %v2062 = vsel %vm2023, %v1998, 0
        %v2064 = vsel %vm2023, %v2000, 0
        %v2066 = vsel %vm2023, %v2002, 0
        %v2068 = vsel %vm2023, %v2004, 0
        %v2070 = vsel %vm2023, %v2006, 0
        %v2072 = vsel %vm2023, %v2008, 0
        %v2074 = vsel %vm2023, %v2010, 0
        %v2076 = vsel %vm2023, %v2012, 0
        %v2078 = vsel %vm2023, %v2014, 0
        %v2080 = vsel %vm2023, %v2016, 0
        %v2082 = vsel %vm2023, %v2018, 0
        %v2084 = vsel %vm2023, %v2020, 0
        %v2086 = vsel %vm2023, %v2022, 0
        %2088 = vmatprep.subr.mxu0 0.0
        %2089 = vmatpush1.xpose.msra.mxu0 %v2086
        %2090 = vmatprep.subr.mxu0 0.0
        %2091 = vmatpush1.xpose.msra.mxu0 %v2084
        %2092 = vmatprep.subr.mxu0 0.0
        %2093 = vmatpush1.xpose.msra.mxu0 %v2082
        %2094 = vmatprep.subr.mxu0 0.0
        %2095 = vmatpush1.xpose.msra.mxu0 %v2080
        %2096 = vmatprep.subr.mxu0 0.0
        %2097 = vmatpush1.xpose.msra.mxu0 %v2078
        %2098 = vmatprep.subr.mxu0 0.0
        %2099 = vmatpush1.xpose.msra.mxu0 %v2076
        %2100 = vmatprep.subr.mxu0 0.0
        %2101 = vmatpush1.xpose.msra.mxu0 %v2074
        %2102 = vmatprep.subr.mxu0 0.0
        %2103 = vmatpush1.xpose.msra.mxu0 %v2072
        %2104 = vmatprep.subr.mxu0 0.0
        %2105 = vmatpush1.xpose.msra.mxu0 %v2070
        %2106 = vmatprep.subr.mxu0 0.0
        %2107 = vmatpush1.xpose.msra.mxu0 %v2068
        %2108 = vmatprep.subr.mxu0 0.0
        %2109 = vmatpush1.xpose.msra.mxu0 %v2066
        %2110 = vmatprep.subr.mxu0 0.0
        %2111 = vmatpush1.xpose.msra.mxu0 %v2064
        %2112 = vmatprep.subr.mxu0 0.0
        %2113 = vmatpush1.xpose.msra.mxu0 %v2062
        %2114 = vmatprep.subr.mxu0 0.0
        %2115 = vmatpush1.xpose.msra.mxu0 %v2060
        %2116 = vmatprep.subr.mxu0 0.0
        %2117 = vmatpush1.xpose.msra.mxu0 %v2058
        %2118 = vmatprep.subr.mxu0 0.0
        %2119 = vmatpush1.xpose.msra.mxu0 %v2056
        %2120 = vmatprep.subr.mxu0 0.0
        %2121 = vmatpush2.xpose.msra.mxu0 0.0
        %2122 = vmatprep.subr.mxu0 0.0
        %2123 = vmatpush2.xpose.msra.mxu0 0.0
        %2124 = vmatprep.subr.mxu0 0.0
        %2125 = vmatpush2.xpose.msra.mxu0 0.0
        %2126 = vmatprep.subr.mxu0 0.0
        %2127 = vmatpush2.xpose.msra.mxu0 0.0
        %2128 = vmatprep.subr.mxu0 0.0
        %2129 = vmatpush2.xpose.msra.mxu0 0.0
        %2130 = vmatprep.subr.mxu0 0.0
        %2131 = vmatpush2.xpose.msra.mxu0 0.0
        %2132 = vmatprep.subr.mxu0 0.0
        %2133 = vmatpush2.xpose.msra.mxu0 0.0
        %2134 = vmatprep.subr.mxu0 0.0
        %2135 = vmatpush2.xpose.msra.mxu0 0.0
        %2136 = vmatprep.subr.mxu0 0.0
        %2137 = vmatpush2.xpose.msra.mxu0 0.0
        %2138 = vmatprep.subr.mxu0 0.0
        %2139 = vmatpush2.xpose.msra.mxu0 0.0
        %2140 = vmatprep.subr.mxu0 0.0
        %2141 = vmatpush2.xpose.msra.mxu0 0.0
        %2142 = vmatprep.subr.mxu0 0.0
        %2143 = vmatpush2.xpose.msra.mxu0 0.0
        %2144 = vmatprep.subr.mxu0 0.0
        %2145 = vmatpush2.xpose.msra.mxu0 0.0
        %2146 = vmatprep.subr.mxu0 0.0
        %2147 = vmatpush2.xpose.msra.mxu0 0.0
        %2148 = vmatprep.subr.mxu0 0.0
        %2149 = vmatpush2.xpose.msra.mxu0 0.0
        %2150 = vmatprep.subr.mxu0 0.0
        %2151 = vmatpush2.xpose.msra.mxu0 0.0
        %2152 = vmatprep.mubr.f32.mxu0 0.0
        %2153 = vmatmul.mubr.f32.gmra.mxu0 %v2024
        %v2154 = vpop.f32.mrf.mxu0
        %v2155 = vadd.f32 0.0, %v2154
        %v2156 = vpop.f32.mrf.mxu0
        %2157 = vmatprep.mubr.f32.mxu0 0.0
        %2158 = vmatmul.mubr.f32.gmra.mxu0 %v2026
        %v2159 = vpop.f32.mrf.mxu0
        %v2160 = vadd.f32 0.0, %v2159
        %v2161 = vpop.f32.mrf.mxu0
        %2162 = vmatprep.mubr.f32.mxu0 0.0
        %2163 = vmatmul.mubr.f32.gmra.mxu0 %v2028
        %v2164 = vpop.f32.mrf.mxu0
        %v2165 = vadd.f32 0.0, %v2164
        %v2166 = vpop.f32.mrf.mxu0
        %2167 = vmatprep.mubr.f32.mxu0 0.0
        %2168 = vmatmul.mubr.f32.gmra.mxu0 %v2030
        %v2169 = vpop.f32.mrf.mxu0
        %v2170 = vadd.f32 0.0, %v2169
        %v2171 = vpop.f32.mrf.mxu0
        %2172 = vmatprep.mubr.f32.mxu0 0.0
        %2173 = vmatmul.mubr.f32.gmra.mxu0 %v2032
        %v2174 = vpop.f32.mrf.mxu0
        %v2175 = vadd.f32 0.0, %v2174
        %v2176 = vpop.f32.mrf.mxu0
        %2177 = vmatprep.mubr.f32.mxu0 0.0
        %2178 = vmatmul.mubr.f32.gmra.mxu0 %v2034
        %v2179 = vpop.f32.mrf.mxu0
        %v2180 = vadd.f32 0.0, %v2179
        %v2181 = vpop.f32.mrf.mxu0
        %2182 = vmatprep.mubr.f32.mxu0 0.0
        %2183 = vmatmul.mubr.f32.gmra.mxu0 %v2036
        %v2184 = vpop.f32.mrf.mxu0
        %v2185 = vadd.f32 0.0, %v2184
        %v2186 = vpop.f32.mrf.mxu0
        %2187 = vmatprep.mubr.f32.mxu0 0.0
        %2188 = vmatmul.mubr.f32.gmra.mxu0 %v2038
        %v2189 = vpop.f32.mrf.mxu0
        %v2190 = vadd.f32 0.0, %v2189
        %v2191 = vpop.f32.mrf.mxu0
        %2192 = vmatprep.mubr.f32.mxu0 0.0
        %2193 = vmatmul.mubr.f32.gmra.mxu0 %v2040
        %v2194 = vpop.f32.mrf.mxu0
        %v2195 = vadd.f32 0.0, %v2194
        %v2196 = vpop.f32.mrf.mxu0
        %2197 = vmatprep.mubr.f32.mxu0 0.0
        %2198 = vmatmul.mubr.f32.gmra.mxu0 %v2042
        %v2199 = vpop.f32.mrf.mxu0
        %v2200 = vadd.f32 0.0, %v2199
        %v2201 = vpop.f32.mrf.mxu0
        %2202 = vmatprep.mubr.f32.mxu0 0.0
        %2203 = vmatmul.mubr.f32.gmra.mxu0 %v2044
        %v2204 = vpop.f32.mrf.mxu0
        %v2205 = vadd.f32 0.0, %v2204
        %v2206 = vpop.f32.mrf.mxu0
        %2207 = vmatprep.mubr.f32.mxu0 0.0
        %2208 = vmatmul.mubr.f32.gmra.mxu0 %v2046
        %v2209 = vpop.f32.mrf.mxu0
        %v2210 = vadd.f32 0.0, %v2209
        %v2211 = vpop.f32.mrf.mxu0
        %2212 = vmatprep.mubr.f32.mxu0 0.0
        %2213 = vmatmul.mubr.f32.gmra.mxu0 %v2048
        %v2214 = vpop.f32.mrf.mxu0
        %v2215 = vadd.f32 0.0, %v2214
        %v2216 = vpop.f32.mrf.mxu0
        %2217 = vmatprep.mubr.f32.mxu0 0.0
        %2218 = vmatmul.mubr.f32.gmra.mxu0 %v2050
        %v2219 = vpop.f32.mrf.mxu0
        %v2220 = vadd.f32 0.0, %v2219
        %v2221 = vpop.f32.mrf.mxu0
        %2222 = vmatprep.mubr.f32.mxu0 0.0
        %2223 = vmatmul.mubr.f32.gmra.mxu0 %v2052
        %v2224 = vpop.f32.mrf.mxu0
        %v2225 = vadd.f32 0.0, %v2224
        %v2226 = vpop.f32.mrf.mxu0
        %2227 = vmatprep.mubr.f32.mxu0 0.0
        %2228 = vmatmul.mubr.f32.gmra.mxu0 %v2054
        %v2229 = vpop.f32.mrf.mxu0
        %v2230 = vadd.f32 0.0, %v2229
        %v2231 = vpop.f32.mrf.mxu0
        %2232 = vdwg.mxu0
        %2233 = vmax.xlane.f32.xlu0 %v2155
        %v2234 = vpop.xlane.xlu0 %2233
        %2235 = vmax.xlane.f32.xlu0 %v2160
        %v2236 = vpop.xlane.xlu0 %2235
        %2237 = vmax.xlane.f32.xlu0 %v2165
        %v2238 = vpop.xlane.xlu0 %2237
        %2239 = vmax.xlane.f32.xlu0 %v2170
        %v2240 = vpop.xlane.xlu0 %2239
        %2241 = vmax.xlane.f32.xlu0 %v2175
        %v2242 = vpop.xlane.xlu0 %2241
        %2243 = vmax.xlane.f32.xlu0 %v2180
        %v2244 = vpop.xlane.xlu0 %2243
        %2245 = vmax.xlane.f32.xlu0 %v2185
        %v2246 = vpop.xlane.xlu0 %2245
        %2247 = vmax.xlane.f32.xlu0 %v2190
        %v2248 = vpop.xlane.xlu0 %2247
        %2249 = vmax.xlane.f32.xlu0 %v2195
        %v2250 = vpop.xlane.xlu0 %2249
        %2251 = vmax.xlane.f32.xlu0 %v2200
        %v2252 = vpop.xlane.xlu0 %2251
        %2253 = vmax.xlane.f32.xlu0 %v2205
        %v2254 = vpop.xlane.xlu0 %2253
        %2255 = vmax.xlane.f32.xlu0 %v2210
        %v2256 = vpop.xlane.xlu0 %2255
        %2257 = vmax.xlane.f32.xlu0 %v2215
        %v2258 = vpop.xlane.xlu0 %2257
        %2259 = vmax.xlane.f32.xlu0 %v2220
        %v2260 = vpop.xlane.xlu0 %2259
        %2261 = vmax.xlane.f32.xlu0 %v2225
        %v2262 = vpop.xlane.xlu0 %2261
        %2263 = vmax.xlane.f32.xlu0 %v2230
        %v2264 = vpop.xlane.xlu0 %2263
        %v2265 = vsub.f32 %v2155, %v2234
        %v2266 = vsub.f32 %v2160, %v2236
        %v2267 = vsub.f32 %v2165, %v2238
        %v2268 = vsub.f32 %v2170, %v2240
        %v2269 = vsub.f32 %v2175, %v2242
        %v2270 = vsub.f32 %v2180, %v2244
        %v2271 = vsub.f32 %v2185, %v2246
        %v2272 = vsub.f32 %v2190, %v2248
        %v2273 = vsub.f32 %v2195, %v2250
        %v2274 = vsub.f32 %v2200, %v2252
        %v2275 = vsub.f32 %v2205, %v2254
        %v2276 = vsub.f32 %v2210, %v2256
        %v2277 = vsub.f32 %v2215, %v2258
        %v2278 = vsub.f32 %v2220, %v2260
        %v2279 = vsub.f32 %v2225, %v2262
        %v2280 = vsub.f32 %v2230, %v2264
        %v2281 = vmul.f32 %v2265, 1.442695
        %v2282 = vpow.pop %v2281
        %v2283 = vmul.f32 %v2266, 1.442695
        %v2284 = vpow.pop %v2283
        %v2285 = vmul.f32 %v2267, 1.442695
        %v2286 = vpow.pop %v2285
        %v2287 = vmul.f32 %v2268, 1.442695
        %v2288 = vpow.pop %v2287
        %v2289 = vmul.f32 %v2269, 1.442695
        %v2290 = vpow.pop %v2289
        %v2291 = vmul.f32 %v2270, 1.442695
        %v2292 = vpow.pop %v2291
        %v2293 = vmul.f32 %v2271, 1.442695
        %v2294 = vpow.pop %v2293
        %v2295 = vmul.f32 %v2272, 1.442695
        %v2296 = vpow.pop %v2295
        %v2297 = vmul.f32 %v2273, 1.442695
        %v2298 = vpow.pop %v2297
        %v2299 = vmul.f32 %v2274, 1.442695
        %v2300 = vpow.pop %v2299
        %v2301 = vmul.f32 %v2275, 1.442695
        %v2302 = vpow.pop %v2301
        %v2303 = vmul.f32 %v2276, 1.442695
        %v2304 = vpow.pop %v2303
        %v2305 = vmul.f32 %v2277, 1.442695
        %v2306 = vpow.pop %v2305
        %v2307 = vmul.f32 %v2278, 1.442695
        %v2308 = vpow.pop %v2307
        %v2309 = vmul.f32 %v2279, 1.442695
        %v2310 = vpow.pop %v2309
        %v2311 = vmul.f32 %v2280, 1.442695
        %v2312 = vpow.pop %v2311
        %2313 = vadd.xlane.f32.xlu0 %v2282
        %v2314 = vpop.xlane.xlu0 %2313
        %2315 = vadd.xlane.f32.xlu0 %v2284
        %v2316 = vpop.xlane.xlu0 %2315
        %2317 = vadd.xlane.f32.xlu0 %v2286
        %v2318 = vpop.xlane.xlu0 %2317
        %2319 = vadd.xlane.f32.xlu0 %v2288
        %v2320 = vpop.xlane.xlu0 %2319
        %2321 = vadd.xlane.f32.xlu0 %v2290
        %v2322 = vpop.xlane.xlu0 %2321
        %2323 = vadd.xlane.f32.xlu0 %v2292
        %v2324 = vpop.xlane.xlu0 %2323
        %2325 = vadd.xlane.f32.xlu0 %v2294
        %v2326 = vpop.xlane.xlu0 %2325
        %2327 = vadd.xlane.f32.xlu0 %v2296
        %v2328 = vpop.xlane.xlu0 %2327
        %2329 = vadd.xlane.f32.xlu0 %v2298
        %v2330 = vpop.xlane.xlu0 %2329
        %2331 = vadd.xlane.f32.xlu0 %v2300
        %v2332 = vpop.xlane.xlu0 %2331
        %2333 = vadd.xlane.f32.xlu0 %v2302
        %v2334 = vpop.xlane.xlu0 %2333
        %2335 = vadd.xlane.f32.xlu0 %v2304
        %v2336 = vpop.xlane.xlu0 %2335
        %2337 = vadd.xlane.f32.xlu0 %v2306
        %v2338 = vpop.xlane.xlu0 %2337
        %2339 = vadd.xlane.f32.xlu0 %v2308
        %v2340 = vpop.xlane.xlu0 %2339
        %2341 = vadd.xlane.f32.xlu0 %v2310
        %v2342 = vpop.xlane.xlu0 %2341
        %2343 = vadd.xlane.f32.xlu0 %v2312
        %v2344 = vpop.xlane.xlu0 %2343
        %2345 = vmatprep.subr.mxu0 0.0
        %2346 = vmatpush1.msra.mxu0 %v1974
        %2347 = vmatprep.subr.mxu0 0.0
        %2348 = vmatpush1.msra.mxu0 %v1973
        %2349 = vmatprep.subr.mxu0 0.0
        %2350 = vmatpush1.msra.mxu0 %v1972
        %2351 = vmatprep.subr.mxu0 0.0
        %2352 = vmatpush1.msra.mxu0 %v1971
        %2353 = vmatprep.subr.mxu0 0.0
        %2354 = vmatpush1.msra.mxu0 %v1970
        %2355 = vmatprep.subr.mxu0 0.0
        %2356 = vmatpush1.msra.mxu0 %v1969
        %2357 = vmatprep.subr.mxu0 0.0
        %2358 = vmatpush1.msra.mxu0 %v1968
        %2359 = vmatprep.subr.mxu0 0.0
        %2360 = vmatpush1.msra.mxu0 %v1967
        %2361 = vmatprep.subr.mxu0 0.0
        %2362 = vmatpush1.msra.mxu0 %v1966
        %2363 = vmatprep.subr.mxu0 0.0
        %2364 = vmatpush1.msra.mxu0 %v1965
        %2365 = vmatprep.subr.mxu0 0.0
        %2366 = vmatpush1.msra.mxu0 %v1964
        %2367 = vmatprep.subr.mxu0 0.0
        %2368 = vmatpush1.msra.mxu0 %v1963
        %2369 = vmatprep.subr.mxu0 0.0
        %2370 = vmatpush1.msra.mxu0 %v1962
        %2371 = vmatprep.subr.mxu0 0.0
        %2372 = vmatpush1.msra.mxu0 %v1961
        %2373 = vmatprep.subr.mxu0 0.0
        %2374 = vmatpush1.msra.mxu0 %v1960
        %2375 = vmatprep.subr.mxu0 0.0
        %2376 = vmatpush1.msra.mxu0 %v1959
        %2377 = vmatprep.subr.mxu0 0.0
        %2378 = vmatpush2.msra.mxu0 0.0
        %2379 = vmatprep.subr.mxu0 0.0
        %2380 = vmatpush2.msra.mxu0 0.0
        %2381 = vmatprep.subr.mxu0 0.0
        %2382 = vmatpush2.msra.mxu0 0.0
        %2383 = vmatprep.subr.mxu0 0.0
        %2384 = vmatpush2.msra.mxu0 0.0
        %2385 = vmatprep.subr.mxu0 0.0
        %2386 = vmatpush2.msra.mxu0 0.0
        %2387 = vmatprep.subr.mxu0 0.0
        %2388 = vmatpush2.msra.mxu0 0.0
        %2389 = vmatprep.subr.mxu0 0.0
        %2390 = vmatpush2.msra.mxu0 0.0
        %2391 = vmatprep.subr.mxu0 0.0
        %2392 = vmatpush2.msra.mxu0 0.0
        %2393 = vmatprep.subr.mxu0 0.0
        %2394 = vmatpush2.msra.mxu0 0.0
        %2395 = vmatprep.subr.mxu0 0.0
        %2396 = vmatpush2.msra.mxu0 0.0
        %2397 = vmatprep.subr.mxu0 0.0
        %2398 = vmatpush2.msra.mxu0 0.0
        %2399 = vmatprep.subr.mxu0 0.0
        %2400 = vmatpush2.msra.mxu0 0.0
        %2401 = vmatprep.subr.mxu0 0.0
        %2402 = vmatpush2.msra.mxu0 0.0
        %2403 = vmatprep.subr.mxu0 0.0
        %2404 = vmatpush2.msra.mxu0 0.0
        %2405 = vmatprep.subr.mxu0 0.0
        %2406 = vmatpush2.msra.mxu0 0.0
        %2407 = vmatprep.subr.mxu0 0.0
        %2408 = vmatpush2.msra.mxu0 0.0
        %2409 = vmatprep.mubr.f32.mxu0 0.0
        %2410 = vmatmul.mubr.f32.gmra.mxu0 %v2282
        %v2411 = vpop.f32.mrf.mxu0
        %v2412 = vadd.f32 0.0, %v2411
        %v2413 = vpop.f32.mrf.mxu0
        %2414 = vmatprep.mubr.f32.mxu0 0.0
        %2415 = vmatmul.mubr.f32.gmra.mxu0 %v2284
        %v2416 = vpop.f32.mrf.mxu0
        %v2417 = vadd.f32 0.0, %v2416
        %v2418 = vpop.f32.mrf.mxu0
        %2419 = vmatprep.mubr.f32.mxu0 0.0
        %2420 = vmatmul.mubr.f32.gmra.mxu0 %v2286
        %v2421 = vpop.f32.mrf.mxu0
        %v2422 = vadd.f32 0.0, %v2421
        %v2423 = vpop.f32.mrf.mxu0
        %2424 = vmatprep.mubr.f32.mxu0 0.0
        %2425 = vmatmul.mubr.f32.gmra.mxu0 %v2288
        %v2426 = vpop.f32.mrf.mxu0
        %v2427 = vadd.f32 0.0, %v2426
        %v2428 = vpop.f32.mrf.mxu0
        %2429 = vmatprep.mubr.f32.mxu0 0.0
        %2430 = vmatmul.mubr.f32.gmra.mxu0 %v2290
        %v2431 = vpop.f32.mrf.mxu0
        %v2432 = vadd.f32 0.0, %v2431
        %v2433 = vpop.f32.mrf.mxu0
        %2434 = vmatprep.mubr.f32.mxu0 0.0
        %2435 = vmatmul.mubr.f32.gmra.mxu0 %v2292
        %v2436 = vpop.f32.mrf.mxu0
        %v2437 = vadd.f32 0.0, %v2436
        %v2438 = vpop.f32.mrf.mxu0
        %2439 = vmatprep.mubr.f32.mxu0 0.0
        %2440 = vmatmul.mubr.f32.gmra.mxu0 %v2294
        %v2441 = vpop.f32.mrf.mxu0
        %v2442 = vadd.f32 0.0, %v2441
        %v2443 = vpop.f32.mrf.mxu0
        %2444 = vmatprep.mubr.f32.mxu0 0.0
        %2445 = vmatmul.mubr.f32.gmra.mxu0 %v2296
        %v2446 = vpop.f32.mrf.mxu0
        %v2447 = vadd.f32 0.0, %v2446
        %v2448 = vpop.f32.mrf.mxu0
        %2449 = vmatprep.mubr.f32.mxu0 0.0
        %2450 = vmatmul.mubr.f32.gmra.mxu0 %v2298
        %v2451 = vpop.f32.mrf.mxu0
        %v2452 = vadd.f32 0.0, %v2451
        %v2453 = vpop.f32.mrf.mxu0
        %2454 = vmatprep.mubr.f32.mxu0 0.0
        %2455 = vmatmul.mubr.f32.gmra.mxu0 %v2300
        %v2456 = vpop.f32.mrf.mxu0
        %v2457 = vadd.f32 0.0, %v2456
        %v2458 = vpop.f32.mrf.mxu0
        %2459 = vmatprep.mubr.f32.mxu0 0.0
        %2460 = vmatmul.mubr.f32.gmra.mxu0 %v2302
        %v2461 = vpop.f32.mrf.mxu0
        %v2462 = vadd.f32 0.0, %v2461
        %v2463 = vpop.f32.mrf.mxu0
        %2464 = vmatprep.mubr.f32.mxu0 0.0
        %2465 = vmatmul.mubr.f32.gmra.mxu0 %v2304
        %v2466 = vpop.f32.mrf.mxu0
        %v2467 = vadd.f32 0.0, %v2466
        %v2468 = vpop.f32.mrf.mxu0
        %2469 = vmatprep.mubr.f32.mxu0 0.0
        %2470 = vmatmul.mubr.f32.gmra.mxu0 %v2306
        %v2471 = vpop.f32.mrf.mxu0
        %v2472 = vadd.f32 0.0, %v2471
        %v2473 = vpop.f32.mrf.mxu0
        %2474 = vmatprep.mubr.f32.mxu0 0.0
        %2475 = vmatmul.mubr.f32.gmra.mxu0 %v2308
        %v2476 = vpop.f32.mrf.mxu0
        %v2477 = vadd.f32 0.0, %v2476
        %v2478 = vpop.f32.mrf.mxu0
        %2479 = vmatprep.mubr.f32.mxu0 0.0
        %2480 = vmatmul.mubr.f32.gmra.mxu0 %v2310
        %v2481 = vpop.f32.mrf.mxu0
        %v2482 = vadd.f32 0.0, %v2481
        %v2483 = vpop.f32.mrf.mxu0
        %2484 = vmatprep.mubr.f32.mxu0 0.0
        %2485 = vmatmul.mubr.f32.gmra.mxu0 %v2312
        %v2486 = vpop.f32.mrf.mxu0
        %v2487 = vadd.f32 0.0, %v2486
        %v2488 = vpop.f32.mrf.mxu0
        %2489 = vdwg.mxu0
        %v2490 = vrcp.pop %v2314
        %v2491 = vrcp.pop %v2316
        %v2492 = vrcp.pop %v2318
        %v2493 = vrcp.pop %v2320
        %v2494 = vrcp.pop %v2322
        %v2495 = vrcp.pop %v2324
        %v2496 = vrcp.pop %v2326
        %v2497 = vrcp.pop %v2328
        %v2498 = vrcp.pop %v2330
        %v2499 = vrcp.pop %v2332
        %v2500 = vrcp.pop %v2334
        %v2501 = vrcp.pop %v2336
        %v2502 = vrcp.pop %v2338
        %v2503 = vrcp.pop %v2340
        %v2504 = vrcp.pop %v2342
        %v2505 = vrcp.pop %v2344
        %v2506 = vmul.f32 %v2412, %v2490
        %v2507 = vmul.f32 %v2417, %v2491
        %v2508 = vmul.f32 %v2422, %v2492
        %v2509 = vmul.f32 %v2427, %v2493
        %v2510 = vmul.f32 %v2432, %v2494
        %v2511 = vmul.f32 %v2437, %v2495
        %v2512 = vmul.f32 %v2442, %v2496
        %v2513 = vmul.f32 %v2447, %v2497
        %v2514 = vmul.f32 %v2452, %v2498
        %v2515 = vmul.f32 %v2457, %v2499
        %v2516 = vmul.f32 %v2462, %v2500
        %v2517 = vmul.f32 %v2467, %v2501
        %v2518 = vmul.f32 %v2472, %v2502
        %v2519 = vmul.f32 %v2477, %v2503
        %v2520 = vmul.f32 %v2482, %v2504
        %v2521 = vmul.f32 %v2487, %v2505
        %s2522 = smul.u32 %s1935, 128
        %s2523 = scalar_lea.vmem [#allocation4], %s2522
        %2524 = vst.msk [vmem:[%s2523] sm:$0xff] %vm2023, %v2506
        %2525 = vst.msk [vmem:[%s2523 + $0x8] sm:$0xff] %vm2023, %v2507
        %2526 = vst.msk [vmem:[%s2523 + $0x10] sm:$0xff] %vm2023, %v2508
        %2527 = vst.msk [vmem:[%s2523 + $0x18] sm:$0xff] %vm2023, %v2509
        %2528 = vst.msk [vmem:[%s2523 + $0x20] sm:$0xff] %vm2023, %v2510
        %2529 = vst.msk [vmem:[%s2523 + $0x28] sm:$0xff] %vm2023, %v2511
        %2530 = vst.msk [vmem:[%s2523 + $0x30] sm:$0xff] %vm2023, %v2512
        %2531 = vst.msk [vmem:[%s2523 + $0x38] sm:$0xff] %vm2023, %v2513
        %2532 = vst.msk [vmem:[%s2523 + $0x40] sm:$0xff] %vm2023, %v2514
        %2533 = vst.msk [vmem:[%s2523 + $0x48] sm:$0xff] %vm2023, %v2515
        %2534 = vst.msk [vmem:[%s2523 + $0x50] sm:$0xff] %vm2023, %v2516
        %2535 = vst.msk [vmem:[%s2523 + $0x58] sm:$0xff] %vm2023, %v2517
        %2536 = vst.msk [vmem:[%s2523 + $0x60] sm:$0xff] %vm2023, %v2518
        %2537 = vst.msk [vmem:[%s2523 + $0x68] sm:$0xff] %vm2023, %v2519
        %2538 = vst.msk [vmem:[%s2523 + $0x70] sm:$0xff] %vm2023, %v2520
        %2539 = vst.msk [vmem:[%s2523 + $0x78] sm:$0xff] %vm2023, %v2521
        %v2540 = vld [vmem:[%s1942] sm:$0xff]
        %v2541 = vld [vmem:[%s1942 + $0x10] sm:$0xff]
        %v2542 = vld [vmem:[%s1942 + $0x20] sm:$0xff]
        %v2543 = vld [vmem:[%s1942 + $0x30] sm:$0xff]
        %v2544 = vld [vmem:[%s1942 + $0x40] sm:$0xff]
        %v2545 = vld [vmem:[%s1942 + $0x50] sm:$0xff]
        %v2546 = vld [vmem:[%s1942 + $0x60] sm:$0xff]
        %v2547 = vld [vmem:[%s1942 + $0x70] sm:$0xff]
        %v2548 = vld [vmem:[%s1942 + $0x80] sm:$0xff]
        %v2549 = vld [vmem:[%s1942 + $0x90] sm:$0xff]
        %v2550 = vld [vmem:[%s1942 + $0xa0] sm:$0xff]
        %v2551 = vld [vmem:[%s1942 + $0xb0] sm:$0xff]
        %v2552 = vld [vmem:[%s1942 + $0xc0] sm:$0xff]
        %v2553 = vld [vmem:[%s1942 + $0xd0] sm:$0xff]
        %v2554 = vld [vmem:[%s1942 + $0xe0] sm:$0xff]
        %v2555 = vld [vmem:[%s1942 + $0xf0] sm:$0xff]
        %v2556 = vld [vmem:[%s1942 + $0x8] sm:$0xff]
        %v2557 = vld [vmem:[%s1942 + $0x18] sm:$0xff]
        %v2558 = vld [vmem:[%s1942 + $0x28] sm:$0xff]
        %v2559 = vld [vmem:[%s1942 + $0x38] sm:$0xff]
        %v2560 = vld [vmem:[%s1942 + $0x48] sm:$0xff]
        %v2561 = vld [vmem:[%s1942 + $0x58] sm:$0xff]
        %v2562 = vld [vmem:[%s1942 + $0x68] sm:$0xff]
        %v2563 = vld [vmem:[%s1942 + $0x78] sm:$0xff]
        %v2564 = vld [vmem:[%s1942 + $0x88] sm:$0xff]
        %v2565 = vld [vmem:[%s1942 + $0x98] sm:$0xff]
        %v2566 = vld [vmem:[%s1942 + $0xa8] sm:$0xff]
        %v2567 = vld [vmem:[%s1942 + $0xb8] sm:$0xff]
        %v2568 = vld [vmem:[%s1942 + $0xc8] sm:$0xff]
        %v2569 = vld [vmem:[%s1942 + $0xd8] sm:$0xff]
        %v2570 = vld [vmem:[%s1942 + $0xe8] sm:$0xff]
        %v2571 = vld [vmem:[%s1942 + $0xf8] sm:$0xff]
        %2588 = vrot.lane.b32.xlu0 %v2540, 120
        %v2589 = vpop.permute.xlu0 %2588
        %2590 = vrot.lane.b32.xlu0 %v2541, 120
        %v2591 = vpop.permute.xlu0 %2590
        %2592 = vrot.lane.b32.xlu0 %v2542, 120
        %v2593 = vpop.permute.xlu0 %2592
        %2594 = vrot.lane.b32.xlu0 %v2543, 120
        %v2595 = vpop.permute.xlu0 %2594
        %2596 = vrot.lane.b32.xlu0 %v2544, 120
        %v2597 = vpop.permute.xlu0 %2596
        %2598 = vrot.lane.b32.xlu0 %v2545, 120
        %v2599 = vpop.permute.xlu0 %2598
        %2600 = vrot.lane.b32.xlu0 %v2546, 120
        %v2601 = vpop.permute.xlu0 %2600
        %2602 = vrot.lane.b32.xlu0 %v2547, 120
        %v2603 = vpop.permute.xlu0 %2602
        %2604 = vrot.lane.b32.xlu0 %v2548, 120
        %v2605 = vpop.permute.xlu0 %2604
        %2606 = vrot.lane.b32.xlu0 %v2549, 120
        %v2607 = vpop.permute.xlu0 %2606
        %2608 = vrot.lane.b32.xlu0 %v2550, 120
        %v2609 = vpop.permute.xlu0 %2608
        %2610 = vrot.lane.b32.xlu0 %v2551, 120
        %v2611 = vpop.permute.xlu0 %2610
        %2612 = vrot.lane.b32.xlu0 %v2552, 120
        %v2613 = vpop.permute.xlu0 %2612
        %2614 = vrot.lane.b32.xlu0 %v2553, 120
        %v2615 = vpop.permute.xlu0 %2614
        %2616 = vrot.lane.b32.xlu0 %v2554, 120
        %v2617 = vpop.permute.xlu0 %2616
        %2618 = vrot.lane.b32.xlu0 %v2555, 120
        %v2619 = vpop.permute.xlu0 %2618
        %2620 = vrot.lane.b32.xlu0 %v2540, 56
        %v2621 = vpop.permute.xlu0 %2620
        %2622 = vrot.lane.b32.xlu0 %v2541, 56
        %v2623 = vpop.permute.xlu0 %2622
        %2624 = vrot.lane.b32.xlu0 %v2542, 56
        %v2625 = vpop.permute.xlu0 %2624
        %2626 = vrot.lane.b32.xlu0 %v2543, 56
        %v2627 = vpop.permute.xlu0 %2626
        %2628 = vrot.lane.b32.xlu0 %v2544, 56
        %v2629 = vpop.permute.xlu0 %2628
        %2630 = vrot.lane.b32.xlu0 %v2545, 56
        %v2631 = vpop.permute.xlu0 %2630
        %2632 = vrot.lane.b32.xlu0 %v2546, 56
        %v2633 = vpop.permute.xlu0 %2632
        %2634 = vrot.lane.b32.xlu0 %v2547, 56
        %v2635 = vpop.permute.xlu0 %2634
        %2636 = vrot.lane.b32.xlu0 %v2548, 56
        %v2637 = vpop.permute.xlu0 %2636
        %2638 = vrot.lane.b32.xlu0 %v2549, 56
        %v2639 = vpop.permute.xlu0 %2638
        %2640 = vrot.lane.b32.xlu0 %v2550, 56
        %v2641 = vpop.permute.xlu0 %2640
        %2642 = vrot.lane.b32.xlu0 %v2551, 56
        %v2643 = vpop.permute.xlu0 %2642
        %2644 = vrot.lane.b32.xlu0 %v2552, 56
        %v2645 = vpop.permute.xlu0 %2644
        %2646 = vrot.lane.b32.xlu0 %v2553, 56
        %v2647 = vpop.permute.xlu0 %2646
        %2648 = vrot.lane.b32.xlu0 %v2554, 56
        %v2649 = vpop.permute.xlu0 %2648
        %2650 = vrot.lane.b32.xlu0 %v2555, 56
        %v2651 = vpop.permute.xlu0 %2650
        %v2652 = vsel %vm2023, %v2589, 0
        %v2654 = vsel %vm2023, %v2591, 0
        %v2656 = vsel %vm2023, %v2593, 0
        %v2658 = vsel %vm2023, %v2595, 0
        %v2660 = vsel %vm2023, %v2597, 0
        %v2662 = vsel %vm2023, %v2599, 0
        %v2664 = vsel %vm2023, %v2601, 0
        %v2666 = vsel %vm2023, %v2603, 0
        %v2668 = vsel %vm2023, %v2605, 0
        %v2670 = vsel %vm2023, %v2607, 0
        %v2672 = vsel %vm2023, %v2609, 0
        %v2674 = vsel %vm2023, %v2611, 0
        %v2676 = vsel %vm2023, %v2613, 0
        %v2678 = vsel %vm2023, %v2615, 0
        %v2680 = vsel %vm2023, %v2617, 0
        %v2682 = vsel %vm2023, %v2619, 0
        %v2684 = vsel %vm2023, %v2621, 0
        %v2686 = vsel %vm2023, %v2623, 0
        %v2688 = vsel %vm2023, %v2625, 0
        %v2690 = vsel %vm2023, %v2627, 0
        %v2692 = vsel %vm2023, %v2629, 0
        %v2694 = vsel %vm2023, %v2631, 0
        %v2696 = vsel %vm2023, %v2633, 0
        %v2698 = vsel %vm2023, %v2635, 0
        %v2700 = vsel %vm2023, %v2637, 0
        %v2702 = vsel %vm2023, %v2639, 0
        %v2704 = vsel %vm2023, %v2641, 0
        %v2706 = vsel %vm2023, %v2643, 0
        %v2708 = vsel %vm2023, %v2645, 0
        %v2710 = vsel %vm2023, %v2647, 0
        %v2712 = vsel %vm2023, %v2649, 0
        %v2714 = vsel %vm2023, %v2651, 0
        %2716 = vmatprep.subr.mxu0 0.0
        %2717 = vmatpush1.xpose.msra.mxu0 %v2714
        %2718 = vmatprep.subr.mxu0 0.0
        %2719 = vmatpush1.xpose.msra.mxu0 %v2712
        %2720 = vmatprep.subr.mxu0 0.0
        %2721 = vmatpush1.xpose.msra.mxu0 %v2710
        %2722 = vmatprep.subr.mxu0 0.0
        %2723 = vmatpush1.xpose.msra.mxu0 %v2708
        %2724 = vmatprep.subr.mxu0 0.0
        %2725 = vmatpush1.xpose.msra.mxu0 %v2706
        %2726 = vmatprep.subr.mxu0 0.0
        %2727 = vmatpush1.xpose.msra.mxu0 %v2704
        %2728 = vmatprep.subr.mxu0 0.0
        %2729 = vmatpush1.xpose.msra.mxu0 %v2702
        %2730 = vmatprep.subr.mxu0 0.0
        %2731 = vmatpush1.xpose.msra.mxu0 %v2700
        %2732 = vmatprep.subr.mxu0 0.0
        %2733 = vmatpush1.xpose.msra.mxu0 %v2698
        %2734 = vmatprep.subr.mxu0 0.0
        %2735 = vmatpush1.xpose.msra.mxu0 %v2696
        %2736 = vmatprep.subr.mxu0 0.0
        %2737 = vmatpush1.xpose.msra.mxu0 %v2694
        %2738 = vmatprep.subr.mxu0 0.0
        %2739 = vmatpush1.xpose.msra.mxu0 %v2692
        %2740 = vmatprep.subr.mxu0 0.0
        %2741 = vmatpush1.xpose.msra.mxu0 %v2690
        %2742 = vmatprep.subr.mxu0 0.0
        %2743 = vmatpush1.xpose.msra.mxu0 %v2688
        %2744 = vmatprep.subr.mxu0 0.0
        %2745 = vmatpush1.xpose.msra.mxu0 %v2686
        %2746 = vmatprep.subr.mxu0 0.0
        %2747 = vmatpush1.xpose.msra.mxu0 %v2684
        %2748 = vmatprep.subr.mxu0 0.0
        %2749 = vmatpush2.xpose.msra.mxu0 0.0
        %2750 = vmatprep.subr.mxu0 0.0
        %2751 = vmatpush2.xpose.msra.mxu0 0.0
        %2752 = vmatprep.subr.mxu0 0.0
        %2753 = vmatpush2.xpose.msra.mxu0 0.0
        %2754 = vmatprep.subr.mxu0 0.0
        %2755 = vmatpush2.xpose.msra.mxu0 0.0
        %2756 = vmatprep.subr.mxu0 0.0
        %2757 = vmatpush2.xpose.msra.mxu0 0.0
        %2758 = vmatprep.subr.mxu0 0.0
        %2759 = vmatpush2.xpose.msra.mxu0 0.0
        %2760 = vmatprep.subr.mxu0 0.0
        %2761 = vmatpush2.xpose.msra.mxu0 0.0
        %2762 = vmatprep.subr.mxu0 0.0
        %2763 = vmatpush2.xpose.msra.mxu0 0.0
        %2764 = vmatprep.subr.mxu0 0.0
        %2765 = vmatpush2.xpose.msra.mxu0 0.0
        %2766 = vmatprep.subr.mxu0 0.0
        %2767 = vmatpush2.xpose.msra.mxu0 0.0
        %2768 = vmatprep.subr.mxu0 0.0
        %2769 = vmatpush2.xpose.msra.mxu0 0.0
        %2770 = vmatprep.subr.mxu0 0.0
        %2771 = vmatpush2.xpose.msra.mxu0 0.0
        %2772 = vmatprep.subr.mxu0 0.0
        %2773 = vmatpush2.xpose.msra.mxu0 0.0
        %2774 = vmatprep.subr.mxu0 0.0
        %2775 = vmatpush2.xpose.msra.mxu0 0.0
        %2776 = vmatprep.subr.mxu0 0.0
        %2777 = vmatpush2.xpose.msra.mxu0 0.0
        %2778 = vmatprep.subr.mxu0 0.0
        %2779 = vmatpush2.xpose.msra.mxu0 0.0
        %2780 = vmatprep.mubr.f32.mxu0 0.0
        %2781 = vmatmul.mubr.f32.gmra.mxu0 %v2652
        %v2782 = vpop.f32.mrf.mxu0
        %v2783 = vadd.f32 0.0, %v2782
        %v2784 = vpop.f32.mrf.mxu0
        %2785 = vmatprep.mubr.f32.mxu0 0.0
        %2786 = vmatmul.mubr.f32.gmra.mxu0 %v2654
        %v2787 = vpop.f32.mrf.mxu0
        %v2788 = vadd.f32 0.0, %v2787
        %v2789 = vpop.f32.mrf.mxu0
        %2790 = vmatprep.mubr.f32.mxu0 0.0
        %2791 = vmatmul.mubr.f32.gmra.mxu0 %v2656
        %v2792 = vpop.f32.mrf.mxu0
        %v2793 = vadd.f32 0.0, %v2792
        %v2794 = vpop.f32.mrf.mxu0
        %2795 = vmatprep.mubr.f32.mxu0 0.0
        %2796 = vmatmul.mubr.f32.gmra.mxu0 %v2658
        %v2797 = vpop.f32.mrf.mxu0
        %v2798 = vadd.f32 0.0, %v2797
        %v2799 = vpop.f32.mrf.mxu0
        %2800 = vmatprep.mubr.f32.mxu0 0.0
        %2801 = vmatmul.mubr.f32.gmra.mxu0 %v2660
        %v2802 = vpop.f32.mrf.mxu0
        %v2803 = vadd.f32 0.0, %v2802
        %v2804 = vpop.f32.mrf.mxu0
        %2805 = vmatprep.mubr.f32.mxu0 0.0
        %2806 = vmatmul.mubr.f32.gmra.mxu0 %v2662
        %v2807 = vpop.f32.mrf.mxu0
        %v2808 = vadd.f32 0.0, %v2807
        %v2809 = vpop.f32.mrf.mxu0
        %2810 = vmatprep.mubr.f32.mxu0 0.0
        %2811 = vmatmul.mubr.f32.gmra.mxu0 %v2664
        %v2812 = vpop.f32.mrf.mxu0
        %v2813 = vadd.f32 0.0, %v2812
        %v2814 = vpop.f32.mrf.mxu0
        %2815 = vmatprep.mubr.f32.mxu0 0.0
        %2816 = vmatmul.mubr.f32.gmra.mxu0 %v2666
        %v2817 = vpop.f32.mrf.mxu0
        %v2818 = vadd.f32 0.0, %v2817
        %v2819 = vpop.f32.mrf.mxu0
        %2820 = vmatprep.mubr.f32.mxu0 0.0
        %2821 = vmatmul.mubr.f32.gmra.mxu0 %v2668
        %v2822 = vpop.f32.mrf.mxu0
        %v2823 = vadd.f32 0.0, %v2822
        %v2824 = vpop.f32.mrf.mxu0
        %2825 = vmatprep.mubr.f32.mxu0 0.0
        %2826 = vmatmul.mubr.f32.gmra.mxu0 %v2670
        %v2827 = vpop.f32.mrf.mxu0
        %v2828 = vadd.f32 0.0, %v2827
        %v2829 = vpop.f32.mrf.mxu0
        %2830 = vmatprep.mubr.f32.mxu0 0.0
        %2831 = vmatmul.mubr.f32.gmra.mxu0 %v2672
        %v2832 = vpop.f32.mrf.mxu0
        %v2833 = vadd.f32 0.0, %v2832
        %v2834 = vpop.f32.mrf.mxu0
        %2835 = vmatprep.mubr.f32.mxu0 0.0
        %2836 = vmatmul.mubr.f32.gmra.mxu0 %v2674
        %v2837 = vpop.f32.mrf.mxu0
        %v2838 = vadd.f32 0.0, %v2837
        %v2839 = vpop.f32.mrf.mxu0
        %2840 = vmatprep.mubr.f32.mxu0 0.0
        %2841 = vmatmul.mubr.f32.gmra.mxu0 %v2676
        %v2842 = vpop.f32.mrf.mxu0
        %v2843 = vadd.f32 0.0, %v2842
        %v2844 = vpop.f32.mrf.mxu0
        %2845 = vmatprep.mubr.f32.mxu0 0.0
        %2846 = vmatmul.mubr.f32.gmra.mxu0 %v2678
        %v2847 = vpop.f32.mrf.mxu0
        %v2848 = vadd.f32 0.0, %v2847
        %v2849 = vpop.f32.mrf.mxu0
        %2850 = vmatprep.mubr.f32.mxu0 0.0
        %2851 = vmatmul.mubr.f32.gmra.mxu0 %v2680
        %v2852 = vpop.f32.mrf.mxu0
        %v2853 = vadd.f32 0.0, %v2852
        %v2854 = vpop.f32.mrf.mxu0
        %2855 = vmatprep.mubr.f32.mxu0 0.0
        %2856 = vmatmul.mubr.f32.gmra.mxu0 %v2682
        %v2857 = vpop.f32.mrf.mxu0
        %v2858 = vadd.f32 0.0, %v2857
        %v2859 = vpop.f32.mrf.mxu0
        %2860 = vdwg.mxu0
        %2861 = vmax.xlane.f32.xlu0 %v2783
        %v2862 = vpop.xlane.xlu0 %2861
        %2863 = vmax.xlane.f32.xlu0 %v2788
        %v2864 = vpop.xlane.xlu0 %2863
        %2865 = vmax.xlane.f32.xlu0 %v2793
        %v2866 = vpop.xlane.xlu0 %2865
        %2867 = vmax.xlane.f32.xlu0 %v2798
        %v2868 = vpop.xlane.xlu0 %2867
        %2869 = vmax.xlane.f32.xlu0 %v2803
        %v2870 = vpop.xlane.xlu0 %2869
        %2871 = vmax.xlane.f32.xlu0 %v2808
        %v2872 = vpop.xlane.xlu0 %2871
        %2873 = vmax.xlane.f32.xlu0 %v2813
        %v2874 = vpop.xlane.xlu0 %2873
        %2875 = vmax.xlane.f32.xlu0 %v2818
        %v2876 = vpop.xlane.xlu0 %2875
        %2877 = vmax.xlane.f32.xlu0 %v2823
        %v2878 = vpop.xlane.xlu0 %2877
        %2879 = vmax.xlane.f32.xlu0 %v2828
        %v2880 = vpop.xlane.xlu0 %2879
        %2881 = vmax.xlane.f32.xlu0 %v2833
        %v2882 = vpop.xlane.xlu0 %2881
        %2883 = vmax.xlane.f32.xlu0 %v2838
        %v2884 = vpop.xlane.xlu0 %2883
        %2885 = vmax.xlane.f32.xlu0 %v2843
        %v2886 = vpop.xlane.xlu0 %2885
        %2887 = vmax.xlane.f32.xlu0 %v2848
        %v2888 = vpop.xlane.xlu0 %2887
        %2889 = vmax.xlane.f32.xlu0 %v2853
        %v2890 = vpop.xlane.xlu0 %2889
        %2891 = vmax.xlane.f32.xlu0 %v2858
        %v2892 = vpop.xlane.xlu0 %2891
        %v2893 = vsub.f32 %v2783, %v2862
        %v2894 = vsub.f32 %v2788, %v2864
        %v2895 = vsub.f32 %v2793, %v2866
        %v2896 = vsub.f32 %v2798, %v2868
        %v2897 = vsub.f32 %v2803, %v2870
        %v2898 = vsub.f32 %v2808, %v2872
        %v2899 = vsub.f32 %v2813, %v2874
        %v2900 = vsub.f32 %v2818, %v2876
        %v2901 = vsub.f32 %v2823, %v2878
        %v2902 = vsub.f32 %v2828, %v2880
        %v2903 = vsub.f32 %v2833, %v2882
        %v2904 = vsub.f32 %v2838, %v2884
        %v2905 = vsub.f32 %v2843, %v2886
        %v2906 = vsub.f32 %v2848, %v2888
        %v2907 = vsub.f32 %v2853, %v2890
        %v2908 = vsub.f32 %v2858, %v2892
        %v2909 = vmul.f32 %v2893, 1.442695
        %v2910 = vpow.pop %v2909
        %v2911 = vmul.f32 %v2894, 1.442695
        %v2912 = vpow.pop %v2911
        %v2913 = vmul.f32 %v2895, 1.442695
        %v2914 = vpow.pop %v2913
        %v2915 = vmul.f32 %v2896, 1.442695
        %v2916 = vpow.pop %v2915
        %v2917 = vmul.f32 %v2897, 1.442695
        %v2918 = vpow.pop %v2917
        %v2919 = vmul.f32 %v2898, 1.442695
        %v2920 = vpow.pop %v2919
        %v2921 = vmul.f32 %v2899, 1.442695
        %v2922 = vpow.pop %v2921
        %v2923 = vmul.f32 %v2900, 1.442695
        %v2924 = vpow.pop %v2923
        %v2925 = vmul.f32 %v2901, 1.442695
        %v2926 = vpow.pop %v2925
        %v2927 = vmul.f32 %v2902, 1.442695
        %v2928 = vpow.pop %v2927
        %v2929 = vmul.f32 %v2903, 1.442695
        %v2930 = vpow.pop %v2929
        %v2931 = vmul.f32 %v2904, 1.442695
        %v2932 = vpow.pop %v2931
        %v2933 = vmul.f32 %v2905, 1.442695
        %v2934 = vpow.pop %v2933
        %v2935 = vmul.f32 %v2906, 1.442695
        %v2936 = vpow.pop %v2935
        %v2937 = vmul.f32 %v2907, 1.442695
        %v2938 = vpow.pop %v2937
        %v2939 = vmul.f32 %v2908, 1.442695
        %v2940 = vpow.pop %v2939
        %2941 = vadd.xlane.f32.xlu0 %v2910
        %v2942 = vpop.xlane.xlu0 %2941
        %2943 = vadd.xlane.f32.xlu0 %v2912
        %v2944 = vpop.xlane.xlu0 %2943
        %2945 = vadd.xlane.f32.xlu0 %v2914
        %v2946 = vpop.xlane.xlu0 %2945
        %2947 = vadd.xlane.f32.xlu0 %v2916
        %v2948 = vpop.xlane.xlu0 %2947
        %2949 = vadd.xlane.f32.xlu0 %v2918
        %v2950 = vpop.xlane.xlu0 %2949
        %2951 = vadd.xlane.f32.xlu0 %v2920
        %v2952 = vpop.xlane.xlu0 %2951
        %2953 = vadd.xlane.f32.xlu0 %v2922
        %v2954 = vpop.xlane.xlu0 %2953
        %2955 = vadd.xlane.f32.xlu0 %v2924
        %v2956 = vpop.xlane.xlu0 %2955
        %2957 = vadd.xlane.f32.xlu0 %v2926
        %v2958 = vpop.xlane.xlu0 %2957
        %2959 = vadd.xlane.f32.xlu0 %v2928
        %v2960 = vpop.xlane.xlu0 %2959
        %2961 = vadd.xlane.f32.xlu0 %v2930
        %v2962 = vpop.xlane.xlu0 %2961
        %2963 = vadd.xlane.f32.xlu0 %v2932
        %v2964 = vpop.xlane.xlu0 %2963
        %2965 = vadd.xlane.f32.xlu0 %v2934
        %v2966 = vpop.xlane.xlu0 %2965
        %2967 = vadd.xlane.f32.xlu0 %v2936
        %v2968 = vpop.xlane.xlu0 %2967
        %2969 = vadd.xlane.f32.xlu0 %v2938
        %v2970 = vpop.xlane.xlu0 %2969
        %2971 = vadd.xlane.f32.xlu0 %v2940
        %v2972 = vpop.xlane.xlu0 %2971
        %2989 = vrot.lane.b32.xlu0 %v2556, 120
        %v2990 = vpop.permute.xlu0 %2989
        %2991 = vrot.lane.b32.xlu0 %v2557, 120
        %v2992 = vpop.permute.xlu0 %2991
        %2993 = vrot.lane.b32.xlu0 %v2558, 120
        %v2994 = vpop.permute.xlu0 %2993
        %2995 = vrot.lane.b32.xlu0 %v2559, 120
        %v2996 = vpop.permute.xlu0 %2995
        %2997 = vrot.lane.b32.xlu0 %v2560, 120
        %v2998 = vpop.permute.xlu0 %2997
        %2999 = vrot.lane.b32.xlu0 %v2561, 120
        %v3000 = vpop.permute.xlu0 %2999
        %3001 = vrot.lane.b32.xlu0 %v2562, 120
        %v3002 = vpop.permute.xlu0 %3001
        %3003 = vrot.lane.b32.xlu0 %v2563, 120
        %v3004 = vpop.permute.xlu0 %3003
        %3005 = vrot.lane.b32.xlu0 %v2564, 120
        %v3006 = vpop.permute.xlu0 %3005
        %3007 = vrot.lane.b32.xlu0 %v2565, 120
        %v3008 = vpop.permute.xlu0 %3007
        %3009 = vrot.lane.b32.xlu0 %v2566, 120
        %v3010 = vpop.permute.xlu0 %3009
        %3011 = vrot.lane.b32.xlu0 %v2567, 120
        %v3012 = vpop.permute.xlu0 %3011
        %3013 = vrot.lane.b32.xlu0 %v2568, 120
        %v3014 = vpop.permute.xlu0 %3013
        %3015 = vrot.lane.b32.xlu0 %v2569, 120
        %v3016 = vpop.permute.xlu0 %3015
        %3017 = vrot.lane.b32.xlu0 %v2570, 120
        %v3018 = vpop.permute.xlu0 %3017
        %3019 = vrot.lane.b32.xlu0 %v2571, 120
        %v3020 = vpop.permute.xlu0 %3019
        %3037 = vmatprep.subr.mxu0 0.0
        %3038 = vmatpush1.msra.mxu0 %v3020
        %3039 = vmatprep.subr.mxu0 0.0
        %3040 = vmatpush1.msra.mxu0 %v3018
        %3041 = vmatprep.subr.mxu0 0.0
        %3042 = vmatpush1.msra.mxu0 %v3016
        %3043 = vmatprep.subr.mxu0 0.0
        %3044 = vmatpush1.msra.mxu0 %v3014
        %3045 = vmatprep.subr.mxu0 0.0
        %3046 = vmatpush1.msra.mxu0 %v3012
        %3047 = vmatprep.subr.mxu0 0.0
        %3048 = vmatpush1.msra.mxu0 %v3010
        %3049 = vmatprep.subr.mxu0 0.0
        %3050 = vmatpush1.msra.mxu0 %v3008
        %3051 = vmatprep.subr.mxu0 0.0
        %3052 = vmatpush1.msra.mxu0 %v3006
        %3053 = vmatprep.subr.mxu0 0.0
        %3054 = vmatpush1.msra.mxu0 %v3004
        %3055 = vmatprep.subr.mxu0 0.0
        %3056 = vmatpush1.msra.mxu0 %v3002
        %3057 = vmatprep.subr.mxu0 0.0
        %3058 = vmatpush1.msra.mxu0 %v3000
        %3059 = vmatprep.subr.mxu0 0.0
        %3060 = vmatpush1.msra.mxu0 %v2998
        %3061 = vmatprep.subr.mxu0 0.0
        %3062 = vmatpush1.msra.mxu0 %v2996
        %3063 = vmatprep.subr.mxu0 0.0
        %3064 = vmatpush1.msra.mxu0 %v2994
        %3065 = vmatprep.subr.mxu0 0.0
        %3066 = vmatpush1.msra.mxu0 %v2992
        %3067 = vmatprep.subr.mxu0 0.0
        %3068 = vmatpush1.msra.mxu0 %v2990
        %3069 = vmatprep.subr.mxu0 0.0
        %3070 = vmatpush2.msra.mxu0 0.0
        %3071 = vmatprep.subr.mxu0 0.0
        %3072 = vmatpush2.msra.mxu0 0.0
        %3073 = vmatprep.subr.mxu0 0.0
        %3074 = vmatpush2.msra.mxu0 0.0
        %3075 = vmatprep.subr.mxu0 0.0
        %3076 = vmatpush2.msra.mxu0 0.0
        %3077 = vmatprep.subr.mxu0 0.0
        %3078 = vmatpush2.msra.mxu0 0.0
        %3079 = vmatprep.subr.mxu0 0.0
        %3080 = vmatpush2.msra.mxu0 0.0
        %3081 = vmatprep.subr.mxu0 0.0
        %3082 = vmatpush2.msra.mxu0 0.0
        %3083 = vmatprep.subr.mxu0 0.0
        %3084 = vmatpush2.msra.mxu0 0.0
        %3085 = vmatprep.subr.mxu0 0.0
        %3086 = vmatpush2.msra.mxu0 0.0
        %3087 = vmatprep.subr.mxu0 0.0
        %3088 = vmatpush2.msra.mxu0 0.0
        %3089 = vmatprep.subr.mxu0 0.0
        %3090 = vmatpush2.msra.mxu0 0.0
        %3091 = vmatprep.subr.mxu0 0.0
        %3092 = vmatpush2.msra.mxu0 0.0
        %3093 = vmatprep.subr.mxu0 0.0
        %3094 = vmatpush2.msra.mxu0 0.0
        %3095 = vmatprep.subr.mxu0 0.0
        %3096 = vmatpush2.msra.mxu0 0.0
        %3097 = vmatprep.subr.mxu0 0.0
        %3098 = vmatpush2.msra.mxu0 0.0
        %3099 = vmatprep.subr.mxu0 0.0
        %3100 = vmatpush2.msra.mxu0 0.0
        %3101 = vmatprep.mubr.f32.mxu0 0.0
        %3102 = vmatmul.mubr.f32.gmra.mxu0 %v2910
        %v3103 = vpop.f32.mrf.mxu0
        %v3104 = vadd.f32 0.0, %v3103
        %v3105 = vpop.f32.mrf.mxu0
        %3106 = vmatprep.mubr.f32.mxu0 0.0
        %3107 = vmatmul.mubr.f32.gmra.mxu0 %v2912
        %v3108 = vpop.f32.mrf.mxu0
        %v3109 = vadd.f32 0.0, %v3108
        %v3110 = vpop.f32.mrf.mxu0
        %3111 = vmatprep.mubr.f32.mxu0 0.0
        %3112 = vmatmul.mubr.f32.gmra.mxu0 %v2914
        %v3113 = vpop.f32.mrf.mxu0
        %v3114 = vadd.f32 0.0, %v3113
        %v3115 = vpop.f32.mrf.mxu0
        %3116 = vmatprep.mubr.f32.mxu0 0.0
        %3117 = vmatmul.mubr.f32.gmra.mxu0 %v2916
        %v3118 = vpop.f32.mrf.mxu0
        %v3119 = vadd.f32 0.0, %v3118
        %v3120 = vpop.f32.mrf.mxu0
        %3121 = vmatprep.mubr.f32.mxu0 0.0
        %3122 = vmatmul.mubr.f32.gmra.mxu0 %v2918
        %v3123 = vpop.f32.mrf.mxu0
        %v3124 = vadd.f32 0.0, %v3123
        %v3125 = vpop.f32.mrf.mxu0
        %3126 = vmatprep.mubr.f32.mxu0 0.0
        %3127 = vmatmul.mubr.f32.gmra.mxu0 %v2920
        %v3128 = vpop.f32.mrf.mxu0
        %v3129 = vadd.f32 0.0, %v3128
        %v3130 = vpop.f32.mrf.mxu0
        %3131 = vmatprep.mubr.f32.mxu0 0.0
        %3132 = vmatmul.mubr.f32.gmra.mxu0 %v2922
        %v3133 = vpop.f32.mrf.mxu0
        %v3134 = vadd.f32 0.0, %v3133
        %v3135 = vpop.f32.mrf.mxu0
        %3136 = vmatprep.mubr.f32.mxu0 0.0
        %3137 = vmatmul.mubr.f32.gmra.mxu0 %v2924
        %v3138 = vpop.f32.mrf.mxu0
        %v3139 = vadd.f32 0.0, %v3138
        %v3140 = vpop.f32.mrf.mxu0
        %3141 = vmatprep.mubr.f32.mxu0 0.0
        %3142 = vmatmul.mubr.f32.gmra.mxu0 %v2926
        %v3143 = vpop.f32.mrf.mxu0
        %v3144 = vadd.f32 0.0, %v3143
        %v3145 = vpop.f32.mrf.mxu0
        %3146 = vmatprep.mubr.f32.mxu0 0.0
        %3147 = vmatmul.mubr.f32.gmra.mxu0 %v2928
        %v3148 = vpop.f32.mrf.mxu0
        %v3149 = vadd.f32 0.0, %v3148
        %v3150 = vpop.f32.mrf.mxu0
        %3151 = vmatprep.mubr.f32.mxu0 0.0
        %3152 = vmatmul.mubr.f32.gmra.mxu0 %v2930
        %v3153 = vpop.f32.mrf.mxu0
        %v3154 = vadd.f32 0.0, %v3153
        %v3155 = vpop.f32.mrf.mxu0
        %3156 = vmatprep.mubr.f32.mxu0 0.0
        %3157 = vmatmul.mubr.f32.gmra.mxu0 %v2932
        %v3158 = vpop.f32.mrf.mxu0
        %v3159 = vadd.f32 0.0, %v3158
        %v3160 = vpop.f32.mrf.mxu0
        %3161 = vmatprep.mubr.f32.mxu0 0.0
        %3162 = vmatmul.mubr.f32.gmra.mxu0 %v2934
        %v3163 = vpop.f32.mrf.mxu0
        %v3164 = vadd.f32 0.0, %v3163
        %v3165 = vpop.f32.mrf.mxu0
        %3166 = vmatprep.mubr.f32.mxu0 0.0
        %3167 = vmatmul.mubr.f32.gmra.mxu0 %v2936
        %v3168 = vpop.f32.mrf.mxu0
        %v3169 = vadd.f32 0.0, %v3168
        %v3170 = vpop.f32.mrf.mxu0
        %3171 = vmatprep.mubr.f32.mxu0 0.0
        %3172 = vmatmul.mubr.f32.gmra.mxu0 %v2938
        %v3173 = vpop.f32.mrf.mxu0
        %v3174 = vadd.f32 0.0, %v3173
        %v3175 = vpop.f32.mrf.mxu0
        %3176 = vmatprep.mubr.f32.mxu0 0.0
        %3177 = vmatmul.mubr.f32.gmra.mxu0 %v2940
        %v3178 = vpop.f32.mrf.mxu0
        %v3179 = vadd.f32 0.0, %v3178
        %v3180 = vpop.f32.mrf.mxu0
        %3181 = vdwg.mxu0
        %v3182 = vrcp.pop %v2942
        %v3183 = vrcp.pop %v2944
        %v3184 = vrcp.pop %v2946
        %v3185 = vrcp.pop %v2948
        %v3186 = vrcp.pop %v2950
        %v3187 = vrcp.pop %v2952
        %v3188 = vrcp.pop %v2954
        %v3189 = vrcp.pop %v2956
        %v3190 = vrcp.pop %v2958
        %v3191 = vrcp.pop %v2960
        %v3192 = vrcp.pop %v2962
        %v3193 = vrcp.pop %v2964
        %v3194 = vrcp.pop %v2966
        %v3195 = vrcp.pop %v2968
        %v3196 = vrcp.pop %v2970
        %v3197 = vrcp.pop %v2972
        %v3198 = vmul.f32 %v3104, %v3182
        %v3199 = vmul.f32 %v3109, %v3183
        %v3200 = vmul.f32 %v3114, %v3184
        %v3201 = vmul.f32 %v3119, %v3185
        %v3202 = vmul.f32 %v3124, %v3186
        %v3203 = vmul.f32 %v3129, %v3187
        %v3204 = vmul.f32 %v3134, %v3188
        %v3205 = vmul.f32 %v3139, %v3189
        %v3206 = vmul.f32 %v3144, %v3190
        %v3207 = vmul.f32 %v3149, %v3191
        %v3208 = vmul.f32 %v3154, %v3192
        %v3209 = vmul.f32 %v3159, %v3193
        %v3210 = vmul.f32 %v3164, %v3194
        %v3211 = vmul.f32 %v3169, %v3195
        %v3212 = vmul.f32 %v3174, %v3196
        %v3213 = vmul.f32 %v3179, %v3197
        %3230 = vrot.lane.b32.xlu0 %v3198, 8
        %v3231 = vpop.permute.xlu0 %3230
        %3232 = vrot.lane.b32.xlu0 %v3199, 8
        %v3233 = vpop.permute.xlu0 %3232
        %3234 = vrot.lane.b32.xlu0 %v3200, 8
        %v3235 = vpop.permute.xlu0 %3234
        %3236 = vrot.lane.b32.xlu0 %v3201, 8
        %v3237 = vpop.permute.xlu0 %3236
        %3238 = vrot.lane.b32.xlu0 %v3202, 8
        %v3239 = vpop.permute.xlu0 %3238
        %3240 = vrot.lane.b32.xlu0 %v3203, 8
        %v3241 = vpop.permute.xlu0 %3240
        %3242 = vrot.lane.b32.xlu0 %v3204, 8
        %v3243 = vpop.permute.xlu0 %3242
        %3244 = vrot.lane.b32.xlu0 %v3205, 8
        %v3245 = vpop.permute.xlu0 %3244
        %3246 = vrot.lane.b32.xlu0 %v3206, 8
        %v3247 = vpop.permute.xlu0 %3246
        %3248 = vrot.lane.b32.xlu0 %v3207, 8
        %v3249 = vpop.permute.xlu0 %3248
        %3250 = vrot.lane.b32.xlu0 %v3208, 8
        %v3251 = vpop.permute.xlu0 %3250
        %3252 = vrot.lane.b32.xlu0 %v3209, 8
        %v3253 = vpop.permute.xlu0 %3252
        %3254 = vrot.lane.b32.xlu0 %v3210, 8
        %v3255 = vpop.permute.xlu0 %3254
        %3256 = vrot.lane.b32.xlu0 %v3211, 8
        %v3257 = vpop.permute.xlu0 %3256
        %3258 = vrot.lane.b32.xlu0 %v3212, 8
        %v3259 = vpop.permute.xlu0 %3258
        %3260 = vrot.lane.b32.xlu0 %v3213, 8
        %v3261 = vpop.permute.xlu0 %3260
        %vm3278 = vcmask 130112
        %3279 = vst.msk [vmem:[%s2523] sm:$0xff] %vm3278, %v3231
        %3280 = vst.msk [vmem:[%s2523 + $0x8] sm:$0xff] %vm3278, %v3233
        %3281 = vst.msk [vmem:[%s2523 + $0x10] sm:$0xff] %vm3278, %v3235
        %3282 = vst.msk [vmem:[%s2523 + $0x18] sm:$0xff] %vm3278, %v3237
        %3283 = vst.msk [vmem:[%s2523 + $0x20] sm:$0xff] %vm3278, %v3239
        %3284 = vst.msk [vmem:[%s2523 + $0x28] sm:$0xff] %vm3278, %v3241
        %3285 = vst.msk [vmem:[%s2523 + $0x30] sm:$0xff] %vm3278, %v3243
        %3286 = vst.msk [vmem:[%s2523 + $0x38] sm:$0xff] %vm3278, %v3245
        %3287 = vst.msk [vmem:[%s2523 + $0x40] sm:$0xff] %vm3278, %v3247
        %3288 = vst.msk [vmem:[%s2523 + $0x48] sm:$0xff] %vm3278, %v3249
        %3289 = vst.msk [vmem:[%s2523 + $0x50] sm:$0xff] %vm3278, %v3251
        %3290 = vst.msk [vmem:[%s2523 + $0x58] sm:$0xff] %vm3278, %v3253
        %3291 = vst.msk [vmem:[%s2523 + $0x60] sm:$0xff] %vm3278, %v3255
        %3292 = vst.msk [vmem:[%s2523 + $0x68] sm:$0xff] %vm3278, %v3257
        %3293 = vst.msk [vmem:[%s2523 + $0x70] sm:$0xff] %vm3278, %v3259
        %3294 = vst.msk [vmem:[%s2523 + $0x78] sm:$0xff] %vm3278, %v3261
        %v3295 = vld [vmem:[%s1942] sm:$0xff]
        %v3296 = vld [vmem:[%s1942 + $0x10] sm:$0xff]
        %v3297 = vld [vmem:[%s1942 + $0x20] sm:$0xff]
        %v3298 = vld [vmem:[%s1942 + $0x30] sm:$0xff]
        %v3299 = vld [vmem:[%s1942 + $0x40] sm:$0xff]
        %v3300 = vld [vmem:[%s1942 + $0x50] sm:$0xff]
        %v3301 = vld [vmem:[%s1942 + $0x60] sm:$0xff]
        %v3302 = vld [vmem:[%s1942 + $0x70] sm:$0xff]
        %v3303 = vld [vmem:[%s1942 + $0x80] sm:$0xff]
        %v3304 = vld [vmem:[%s1942 + $0x90] sm:$0xff]
        %v3305 = vld [vmem:[%s1942 + $0xa0] sm:$0xff]
        %v3306 = vld [vmem:[%s1942 + $0xb0] sm:$0xff]
        %v3307 = vld [vmem:[%s1942 + $0xc0] sm:$0xff]
        %v3308 = vld [vmem:[%s1942 + $0xd0] sm:$0xff]
        %v3309 = vld [vmem:[%s1942 + $0xe0] sm:$0xff]
        %v3310 = vld [vmem:[%s1942 + $0xf0] sm:$0xff]
        %v3311 = vld [vmem:[%s1942 + $0x8] sm:$0xff]
        %v3312 = vld [vmem:[%s1942 + $0x18] sm:$0xff]
        %v3313 = vld [vmem:[%s1942 + $0x28] sm:$0xff]
        %v3314 = vld [vmem:[%s1942 + $0x38] sm:$0xff]
        %v3315 = vld [vmem:[%s1942 + $0x48] sm:$0xff]
        %v3316 = vld [vmem:[%s1942 + $0x58] sm:$0xff]
        %v3317 = vld [vmem:[%s1942 + $0x68] sm:$0xff]
        %v3318 = vld [vmem:[%s1942 + $0x78] sm:$0xff]
        %v3319 = vld [vmem:[%s1942 + $0x88] sm:$0xff]
        %v3320 = vld [vmem:[%s1942 + $0x98] sm:$0xff]
        %v3321 = vld [vmem:[%s1942 + $0xa8] sm:$0xff]
        %v3322 = vld [vmem:[%s1942 + $0xb8] sm:$0xff]
        %v3323 = vld [vmem:[%s1942 + $0xc8] sm:$0xff]
        %v3324 = vld [vmem:[%s1942 + $0xd8] sm:$0xff]
        %v3325 = vld [vmem:[%s1942 + $0xe8] sm:$0xff]
        %v3326 = vld [vmem:[%s1942 + $0xf8] sm:$0xff]
        %3343 = vrot.lane.b32.xlu0 %v3295, 112
        %v3344 = vpop.permute.xlu0 %3343
        %3345 = vrot.lane.b32.xlu0 %v3296, 112
        %v3346 = vpop.permute.xlu0 %3345
        %3347 = vrot.lane.b32.xlu0 %v3297, 112
        %v3348 = vpop.permute.xlu0 %3347
        %3349 = vrot.lane.b32.xlu0 %v3298, 112
        %v3350 = vpop.permute.xlu0 %3349
        %3351 = vrot.lane.b32.xlu0 %v3299, 112
        %v3352 = vpop.permute.xlu0 %3351
        %3353 = vrot.lane.b32.xlu0 %v3300, 112
        %v3354 = vpop.permute.xlu0 %3353
        %3355 = vrot.lane.b32.xlu0 %v3301, 112
        %v3356 = vpop.permute.xlu0 %3355
        %3357 = vrot.lane.b32.xlu0 %v3302, 112
        %v3358 = vpop.permute.xlu0 %3357
        %3359 = vrot.lane.b32.xlu0 %v3303, 112
        %v3360 = vpop.permute.xlu0 %3359
        %3361 = vrot.lane.b32.xlu0 %v3304, 112
        %v3362 = vpop.permute.xlu0 %3361
        %3363 = vrot.lane.b32.xlu0 %v3305, 112
        %v3364 = vpop.permute.xlu0 %3363
        %3365 = vrot.lane.b32.xlu0 %v3306, 112
        %v3366 = vpop.permute.xlu0 %3365
        %3367 = vrot.lane.b32.xlu0 %v3307, 112
        %v3368 = vpop.permute.xlu0 %3367
        %3369 = vrot.lane.b32.xlu0 %v3308, 112
        %v3370 = vpop.permute.xlu0 %3369
        %3371 = vrot.lane.b32.xlu0 %v3309, 112
        %v3372 = vpop.permute.xlu0 %3371
        %3373 = vrot.lane.b32.xlu0 %v3310, 112
        %v3374 = vpop.permute.xlu0 %3373
        %3375 = vrot.lane.b32.xlu0 %v3295, 48
        %v3376 = vpop.permute.xlu0 %3375
        %3377 = vrot.lane.b32.xlu0 %v3296, 48
        %v3378 = vpop.permute.xlu0 %3377
        %3379 = vrot.lane.b32.xlu0 %v3297, 48
        %v3380 = vpop.permute.xlu0 %3379
        %3381 = vrot.lane.b32.xlu0 %v3298, 48
        %v3382 = vpop.permute.xlu0 %3381
        %3383 = vrot.lane.b32.xlu0 %v3299, 48
        %v3384 = vpop.permute.xlu0 %3383
        %3385 = vrot.lane.b32.xlu0 %v3300, 48
        %v3386 = vpop.permute.xlu0 %3385
        %3387 = vrot.lane.b32.xlu0 %v3301, 48
        %v3388 = vpop.permute.xlu0 %3387
        %3389 = vrot.lane.b32.xlu0 %v3302, 48
        %v3390 = vpop.permute.xlu0 %3389
        %3391 = vrot.lane.b32.xlu0 %v3303, 48
        %v3392 = vpop.permute.xlu0 %3391
        %3393 = vrot.lane.b32.xlu0 %v3304, 48
        %v3394 = vpop.permute.xlu0 %3393
        %3395 = vrot.lane.b32.xlu0 %v3305, 48
        %v3396 = vpop.permute.xlu0 %3395
        %3397 = vrot.lane.b32.xlu0 %v3306, 48
        %v3398 = vpop.permute.xlu0 %3397
        %3399 = vrot.lane.b32.xlu0 %v3307, 48
        %v3400 = vpop.permute.xlu0 %3399
        %3401 = vrot.lane.b32.xlu0 %v3308, 48
        %v3402 = vpop.permute.xlu0 %3401
        %3403 = vrot.lane.b32.xlu0 %v3309, 48
        %v3404 = vpop.permute.xlu0 %3403
        %3405 = vrot.lane.b32.xlu0 %v3310, 48
        %v3406 = vpop.permute.xlu0 %3405
        %v3407 = vsel %vm2023, %v3344, 0
        %v3409 = vsel %vm2023, %v3346, 0
        %v3411 = vsel %vm2023, %v3348, 0
        %v3413 = vsel %vm2023, %v3350, 0
        %v3415 = vsel %vm2023, %v3352, 0
        %v3417 = vsel %vm2023, %v3354, 0
        %v3419 = vsel %vm2023, %v3356, 0
        %v3421 = vsel %vm2023, %v3358, 0
        %v3423 = vsel %vm2023, %v3360, 0
        %v3425 = vsel %vm2023, %v3362, 0
        %v3427 = vsel %vm2023, %v3364, 0
        %v3429 = vsel %vm2023, %v3366, 0
        %v3431 = vsel %vm2023, %v3368, 0
        %v3433 = vsel %vm2023, %v3370, 0
        %v3435 = vsel %vm2023, %v3372, 0
        %v3437 = vsel %vm2023, %v3374, 0
        %v3439 = vsel %vm2023, %v3376, 0
        %v3441 = vsel %vm2023, %v3378, 0
        %v3443 = vsel %vm2023, %v3380, 0
        %v3445 = vsel %vm2023, %v3382, 0
        %v3447 = vsel %vm2023, %v3384, 0
        %v3449 = vsel %vm2023, %v3386, 0
        %v3451 = vsel %vm2023, %v3388, 0
        %v3453 = vsel %vm2023, %v3390, 0
        %v3455 = vsel %vm2023, %v3392, 0
        %v3457 = vsel %vm2023, %v3394, 0
        %v3459 = vsel %vm2023, %v3396, 0
        %v3461 = vsel %vm2023, %v3398, 0
        %v3463 = vsel %vm2023, %v3400, 0
        %v3465 = vsel %vm2023, %v3402, 0
        %v3467 = vsel %vm2023, %v3404, 0
        %v3469 = vsel %vm2023, %v3406, 0
        %3471 = vmatprep.subr.mxu0 0.0
        %3472 = vmatpush1.xpose.msra.mxu0 %v3469
        %3473 = vmatprep.subr.mxu0 0.0
        %3474 = vmatpush1.xpose.msra.mxu0 %v3467
        %3475 = vmatprep.subr.mxu0 0.0
        %3476 = vmatpush1.xpose.msra.mxu0 %v3465
        %3477 = vmatprep.subr.mxu0 0.0
        %3478 = vmatpush1.xpose.msra.mxu0 %v3463
        %3479 = vmatprep.subr.mxu0 0.0
        %3480 = vmatpush1.xpose.msra.mxu0 %v3461
        %3481 = vmatprep.subr.mxu0 0.0
        %3482 = vmatpush1.xpose.msra.mxu0 %v3459
        %3483 = vmatprep.subr.mxu0 0.0
        %3484 = vmatpush1.xpose.msra.mxu0 %v3457
        %3485 = vmatprep.subr.mxu0 0.0
        %3486 = vmatpush1.xpose.msra.mxu0 %v3455
        %3487 = vmatprep.subr.mxu0 0.0
        %3488 = vmatpush1.xpose.msra.mxu0 %v3453
        %3489 = vmatprep.subr.mxu0 0.0
        %3490 = vmatpush1.xpose.msra.mxu0 %v3451
        %3491 = vmatprep.subr.mxu0 0.0
        %3492 = vmatpush1.xpose.msra.mxu0 %v3449
        %3493 = vmatprep.subr.mxu0 0.0
        %3494 = vmatpush1.xpose.msra.mxu0 %v3447
        %3495 = vmatprep.subr.mxu0 0.0
        %3496 = vmatpush1.xpose.msra.mxu0 %v3445
        %3497 = vmatprep.subr.mxu0 0.0
        %3498 = vmatpush1.xpose.msra.mxu0 %v3443
        %3499 = vmatprep.subr.mxu0 0.0
        %3500 = vmatpush1.xpose.msra.mxu0 %v3441
        %3501 = vmatprep.subr.mxu0 0.0
        %3502 = vmatpush1.xpose.msra.mxu0 %v3439
        %3503 = vmatprep.subr.mxu0 0.0
        %3504 = vmatpush2.xpose.msra.mxu0 0.0
        %3505 = vmatprep.subr.mxu0 0.0
        %3506 = vmatpush2.xpose.msra.mxu0 0.0
        %3507 = vmatprep.subr.mxu0 0.0
        %3508 = vmatpush2.xpose.msra.mxu0 0.0
        %3509 = vmatprep.subr.mxu0 0.0
        %3510 = vmatpush2.xpose.msra.mxu0 0.0
        %3511 = vmatprep.subr.mxu0 0.0
        %3512 = vmatpush2.xpose.msra.mxu0 0.0
        %3513 = vmatprep.subr.mxu0 0.0
        %3514 = vmatpush2.xpose.msra.mxu0 0.0
        %3515 = vmatprep.subr.mxu0 0.0
        %3516 = vmatpush2.xpose.msra.mxu0 0.0
        %3517 = vmatprep.subr.mxu0 0.0
        %3518 = vmatpush2.xpose.msra.mxu0 0.0
        %3519 = vmatprep.subr.mxu0 0.0
        %3520 = vmatpush2.xpose.msra.mxu0 0.0
        %3521 = vmatprep.subr.mxu0 0.0
        %3522 = vmatpush2.xpose.msra.mxu0 0.0
        %3523 = vmatprep.subr.mxu0 0.0
        %3524 = vmatpush2.xpose.msra.mxu0 0.0
        %3525 = vmatprep.subr.mxu0 0.0
        %3526 = vmatpush2.xpose.msra.mxu0 0.0
        %3527 = vmatprep.subr.mxu0 0.0
        %3528 = vmatpush2.xpose.msra.mxu0 0.0
        %3529 = vmatprep.subr.mxu0 0.0
        %3530 = vmatpush2.xpose.msra.mxu0 0.0
        %3531 = vmatprep.subr.mxu0 0.0
        %3532 = vmatpush2.xpose.msra.mxu0 0.0
        %3533 = vmatprep.subr.mxu0 0.0
        %3534 = vmatpush2.xpose.msra.mxu0 0.0
        %3535 = vmatprep.mubr.f32.mxu0 0.0
        %3536 = vmatmul.mubr.f32.gmra.mxu0 %v3407
        %v3537 = vpop.f32.mrf.mxu0
        %v3538 = vadd.f32 0.0, %v3537
        %v3539 = vpop.f32.mrf.mxu0
        %3540 = vmatprep.mubr.f32.mxu0 0.0
        %3541 = vmatmul.mubr.f32.gmra.mxu0 %v3409
        %v3542 = vpop.f32.mrf.mxu0
        %v3543 = vadd.f32 0.0, %v3542
        %v3544 = vpop.f32.mrf.mxu0
        %3545 = vmatprep.mubr.f32.mxu0 0.0
        %3546 = vmatmul.mubr.f32.gmra.mxu0 %v3411
        %v3547 = vpop.f32.mrf.mxu0
        %v3548 = vadd.f32 0.0, %v3547
        %v3549 = vpop.f32.mrf.mxu0
        %3550 = vmatprep.mubr.f32.mxu0 0.0
        %3551 = vmatmul.mubr.f32.gmra.mxu0 %v3413
        %v3552 = vpop.f32.mrf.mxu0
        %v3553 = vadd.f32 0.0, %v3552
        %v3554 = vpop.f32.mrf.mxu0
        %3555 = vmatprep.mubr.f32.mxu0 0.0
        %3556 = vmatmul.mubr.f32.gmra.mxu0 %v3415
        %v3557 = vpop.f32.mrf.mxu0
        %v3558 = vadd.f32 0.0, %v3557
        %v3559 = vpop.f32.mrf.mxu0
        %3560 = vmatprep.mubr.f32.mxu0 0.0
        %3561 = vmatmul.mubr.f32.gmra.mxu0 %v3417
        %v3562 = vpop.f32.mrf.mxu0
        %v3563 = vadd.f32 0.0, %v3562
        %v3564 = vpop.f32.mrf.mxu0
        %3565 = vmatprep.mubr.f32.mxu0 0.0
        %3566 = vmatmul.mubr.f32.gmra.mxu0 %v3419
        %v3567 = vpop.f32.mrf.mxu0
        %v3568 = vadd.f32 0.0, %v3567
        %v3569 = vpop.f32.mrf.mxu0
        %3570 = vmatprep.mubr.f32.mxu0 0.0
        %3571 = vmatmul.mubr.f32.gmra.mxu0 %v3421
        %v3572 = vpop.f32.mrf.mxu0
        %v3573 = vadd.f32 0.0, %v3572
        %v3574 = vpop.f32.mrf.mxu0
        %3575 = vmatprep.mubr.f32.mxu0 0.0
        %3576 = vmatmul.mubr.f32.gmra.mxu0 %v3423
        %v3577 = vpop.f32.mrf.mxu0
        %v3578 = vadd.f32 0.0, %v3577
        %v3579 = vpop.f32.mrf.mxu0
        %3580 = vmatprep.mubr.f32.mxu0 0.0
        %3581 = vmatmul.mubr.f32.gmra.mxu0 %v3425
        %v3582 = vpop.f32.mrf.mxu0
        %v3583 = vadd.f32 0.0, %v3582
        %v3584 = vpop.f32.mrf.mxu0
        %3585 = vmatprep.mubr.f32.mxu0 0.0
        %3586 = vmatmul.mubr.f32.gmra.mxu0 %v3427
        %v3587 = vpop.f32.mrf.mxu0
        %v3588 = vadd.f32 0.0, %v3587
        %v3589 = vpop.f32.mrf.mxu0
        %3590 = vmatprep.mubr.f32.mxu0 0.0
        %3591 = vmatmul.mubr.f32.gmra.mxu0 %v3429
        %v3592 = vpop.f32.mrf.mxu0
        %v3593 = vadd.f32 0.0, %v3592
        %v3594 = vpop.f32.mrf.mxu0
        %3595 = vmatprep.mubr.f32.mxu0 0.0
        %3596 = vmatmul.mubr.f32.gmra.mxu0 %v3431
        %v3597 = vpop.f32.mrf.mxu0
        %v3598 = vadd.f32 0.0, %v3597
        %v3599 = vpop.f32.mrf.mxu0
        %3600 = vmatprep.mubr.f32.mxu0 0.0
        %3601 = vmatmul.mubr.f32.gmra.mxu0 %v3433
        %v3602 = vpop.f32.mrf.mxu0
        %v3603 = vadd.f32 0.0, %v3602
        %v3604 = vpop.f32.mrf.mxu0
        %3605 = vmatprep.mubr.f32.mxu0 0.0
        %3606 = vmatmul.mubr.f32.gmra.mxu0 %v3435
        %v3607 = vpop.f32.mrf.mxu0
        %v3608 = vadd.f32 0.0, %v3607
        %v3609 = vpop.f32.mrf.mxu0
        %3610 = vmatprep.mubr.f32.mxu0 0.0
        %3611 = vmatmul.mubr.f32.gmra.mxu0 %v3437
        %v3612 = vpop.f32.mrf.mxu0
        %v3613 = vadd.f32 0.0, %v3612
        %v3614 = vpop.f32.mrf.mxu0
        %3615 = vdwg.mxu0
        %3616 = vmax.xlane.f32.xlu0 %v3538
        %v3617 = vpop.xlane.xlu0 %3616
        %3618 = vmax.xlane.f32.xlu0 %v3543
        %v3619 = vpop.xlane.xlu0 %3618
        %3620 = vmax.xlane.f32.xlu0 %v3548
        %v3621 = vpop.xlane.xlu0 %3620
        %3622 = vmax.xlane.f32.xlu0 %v3553
        %v3623 = vpop.xlane.xlu0 %3622
        %3624 = vmax.xlane.f32.xlu0 %v3558
        %v3625 = vpop.xlane.xlu0 %3624
        %3626 = vmax.xlane.f32.xlu0 %v3563
        %v3627 = vpop.xlane.xlu0 %3626
        %3628 = vmax.xlane.f32.xlu0 %v3568
        %v3629 = vpop.xlane.xlu0 %3628
        %3630 = vmax.xlane.f32.xlu0 %v3573
        %v3631 = vpop.xlane.xlu0 %3630
        %3632 = vmax.xlane.f32.xlu0 %v3578
        %v3633 = vpop.xlane.xlu0 %3632
        %3634 = vmax.xlane.f32.xlu0 %v3583
        %v3635 = vpop.xlane.xlu0 %3634
        %3636 = vmax.xlane.f32.xlu0 %v3588
        %v3637 = vpop.xlane.xlu0 %3636
        %3638 = vmax.xlane.f32.xlu0 %v3593
        %v3639 = vpop.xlane.xlu0 %3638
        %3640 = vmax.xlane.f32.xlu0 %v3598
        %v3641 = vpop.xlane.xlu0 %3640
        %3642 = vmax.xlane.f32.xlu0 %v3603
        %v3643 = vpop.xlane.xlu0 %3642
        %3644 = vmax.xlane.f32.xlu0 %v3608
        %v3645 = vpop.xlane.xlu0 %3644
        %3646 = vmax.xlane.f32.xlu0 %v3613
        %v3647 = vpop.xlane.xlu0 %3646
        %v3648 = vsub.f32 %v3538, %v3617
        %v3649 = vsub.f32 %v3543, %v3619
        %v3650 = vsub.f32 %v3548, %v3621
        %v3651 = vsub.f32 %v3553, %v3623
        %v3652 = vsub.f32 %v3558, %v3625
        %v3653 = vsub.f32 %v3563, %v3627
        %v3654 = vsub.f32 %v3568, %v3629
        %v3655 = vsub.f32 %v3573, %v3631
        %v3656 = vsub.f32 %v3578, %v3633
        %v3657 = vsub.f32 %v3583, %v3635
        %v3658 = vsub.f32 %v3588, %v3637
        %v3659 = vsub.f32 %v3593, %v3639
        %v3660 = vsub.f32 %v3598, %v3641
        %v3661 = vsub.f32 %v3603, %v3643
        %v3662 = vsub.f32 %v3608, %v3645
        %v3663 = vsub.f32 %v3613, %v3647
        %v3664 = vmul.f32 %v3648, 1.442695
        %v3665 = vpow.pop %v3664
        %v3666 = vmul.f32 %v3649, 1.442695
        %v3667 = vpow.pop %v3666
        %v3668 = vmul.f32 %v3650, 1.442695
        %v3669 = vpow.pop %v3668
        %v3670 = vmul.f32 %v3651, 1.442695
        %v3671 = vpow.pop %v3670
        %v3672 = vmul.f32 %v3652, 1.442695
        %v3673 = vpow.pop %v3672
        %v3674 = vmul.f32 %v3653, 1.442695
        %v3675 = vpow.pop %v3674
        %v3676 = vmul.f32 %v3654, 1.442695
        %v3677 = vpow.pop %v3676
        %v3678 = vmul.f32 %v3655, 1.442695
        %v3679 = vpow.pop %v3678
        %v3680 = vmul.f32 %v3656, 1.442695
        %v3681 = vpow.pop %v3680
        %v3682 = vmul.f32 %v3657, 1.442695
        %v3683 = vpow.pop %v3682
        %v3684 = vmul.f32 %v3658, 1.442695
        %v3685 = vpow.pop %v3684
        %v3686 = vmul.f32 %v3659, 1.442695
        %v3687 = vpow.pop %v3686
        %v3688 = vmul.f32 %v3660, 1.442695
        %v3689 = vpow.pop %v3688
        %v3690 = vmul.f32 %v3661, 1.442695
        %v3691 = vpow.pop %v3690
        %v3692 = vmul.f32 %v3662, 1.442695
        %v3693 = vpow.pop %v3692
        %v3694 = vmul.f32 %v3663, 1.442695
        %v3695 = vpow.pop %v3694
        %3696 = vadd.xlane.f32.xlu0 %v3665
        %v3697 = vpop.xlane.xlu0 %3696
        %3698 = vadd.xlane.f32.xlu0 %v3667
        %v3699 = vpop.xlane.xlu0 %3698
        %3700 = vadd.xlane.f32.xlu0 %v3669
        %v3701 = vpop.xlane.xlu0 %3700
        %3702 = vadd.xlane.f32.xlu0 %v3671
        %v3703 = vpop.xlane.xlu0 %3702
        %3704 = vadd.xlane.f32.xlu0 %v3673
        %v3705 = vpop.xlane.xlu0 %3704
        %3706 = vadd.xlane.f32.xlu0 %v3675
        %v3707 = vpop.xlane.xlu0 %3706
        %3708 = vadd.xlane.f32.xlu0 %v3677
        %v3709 = vpop.xlane.xlu0 %3708
        %3710 = vadd.xlane.f32.xlu0 %v3679
        %v3711 = vpop.xlane.xlu0 %3710
        %3712 = vadd.xlane.f32.xlu0 %v3681
        %v3713 = vpop.xlane.xlu0 %3712
        %3714 = vadd.xlane.f32.xlu0 %v3683
        %v3715 = vpop.xlane.xlu0 %3714
        %3716 = vadd.xlane.f32.xlu0 %v3685
        %v3717 = vpop.xlane.xlu0 %3716
        %3718 = vadd.xlane.f32.xlu0 %v3687
        %v3719 = vpop.xlane.xlu0 %3718
        %3720 = vadd.xlane.f32.xlu0 %v3689
        %v3721 = vpop.xlane.xlu0 %3720
        %3722 = vadd.xlane.f32.xlu0 %v3691
        %v3723 = vpop.xlane.xlu0 %3722
        %3724 = vadd.xlane.f32.xlu0 %v3693
        %v3725 = vpop.xlane.xlu0 %3724
        %3726 = vadd.xlane.f32.xlu0 %v3695
        %v3727 = vpop.xlane.xlu0 %3726
        %3744 = vrot.lane.b32.xlu0 %v3311, 112
        %v3745 = vpop.permute.xlu0 %3744
        %3746 = vrot.lane.b32.xlu0 %v3312, 112
        %v3747 = vpop.permute.xlu0 %3746
        %3748 = vrot.lane.b32.xlu0 %v3313, 112
        %v3749 = vpop.permute.xlu0 %3748
        %3750 = vrot.lane.b32.xlu0 %v3314, 112
        %v3751 = vpop.permute.xlu0 %3750
        %3752 = vrot.lane.b32.xlu0 %v3315, 112
        %v3753 = vpop.permute.xlu0 %3752
        %3754 = vrot.lane.b32.xlu0 %v3316, 112
        %v3755 = vpop.permute.xlu0 %3754
        %3756 = vrot.lane.b32.xlu0 %v3317, 112
        %v3757 = vpop.permute.xlu0 %3756
        %3758 = vrot.lane.b32.xlu0 %v3318, 112
        %v3759 = vpop.permute.xlu0 %3758
        %3760 = vrot.lane.b32.xlu0 %v3319, 112
        %v3761 = vpop.permute.xlu0 %3760
        %3762 = vrot.lane.b32.xlu0 %v3320, 112
        %v3763 = vpop.permute.xlu0 %3762
        %3764 = vrot.lane.b32.xlu0 %v3321, 112
        %v3765 = vpop.permute.xlu0 %3764
        %3766 = vrot.lane.b32.xlu0 %v3322, 112
        %v3767 = vpop.permute.xlu0 %3766
        %3768 = vrot.lane.b32.xlu0 %v3323, 112
        %v3769 = vpop.permute.xlu0 %3768
        %3770 = vrot.lane.b32.xlu0 %v3324, 112
        %v3771 = vpop.permute.xlu0 %3770
        %3772 = vrot.lane.b32.xlu0 %v3325, 112
        %v3773 = vpop.permute.xlu0 %3772
        %3774 = vrot.lane.b32.xlu0 %v3326, 112
        %v3775 = vpop.permute.xlu0 %3774
        %3792 = vmatprep.subr.mxu0 0.0
        %3793 = vmatpush1.msra.mxu0 %v3775
        %3794 = vmatprep.subr.mxu0 0.0
        %3795 = vmatpush1.msra.mxu0 %v3773
        %3796 = vmatprep.subr.mxu0 0.0
        %3797 = vmatpush1.msra.mxu0 %v3771
        %3798 = vmatprep.subr.mxu0 0.0
        %3799 = vmatpush1.msra.mxu0 %v3769
        %3800 = vmatprep.subr.mxu0 0.0
        %3801 = vmatpush1.msra.mxu0 %v3767
        %3802 = vmatprep.subr.mxu0 0.0
        %3803 = vmatpush1.msra.mxu0 %v3765
        %3804 = vmatprep.subr.mxu0 0.0
        %3805 = vmatpush1.msra.mxu0 %v3763
        %3806 = vmatprep.subr.mxu0 0.0
        %3807 = vmatpush1.msra.mxu0 %v3761
        %3808 = vmatprep.subr.mxu0 0.0
        %3809 = vmatpush1.msra.mxu0 %v3759
        %3810 = vmatprep.subr.mxu0 0.0
        %3811 = vmatpush1.msra.mxu0 %v3757
        %3812 = vmatprep.subr.mxu0 0.0
        %3813 = vmatpush1.msra.mxu0 %v3755
        %3814 = vmatprep.subr.mxu0 0.0
        %3815 = vmatpush1.msra.mxu0 %v3753
        %3816 = vmatprep.subr.mxu0 0.0
        %3817 = vmatpush1.msra.mxu0 %v3751
        %3818 = vmatprep.subr.mxu0 0.0
        %3819 = vmatpush1.msra.mxu0 %v3749
        %3820 = vmatprep.subr.mxu0 0.0
        %3821 = vmatpush1.msra.mxu0 %v3747
        %3822 = vmatprep.subr.mxu0 0.0
        %3823 = vmatpush1.msra.mxu0 %v3745
        %3824 = vmatprep.subr.mxu0 0.0
        %3825 = vmatpush2.msra.mxu0 0.0
        %3826 = vmatprep.subr.mxu0 0.0
        %3827 = vmatpush2.msra.mxu0 0.0
        %3828 = vmatprep.subr.mxu0 0.0
        %3829 = vmatpush2.msra.mxu0 0.0
        %3830 = vmatprep.subr.mxu0 0.0
        %3831 = vmatpush2.msra.mxu0 0.0
        %3832 = vmatprep.subr.mxu0 0.0
        %3833 = vmatpush2.msra.mxu0 0.0
        %3834 = vmatprep.subr.mxu0 0.0
        %3835 = vmatpush2.msra.mxu0 0.0
        %3836 = vmatprep.subr.mxu0 0.0
        %3837 = vmatpush2.msra.mxu0 0.0
        %3838 = vmatprep.subr.mxu0 0.0
        %3839 = vmatpush2.msra.mxu0 0.0
        %3840 = vmatprep.subr.mxu0 0.0
        %3841 = vmatpush2.msra.mxu0 0.0
        %3842 = vmatprep.subr.mxu0 0.0
        %3843 = vmatpush2.msra.mxu0 0.0
        %3844 = vmatprep.subr.mxu0 0.0
        %3845 = vmatpush2.msra.mxu0 0.0
        %3846 = vmatprep.subr.mxu0 0.0
        %3847 = vmatpush2.msra.mxu0 0.0
        %3848 = vmatprep.subr.mxu0 0.0
        %3849 = vmatpush2.msra.mxu0 0.0
        %3850 = vmatprep.subr.mxu0 0.0
        %3851 = vmatpush2.msra.mxu0 0.0
        %3852 = vmatprep.subr.mxu0 0.0
        %3853 = vmatpush2.msra.mxu0 0.0
        %3854 = vmatprep.subr.mxu0 0.0
        %3855 = vmatpush2.msra.mxu0 0.0
        %3856 = vmatprep.mubr.f32.mxu0 0.0
        %3857 = vmatmul.mubr.f32.gmra.mxu0 %v3665
        %v3858 = vpop.f32.mrf.mxu0
        %v3859 = vadd.f32 0.0, %v3858
        %v3860 = vpop.f32.mrf.mxu0
        %3861 = vmatprep.mubr.f32.mxu0 0.0
        %3862 = vmatmul.mubr.f32.gmra.mxu0 %v3667
        %v3863 = vpop.f32.mrf.mxu0
        %v3864 = vadd.f32 0.0, %v3863
        %v3865 = vpop.f32.mrf.mxu0
        %3866 = vmatprep.mubr.f32.mxu0 0.0
        %3867 = vmatmul.mubr.f32.gmra.mxu0 %v3669
        %v3868 = vpop.f32.mrf.mxu0
        %v3869 = vadd.f32 0.0, %v3868
        %v3870 = vpop.f32.mrf.mxu0
        %3871 = vmatprep.mubr.f32.mxu0 0.0
        %3872 = vmatmul.mubr.f32.gmra.mxu0 %v3671
        %v3873 = vpop.f32.mrf.mxu0
        %v3874 = vadd.f32 0.0, %v3873
        %v3875 = vpop.f32.mrf.mxu0
        %3876 = vmatprep.mubr.f32.mxu0 0.0
        %3877 = vmatmul.mubr.f32.gmra.mxu0 %v3673
        %v3878 = vpop.f32.mrf.mxu0
        %v3879 = vadd.f32 0.0, %v3878
        %v3880 = vpop.f32.mrf.mxu0
        %3881 = vmatprep.mubr.f32.mxu0 0.0
        %3882 = vmatmul.mubr.f32.gmra.mxu0 %v3675
        %v3883 = vpop.f32.mrf.mxu0
        %v3884 = vadd.f32 0.0, %v3883
        %v3885 = vpop.f32.mrf.mxu0
        %3886 = vmatprep.mubr.f32.mxu0 0.0
        %3887 = vmatmul.mubr.f32.gmra.mxu0 %v3677
        %v3888 = vpop.f32.mrf.mxu0
        %v3889 = vadd.f32 0.0, %v3888
        %v3890 = vpop.f32.mrf.mxu0
        %3891 = vmatprep.mubr.f32.mxu0 0.0
        %3892 = vmatmul.mubr.f32.gmra.mxu0 %v3679
        %v3893 = vpop.f32.mrf.mxu0
        %v3894 = vadd.f32 0.0, %v3893
        %v3895 = vpop.f32.mrf.mxu0
        %3896 = vmatprep.mubr.f32.mxu0 0.0
        %3897 = vmatmul.mubr.f32.gmra.mxu0 %v3681
        %v3898 = vpop.f32.mrf.mxu0
        %v3899 = vadd.f32 0.0, %v3898
        %v3900 = vpop.f32.mrf.mxu0
        %3901 = vmatprep.mubr.f32.mxu0 0.0
        %3902 = vmatmul.mubr.f32.gmra.mxu0 %v3683
        %v3903 = vpop.f32.mrf.mxu0
        %v3904 = vadd.f32 0.0, %v3903
        %v3905 = vpop.f32.mrf.mxu0
        %3906 = vmatprep.mubr.f32.mxu0 0.0
        %3907 = vmatmul.mubr.f32.gmra.mxu0 %v3685
        %v3908 = vpop.f32.mrf.mxu0
        %v3909 = vadd.f32 0.0, %v3908
        %v3910 = vpop.f32.mrf.mxu0
        %3911 = vmatprep.mubr.f32.mxu0 0.0
        %3912 = vmatmul.mubr.f32.gmra.mxu0 %v3687
        %v3913 = vpop.f32.mrf.mxu0
        %v3914 = vadd.f32 0.0, %v3913
        %v3915 = vpop.f32.mrf.mxu0
        %3916 = vmatprep.mubr.f32.mxu0 0.0
        %3917 = vmatmul.mubr.f32.gmra.mxu0 %v3689
        %v3918 = vpop.f32.mrf.mxu0
        %v3919 = vadd.f32 0.0, %v3918
        %v3920 = vpop.f32.mrf.mxu0
        %3921 = vmatprep.mubr.f32.mxu0 0.0
        %3922 = vmatmul.mubr.f32.gmra.mxu0 %v3691
        %v3923 = vpop.f32.mrf.mxu0
        %v3924 = vadd.f32 0.0, %v3923
        %v3925 = vpop.f32.mrf.mxu0
        %3926 = vmatprep.mubr.f32.mxu0 0.0
        %3927 = vmatmul.mubr.f32.gmra.mxu0 %v3693
        %v3928 = vpop.f32.mrf.mxu0
        %v3929 = vadd.f32 0.0, %v3928
        %v3930 = vpop.f32.mrf.mxu0
        %3931 = vmatprep.mubr.f32.mxu0 0.0
        %3932 = vmatmul.mubr.f32.gmra.mxu0 %v3695
        %v3933 = vpop.f32.mrf.mxu0
        %v3934 = vadd.f32 0.0, %v3933
        %v3935 = vpop.f32.mrf.mxu0
        %3936 = vdwg.mxu0
        %v3937 = vrcp.pop %v3697
        %v3938 = vrcp.pop %v3699
        %v3939 = vrcp.pop %v3701
        %v3940 = vrcp.pop %v3703
        %v3941 = vrcp.pop %v3705
        %v3942 = vrcp.pop %v3707
        %v3943 = vrcp.pop %v3709
        %v3944 = vrcp.pop %v3711
        %v3945 = vrcp.pop %v3713
        %v3946 = vrcp.pop %v3715
        %v3947 = vrcp.pop %v3717
        %v3948 = vrcp.pop %v3719
        %v3949 = vrcp.pop %v3721
        %v3950 = vrcp.pop %v3723
        %v3951 = vrcp.pop %v3725
        %v3952 = vrcp.pop %v3727
        %v3953 = vmul.f32 %v3859, %v3937
        %v3954 = vmul.f32 %v3864, %v3938
        %v3955 = vmul.f32 %v3869, %v3939
        %v3956 = vmul.f32 %v3874, %v3940
        %v3957 = vmul.f32 %v3879, %v3941
        %v3958 = vmul.f32 %v3884, %v3942
        %v3959 = vmul.f32 %v3889, %v3943
        %v3960 = vmul.f32 %v3894, %v3944
        %v3961 = vmul.f32 %v3899, %v3945
        %v3962 = vmul.f32 %v3904, %v3946
        %v3963 = vmul.f32 %v3909, %v3947
        %v3964 = vmul.f32 %v3914, %v3948
        %v3965 = vmul.f32 %v3919, %v3949
        %v3966 = vmul.f32 %v3924, %v3950
        %v3967 = vmul.f32 %v3929, %v3951
        %v3968 = vmul.f32 %v3934, %v3952
        %3985 = vrot.lane.b32.xlu0 %v3953, 16
        %v3986 = vpop.permute.xlu0 %3985
        %3987 = vrot.lane.b32.xlu0 %v3954, 16
        %v3988 = vpop.permute.xlu0 %3987
        %3989 = vrot.lane.b32.xlu0 %v3955, 16
        %v3990 = vpop.permute.xlu0 %3989
        %3991 = vrot.lane.b32.xlu0 %v3956, 16
        %v3992 = vpop.permute.xlu0 %3991
        %3993 = vrot.lane.b32.xlu0 %v3957, 16
        %v3994 = vpop.permute.xlu0 %3993
        %3995 = vrot.lane.b32.xlu0 %v3958, 16
        %v3996 = vpop.permute.xlu0 %3995
        %3997 = vrot.lane.b32.xlu0 %v3959, 16
        %v3998 = vpop.permute.xlu0 %3997
        %3999 = vrot.lane.b32.xlu0 %v3960, 16
        %v4000 = vpop.permute.xlu0 %3999
        %4001 = vrot.lane.b32.xlu0 %v3961, 16
        %v4002 = vpop.permute.xlu0 %4001
        %4003 = vrot.lane.b32.xlu0 %v3962, 16
        %v4004 = vpop.permute.xlu0 %4003
        %4005 = vrot.lane.b32.xlu0 %v3963, 16
        %v4006 = vpop.permute.xlu0 %4005
        %4007 = vrot.lane.b32.xlu0 %v3964, 16
        %v4008 = vpop.permute.xlu0 %4007
        %4009 = vrot.lane.b32.xlu0 %v3965, 16
        %v4010 = vpop.permute.xlu0 %4009
        %4011 = vrot.lane.b32.xlu0 %v3966, 16
        %v4012 = vpop.permute.xlu0 %4011
        %4013 = vrot.lane.b32.xlu0 %v3967, 16
        %v4014 = vpop.permute.xlu0 %4013
        %4015 = vrot.lane.b32.xlu0 %v3968, 16
        %v4016 = vpop.permute.xlu0 %4015
        %vm4033 = vcmask 195712
        %4034 = vst.msk [vmem:[%s2523] sm:$0xff] %vm4033, %v3986
        %4035 = vst.msk [vmem:[%s2523 + $0x8] sm:$0xff] %vm4033, %v3988
        %4036 = vst.msk [vmem:[%s2523 + $0x10] sm:$0xff] %vm4033, %v3990
        %4037 = vst.msk [vmem:[%s2523 + $0x18] sm:$0xff] %vm4033, %v3992
        %4038 = vst.msk [vmem:[%s2523 + $0x20] sm:$0xff] %vm4033, %v3994
        %4039 = vst.msk [vmem:[%s2523 + $0x28] sm:$0xff] %vm4033, %v3996
        %4040 = vst.msk [vmem:[%s2523 + $0x30] sm:$0xff] %vm4033, %v3998
        %4041 = vst.msk [vmem:[%s2523 + $0x38] sm:$0xff] %vm4033, %v4000
        %4042 = vst.msk [vmem:[%s2523 + $0x40] sm:$0xff] %vm4033, %v4002
        %4043 = vst.msk [vmem:[%s2523 + $0x48] sm:$0xff] %vm4033, %v4004
        %4044 = vst.msk [vmem:[%s2523 + $0x50] sm:$0xff] %vm4033, %v4006
        %4045 = vst.msk [vmem:[%s2523 + $0x58] sm:$0xff] %vm4033, %v4008
        %4046 = vst.msk [vmem:[%s2523 + $0x60] sm:$0xff] %vm4033, %v4010
        %4047 = vst.msk [vmem:[%s2523 + $0x68] sm:$0xff] %vm4033, %v4012
        %4048 = vst.msk [vmem:[%s2523 + $0x70] sm:$0xff] %vm4033, %v4014
        %4049 = vst.msk [vmem:[%s2523 + $0x78] sm:$0xff] %vm4033, %v4016
        %v4050 = vld [vmem:[%s1942] sm:$0xff]
        %v4051 = vld [vmem:[%s1942 + $0x10] sm:$0xff]
        %v4052 = vld [vmem:[%s1942 + $0x20] sm:$0xff]
        %v4053 = vld [vmem:[%s1942 + $0x30] sm:$0xff]
        %v4054 = vld [vmem:[%s1942 + $0x40] sm:$0xff]
        %v4055 = vld [vmem:[%s1942 + $0x50] sm:$0xff]
        %v4056 = vld [vmem:[%s1942 + $0x60] sm:$0xff]
        %v4057 = vld [vmem:[%s1942 + $0x70] sm:$0xff]
        %v4058 = vld [vmem:[%s1942 + $0x80] sm:$0xff]
        %v4059 = vld [vmem:[%s1942 + $0x90] sm:$0xff]
        %v4060 = vld [vmem:[%s1942 + $0xa0] sm:$0xff]
        %v4061 = vld [vmem:[%s1942 + $0xb0] sm:$0xff]
        %v4062 = vld [vmem:[%s1942 + $0xc0] sm:$0xff]
        %v4063 = vld [vmem:[%s1942 + $0xd0] sm:$0xff]
        %v4064 = vld [vmem:[%s1942 + $0xe0] sm:$0xff]
        %v4065 = vld [vmem:[%s1942 + $0xf0] sm:$0xff]
        %v4066 = vld [vmem:[%s1942 + $0x8] sm:$0xff]
        %v4067 = vld [vmem:[%s1942 + $0x18] sm:$0xff]
        %v4068 = vld [vmem:[%s1942 + $0x28] sm:$0xff]
        %v4069 = vld [vmem:[%s1942 + $0x38] sm:$0xff]
        %v4070 = vld [vmem:[%s1942 + $0x48] sm:$0xff]
        %v4071 = vld [vmem:[%s1942 + $0x58] sm:$0xff]
        %v4072 = vld [vmem:[%s1942 + $0x68] sm:$0xff]
        %v4073 = vld [vmem:[%s1942 + $0x78] sm:$0xff]
        %v4074 = vld [vmem:[%s1942 + $0x88] sm:$0xff]
        %v4075 = vld [vmem:[%s1942 + $0x98] sm:$0xff]
        %v4076 = vld [vmem:[%s1942 + $0xa8] sm:$0xff]
        %v4077 = vld [vmem:[%s1942 + $0xb8] sm:$0xff]
        %v4078 = vld [vmem:[%s1942 + $0xc8] sm:$0xff]
        %v4079 = vld [vmem:[%s1942 + $0xd8] sm:$0xff]
        %v4080 = vld [vmem:[%s1942 + $0xe8] sm:$0xff]
        %v4081 = vld [vmem:[%s1942 + $0xf8] sm:$0xff]
        %4098 = vrot.lane.b32.xlu0 %v4050, 104
        %v4099 = vpop.permute.xlu0 %4098
        %4100 = vrot.lane.b32.xlu0 %v4051, 104
        %v4101 = vpop.permute.xlu0 %4100
        %4102 = vrot.lane.b32.xlu0 %v4052, 104
        %v4103 = vpop.permute.xlu0 %4102
        %4104 = vrot.lane.b32.xlu0 %v4053, 104
        %v4105 = vpop.permute.xlu0 %4104
        %4106 = vrot.lane.b32.xlu0 %v4054, 104
        %v4107 = vpop.permute.xlu0 %4106
        %4108 = vrot.lane.b32.xlu0 %v4055, 104
        %v4109 = vpop.permute.xlu0 %4108
        %4110 = vrot.lane.b32.xlu0 %v4056, 104
        %v4111 = vpop.permute.xlu0 %4110
        %4112 = vrot.lane.b32.xlu0 %v4057, 104
        %v4113 = vpop.permute.xlu0 %4112
        %4114 = vrot.lane.b32.xlu0 %v4058, 104
        %v4115 = vpop.permute.xlu0 %4114
        %4116 = vrot.lane.b32.xlu0 %v4059, 104
        %v4117 = vpop.permute.xlu0 %4116
        %4118 = vrot.lane.b32.xlu0 %v4060, 104
        %v4119 = vpop.permute.xlu0 %4118
        %4120 = vrot.lane.b32.xlu0 %v4061, 104
        %v4121 = vpop.permute.xlu0 %4120
        %4122 = vrot.lane.b32.xlu0 %v4062, 104
        %v4123 = vpop.permute.xlu0 %4122
        %4124 = vrot.lane.b32.xlu0 %v4063, 104
        %v4125 = vpop.permute.xlu0 %4124
        %4126 = vrot.lane.b32.xlu0 %v4064, 104
        %v4127 = vpop.permute.xlu0 %4126
        %4128 = vrot.lane.b32.xlu0 %v4065, 104
        %v4129 = vpop.permute.xlu0 %4128
        %4130 = vrot.lane.b32.xlu0 %v4050, 40
        %v4131 = vpop.permute.xlu0 %4130
        %4132 = vrot.lane.b32.xlu0 %v4051, 40
        %v4133 = vpop.permute.xlu0 %4132
        %4134 = vrot.lane.b32.xlu0 %v4052, 40
        %v4135 = vpop.permute.xlu0 %4134
        %4136 = vrot.lane.b32.xlu0 %v4053, 40
        %v4137 = vpop.permute.xlu0 %4136
        %4138 = vrot.lane.b32.xlu0 %v4054, 40
        %v4139 = vpop.permute.xlu0 %4138
        %4140 = vrot.lane.b32.xlu0 %v4055, 40
        %v4141 = vpop.permute.xlu0 %4140
        %4142 = vrot.lane.b32.xlu0 %v4056, 40
        %v4143 = vpop.permute.xlu0 %4142
        %4144 = vrot.lane.b32.xlu0 %v4057, 40
        %v4145 = vpop.permute.xlu0 %4144
        %4146 = vrot.lane.b32.xlu0 %v4058, 40
        %v4147 = vpop.permute.xlu0 %4146
        %4148 = vrot.lane.b32.xlu0 %v4059, 40
        %v4149 = vpop.permute.xlu0 %4148
        %4150 = vrot.lane.b32.xlu0 %v4060, 40
        %v4151 = vpop.permute.xlu0 %4150
        %4152 = vrot.lane.b32.xlu0 %v4061, 40
        %v4153 = vpop.permute.xlu0 %4152
        %4154 = vrot.lane.b32.xlu0 %v4062, 40
        %v4155 = vpop.permute.xlu0 %4154
        %4156 = vrot.lane.b32.xlu0 %v4063, 40
        %v4157 = vpop.permute.xlu0 %4156
        %4158 = vrot.lane.b32.xlu0 %v4064, 40
        %v4159 = vpop.permute.xlu0 %4158
        %4160 = vrot.lane.b32.xlu0 %v4065, 40
        %v4161 = vpop.permute.xlu0 %4160
        %v4162 = vsel %vm2023, %v4099, 0
        %v4164 = vsel %vm2023, %v4101, 0
        %v4166 = vsel %vm2023, %v4103, 0
        %v4168 = vsel %vm2023, %v4105, 0
        %v4170 = vsel %vm2023, %v4107, 0
        %v4172 = vsel %vm2023, %v4109, 0
        %v4174 = vsel %vm2023, %v4111, 0
        %v4176 = vsel %vm2023, %v4113, 0
        %v4178 = vsel %vm2023, %v4115, 0
        %v4180 = vsel %vm2023, %v4117, 0
        %v4182 = vsel %vm2023, %v4119, 0
        %v4184 = vsel %vm2023, %v4121, 0
        %v4186 = vsel %vm2023, %v4123, 0
        %v4188 = vsel %vm2023, %v4125, 0
        %v4190 = vsel %vm2023, %v4127, 0
        %v4192 = vsel %vm2023, %v4129, 0
        %v4194 = vsel %vm2023, %v4131, 0
        %v4196 = vsel %vm2023, %v4133, 0
        %v4198 = vsel %vm2023, %v4135, 0
        %v4200 = vsel %vm2023, %v4137, 0
        %v4202 = vsel %vm2023, %v4139, 0
        %v4204 = vsel %vm2023, %v4141, 0
        %v4206 = vsel %vm2023, %v4143, 0
        %v4208 = vsel %vm2023, %v4145, 0
        %v4210 = vsel %vm2023, %v4147, 0
        %v4212 = vsel %vm2023, %v4149, 0
        %v4214 = vsel %vm2023, %v4151, 0
        %v4216 = vsel %vm2023, %v4153, 0
        %v4218 = vsel %vm2023, %v4155, 0
        %v4220 = vsel %vm2023, %v4157, 0
        %v4222 = vsel %vm2023, %v4159, 0
        %v4224 = vsel %vm2023, %v4161, 0
        %4226 = vmatprep.subr.mxu0 0.0
        %4227 = vmatpush1.xpose.msra.mxu0 %v4224
        %4228 = vmatprep.subr.mxu0 0.0
        %4229 = vmatpush1.xpose.msra.mxu0 %v4222
        %4230 = vmatprep.subr.mxu0 0.0
        %4231 = vmatpush1.xpose.msra.mxu0 %v4220
        %4232 = vmatprep.subr.mxu0 0.0
        %4233 = vmatpush1.xpose.msra.mxu0 %v4218
        %4234 = vmatprep.subr.mxu0 0.0
        %4235 = vmatpush1.xpose.msra.mxu0 %v4216
        %4236 = vmatprep.subr.mxu0 0.0
        %4237 = vmatpush1.xpose.msra.mxu0 %v4214
        %4238 = vmatprep.subr.mxu0 0.0
        %4239 = vmatpush1.xpose.msra.mxu0 %v4212
        %4240 = vmatprep.subr.mxu0 0.0
        %4241 = vmatpush1.xpose.msra.mxu0 %v4210
        %4242 = vmatprep.subr.mxu0 0.0
        %4243 = vmatpush1.xpose.msra.mxu0 %v4208
        %4244 = vmatprep.subr.mxu0 0.0
        %4245 = vmatpush1.xpose.msra.mxu0 %v4206
        %4246 = vmatprep.subr.mxu0 0.0
        %4247 = vmatpush1.xpose.msra.mxu0 %v4204
        %4248 = vmatprep.subr.mxu0 0.0
        %4249 = vmatpush1.xpose.msra.mxu0 %v4202
        %4250 = vmatprep.subr.mxu0 0.0
        %4251 = vmatpush1.xpose.msra.mxu0 %v4200
        %4252 = vmatprep.subr.mxu0 0.0
        %4253 = vmatpush1.xpose.msra.mxu0 %v4198
        %4254 = vmatprep.subr.mxu0 0.0
        %4255 = vmatpush1.xpose.msra.mxu0 %v4196
        %4256 = vmatprep.subr.mxu0 0.0
        %4257 = vmatpush1.xpose.msra.mxu0 %v4194
        %4258 = vmatprep.subr.mxu0 0.0
        %4259 = vmatpush2.xpose.msra.mxu0 0.0
        %4260 = vmatprep.subr.mxu0 0.0
        %4261 = vmatpush2.xpose.msra.mxu0 0.0
        %4262 = vmatprep.subr.mxu0 0.0
        %4263 = vmatpush2.xpose.msra.mxu0 0.0
        %4264 = vmatprep.subr.mxu0 0.0
        %4265 = vmatpush2.xpose.msra.mxu0 0.0
        %4266 = vmatprep.subr.mxu0 0.0
        %4267 = vmatpush2.xpose.msra.mxu0 0.0
        %4268 = vmatprep.subr.mxu0 0.0
        %4269 = vmatpush2.xpose.msra.mxu0 0.0
        %4270 = vmatprep.subr.mxu0 0.0
        %4271 = vmatpush2.xpose.msra.mxu0 0.0
        %4272 = vmatprep.subr.mxu0 0.0
        %4273 = vmatpush2.xpose.msra.mxu0 0.0
        %4274 = vmatprep.subr.mxu0 0.0
        %4275 = vmatpush2.xpose.msra.mxu0 0.0
        %4276 = vmatprep.subr.mxu0 0.0
        %4277 = vmatpush2.xpose.msra.mxu0 0.0
        %4278 = vmatprep.subr.mxu0 0.0
        %4279 = vmatpush2.xpose.msra.mxu0 0.0
        %4280 = vmatprep.subr.mxu0 0.0
        %4281 = vmatpush2.xpose.msra.mxu0 0.0
        %4282 = vmatprep.subr.mxu0 0.0
        %4283 = vmatpush2.xpose.msra.mxu0 0.0
        %4284 = vmatprep.subr.mxu0 0.0
        %4285 = vmatpush2.xpose.msra.mxu0 0.0
        %4286 = vmatprep.subr.mxu0 0.0
        %4287 = vmatpush2.xpose.msra.mxu0 0.0
        %4288 = vmatprep.subr.mxu0 0.0
        %4289 = vmatpush2.xpose.msra.mxu0 0.0
        %4290 = vmatprep.mubr.f32.mxu0 0.0
        %4291 = vmatmul.mubr.f32.gmra.mxu0 %v4162
        %v4292 = vpop.f32.mrf.mxu0
        %v4293 = vadd.f32 0.0, %v4292
        %v4294 = vpop.f32.mrf.mxu0
        %4295 = vmatprep.mubr.f32.mxu0 0.0
        %4296 = vmatmul.mubr.f32.gmra.mxu0 %v4164
        %v4297 = vpop.f32.mrf.mxu0
        %v4298 = vadd.f32 0.0, %v4297
        %v4299 = vpop.f32.mrf.mxu0
        %4300 = vmatprep.mubr.f32.mxu0 0.0
        %4301 = vmatmul.mubr.f32.gmra.mxu0 %v4166
        %v4302 = vpop.f32.mrf.mxu0
        %v4303 = vadd.f32 0.0, %v4302
        %v4304 = vpop.f32.mrf.mxu0
        %4305 = vmatprep.mubr.f32.mxu0 0.0
        %4306 = vmatmul.mubr.f32.gmra.mxu0 %v4168
        %v4307 = vpop.f32.mrf.mxu0
        %v4308 = vadd.f32 0.0, %v4307
        %v4309 = vpop.f32.mrf.mxu0
        %4310 = vmatprep.mubr.f32.mxu0 0.0
        %4311 = vmatmul.mubr.f32.gmra.mxu0 %v4170
        %v4312 = vpop.f32.mrf.mxu0
        %v4313 = vadd.f32 0.0, %v4312
        %v4314 = vpop.f32.mrf.mxu0
        %4315 = vmatprep.mubr.f32.mxu0 0.0
        %4316 = vmatmul.mubr.f32.gmra.mxu0 %v4172
        %v4317 = vpop.f32.mrf.mxu0
        %v4318 = vadd.f32 0.0, %v4317
        %v4319 = vpop.f32.mrf.mxu0
        %4320 = vmatprep.mubr.f32.mxu0 0.0
        %4321 = vmatmul.mubr.f32.gmra.mxu0 %v4174
        %v4322 = vpop.f32.mrf.mxu0
        %v4323 = vadd.f32 0.0, %v4322
        %v4324 = vpop.f32.mrf.mxu0
        %4325 = vmatprep.mubr.f32.mxu0 0.0
        %4326 = vmatmul.mubr.f32.gmra.mxu0 %v4176
        %v4327 = vpop.f32.mrf.mxu0
        %v4328 = vadd.f32 0.0, %v4327
        %v4329 = vpop.f32.mrf.mxu0
        %4330 = vmatprep.mubr.f32.mxu0 0.0
        %4331 = vmatmul.mubr.f32.gmra.mxu0 %v4178
        %v4332 = vpop.f32.mrf.mxu0
        %v4333 = vadd.f32 0.0, %v4332
        %v4334 = vpop.f32.mrf.mxu0
        %4335 = vmatprep.mubr.f32.mxu0 0.0
        %4336 = vmatmul.mubr.f32.gmra.mxu0 %v4180
        %v4337 = vpop.f32.mrf.mxu0
        %v4338 = vadd.f32 0.0, %v4337
        %v4339 = vpop.f32.mrf.mxu0
        %4340 = vmatprep.mubr.f32.mxu0 0.0
        %4341 = vmatmul.mubr.f32.gmra.mxu0 %v4182
        %v4342 = vpop.f32.mrf.mxu0
        %v4343 = vadd.f32 0.0, %v4342
        %v4344 = vpop.f32.mrf.mxu0
        %4345 = vmatprep.mubr.f32.mxu0 0.0
        %4346 = vmatmul.mubr.f32.gmra.mxu0 %v4184
        %v4347 = vpop.f32.mrf.mxu0
        %v4348 = vadd.f32 0.0, %v4347
        %v4349 = vpop.f32.mrf.mxu0
        %4350 = vmatprep.mubr.f32.mxu0 0.0
        %4351 = vmatmul.mubr.f32.gmra.mxu0 %v4186
        %v4352 = vpop.f32.mrf.mxu0
        %v4353 = vadd.f32 0.0, %v4352
        %v4354 = vpop.f32.mrf.mxu0
        %4355 = vmatprep.mubr.f32.mxu0 0.0
        %4356 = vmatmul.mubr.f32.gmra.mxu0 %v4188
        %v4357 = vpop.f32.mrf.mxu0
        %v4358 = vadd.f32 0.0, %v4357
        %v4359 = vpop.f32.mrf.mxu0
        %4360 = vmatprep.mubr.f32.mxu0 0.0
        %4361 = vmatmul.mubr.f32.gmra.mxu0 %v4190
        %v4362 = vpop.f32.mrf.mxu0
        %v4363 = vadd.f32 0.0, %v4362
        %v4364 = vpop.f32.mrf.mxu0
        %4365 = vmatprep.mubr.f32.mxu0 0.0
        %4366 = vmatmul.mubr.f32.gmra.mxu0 %v4192
        %v4367 = vpop.f32.mrf.mxu0
        %v4368 = vadd.f32 0.0, %v4367
        %v4369 = vpop.f32.mrf.mxu0
        %4370 = vdwg.mxu0
        %4371 = vmax.xlane.f32.xlu0 %v4293
        %v4372 = vpop.xlane.xlu0 %4371
        %4373 = vmax.xlane.f32.xlu0 %v4298
        %v4374 = vpop.xlane.xlu0 %4373
        %4375 = vmax.xlane.f32.xlu0 %v4303
        %v4376 = vpop.xlane.xlu0 %4375
        %4377 = vmax.xlane.f32.xlu0 %v4308
        %v4378 = vpop.xlane.xlu0 %4377
        %4379 = vmax.xlane.f32.xlu0 %v4313
        %v4380 = vpop.xlane.xlu0 %4379
        %4381 = vmax.xlane.f32.xlu0 %v4318
        %v4382 = vpop.xlane.xlu0 %4381
        %4383 = vmax.xlane.f32.xlu0 %v4323
        %v4384 = vpop.xlane.xlu0 %4383
        %4385 = vmax.xlane.f32.xlu0 %v4328
        %v4386 = vpop.xlane.xlu0 %4385
        %4387 = vmax.xlane.f32.xlu0 %v4333
        %v4388 = vpop.xlane.xlu0 %4387
        %4389 = vmax.xlane.f32.xlu0 %v4338
        %v4390 = vpop.xlane.xlu0 %4389
        %4391 = vmax.xlane.f32.xlu0 %v4343
        %v4392 = vpop.xlane.xlu0 %4391
        %4393 = vmax.xlane.f32.xlu0 %v4348
        %v4394 = vpop.xlane.xlu0 %4393
        %4395 = vmax.xlane.f32.xlu0 %v4353
        %v4396 = vpop.xlane.xlu0 %4395
        %4397 = vmax.xlane.f32.xlu0 %v4358
        %v4398 = vpop.xlane.xlu0 %4397
        %4399 = vmax.xlane.f32.xlu0 %v4363
        %v4400 = vpop.xlane.xlu0 %4399
        %4401 = vmax.xlane.f32.xlu0 %v4368
        %v4402 = vpop.xlane.xlu0 %4401
        %v4403 = vsub.f32 %v4293, %v4372
        %v4404 = vsub.f32 %v4298, %v4374
        %v4405 = vsub.f32 %v4303, %v4376
        %v4406 = vsub.f32 %v4308, %v4378
        %v4407 = vsub.f32 %v4313, %v4380
        %v4408 = vsub.f32 %v4318, %v4382
        %v4409 = vsub.f32 %v4323, %v4384
        %v4410 = vsub.f32 %v4328, %v4386
        %v4411 = vsub.f32 %v4333, %v4388
        %v4412 = vsub.f32 %v4338, %v4390
        %v4413 = vsub.f32 %v4343, %v4392
        %v4414 = vsub.f32 %v4348, %v4394
        %v4415 = vsub.f32 %v4353, %v4396
        %v4416 = vsub.f32 %v4358, %v4398
        %v4417 = vsub.f32 %v4363, %v4400
        %v4418 = vsub.f32 %v4368, %v4402
        %v4419 = vmul.f32 %v4403, 1.442695
        %v4420 = vpow.pop %v4419
        %v4421 = vmul.f32 %v4404, 1.442695
        %v4422 = vpow.pop %v4421
        %v4423 = vmul.f32 %v4405, 1.442695
        %v4424 = vpow.pop %v4423
        %v4425 = vmul.f32 %v4406, 1.442695
        %v4426 = vpow.pop %v4425
        %v4427 = vmul.f32 %v4407, 1.442695
        %v4428 = vpow.pop %v4427
        %v4429 = vmul.f32 %v4408, 1.442695
        %v4430 = vpow.pop %v4429
        %v4431 = vmul.f32 %v4409, 1.442695
        %v4432 = vpow.pop %v4431
        %v4433 = vmul.f32 %v4410, 1.442695
        %v4434 = vpow.pop %v4433
        %v4435 = vmul.f32 %v4411, 1.442695
        %v4436 = vpow.pop %v4435
        %v4437 = vmul.f32 %v4412, 1.442695
        %v4438 = vpow.pop %v4437
        %v4439 = vmul.f32 %v4413, 1.442695
        %v4440 = vpow.pop %v4439
        %v4441 = vmul.f32 %v4414, 1.442695
        %v4442 = vpow.pop %v4441
        %v4443 = vmul.f32 %v4415, 1.442695
        %v4444 = vpow.pop %v4443
        %v4445 = vmul.f32 %v4416, 1.442695
        %v4446 = vpow.pop %v4445
        %v4447 = vmul.f32 %v4417, 1.442695
        %v4448 = vpow.pop %v4447
        %v4449 = vmul.f32 %v4418, 1.442695
        %v4450 = vpow.pop %v4449
        %4451 = vadd.xlane.f32.xlu0 %v4420
        %v4452 = vpop.xlane.xlu0 %4451
        %4453 = vadd.xlane.f32.xlu0 %v4422
        %v4454 = vpop.xlane.xlu0 %4453
        %4455 = vadd.xlane.f32.xlu0 %v4424
        %v4456 = vpop.xlane.xlu0 %4455
        %4457 = vadd.xlane.f32.xlu0 %v4426
        %v4458 = vpop.xlane.xlu0 %4457
        %4459 = vadd.xlane.f32.xlu0 %v4428
        %v4460 = vpop.xlane.xlu0 %4459
        %4461 = vadd.xlane.f32.xlu0 %v4430
        %v4462 = vpop.xlane.xlu0 %4461
        %4463 = vadd.xlane.f32.xlu0 %v4432
        %v4464 = vpop.xlane.xlu0 %4463
        %4465 = vadd.xlane.f32.xlu0 %v4434
        %v4466 = vpop.xlane.xlu0 %4465
        %4467 = vadd.xlane.f32.xlu0 %v4436
        %v4468 = vpop.xlane.xlu0 %4467
        %4469 = vadd.xlane.f32.xlu0 %v4438
        %v4470 = vpop.xlane.xlu0 %4469
        %4471 = vadd.xlane.f32.xlu0 %v4440
        %v4472 = vpop.xlane.xlu0 %4471
        %4473 = vadd.xlane.f32.xlu0 %v4442
        %v4474 = vpop.xlane.xlu0 %4473
        %4475 = vadd.xlane.f32.xlu0 %v4444
        %v4476 = vpop.xlane.xlu0 %4475
        %4477 = vadd.xlane.f32.xlu0 %v4446
        %v4478 = vpop.xlane.xlu0 %4477
        %4479 = vadd.xlane.f32.xlu0 %v4448
        %v4480 = vpop.xlane.xlu0 %4479
        %4481 = vadd.xlane.f32.xlu0 %v4450
        %v4482 = vpop.xlane.xlu0 %4481
        %4499 = vrot.lane.b32.xlu0 %v4066, 104
        %v4500 = vpop.permute.xlu0 %4499
        %4501 = vrot.lane.b32.xlu0 %v4067, 104
        %v4502 = vpop.permute.xlu0 %4501
        %4503 = vrot.lane.b32.xlu0 %v4068, 104
        %v4504 = vpop.permute.xlu0 %4503
        %4505 = vrot.lane.b32.xlu0 %v4069, 104
        %v4506 = vpop.permute.xlu0 %4505
        %4507 = vrot.lane.b32.xlu0 %v4070, 104
        %v4508 = vpop.permute.xlu0 %4507
        %4509 = vrot.lane.b32.xlu0 %v4071, 104
        %v4510 = vpop.permute.xlu0 %4509
        %4511 = vrot.lane.b32.xlu0 %v4072, 104
        %v4512 = vpop.permute.xlu0 %4511
        %4513 = vrot.lane.b32.xlu0 %v4073, 104
        %v4514 = vpop.permute.xlu0 %4513
        %4515 = vrot.lane.b32.xlu0 %v4074, 104
        %v4516 = vpop.permute.xlu0 %4515
        %4517 = vrot.lane.b32.xlu0 %v4075, 104
        %v4518 = vpop.permute.xlu0 %4517
        %4519 = vrot.lane.b32.xlu0 %v4076, 104
        %v4520 = vpop.permute.xlu0 %4519
        %4521 = vrot.lane.b32.xlu0 %v4077, 104
        %v4522 = vpop.permute.xlu0 %4521
        %4523 = vrot.lane.b32.xlu0 %v4078, 104
        %v4524 = vpop.permute.xlu0 %4523
        %4525 = vrot.lane.b32.xlu0 %v4079, 104
        %v4526 = vpop.permute.xlu0 %4525
        %4527 = vrot.lane.b32.xlu0 %v4080, 104
        %v4528 = vpop.permute.xlu0 %4527
        %4529 = vrot.lane.b32.xlu0 %v4081, 104
        %v4530 = vpop.permute.xlu0 %4529
        %4547 = vmatprep.subr.mxu0 0.0
        %4548 = vmatpush1.msra.mxu0 %v4530
        %4549 = vmatprep.subr.mxu0 0.0
        %4550 = vmatpush1.msra.mxu0 %v4528
        %4551 = vmatprep.subr.mxu0 0.0
        %4552 = vmatpush1.msra.mxu0 %v4526
        %4553 = vmatprep.subr.mxu0 0.0
        %4554 = vmatpush1.msra.mxu0 %v4524
        %4555 = vmatprep.subr.mxu0 0.0
        %4556 = vmatpush1.msra.mxu0 %v4522
        %4557 = vmatprep.subr.mxu0 0.0
        %4558 = vmatpush1.msra.mxu0 %v4520
        %4559 = vmatprep.subr.mxu0 0.0
        %4560 = vmatpush1.msra.mxu0 %v4518
        %4561 = vmatprep.subr.mxu0 0.0
        %4562 = vmatpush1.msra.mxu0 %v4516
        %4563 = vmatprep.subr.mxu0 0.0
        %4564 = vmatpush1.msra.mxu0 %v4514
        %4565 = vmatprep.subr.mxu0 0.0
        %4566 = vmatpush1.msra.mxu0 %v4512
        %4567 = vmatprep.subr.mxu0 0.0
        %4568 = vmatpush1.msra.mxu0 %v4510
        %4569 = vmatprep.subr.mxu0 0.0
        %4570 = vmatpush1.msra.mxu0 %v4508
        %4571 = vmatprep.subr.mxu0 0.0
        %4572 = vmatpush1.msra.mxu0 %v4506
        %4573 = vmatprep.subr.mxu0 0.0
        %4574 = vmatpush1.msra.mxu0 %v4504
        %4575 = vmatprep.subr.mxu0 0.0
        %4576 = vmatpush1.msra.mxu0 %v4502
        %4577 = vmatprep.subr.mxu0 0.0
        %4578 = vmatpush1.msra.mxu0 %v4500
        %4579 = vmatprep.subr.mxu0 0.0
        %4580 = vmatpush2.msra.mxu0 0.0
        %4581 = vmatprep.subr.mxu0 0.0
        %4582 = vmatpush2.msra.mxu0 0.0
        %4583 = vmatprep.subr.mxu0 0.0
        %4584 = vmatpush2.msra.mxu0 0.0
        %4585 = vmatprep.subr.mxu0 0.0
        %4586 = vmatpush2.msra.mxu0 0.0
        %4587 = vmatprep.subr.mxu0 0.0
        %4588 = vmatpush2.msra.mxu0 0.0
        %4589 = vmatprep.subr.mxu0 0.0
        %4590 = vmatpush2.msra.mxu0 0.0
        %4591 = vmatprep.subr.mxu0 0.0
        %4592 = vmatpush2.msra.mxu0 0.0
        %4593 = vmatprep.subr.mxu0 0.0
        %4594 = vmatpush2.msra.mxu0 0.0
        %4595 = vmatprep.subr.mxu0 0.0
        %4596 = vmatpush2.msra.mxu0 0.0
        %4597 = vmatprep.subr.mxu0 0.0
        %4598 = vmatpush2.msra.mxu0 0.0
        %4599 = vmatprep.subr.mxu0 0.0
        %4600 = vmatpush2.msra.mxu0 0.0
        %4601 = vmatprep.subr.mxu0 0.0
        %4602 = vmatpush2.msra.mxu0 0.0
        %4603 = vmatprep.subr.mxu0 0.0
        %4604 = vmatpush2.msra.mxu0 0.0
        %4605 = vmatprep.subr.mxu0 0.0
        %4606 = vmatpush2.msra.mxu0 0.0
        %4607 = vmatprep.subr.mxu0 0.0
        %4608 = vmatpush2.msra.mxu0 0.0
        %4609 = vmatprep.subr.mxu0 0.0
        %4610 = vmatpush2.msra.mxu0 0.0
        %4611 = vmatprep.mubr.f32.mxu0 0.0
        %4612 = vmatmul.mubr.f32.gmra.mxu0 %v4420
        %v4613 = vpop.f32.mrf.mxu0
        %v4614 = vadd.f32 0.0, %v4613
        %v4615 = vpop.f32.mrf.mxu0
        %4616 = vmatprep.mubr.f32.mxu0 0.0
        %4617 = vmatmul.mubr.f32.gmra.mxu0 %v4422
        %v4618 = vpop.f32.mrf.mxu0
        %v4619 = vadd.f32 0.0, %v4618
        %v4620 = vpop.f32.mrf.mxu0
        %4621 = vmatprep.mubr.f32.mxu0 0.0
        %4622 = vmatmul.mubr.f32.gmra.mxu0 %v4424
        %v4623 = vpop.f32.mrf.mxu0
        %v4624 = vadd.f32 0.0, %v4623
        %v4625 = vpop.f32.mrf.mxu0
        %4626 = vmatprep.mubr.f32.mxu0 0.0
        %4627 = vmatmul.mubr.f32.gmra.mxu0 %v4426
        %v4628 = vpop.f32.mrf.mxu0
        %v4629 = vadd.f32 0.0, %v4628
        %v4630 = vpop.f32.mrf.mxu0
        %4631 = vmatprep.mubr.f32.mxu0 0.0
        %4632 = vmatmul.mubr.f32.gmra.mxu0 %v4428
        %v4633 = vpop.f32.mrf.mxu0
        %v4634 = vadd.f32 0.0, %v4633
        %v4635 = vpop.f32.mrf.mxu0
        %4636 = vmatprep.mubr.f32.mxu0 0.0
        %4637 = vmatmul.mubr.f32.gmra.mxu0 %v4430
        %v4638 = vpop.f32.mrf.mxu0
        %v4639 = vadd.f32 0.0, %v4638
        %v4640 = vpop.f32.mrf.mxu0
        %4641 = vmatprep.mubr.f32.mxu0 0.0
        %4642 = vmatmul.mubr.f32.gmra.mxu0 %v4432
        %v4643 = vpop.f32.mrf.mxu0
        %v4644 = vadd.f32 0.0, %v4643
        %v4645 = vpop.f32.mrf.mxu0
        %4646 = vmatprep.mubr.f32.mxu0 0.0
        %4647 = vmatmul.mubr.f32.gmra.mxu0 %v4434
        %v4648 = vpop.f32.mrf.mxu0
        %v4649 = vadd.f32 0.0, %v4648
        %v4650 = vpop.f32.mrf.mxu0
        %4651 = vmatprep.mubr.f32.mxu0 0.0
        %4652 = vmatmul.mubr.f32.gmra.mxu0 %v4436
        %v4653 = vpop.f32.mrf.mxu0
        %v4654 = vadd.f32 0.0, %v4653
        %v4655 = vpop.f32.mrf.mxu0
        %4656 = vmatprep.mubr.f32.mxu0 0.0
        %4657 = vmatmul.mubr.f32.gmra.mxu0 %v4438
        %v4658 = vpop.f32.mrf.mxu0
        %v4659 = vadd.f32 0.0, %v4658
        %v4660 = vpop.f32.mrf.mxu0
        %4661 = vmatprep.mubr.f32.mxu0 0.0
        %4662 = vmatmul.mubr.f32.gmra.mxu0 %v4440
        %v4663 = vpop.f32.mrf.mxu0
        %v4664 = vadd.f32 0.0, %v4663
        %v4665 = vpop.f32.mrf.mxu0
        %4666 = vmatprep.mubr.f32.mxu0 0.0
        %4667 = vmatmul.mubr.f32.gmra.mxu0 %v4442
        %v4668 = vpop.f32.mrf.mxu0
        %v4669 = vadd.f32 0.0, %v4668
        %v4670 = vpop.f32.mrf.mxu0
        %4671 = vmatprep.mubr.f32.mxu0 0.0
        %4672 = vmatmul.mubr.f32.gmra.mxu0 %v4444
        %v4673 = vpop.f32.mrf.mxu0
        %v4674 = vadd.f32 0.0, %v4673
        %v4675 = vpop.f32.mrf.mxu0
        %4676 = vmatprep.mubr.f32.mxu0 0.0
        %4677 = vmatmul.mubr.f32.gmra.mxu0 %v4446
        %v4678 = vpop.f32.mrf.mxu0
        %v4679 = vadd.f32 0.0, %v4678
        %v4680 = vpop.f32.mrf.mxu0
        %4681 = vmatprep.mubr.f32.mxu0 0.0
        %4682 = vmatmul.mubr.f32.gmra.mxu0 %v4448
        %v4683 = vpop.f32.mrf.mxu0
        %v4684 = vadd.f32 0.0, %v4683
        %v4685 = vpop.f32.mrf.mxu0
        %4686 = vmatprep.mubr.f32.mxu0 0.0
        %4687 = vmatmul.mubr.f32.gmra.mxu0 %v4450
        %v4688 = vpop.f32.mrf.mxu0
        %v4689 = vadd.f32 0.0, %v4688
        %v4690 = vpop.f32.mrf.mxu0
        %4691 = vdwg.mxu0
        %v4692 = vrcp.pop %v4452
        %v4693 = vrcp.pop %v4454
        %v4694 = vrcp.pop %v4456
        %v4695 = vrcp.pop %v4458
        %v4696 = vrcp.pop %v4460
        %v4697 = vrcp.pop %v4462
        %v4698 = vrcp.pop %v4464
        %v4699 = vrcp.pop %v4466
        %v4700 = vrcp.pop %v4468
        %v4701 = vrcp.pop %v4470
        %v4702 = vrcp.pop %v4472
        %v4703 = vrcp.pop %v4474
        %v4704 = vrcp.pop %v4476
        %v4705 = vrcp.pop %v4478
        %v4706 = vrcp.pop %v4480
        %v4707 = vrcp.pop %v4482
        %v4708 = vmul.f32 %v4614, %v4692
        %v4709 = vmul.f32 %v4619, %v4693
        %v4710 = vmul.f32 %v4624, %v4694
        %v4711 = vmul.f32 %v4629, %v4695
        %v4712 = vmul.f32 %v4634, %v4696
        %v4713 = vmul.f32 %v4639, %v4697
        %v4714 = vmul.f32 %v4644, %v4698
        %v4715 = vmul.f32 %v4649, %v4699
        %v4716 = vmul.f32 %v4654, %v4700
        %v4717 = vmul.f32 %v4659, %v4701
        %v4718 = vmul.f32 %v4664, %v4702
        %v4719 = vmul.f32 %v4669, %v4703
        %v4720 = vmul.f32 %v4674, %v4704
        %v4721 = vmul.f32 %v4679, %v4705
        %v4722 = vmul.f32 %v4684, %v4706
        %v4723 = vmul.f32 %v4689, %v4707
        %4740 = vrot.lane.b32.xlu0 %v4708, 24
        %v4741 = vpop.permute.xlu0 %4740
        %4742 = vrot.lane.b32.xlu0 %v4709, 24
        %v4743 = vpop.permute.xlu0 %4742
        %4744 = vrot.lane.b32.xlu0 %v4710, 24
        %v4745 = vpop.permute.xlu0 %4744
        %4746 = vrot.lane.b32.xlu0 %v4711, 24
        %v4747 = vpop.permute.xlu0 %4746
        %4748 = vrot.lane.b32.xlu0 %v4712, 24
        %v4749 = vpop.permute.xlu0 %4748
        %4750 = vrot.lane.b32.xlu0 %v4713, 24
        %v4751 = vpop.permute.xlu0 %4750
        %4752 = vrot.lane.b32.xlu0 %v4714, 24
        %v4753 = vpop.permute.xlu0 %4752
        %4754 = vrot.lane.b32.xlu0 %v4715, 24
        %v4755 = vpop.permute.xlu0 %4754
        %4756 = vrot.lane.b32.xlu0 %v4716, 24
        %v4757 = vpop.permute.xlu0 %4756
        %4758 = vrot.lane.b32.xlu0 %v4717, 24
        %v4759 = vpop.permute.xlu0 %4758
        %4760 = vrot.lane.b32.xlu0 %v4718, 24
        %v4761 = vpop.permute.xlu0 %4760
        %4762 = vrot.lane.b32.xlu0 %v4719, 24
        %v4763 = vpop.permute.xlu0 %4762
        %4764 = vrot.lane.b32.xlu0 %v4720, 24
        %v4765 = vpop.permute.xlu0 %4764
        %4766 = vrot.lane.b32.xlu0 %v4721, 24
        %v4767 = vpop.permute.xlu0 %4766
        %4768 = vrot.lane.b32.xlu0 %v4722, 24
        %v4769 = vpop.permute.xlu0 %4768
        %4770 = vrot.lane.b32.xlu0 %v4723, 24
        %v4771 = vpop.permute.xlu0 %4770
        %vm4788 = vcmask 261312
        %4789 = vst.msk [vmem:[%s2523] sm:$0xff] %vm4788, %v4741
        %4790 = vst.msk [vmem:[%s2523 + $0x8] sm:$0xff] %vm4788, %v4743
        %4791 = vst.msk [vmem:[%s2523 + $0x10] sm:$0xff] %vm4788, %v4745
        %4792 = vst.msk [vmem:[%s2523 + $0x18] sm:$0xff] %vm4788, %v4747
        %4793 = vst.msk [vmem:[%s2523 + $0x20] sm:$0xff] %vm4788, %v4749
        %4794 = vst.msk [vmem:[%s2523 + $0x28] sm:$0xff] %vm4788, %v4751
        %4795 = vst.msk [vmem:[%s2523 + $0x30] sm:$0xff] %vm4788, %v4753
        %4796 = vst.msk [vmem:[%s2523 + $0x38] sm:$0xff] %vm4788, %v4755
        %4797 = vst.msk [vmem:[%s2523 + $0x40] sm:$0xff] %vm4788, %v4757
        %4798 = vst.msk [vmem:[%s2523 + $0x48] sm:$0xff] %vm4788, %v4759
        %4799 = vst.msk [vmem:[%s2523 + $0x50] sm:$0xff] %vm4788, %v4761
        %4800 = vst.msk [vmem:[%s2523 + $0x58] sm:$0xff] %vm4788, %v4763
        %4801 = vst.msk [vmem:[%s2523 + $0x60] sm:$0xff] %vm4788, %v4765
        %4802 = vst.msk [vmem:[%s2523 + $0x68] sm:$0xff] %vm4788, %v4767
        %4803 = vst.msk [vmem:[%s2523 + $0x70] sm:$0xff] %vm4788, %v4769
        %4804 = vst.msk [vmem:[%s2523 + $0x78] sm:$0xff] %vm4788, %v4771
        %v4805 = vld [vmem:[%s1942] sm:$0xff]
        %v4806 = vld [vmem:[%s1942 + $0x10] sm:$0xff]
        %v4807 = vld [vmem:[%s1942 + $0x20] sm:$0xff]
        %v4808 = vld [vmem:[%s1942 + $0x30] sm:$0xff]
        %v4809 = vld [vmem:[%s1942 + $0x40] sm:$0xff]
        %v4810 = vld [vmem:[%s1942 + $0x50] sm:$0xff]
        %v4811 = vld [vmem:[%s1942 + $0x60] sm:$0xff]
        %v4812 = vld [vmem:[%s1942 + $0x70] sm:$0xff]
        %v4813 = vld [vmem:[%s1942 + $0x80] sm:$0xff]
        %v4814 = vld [vmem:[%s1942 + $0x90] sm:$0xff]
        %v4815 = vld [vmem:[%s1942 + $0xa0] sm:$0xff]
        %v4816 = vld [vmem:[%s1942 + $0xb0] sm:$0xff]
        %v4817 = vld [vmem:[%s1942 + $0xc0] sm:$0xff]
        %v4818 = vld [vmem:[%s1942 + $0xd0] sm:$0xff]
        %v4819 = vld [vmem:[%s1942 + $0xe0] sm:$0xff]
        %v4820 = vld [vmem:[%s1942 + $0xf0] sm:$0xff]
        %v4821 = vld [vmem:[%s1942 + $0x8] sm:$0xff]
        %v4822 = vld [vmem:[%s1942 + $0x18] sm:$0xff]
        %v4823 = vld [vmem:[%s1942 + $0x28] sm:$0xff]
        %v4824 = vld [vmem:[%s1942 + $0x38] sm:$0xff]
        %v4825 = vld [vmem:[%s1942 + $0x48] sm:$0xff]
        %v4826 = vld [vmem:[%s1942 + $0x58] sm:$0xff]
        %v4827 = vld [vmem:[%s1942 + $0x68] sm:$0xff]
        %v4828 = vld [vmem:[%s1942 + $0x78] sm:$0xff]
        %v4829 = vld [vmem:[%s1942 + $0x88] sm:$0xff]
        %v4830 = vld [vmem:[%s1942 + $0x98] sm:$0xff]
        %v4831 = vld [vmem:[%s1942 + $0xa8] sm:$0xff]
        %v4832 = vld [vmem:[%s1942 + $0xb8] sm:$0xff]
        %v4833 = vld [vmem:[%s1942 + $0xc8] sm:$0xff]
        %v4834 = vld [vmem:[%s1942 + $0xd8] sm:$0xff]
        %v4835 = vld [vmem:[%s1942 + $0xe8] sm:$0xff]
        %v4836 = vld [vmem:[%s1942 + $0xf8] sm:$0xff]
        %4853 = vrot.lane.b32.xlu0 %v4805, 96
        %v4854 = vpop.permute.xlu0 %4853
        %4855 = vrot.lane.b32.xlu0 %v4806, 96
        %v4856 = vpop.permute.xlu0 %4855
        %4857 = vrot.lane.b32.xlu0 %v4807, 96
        %v4858 = vpop.permute.xlu0 %4857
        %4859 = vrot.lane.b32.xlu0 %v4808, 96
        %v4860 = vpop.permute.xlu0 %4859
        %4861 = vrot.lane.b32.xlu0 %v4809, 96
        %v4862 = vpop.permute.xlu0 %4861
        %4863 = vrot.lane.b32.xlu0 %v4810, 96
        %v4864 = vpop.permute.xlu0 %4863
        %4865 = vrot.lane.b32.xlu0 %v4811, 96
        %v4866 = vpop.permute.xlu0 %4865
        %4867 = vrot.lane.b32.xlu0 %v4812, 96
        %v4868 = vpop.permute.xlu0 %4867
        %4869 = vrot.lane.b32.xlu0 %v4813, 96
        %v4870 = vpop.permute.xlu0 %4869
        %4871 = vrot.lane.b32.xlu0 %v4814, 96
        %v4872 = vpop.permute.xlu0 %4871
        %4873 = vrot.lane.b32.xlu0 %v4815, 96
        %v4874 = vpop.permute.xlu0 %4873
        %4875 = vrot.lane.b32.xlu0 %v4816, 96
        %v4876 = vpop.permute.xlu0 %4875
        %4877 = vrot.lane.b32.xlu0 %v4817, 96
        %v4878 = vpop.permute.xlu0 %4877
        %4879 = vrot.lane.b32.xlu0 %v4818, 96
        %v4880 = vpop.permute.xlu0 %4879
        %4881 = vrot.lane.b32.xlu0 %v4819, 96
        %v4882 = vpop.permute.xlu0 %4881
        %4883 = vrot.lane.b32.xlu0 %v4820, 96
        %v4884 = vpop.permute.xlu0 %4883
        %4885 = vrot.lane.b32.xlu0 %v4805, 32
        %v4886 = vpop.permute.xlu0 %4885
        %4887 = vrot.lane.b32.xlu0 %v4806, 32
        %v4888 = vpop.permute.xlu0 %4887
        %4889 = vrot.lane.b32.xlu0 %v4807, 32
        %v4890 = vpop.permute.xlu0 %4889
        %4891 = vrot.lane.b32.xlu0 %v4808, 32
        %v4892 = vpop.permute.xlu0 %4891
        %4893 = vrot.lane.b32.xlu0 %v4809, 32
        %v4894 = vpop.permute.xlu0 %4893
        %4895 = vrot.lane.b32.xlu0 %v4810, 32
        %v4896 = vpop.permute.xlu0 %4895
        %4897 = vrot.lane.b32.xlu0 %v4811, 32
        %v4898 = vpop.permute.xlu0 %4897
        %4899 = vrot.lane.b32.xlu0 %v4812, 32
        %v4900 = vpop.permute.xlu0 %4899
        %4901 = vrot.lane.b32.xlu0 %v4813, 32
        %v4902 = vpop.permute.xlu0 %4901
        %4903 = vrot.lane.b32.xlu0 %v4814, 32
        %v4904 = vpop.permute.xlu0 %4903
        %4905 = vrot.lane.b32.xlu0 %v4815, 32
        %v4906 = vpop.permute.xlu0 %4905
        %4907 = vrot.lane.b32.xlu0 %v4816, 32
        %v4908 = vpop.permute.xlu0 %4907
        %4909 = vrot.lane.b32.xlu0 %v4817, 32
        %v4910 = vpop.permute.xlu0 %4909
        %4911 = vrot.lane.b32.xlu0 %v4818, 32
        %v4912 = vpop.permute.xlu0 %4911
        %4913 = vrot.lane.b32.xlu0 %v4819, 32
        %v4914 = vpop.permute.xlu0 %4913
        %4915 = vrot.lane.b32.xlu0 %v4820, 32
        %v4916 = vpop.permute.xlu0 %4915
        %v4917 = vsel %vm2023, %v4854, 0
        %v4919 = vsel %vm2023, %v4856, 0
        %v4921 = vsel %vm2023, %v4858, 0
        %v4923 = vsel %vm2023, %v4860, 0
        %v4925 = vsel %vm2023, %v4862, 0
        %v4927 = vsel %vm2023, %v4864, 0
        %v4929 = vsel %vm2023, %v4866, 0
        %v4931 = vsel %vm2023, %v4868, 0
        %v4933 = vsel %vm2023, %v4870, 0
        %v4935 = vsel %vm2023, %v4872, 0
        %v4937 = vsel %vm2023, %v4874, 0
        %v4939 = vsel %vm2023, %v4876, 0
        %v4941 = vsel %vm2023, %v4878, 0
        %v4943 = vsel %vm2023, %v4880, 0
        %v4945 = vsel %vm2023, %v4882, 0
        %v4947 = vsel %vm2023, %v4884, 0
        %v4949 = vsel %vm2023, %v4886, 0
        %v4951 = vsel %vm2023, %v4888, 0
        %v4953 = vsel %vm2023, %v4890, 0
        %v4955 = vsel %vm2023, %v4892, 0
        %v4957 = vsel %vm2023, %v4894, 0
        %v4959 = vsel %vm2023, %v4896, 0
        %v4961 = vsel %vm2023, %v4898, 0
        %v4963 = vsel %vm2023, %v4900, 0
        %v4965 = vsel %vm2023, %v4902, 0
        %v4967 = vsel %vm2023, %v4904, 0
        %v4969 = vsel %vm2023, %v4906, 0
        %v4971 = vsel %vm2023, %v4908, 0
        %v4973 = vsel %vm2023, %v4910, 0
        %v4975 = vsel %vm2023, %v4912, 0
        %v4977 = vsel %vm2023, %v4914, 0
        %v4979 = vsel %vm2023, %v4916, 0
        %4981 = vmatprep.subr.mxu0 0.0
        %4982 = vmatpush1.xpose.msra.mxu0 %v4979
        %4983 = vmatprep.subr.mxu0 0.0
        %4984 = vmatpush1.xpose.msra.mxu0 %v4977
        %4985 = vmatprep.subr.mxu0 0.0
        %4986 = vmatpush1.xpose.msra.mxu0 %v4975
        %4987 = vmatprep.subr.mxu0 0.0
        %4988 = vmatpush1.xpose.msra.mxu0 %v4973
        %4989 = vmatprep.subr.mxu0 0.0
        %4990 = vmatpush1.xpose.msra.mxu0 %v4971
        %4991 = vmatprep.subr.mxu0 0.0
        %4992 = vmatpush1.xpose.msra.mxu0 %v4969
        %4993 = vmatprep.subr.mxu0 0.0
        %4994 = vmatpush1.xpose.msra.mxu0 %v4967
        %4995 = vmatprep.subr.mxu0 0.0
        %4996 = vmatpush1.xpose.msra.mxu0 %v4965
        %4997 = vmatprep.subr.mxu0 0.0
        %4998 = vmatpush1.xpose.msra.mxu0 %v4963
        %4999 = vmatprep.subr.mxu0 0.0
        %5000 = vmatpush1.xpose.msra.mxu0 %v4961
        %5001 = vmatprep.subr.mxu0 0.0
        %5002 = vmatpush1.xpose.msra.mxu0 %v4959
        %5003 = vmatprep.subr.mxu0 0.0
        %5004 = vmatpush1.xpose.msra.mxu0 %v4957
        %5005 = vmatprep.subr.mxu0 0.0
        %5006 = vmatpush1.xpose.msra.mxu0 %v4955
        %5007 = vmatprep.subr.mxu0 0.0
        %5008 = vmatpush1.xpose.msra.mxu0 %v4953
        %5009 = vmatprep.subr.mxu0 0.0
        %5010 = vmatpush1.xpose.msra.mxu0 %v4951
        %5011 = vmatprep.subr.mxu0 0.0
        %5012 = vmatpush1.xpose.msra.mxu0 %v4949
        %5013 = vmatprep.subr.mxu0 0.0
        %5014 = vmatpush2.xpose.msra.mxu0 0.0
        %5015 = vmatprep.subr.mxu0 0.0
        %5016 = vmatpush2.xpose.msra.mxu0 0.0
        %5017 = vmatprep.subr.mxu0 0.0
        %5018 = vmatpush2.xpose.msra.mxu0 0.0
        %5019 = vmatprep.subr.mxu0 0.0
        %5020 = vmatpush2.xpose.msra.mxu0 0.0
        %5021 = vmatprep.subr.mxu0 0.0
        %5022 = vmatpush2.xpose.msra.mxu0 0.0
        %5023 = vmatprep.subr.mxu0 0.0
        %5024 = vmatpush2.xpose.msra.mxu0 0.0
        %5025 = vmatprep.subr.mxu0 0.0
        %5026 = vmatpush2.xpose.msra.mxu0 0.0
        %5027 = vmatprep.subr.mxu0 0.0
        %5028 = vmatpush2.xpose.msra.mxu0 0.0
        %5029 = vmatprep.subr.mxu0 0.0
        %5030 = vmatpush2.xpose.msra.mxu0 0.0
        %5031 = vmatprep.subr.mxu0 0.0
        %5032 = vmatpush2.xpose.msra.mxu0 0.0
        %5033 = vmatprep.subr.mxu0 0.0
        %5034 = vmatpush2.xpose.msra.mxu0 0.0
        %5035 = vmatprep.subr.mxu0 0.0
        %5036 = vmatpush2.xpose.msra.mxu0 0.0
        %5037 = vmatprep.subr.mxu0 0.0
        %5038 = vmatpush2.xpose.msra.mxu0 0.0
        %5039 = vmatprep.subr.mxu0 0.0
        %5040 = vmatpush2.xpose.msra.mxu0 0.0
        %5041 = vmatprep.subr.mxu0 0.0
        %5042 = vmatpush2.xpose.msra.mxu0 0.0
        %5043 = vmatprep.subr.mxu0 0.0
        %5044 = vmatpush2.xpose.msra.mxu0 0.0
        %5045 = vmatprep.mubr.f32.mxu0 0.0
        %5046 = vmatmul.mubr.f32.gmra.mxu0 %v4917
        %v5047 = vpop.f32.mrf.mxu0
        %v5048 = vadd.f32 0.0, %v5047
        %v5049 = vpop.f32.mrf.mxu0
        %5050 = vmatprep.mubr.f32.mxu0 0.0
        %5051 = vmatmul.mubr.f32.gmra.mxu0 %v4919
        %v5052 = vpop.f32.mrf.mxu0
        %v5053 = vadd.f32 0.0, %v5052
        %v5054 = vpop.f32.mrf.mxu0
        %5055 = vmatprep.mubr.f32.mxu0 0.0
        %5056 = vmatmul.mubr.f32.gmra.mxu0 %v4921
        %v5057 = vpop.f32.mrf.mxu0
        %v5058 = vadd.f32 0.0, %v5057
        %v5059 = vpop.f32.mrf.mxu0
        %5060 = vmatprep.mubr.f32.mxu0 0.0
        %5061 = vmatmul.mubr.f32.gmra.mxu0 %v4923
        %v5062 = vpop.f32.mrf.mxu0
        %v5063 = vadd.f32 0.0, %v5062
        %v5064 = vpop.f32.mrf.mxu0
        %5065 = vmatprep.mubr.f32.mxu0 0.0
        %5066 = vmatmul.mubr.f32.gmra.mxu0 %v4925
        %v5067 = vpop.f32.mrf.mxu0
        %v5068 = vadd.f32 0.0, %v5067
        %v5069 = vpop.f32.mrf.mxu0
        %5070 = vmatprep.mubr.f32.mxu0 0.0
        %5071 = vmatmul.mubr.f32.gmra.mxu0 %v4927
        %v5072 = vpop.f32.mrf.mxu0
        %v5073 = vadd.f32 0.0, %v5072
        %v5074 = vpop.f32.mrf.mxu0
        %5075 = vmatprep.mubr.f32.mxu0 0.0
        %5076 = vmatmul.mubr.f32.gmra.mxu0 %v4929
        %v5077 = vpop.f32.mrf.mxu0
        %v5078 = vadd.f32 0.0, %v5077
        %v5079 = vpop.f32.mrf.mxu0
        %5080 = vmatprep.mubr.f32.mxu0 0.0
        %5081 = vmatmul.mubr.f32.gmra.mxu0 %v4931
        %v5082 = vpop.f32.mrf.mxu0
        %v5083 = vadd.f32 0.0, %v5082
        %v5084 = vpop.f32.mrf.mxu0
        %5085 = vmatprep.mubr.f32.mxu0 0.0
        %5086 = vmatmul.mubr.f32.gmra.mxu0 %v4933
        %v5087 = vpop.f32.mrf.mxu0
        %v5088 = vadd.f32 0.0, %v5087
        %v5089 = vpop.f32.mrf.mxu0
        %5090 = vmatprep.mubr.f32.mxu0 0.0
        %5091 = vmatmul.mubr.f32.gmra.mxu0 %v4935
        %v5092 = vpop.f32.mrf.mxu0
        %v5093 = vadd.f32 0.0, %v5092
        %v5094 = vpop.f32.mrf.mxu0
        %5095 = vmatprep.mubr.f32.mxu0 0.0
        %5096 = vmatmul.mubr.f32.gmra.mxu0 %v4937
        %v5097 = vpop.f32.mrf.mxu0
        %v5098 = vadd.f32 0.0, %v5097
        %v5099 = vpop.f32.mrf.mxu0
        %5100 = vmatprep.mubr.f32.mxu0 0.0
        %5101 = vmatmul.mubr.f32.gmra.mxu0 %v4939
        %v5102 = vpop.f32.mrf.mxu0
        %v5103 = vadd.f32 0.0, %v5102
        %v5104 = vpop.f32.mrf.mxu0
        %5105 = vmatprep.mubr.f32.mxu0 0.0
        %5106 = vmatmul.mubr.f32.gmra.mxu0 %v4941
        %v5107 = vpop.f32.mrf.mxu0
        %v5108 = vadd.f32 0.0, %v5107
        %v5109 = vpop.f32.mrf.mxu0
        %5110 = vmatprep.mubr.f32.mxu0 0.0
        %5111 = vmatmul.mubr.f32.gmra.mxu0 %v4943
        %v5112 = vpop.f32.mrf.mxu0
        %v5113 = vadd.f32 0.0, %v5112
        %v5114 = vpop.f32.mrf.mxu0
        %5115 = vmatprep.mubr.f32.mxu0 0.0
        %5116 = vmatmul.mubr.f32.gmra.mxu0 %v4945
        %v5117 = vpop.f32.mrf.mxu0
        %v5118 = vadd.f32 0.0, %v5117
        %v5119 = vpop.f32.mrf.mxu0
        %5120 = vmatprep.mubr.f32.mxu0 0.0
        %5121 = vmatmul.mubr.f32.gmra.mxu0 %v4947
        %v5122 = vpop.f32.mrf.mxu0
        %v5123 = vadd.f32 0.0, %v5122
        %v5124 = vpop.f32.mrf.mxu0
        %5125 = vdwg.mxu0
        %5126 = vmax.xlane.f32.xlu0 %v5048
        %v5127 = vpop.xlane.xlu0 %5126
        %5128 = vmax.xlane.f32.xlu0 %v5053
        %v5129 = vpop.xlane.xlu0 %5128
        %5130 = vmax.xlane.f32.xlu0 %v5058
        %v5131 = vpop.xlane.xlu0 %5130
        %5132 = vmax.xlane.f32.xlu0 %v5063
        %v5133 = vpop.xlane.xlu0 %5132
        %5134 = vmax.xlane.f32.xlu0 %v5068
        %v5135 = vpop.xlane.xlu0 %5134
        %5136 = vmax.xlane.f32.xlu0 %v5073
        %v5137 = vpop.xlane.xlu0 %5136
        %5138 = vmax.xlane.f32.xlu0 %v5078
        %v5139 = vpop.xlane.xlu0 %5138
        %5140 = vmax.xlane.f32.xlu0 %v5083
        %v5141 = vpop.xlane.xlu0 %5140
        %5142 = vmax.xlane.f32.xlu0 %v5088
        %v5143 = vpop.xlane.xlu0 %5142
        %5144 = vmax.xlane.f32.xlu0 %v5093
        %v5145 = vpop.xlane.xlu0 %5144
        %5146 = vmax.xlane.f32.xlu0 %v5098
        %v5147 = vpop.xlane.xlu0 %5146
        %5148 = vmax.xlane.f32.xlu0 %v5103
        %v5149 = vpop.xlane.xlu0 %5148
        %5150 = vmax.xlane.f32.xlu0 %v5108
        %v5151 = vpop.xlane.xlu0 %5150
        %5152 = vmax.xlane.f32.xlu0 %v5113
        %v5153 = vpop.xlane.xlu0 %5152
        %5154 = vmax.xlane.f32.xlu0 %v5118
        %v5155 = vpop.xlane.xlu0 %5154
        %5156 = vmax.xlane.f32.xlu0 %v5123
        %v5157 = vpop.xlane.xlu0 %5156
        %v5158 = vsub.f32 %v5048, %v5127
        %v5159 = vsub.f32 %v5053, %v5129
        %v5160 = vsub.f32 %v5058, %v5131
        %v5161 = vsub.f32 %v5063, %v5133
        %v5162 = vsub.f32 %v5068, %v5135
        %v5163 = vsub.f32 %v5073, %v5137
        %v5164 = vsub.f32 %v5078, %v5139
        %v5165 = vsub.f32 %v5083, %v5141
        %v5166 = vsub.f32 %v5088, %v5143
        %v5167 = vsub.f32 %v5093, %v5145
        %v5168 = vsub.f32 %v5098, %v5147
        %v5169 = vsub.f32 %v5103, %v5149
        %v5170 = vsub.f32 %v5108, %v5151
        %v5171 = vsub.f32 %v5113, %v5153
        %v5172 = vsub.f32 %v5118, %v5155
        %v5173 = vsub.f32 %v5123, %v5157
        %v5174 = vmul.f32 %v5158, 1.442695
        %v5175 = vpow.pop %v5174
        %v5176 = vmul.f32 %v5159, 1.442695
        %v5177 = vpow.pop %v5176
        %v5178 = vmul.f32 %v5160, 1.442695
        %v5179 = vpow.pop %v5178
        %v5180 = vmul.f32 %v5161, 1.442695
        %v5181 = vpow.pop %v5180
        %v5182 = vmul.f32 %v5162, 1.442695
        %v5183 = vpow.pop %v5182
        %v5184 = vmul.f32 %v5163, 1.442695
        %v5185 = vpow.pop %v5184
        %v5186 = vmul.f32 %v5164, 1.442695
        %v5187 = vpow.pop %v5186
        %v5188 = vmul.f32 %v5165, 1.442695
        %v5189 = vpow.pop %v5188
        %v5190 = vmul.f32 %v5166, 1.442695
        %v5191 = vpow.pop %v5190
        %v5192 = vmul.f32 %v5167, 1.442695
        %v5193 = vpow.pop %v5192
        %v5194 = vmul.f32 %v5168, 1.442695
        %v5195 = vpow.pop %v5194
        %v5196 = vmul.f32 %v5169, 1.442695
        %v5197 = vpow.pop %v5196
        %v5198 = vmul.f32 %v5170, 1.442695
        %v5199 = vpow.pop %v5198
        %v5200 = vmul.f32 %v5171, 1.442695
        %v5201 = vpow.pop %v5200
        %v5202 = vmul.f32 %v5172, 1.442695
        %v5203 = vpow.pop %v5202
        %v5204 = vmul.f32 %v5173, 1.442695
        %v5205 = vpow.pop %v5204
        %5206 = vadd.xlane.f32.xlu0 %v5175
        %v5207 = vpop.xlane.xlu0 %5206
        %5208 = vadd.xlane.f32.xlu0 %v5177
        %v5209 = vpop.xlane.xlu0 %5208
        %5210 = vadd.xlane.f32.xlu0 %v5179
        %v5211 = vpop.xlane.xlu0 %5210
        %5212 = vadd.xlane.f32.xlu0 %v5181
        %v5213 = vpop.xlane.xlu0 %5212
        %5214 = vadd.xlane.f32.xlu0 %v5183
        %v5215 = vpop.xlane.xlu0 %5214
        %5216 = vadd.xlane.f32.xlu0 %v5185
        %v5217 = vpop.xlane.xlu0 %5216
        %5218 = vadd.xlane.f32.xlu0 %v5187
        %v5219 = vpop.xlane.xlu0 %5218
        %5220 = vadd.xlane.f32.xlu0 %v5189
        %v5221 = vpop.xlane.xlu0 %5220
        %5222 = vadd.xlane.f32.xlu0 %v5191
        %v5223 = vpop.xlane.xlu0 %5222
        %5224 = vadd.xlane.f32.xlu0 %v5193
        %v5225 = vpop.xlane.xlu0 %5224
        %5226 = vadd.xlane.f32.xlu0 %v5195
        %v5227 = vpop.xlane.xlu0 %5226
        %5228 = vadd.xlane.f32.xlu0 %v5197
        %v5229 = vpop.xlane.xlu0 %5228
        %5230 = vadd.xlane.f32.xlu0 %v5199
        %v5231 = vpop.xlane.xlu0 %5230
        %5232 = vadd.xlane.f32.xlu0 %v5201
        %v5233 = vpop.xlane.xlu0 %5232
        %5234 = vadd.xlane.f32.xlu0 %v5203
        %v5235 = vpop.xlane.xlu0 %5234
        %5236 = vadd.xlane.f32.xlu0 %v5205
        %v5237 = vpop.xlane.xlu0 %5236
        %5254 = vrot.lane.b32.xlu0 %v4821, 96
        %v5255 = vpop.permute.xlu0 %5254
        %5256 = vrot.lane.b32.xlu0 %v4822, 96
        %v5257 = vpop.permute.xlu0 %5256
        %5258 = vrot.lane.b32.xlu0 %v4823, 96
        %v5259 = vpop.permute.xlu0 %5258
        %5260 = vrot.lane.b32.xlu0 %v4824, 96
        %v5261 = vpop.permute.xlu0 %5260
        %5262 = vrot.lane.b32.xlu0 %v4825, 96
        %v5263 = vpop.permute.xlu0 %5262
        %5264 = vrot.lane.b32.xlu0 %v4826, 96
        %v5265 = vpop.permute.xlu0 %5264
        %5266 = vrot.lane.b32.xlu0 %v4827, 96
        %v5267 = vpop.permute.xlu0 %5266
        %5268 = vrot.lane.b32.xlu0 %v4828, 96
        %v5269 = vpop.permute.xlu0 %5268
        %5270 = vrot.lane.b32.xlu0 %v4829, 96
        %v5271 = vpop.permute.xlu0 %5270
        %5272 = vrot.lane.b32.xlu0 %v4830, 96
        %v5273 = vpop.permute.xlu0 %5272
        %5274 = vrot.lane.b32.xlu0 %v4831, 96
        %v5275 = vpop.permute.xlu0 %5274
        %5276 = vrot.lane.b32.xlu0 %v4832, 96
        %v5277 = vpop.permute.xlu0 %5276
        %5278 = vrot.lane.b32.xlu0 %v4833, 96
        %v5279 = vpop.permute.xlu0 %5278
        %5280 = vrot.lane.b32.xlu0 %v4834, 96
        %v5281 = vpop.permute.xlu0 %5280
        %5282 = vrot.lane.b32.xlu0 %v4835, 96
        %v5283 = vpop.permute.xlu0 %5282
        %5284 = vrot.lane.b32.xlu0 %v4836, 96
        %v5285 = vpop.permute.xlu0 %5284
        %5302 = vmatprep.subr.mxu0 0.0
        %5303 = vmatpush1.msra.mxu0 %v5285
        %5304 = vmatprep.subr.mxu0 0.0
        %5305 = vmatpush1.msra.mxu0 %v5283
        %5306 = vmatprep.subr.mxu0 0.0
        %5307 = vmatpush1.msra.mxu0 %v5281
        %5308 = vmatprep.subr.mxu0 0.0
        %5309 = vmatpush1.msra.mxu0 %v5279
        %5310 = vmatprep.subr.mxu0 0.0
        %5311 = vmatpush1.msra.mxu0 %v5277
        %5312 = vmatprep.subr.mxu0 0.0
        %5313 = vmatpush1.msra.mxu0 %v5275
        %5314 = vmatprep.subr.mxu0 0.0
        %5315 = vmatpush1.msra.mxu0 %v5273
        %5316 = vmatprep.subr.mxu0 0.0
        %5317 = vmatpush1.msra.mxu0 %v5271
        %5318 = vmatprep.subr.mxu0 0.0
        %5319 = vmatpush1.msra.mxu0 %v5269
        %5320 = vmatprep.subr.mxu0 0.0
        %5321 = vmatpush1.msra.mxu0 %v5267
        %5322 = vmatprep.subr.mxu0 0.0
        %5323 = vmatpush1.msra.mxu0 %v5265
        %5324 = vmatprep.subr.mxu0 0.0
        %5325 = vmatpush1.msra.mxu0 %v5263
        %5326 = vmatprep.subr.mxu0 0.0
        %5327 = vmatpush1.msra.mxu0 %v5261
        %5328 = vmatprep.subr.mxu0 0.0
        %5329 = vmatpush1.msra.mxu0 %v5259
        %5330 = vmatprep.subr.mxu0 0.0
        %5331 = vmatpush1.msra.mxu0 %v5257
        %5332 = vmatprep.subr.mxu0 0.0
        %5333 = vmatpush1.msra.mxu0 %v5255
        %5334 = vmatprep.subr.mxu0 0.0
        %5335 = vmatpush2.msra.mxu0 0.0
        %5336 = vmatprep.subr.mxu0 0.0
        %5337 = vmatpush2.msra.mxu0 0.0
        %5338 = vmatprep.subr.mxu0 0.0
        %5339 = vmatpush2.msra.mxu0 0.0
        %5340 = vmatprep.subr.mxu0 0.0
        %5341 = vmatpush2.msra.mxu0 0.0
        %5342 = vmatprep.subr.mxu0 0.0
        %5343 = vmatpush2.msra.mxu0 0.0
        %5344 = vmatprep.subr.mxu0 0.0
        %5345 = vmatpush2.msra.mxu0 0.0
        %5346 = vmatprep.subr.mxu0 0.0
        %5347 = vmatpush2.msra.mxu0 0.0
        %5348 = vmatprep.subr.mxu0 0.0
        %5349 = vmatpush2.msra.mxu0 0.0
        %5350 = vmatprep.subr.mxu0 0.0
        %5351 = vmatpush2.msra.mxu0 0.0
        %5352 = vmatprep.subr.mxu0 0.0
        %5353 = vmatpush2.msra.mxu0 0.0
        %5354 = vmatprep.subr.mxu0 0.0
        %5355 = vmatpush2.msra.mxu0 0.0
        %5356 = vmatprep.subr.mxu0 0.0
        %5357 = vmatpush2.msra.mxu0 0.0
        %5358 = vmatprep.subr.mxu0 0.0
        %5359 = vmatpush2.msra.mxu0 0.0
        %5360 = vmatprep.subr.mxu0 0.0
        %5361 = vmatpush2.msra.mxu0 0.0
        %5362 = vmatprep.subr.mxu0 0.0
        %5363 = vmatpush2.msra.mxu0 0.0
        %5364 = vmatprep.subr.mxu0 0.0
        %5365 = vmatpush2.msra.mxu0 0.0
        %5366 = vmatprep.mubr.f32.mxu0 0.0
        %5367 = vmatmul.mubr.f32.gmra.mxu0 %v5175
        %v5368 = vpop.f32.mrf.mxu0
        %v5369 = vadd.f32 0.0, %v5368
        %v5370 = vpop.f32.mrf.mxu0
        %5371 = vmatprep.mubr.f32.mxu0 0.0
        %5372 = vmatmul.mubr.f32.gmra.mxu0 %v5177
        %v5373 = vpop.f32.mrf.mxu0
        %v5374 = vadd.f32 0.0, %v5373
        %v5375 = vpop.f32.mrf.mxu0
        %5376 = vmatprep.mubr.f32.mxu0 0.0
        %5377 = vmatmul.mubr.f32.gmra.mxu0 %v5179
        %v5378 = vpop.f32.mrf.mxu0
        %v5379 = vadd.f32 0.0, %v5378
        %v5380 = vpop.f32.mrf.mxu0
        %5381 = vmatprep.mubr.f32.mxu0 0.0
        %5382 = vmatmul.mubr.f32.gmra.mxu0 %v5181
        %v5383 = vpop.f32.mrf.mxu0
        %v5384 = vadd.f32 0.0, %v5383
        %v5385 = vpop.f32.mrf.mxu0
        %5386 = vmatprep.mubr.f32.mxu0 0.0
        %5387 = vmatmul.mubr.f32.gmra.mxu0 %v5183
        %v5388 = vpop.f32.mrf.mxu0
        %v5389 = vadd.f32 0.0, %v5388
        %v5390 = vpop.f32.mrf.mxu0
        %5391 = vmatprep.mubr.f32.mxu0 0.0
        %5392 = vmatmul.mubr.f32.gmra.mxu0 %v5185
        %v5393 = vpop.f32.mrf.mxu0
        %v5394 = vadd.f32 0.0, %v5393
        %v5395 = vpop.f32.mrf.mxu0
        %5396 = vmatprep.mubr.f32.mxu0 0.0
        %5397 = vmatmul.mubr.f32.gmra.mxu0 %v5187
        %v5398 = vpop.f32.mrf.mxu0
        %v5399 = vadd.f32 0.0, %v5398
        %v5400 = vpop.f32.mrf.mxu0
        %5401 = vmatprep.mubr.f32.mxu0 0.0
        %5402 = vmatmul.mubr.f32.gmra.mxu0 %v5189
        %v5403 = vpop.f32.mrf.mxu0
        %v5404 = vadd.f32 0.0, %v5403
        %v5405 = vpop.f32.mrf.mxu0
        %5406 = vmatprep.mubr.f32.mxu0 0.0
        %5407 = vmatmul.mubr.f32.gmra.mxu0 %v5191
        %v5408 = vpop.f32.mrf.mxu0
        %v5409 = vadd.f32 0.0, %v5408
        %v5410 = vpop.f32.mrf.mxu0
        %5411 = vmatprep.mubr.f32.mxu0 0.0
        %5412 = vmatmul.mubr.f32.gmra.mxu0 %v5193
        %v5413 = vpop.f32.mrf.mxu0
        %v5414 = vadd.f32 0.0, %v5413
        %v5415 = vpop.f32.mrf.mxu0
        %5416 = vmatprep.mubr.f32.mxu0 0.0
        %5417 = vmatmul.mubr.f32.gmra.mxu0 %v5195
        %v5418 = vpop.f32.mrf.mxu0
        %v5419 = vadd.f32 0.0, %v5418
        %v5420 = vpop.f32.mrf.mxu0
        %5421 = vmatprep.mubr.f32.mxu0 0.0
        %5422 = vmatmul.mubr.f32.gmra.mxu0 %v5197
        %v5423 = vpop.f32.mrf.mxu0
        %v5424 = vadd.f32 0.0, %v5423
        %v5425 = vpop.f32.mrf.mxu0
        %5426 = vmatprep.mubr.f32.mxu0 0.0
        %5427 = vmatmul.mubr.f32.gmra.mxu0 %v5199
        %v5428 = vpop.f32.mrf.mxu0
        %v5429 = vadd.f32 0.0, %v5428
        %v5430 = vpop.f32.mrf.mxu0
        %5431 = vmatprep.mubr.f32.mxu0 0.0
        %5432 = vmatmul.mubr.f32.gmra.mxu0 %v5201
        %v5433 = vpop.f32.mrf.mxu0
        %v5434 = vadd.f32 0.0, %v5433
        %v5435 = vpop.f32.mrf.mxu0
        %5436 = vmatprep.mubr.f32.mxu0 0.0
        %5437 = vmatmul.mubr.f32.gmra.mxu0 %v5203
        %v5438 = vpop.f32.mrf.mxu0
        %v5439 = vadd.f32 0.0, %v5438
        %v5440 = vpop.f32.mrf.mxu0
        %5441 = vmatprep.mubr.f32.mxu0 0.0
        %5442 = vmatmul.mubr.f32.gmra.mxu0 %v5205
        %v5443 = vpop.f32.mrf.mxu0
        %v5444 = vadd.f32 0.0, %v5443
        %v5445 = vpop.f32.mrf.mxu0
        %5446 = vdwg.mxu0
        %v5447 = vrcp.pop %v5207
        %v5448 = vrcp.pop %v5209
        %v5449 = vrcp.pop %v5211
        %v5450 = vrcp.pop %v5213
        %v5451 = vrcp.pop %v5215
        %v5452 = vrcp.pop %v5217
        %v5453 = vrcp.pop %v5219
        %v5454 = vrcp.pop %v5221
        %v5455 = vrcp.pop %v5223
        %v5456 = vrcp.pop %v5225
        %v5457 = vrcp.pop %v5227
        %v5458 = vrcp.pop %v5229
        %v5459 = vrcp.pop %v5231
        %v5460 = vrcp.pop %v5233
        %v5461 = vrcp.pop %v5235
        %v5462 = vrcp.pop %v5237
        %v5463 = vmul.f32 %v5369, %v5447
        %v5464 = vmul.f32 %v5374, %v5448
        %v5465 = vmul.f32 %v5379, %v5449
        %v5466 = vmul.f32 %v5384, %v5450
        %v5467 = vmul.f32 %v5389, %v5451
        %v5468 = vmul.f32 %v5394, %v5452
        %v5469 = vmul.f32 %v5399, %v5453
        %v5470 = vmul.f32 %v5404, %v5454
        %v5471 = vmul.f32 %v5409, %v5455
        %v5472 = vmul.f32 %v5414, %v5456
        %v5473 = vmul.f32 %v5419, %v5457
        %v5474 = vmul.f32 %v5424, %v5458
        %v5475 = vmul.f32 %v5429, %v5459
        %v5476 = vmul.f32 %v5434, %v5460
        %v5477 = vmul.f32 %v5439, %v5461
        %v5478 = vmul.f32 %v5444, %v5462
        %5495 = vrot.lane.b32.xlu0 %v5463, 32
        %v5496 = vpop.permute.xlu0 %5495
        %5497 = vrot.lane.b32.xlu0 %v5464, 32
        %v5498 = vpop.permute.xlu0 %5497
        %5499 = vrot.lane.b32.xlu0 %v5465, 32
        %v5500 = vpop.permute.xlu0 %5499
        %5501 = vrot.lane.b32.xlu0 %v5466, 32
        %v5502 = vpop.permute.xlu0 %5501
        %5503 = vrot.lane.b32.xlu0 %v5467, 32
        %v5504 = vpop.permute.xlu0 %5503
        %5505 = vrot.lane.b32.xlu0 %v5468, 32
        %v5506 = vpop.permute.xlu0 %5505
        %5507 = vrot.lane.b32.xlu0 %v5469, 32
        %v5508 = vpop.permute.xlu0 %5507
        %5509 = vrot.lane.b32.xlu0 %v5470, 32
        %v5510 = vpop.permute.xlu0 %5509
        %5511 = vrot.lane.b32.xlu0 %v5471, 32
        %v5512 = vpop.permute.xlu0 %5511
        %5513 = vrot.lane.b32.xlu0 %v5472, 32
        %v5514 = vpop.permute.xlu0 %5513
        %5515 = vrot.lane.b32.xlu0 %v5473, 32
        %v5516 = vpop.permute.xlu0 %5515
        %5517 = vrot.lane.b32.xlu0 %v5474, 32
        %v5518 = vpop.permute.xlu0 %5517
        %5519 = vrot.lane.b32.xlu0 %v5475, 32
        %v5520 = vpop.permute.xlu0 %5519
        %5521 = vrot.lane.b32.xlu0 %v5476, 32
        %v5522 = vpop.permute.xlu0 %5521
        %5523 = vrot.lane.b32.xlu0 %v5477, 32
        %v5524 = vpop.permute.xlu0 %5523
        %5525 = vrot.lane.b32.xlu0 %v5478, 32
        %v5526 = vpop.permute.xlu0 %5525
        %vm5543 = vcmask 326912
        %5544 = vst.msk [vmem:[%s2523] sm:$0xff] %vm5543, %v5496
        %5545 = vst.msk [vmem:[%s2523 + $0x8] sm:$0xff] %vm5543, %v5498
        %5546 = vst.msk [vmem:[%s2523 + $0x10] sm:$0xff] %vm5543, %v5500
        %5547 = vst.msk [vmem:[%s2523 + $0x18] sm:$0xff] %vm5543, %v5502
        %5548 = vst.msk [vmem:[%s2523 + $0x20] sm:$0xff] %vm5543, %v5504
        %5549 = vst.msk [vmem:[%s2523 + $0x28] sm:$0xff] %vm5543, %v5506
        %5550 = vst.msk [vmem:[%s2523 + $0x30] sm:$0xff] %vm5543, %v5508
        %5551 = vst.msk [vmem:[%s2523 + $0x38] sm:$0xff] %vm5543, %v5510
        %5552 = vst.msk [vmem:[%s2523 + $0x40] sm:$0xff] %vm5543, %v5512
        %5553 = vst.msk [vmem:[%s2523 + $0x48] sm:$0xff] %vm5543, %v5514
        %5554 = vst.msk [vmem:[%s2523 + $0x50] sm:$0xff] %vm5543, %v5516
        %5555 = vst.msk [vmem:[%s2523 + $0x58] sm:$0xff] %vm5543, %v5518
        %5556 = vst.msk [vmem:[%s2523 + $0x60] sm:$0xff] %vm5543, %v5520
        %5557 = vst.msk [vmem:[%s2523 + $0x68] sm:$0xff] %vm5543, %v5522
        %5558 = vst.msk [vmem:[%s2523 + $0x70] sm:$0xff] %vm5543, %v5524
        %5559 = vst.msk [vmem:[%s2523 + $0x78] sm:$0xff] %vm5543, %v5526
        %v5560 = vld [vmem:[%s1942] sm:$0xff]
        %v5561 = vld [vmem:[%s1942 + $0x10] sm:$0xff]
        %v5562 = vld [vmem:[%s1942 + $0x20] sm:$0xff]
        %v5563 = vld [vmem:[%s1942 + $0x30] sm:$0xff]
        %v5564 = vld [vmem:[%s1942 + $0x40] sm:$0xff]
        %v5565 = vld [vmem:[%s1942 + $0x50] sm:$0xff]
        %v5566 = vld [vmem:[%s1942 + $0x60] sm:$0xff]
        %v5567 = vld [vmem:[%s1942 + $0x70] sm:$0xff]
        %v5568 = vld [vmem:[%s1942 + $0x80] sm:$0xff]
        %v5569 = vld [vmem:[%s1942 + $0x90] sm:$0xff]
        %v5570 = vld [vmem:[%s1942 + $0xa0] sm:$0xff]
        %v5571 = vld [vmem:[%s1942 + $0xb0] sm:$0xff]
        %v5572 = vld [vmem:[%s1942 + $0xc0] sm:$0xff]
        %v5573 = vld [vmem:[%s1942 + $0xd0] sm:$0xff]
        %v5574 = vld [vmem:[%s1942 + $0xe0] sm:$0xff]
        %v5575 = vld [vmem:[%s1942 + $0xf0] sm:$0xff]
        %v5576 = vld [vmem:[%s1942 + $0x8] sm:$0xff]
        %v5577 = vld [vmem:[%s1942 + $0x18] sm:$0xff]
        %v5578 = vld [vmem:[%s1942 + $0x28] sm:$0xff]
        %v5579 = vld [vmem:[%s1942 + $0x38] sm:$0xff]
        %v5580 = vld [vmem:[%s1942 + $0x48] sm:$0xff]
        %v5581 = vld [vmem:[%s1942 + $0x58] sm:$0xff]
        %v5582 = vld [vmem:[%s1942 + $0x68] sm:$0xff]
        %v5583 = vld [vmem:[%s1942 + $0x78] sm:$0xff]
        %v5584 = vld [vmem:[%s1942 + $0x88] sm:$0xff]
        %v5585 = vld [vmem:[%s1942 + $0x98] sm:$0xff]
        %v5586 = vld [vmem:[%s1942 + $0xa8] sm:$0xff]
        %v5587 = vld [vmem:[%s1942 + $0xb8] sm:$0xff]
        %v5588 = vld [vmem:[%s1942 + $0xc8] sm:$0xff]
        %v5589 = vld [vmem:[%s1942 + $0xd8] sm:$0xff]
        %v5590 = vld [vmem:[%s1942 + $0xe8] sm:$0xff]
        %v5591 = vld [vmem:[%s1942 + $0xf8] sm:$0xff]
        %5608 = vrot.lane.b32.xlu0 %v5560, 88
        %v5609 = vpop.permute.xlu0 %5608
        %5610 = vrot.lane.b32.xlu0 %v5561, 88
        %v5611 = vpop.permute.xlu0 %5610
        %5612 = vrot.lane.b32.xlu0 %v5562, 88
        %v5613 = vpop.permute.xlu0 %5612
        %5614 = vrot.lane.b32.xlu0 %v5563, 88
        %v5615 = vpop.permute.xlu0 %5614
        %5616 = vrot.lane.b32.xlu0 %v5564, 88
        %v5617 = vpop.permute.xlu0 %5616
        %5618 = vrot.lane.b32.xlu0 %v5565, 88
        %v5619 = vpop.permute.xlu0 %5618
        %5620 = vrot.lane.b32.xlu0 %v5566, 88
        %v5621 = vpop.permute.xlu0 %5620
        %5622 = vrot.lane.b32.xlu0 %v5567, 88
        %v5623 = vpop.permute.xlu0 %5622
        %5624 = vrot.lane.b32.xlu0 %v5568, 88
        %v5625 = vpop.permute.xlu0 %5624
        %5626 = vrot.lane.b32.xlu0 %v5569, 88
        %v5627 = vpop.permute.xlu0 %5626
        %5628 = vrot.lane.b32.xlu0 %v5570, 88
        %v5629 = vpop.permute.xlu0 %5628
        %5630 = vrot.lane.b32.xlu0 %v5571, 88
        %v5631 = vpop.permute.xlu0 %5630
        %5632 = vrot.lane.b32.xlu0 %v5572, 88
        %v5633 = vpop.permute.xlu0 %5632
        %5634 = vrot.lane.b32.xlu0 %v5573, 88
        %v5635 = vpop.permute.xlu0 %5634
        %5636 = vrot.lane.b32.xlu0 %v5574, 88
        %v5637 = vpop.permute.xlu0 %5636
        %5638 = vrot.lane.b32.xlu0 %v5575, 88
        %v5639 = vpop.permute.xlu0 %5638
        %5640 = vrot.lane.b32.xlu0 %v5560, 24
        %v5641 = vpop.permute.xlu0 %5640
        %5642 = vrot.lane.b32.xlu0 %v5561, 24
        %v5643 = vpop.permute.xlu0 %5642
        %5644 = vrot.lane.b32.xlu0 %v5562, 24
        %v5645 = vpop.permute.xlu0 %5644
        %5646 = vrot.lane.b32.xlu0 %v5563, 24
        %v5647 = vpop.permute.xlu0 %5646
        %5648 = vrot.lane.b32.xlu0 %v5564, 24
        %v5649 = vpop.permute.xlu0 %5648
        %5650 = vrot.lane.b32.xlu0 %v5565, 24
        %v5651 = vpop.permute.xlu0 %5650
        %5652 = vrot.lane.b32.xlu0 %v5566, 24
        %v5653 = vpop.permute.xlu0 %5652
        %5654 = vrot.lane.b32.xlu0 %v5567, 24
        %v5655 = vpop.permute.xlu0 %5654
        %5656 = vrot.lane.b32.xlu0 %v5568, 24
        %v5657 = vpop.permute.xlu0 %5656
        %5658 = vrot.lane.b32.xlu0 %v5569, 24
        %v5659 = vpop.permute.xlu0 %5658
        %5660 = vrot.lane.b32.xlu0 %v5570, 24
        %v5661 = vpop.permute.xlu0 %5660
        %5662 = vrot.lane.b32.xlu0 %v5571, 24
        %v5663 = vpop.permute.xlu0 %5662
        %5664 = vrot.lane.b32.xlu0 %v5572, 24
        %v5665 = vpop.permute.xlu0 %5664
        %5666 = vrot.lane.b32.xlu0 %v5573, 24
        %v5667 = vpop.permute.xlu0 %5666
        %5668 = vrot.lane.b32.xlu0 %v5574, 24
        %v5669 = vpop.permute.xlu0 %5668
        %5670 = vrot.lane.b32.xlu0 %v5575, 24
        %v5671 = vpop.permute.xlu0 %5670
        %v5672 = vsel %vm2023, %v5609, 0
        %v5674 = vsel %vm2023, %v5611, 0
        %v5676 = vsel %vm2023, %v5613, 0
        %v5678 = vsel %vm2023, %v5615, 0
        %v5680 = vsel %vm2023, %v5617, 0
        %v5682 = vsel %vm2023, %v5619, 0
        %v5684 = vsel %vm2023, %v5621, 0
        %v5686 = vsel %vm2023, %v5623, 0
        %v5688 = vsel %vm2023, %v5625, 0
        %v5690 = vsel %vm2023, %v5627, 0
        %v5692 = vsel %vm2023, %v5629, 0
        %v5694 = vsel %vm2023, %v5631, 0
        %v5696 = vsel %vm2023, %v5633, 0
        %v5698 = vsel %vm2023, %v5635, 0
        %v5700 = vsel %vm2023, %v5637, 0
        %v5702 = vsel %vm2023, %v5639, 0
        %v5704 = vsel %vm2023, %v5641, 0
        %v5706 = vsel %vm2023, %v5643, 0
        %v5708 = vsel %vm2023, %v5645, 0
        %v5710 = vsel %vm2023, %v5647, 0
        %v5712 = vsel %vm2023, %v5649, 0
        %v5714 = vsel %vm2023, %v5651, 0
        %v5716 = vsel %vm2023, %v5653, 0
        %v5718 = vsel %vm2023, %v5655, 0
        %v5720 = vsel %vm2023, %v5657, 0
        %v5722 = vsel %vm2023, %v5659, 0
        %v5724 = vsel %vm2023, %v5661, 0
        %v5726 = vsel %vm2023, %v5663, 0
        %v5728 = vsel %vm2023, %v5665, 0
        %v5730 = vsel %vm2023, %v5667, 0
        %v5732 = vsel %vm2023, %v5669, 0
        %v5734 = vsel %vm2023, %v5671, 0
        %5736 = vmatprep.subr.mxu0 0.0
        %5737 = vmatpush1.xpose.msra.mxu0 %v5734
        %5738 = vmatprep.subr.mxu0 0.0
        %5739 = vmatpush1.xpose.msra.mxu0 %v5732
        %5740 = vmatprep.subr.mxu0 0.0
        %5741 = vmatpush1.xpose.msra.mxu0 %v5730
        %5742 = vmatprep.subr.mxu0 0.0
        %5743 = vmatpush1.xpose.msra.mxu0 %v5728
        %5744 = vmatprep.subr.mxu0 0.0
        %5745 = vmatpush1.xpose.msra.mxu0 %v5726
        %5746 = vmatprep.subr.mxu0 0.0
        %5747 = vmatpush1.xpose.msra.mxu0 %v5724
        %5748 = vmatprep.subr.mxu0 0.0
        %5749 = vmatpush1.xpose.msra.mxu0 %v5722
        %5750 = vmatprep.subr.mxu0 0.0
        %5751 = vmatpush1.xpose.msra.mxu0 %v5720
        %5752 = vmatprep.subr.mxu0 0.0
        %5753 = vmatpush1.xpose.msra.mxu0 %v5718
        %5754 = vmatprep.subr.mxu0 0.0
        %5755 = vmatpush1.xpose.msra.mxu0 %v5716
        %5756 = vmatprep.subr.mxu0 0.0
        %5757 = vmatpush1.xpose.msra.mxu0 %v5714
        %5758 = vmatprep.subr.mxu0 0.0
        %5759 = vmatpush1.xpose.msra.mxu0 %v5712
        %5760 = vmatprep.subr.mxu0 0.0
        %5761 = vmatpush1.xpose.msra.mxu0 %v5710
        %5762 = vmatprep.subr.mxu0 0.0
        %5763 = vmatpush1.xpose.msra.mxu0 %v5708
        %5764 = vmatprep.subr.mxu0 0.0
        %5765 = vmatpush1.xpose.msra.mxu0 %v5706
        %5766 = vmatprep.subr.mxu0 0.0
        %5767 = vmatpush1.xpose.msra.mxu0 %v5704
        %5768 = vmatprep.subr.mxu0 0.0
        %5769 = vmatpush2.xpose.msra.mxu0 0.0
        %5770 = vmatprep.subr.mxu0 0.0
        %5771 = vmatpush2.xpose.msra.mxu0 0.0
        %5772 = vmatprep.subr.mxu0 0.0
        %5773 = vmatpush2.xpose.msra.mxu0 0.0
        %5774 = vmatprep.subr.mxu0 0.0
        %5775 = vmatpush2.xpose.msra.mxu0 0.0
        %5776 = vmatprep.subr.mxu0 0.0
        %5777 = vmatpush2.xpose.msra.mxu0 0.0
        %5778 = vmatprep.subr.mxu0 0.0
        %5779 = vmatpush2.xpose.msra.mxu0 0.0
        %5780 = vmatprep.subr.mxu0 0.0
        %5781 = vmatpush2.xpose.msra.mxu0 0.0
        %5782 = vmatprep.subr.mxu0 0.0
        %5783 = vmatpush2.xpose.msra.mxu0 0.0
        %5784 = vmatprep.subr.mxu0 0.0
        %5785 = vmatpush2.xpose.msra.mxu0 0.0
        %5786 = vmatprep.subr.mxu0 0.0
        %5787 = vmatpush2.xpose.msra.mxu0 0.0
        %5788 = vmatprep.subr.mxu0 0.0
        %5789 = vmatpush2.xpose.msra.mxu0 0.0
        %5790 = vmatprep.subr.mxu0 0.0
        %5791 = vmatpush2.xpose.msra.mxu0 0.0
        %5792 = vmatprep.subr.mxu0 0.0
        %5793 = vmatpush2.xpose.msra.mxu0 0.0
        %5794 = vmatprep.subr.mxu0 0.0
        %5795 = vmatpush2.xpose.msra.mxu0 0.0
        %5796 = vmatprep.subr.mxu0 0.0
        %5797 = vmatpush2.xpose.msra.mxu0 0.0
        %5798 = vmatprep.subr.mxu0 0.0
        %5799 = vmatpush2.xpose.msra.mxu0 0.0
        %5800 = vmatprep.mubr.f32.mxu0 0.0
        %5801 = vmatmul.mubr.f32.gmra.mxu0 %v5672
        %v5802 = vpop.f32.mrf.mxu0
        %v5803 = vadd.f32 0.0, %v5802
        %v5804 = vpop.f32.mrf.mxu0
        %5805 = vmatprep.mubr.f32.mxu0 0.0
        %5806 = vmatmul.mubr.f32.gmra.mxu0 %v5674
        %v5807 = vpop.f32.mrf.mxu0
        %v5808 = vadd.f32 0.0, %v5807
        %v5809 = vpop.f32.mrf.mxu0
        %5810 = vmatprep.mubr.f32.mxu0 0.0
        %5811 = vmatmul.mubr.f32.gmra.mxu0 %v5676
        %v5812 = vpop.f32.mrf.mxu0
        %v5813 = vadd.f32 0.0, %v5812
        %v5814 = vpop.f32.mrf.mxu0
        %5815 = vmatprep.mubr.f32.mxu0 0.0
        %5816 = vmatmul.mubr.f32.gmra.mxu0 %v5678
        %v5817 = vpop.f32.mrf.mxu0
        %v5818 = vadd.f32 0.0, %v5817
        %v5819 = vpop.f32.mrf.mxu0
        %5820 = vmatprep.mubr.f32.mxu0 0.0
        %5821 = vmatmul.mubr.f32.gmra.mxu0 %v5680
        %v5822 = vpop.f32.mrf.mxu0
        %v5823 = vadd.f32 0.0, %v5822
        %v5824 = vpop.f32.mrf.mxu0
        %5825 = vmatprep.mubr.f32.mxu0 0.0
        %5826 = vmatmul.mubr.f32.gmra.mxu0 %v5682
        %v5827 = vpop.f32.mrf.mxu0
        %v5828 = vadd.f32 0.0, %v5827
        %v5829 = vpop.f32.mrf.mxu0
        %5830 = vmatprep.mubr.f32.mxu0 0.0
        %5831 = vmatmul.mubr.f32.gmra.mxu0 %v5684
        %v5832 = vpop.f32.mrf.mxu0
        %v5833 = vadd.f32 0.0, %v5832
        %v5834 = vpop.f32.mrf.mxu0
        %5835 = vmatprep.mubr.f32.mxu0 0.0
        %5836 = vmatmul.mubr.f32.gmra.mxu0 %v5686
        %v5837 = vpop.f32.mrf.mxu0
        %v5838 = vadd.f32 0.0, %v5837
        %v5839 = vpop.f32.mrf.mxu0
        %5840 = vmatprep.mubr.f32.mxu0 0.0
        %5841 = vmatmul.mubr.f32.gmra.mxu0 %v5688
        %v5842 = vpop.f32.mrf.mxu0
        %v5843 = vadd.f32 0.0, %v5842
        %v5844 = vpop.f32.mrf.mxu0
        %5845 = vmatprep.mubr.f32.mxu0 0.0
        %5846 = vmatmul.mubr.f32.gmra.mxu0 %v5690
        %v5847 = vpop.f32.mrf.mxu0
        %v5848 = vadd.f32 0.0, %v5847
        %v5849 = vpop.f32.mrf.mxu0
        %5850 = vmatprep.mubr.f32.mxu0 0.0
        %5851 = vmatmul.mubr.f32.gmra.mxu0 %v5692
        %v5852 = vpop.f32.mrf.mxu0
        %v5853 = vadd.f32 0.0, %v5852
        %v5854 = vpop.f32.mrf.mxu0
        %5855 = vmatprep.mubr.f32.mxu0 0.0
        %5856 = vmatmul.mubr.f32.gmra.mxu0 %v5694
        %v5857 = vpop.f32.mrf.mxu0
        %v5858 = vadd.f32 0.0, %v5857
        %v5859 = vpop.f32.mrf.mxu0
        %5860 = vmatprep.mubr.f32.mxu0 0.0
        %5861 = vmatmul.mubr.f32.gmra.mxu0 %v5696
        %v5862 = vpop.f32.mrf.mxu0
        %v5863 = vadd.f32 0.0, %v5862
        %v5864 = vpop.f32.mrf.mxu0
        %5865 = vmatprep.mubr.f32.mxu0 0.0
        %5866 = vmatmul.mubr.f32.gmra.mxu0 %v5698
        %v5867 = vpop.f32.mrf.mxu0
        %v5868 = vadd.f32 0.0, %v5867
        %v5869 = vpop.f32.mrf.mxu0
        %5870 = vmatprep.mubr.f32.mxu0 0.0
        %5871 = vmatmul.mubr.f32.gmra.mxu0 %v5700
        %v5872 = vpop.f32.mrf.mxu0
        %v5873 = vadd.f32 0.0, %v5872
        %v5874 = vpop.f32.mrf.mxu0
        %5875 = vmatprep.mubr.f32.mxu0 0.0
        %5876 = vmatmul.mubr.f32.gmra.mxu0 %v5702
        %v5877 = vpop.f32.mrf.mxu0
        %v5878 = vadd.f32 0.0, %v5877
        %v5879 = vpop.f32.mrf.mxu0
        %5880 = vdwg.mxu0
        %5881 = vmax.xlane.f32.xlu0 %v5803
        %v5882 = vpop.xlane.xlu0 %5881
        %5883 = vmax.xlane.f32.xlu0 %v5808
        %v5884 = vpop.xlane.xlu0 %5883
        %5885 = vmax.xlane.f32.xlu0 %v5813
        %v5886 = vpop.xlane.xlu0 %5885
        %5887 = vmax.xlane.f32.xlu0 %v5818
        %v5888 = vpop.xlane.xlu0 %5887
        %5889 = vmax.xlane.f32.xlu0 %v5823
        %v5890 = vpop.xlane.xlu0 %5889
        %5891 = vmax.xlane.f32.xlu0 %v5828
        %v5892 = vpop.xlane.xlu0 %5891
        %5893 = vmax.xlane.f32.xlu0 %v5833
        %v5894 = vpop.xlane.xlu0 %5893
        %5895 = vmax.xlane.f32.xlu0 %v5838
        %v5896 = vpop.xlane.xlu0 %5895
        %5897 = vmax.xlane.f32.xlu0 %v5843
        %v5898 = vpop.xlane.xlu0 %5897
        %5899 = vmax.xlane.f32.xlu0 %v5848
        %v5900 = vpop.xlane.xlu0 %5899
        %5901 = vmax.xlane.f32.xlu0 %v5853
        %v5902 = vpop.xlane.xlu0 %5901
        %5903 = vmax.xlane.f32.xlu0 %v5858
        %v5904 = vpop.xlane.xlu0 %5903
        %5905 = vmax.xlane.f32.xlu0 %v5863
        %v5906 = vpop.xlane.xlu0 %5905
        %5907 = vmax.xlane.f32.xlu0 %v5868
        %v5908 = vpop.xlane.xlu0 %5907
        %5909 = vmax.xlane.f32.xlu0 %v5873
        %v5910 = vpop.xlane.xlu0 %5909
        %5911 = vmax.xlane.f32.xlu0 %v5878
        %v5912 = vpop.xlane.xlu0 %5911
        %v5913 = vsub.f32 %v5803, %v5882
        %v5914 = vsub.f32 %v5808, %v5884
        %v5915 = vsub.f32 %v5813, %v5886
        %v5916 = vsub.f32 %v5818, %v5888
        %v5917 = vsub.f32 %v5823, %v5890
        %v5918 = vsub.f32 %v5828, %v5892
        %v5919 = vsub.f32 %v5833, %v5894
        %v5920 = vsub.f32 %v5838, %v5896
        %v5921 = vsub.f32 %v5843, %v5898
        %v5922 = vsub.f32 %v5848, %v5900
        %v5923 = vsub.f32 %v5853, %v5902
        %v5924 = vsub.f32 %v5858, %v5904
        %v5925 = vsub.f32 %v5863, %v5906
        %v5926 = vsub.f32 %v5868, %v5908
        %v5927 = vsub.f32 %v5873, %v5910
        %v5928 = vsub.f32 %v5878, %v5912
        %v5929 = vmul.f32 %v5913, 1.442695
        %v5930 = vpow.pop %v5929
        %v5931 = vmul.f32 %v5914, 1.442695
        %v5932 = vpow.pop %v5931
        %v5933 = vmul.f32 %v5915, 1.442695
        %v5934 = vpow.pop %v5933
        %v5935 = vmul.f32 %v5916, 1.442695
        %v5936 = vpow.pop %v5935
        %v5937 = vmul.f32 %v5917, 1.442695
        %v5938 = vpow.pop %v5937
        %v5939 = vmul.f32 %v5918, 1.442695
        %v5940 = vpow.pop %v5939
        %v5941 = vmul.f32 %v5919, 1.442695
        %v5942 = vpow.pop %v5941
        %v5943 = vmul.f32 %v5920, 1.442695
        %v5944 = vpow.pop %v5943
        %v5945 = vmul.f32 %v5921, 1.442695
        %v5946 = vpow.pop %v5945
        %v5947 = vmul.f32 %v5922, 1.442695
        %v5948 = vpow.pop %v5947
        %v5949 = vmul.f32 %v5923, 1.442695
        %v5950 = vpow.pop %v5949
        %v5951 = vmul.f32 %v5924, 1.442695
        %v5952 = vpow.pop %v5951
        %v5953 = vmul.f32 %v5925, 1.442695
        %v5954 = vpow.pop %v5953
        %v5955 = vmul.f32 %v5926, 1.442695
        %v5956 = vpow.pop %v5955
        %v5957 = vmul.f32 %v5927, 1.442695
        %v5958 = vpow.pop %v5957
        %v5959 = vmul.f32 %v5928, 1.442695
        %v5960 = vpow.pop %v5959
        %5961 = vadd.xlane.f32.xlu0 %v5930
        %v5962 = vpop.xlane.xlu0 %5961
        %5963 = vadd.xlane.f32.xlu0 %v5932
        %v5964 = vpop.xlane.xlu0 %5963
        %5965 = vadd.xlane.f32.xlu0 %v5934
        %v5966 = vpop.xlane.xlu0 %5965
        %5967 = vadd.xlane.f32.xlu0 %v5936
        %v5968 = vpop.xlane.xlu0 %5967
        %5969 = vadd.xlane.f32.xlu0 %v5938
        %v5970 = vpop.xlane.xlu0 %5969
        %5971 = vadd.xlane.f32.xlu0 %v5940
        %v5972 = vpop.xlane.xlu0 %5971
        %5973 = vadd.xlane.f32.xlu0 %v5942
        %v5974 = vpop.xlane.xlu0 %5973
        %5975 = vadd.xlane.f32.xlu0 %v5944
        %v5976 = vpop.xlane.xlu0 %5975
        %5977 = vadd.xlane.f32.xlu0 %v5946
        %v5978 = vpop.xlane.xlu0 %5977
        %5979 = vadd.xlane.f32.xlu0 %v5948
        %v5980 = vpop.xlane.xlu0 %5979
        %5981 = vadd.xlane.f32.xlu0 %v5950
        %v5982 = vpop.xlane.xlu0 %5981
        %5983 = vadd.xlane.f32.xlu0 %v5952
        %v5984 = vpop.xlane.xlu0 %5983
        %5985 = vadd.xlane.f32.xlu0 %v5954
        %v5986 = vpop.xlane.xlu0 %5985
        %5987 = vadd.xlane.f32.xlu0 %v5956
        %v5988 = vpop.xlane.xlu0 %5987
        %5989 = vadd.xlane.f32.xlu0 %v5958
        %v5990 = vpop.xlane.xlu0 %5989
        %5991 = vadd.xlane.f32.xlu0 %v5960
        %v5992 = vpop.xlane.xlu0 %5991
        %6009 = vrot.lane.b32.xlu0 %v5576, 88
        %v6010 = vpop.permute.xlu0 %6009
        %6011 = vrot.lane.b32.xlu0 %v5577, 88
        %v6012 = vpop.permute.xlu0 %6011
        %6013 = vrot.lane.b32.xlu0 %v5578, 88
        %v6014 = vpop.permute.xlu0 %6013
        %6015 = vrot.lane.b32.xlu0 %v5579, 88
        %v6016 = vpop.permute.xlu0 %6015
        %6017 = vrot.lane.b32.xlu0 %v5580, 88
        %v6018 = vpop.permute.xlu0 %6017
        %6019 = vrot.lane.b32.xlu0 %v5581, 88
        %v6020 = vpop.permute.xlu0 %6019
        %6021 = vrot.lane.b32.xlu0 %v5582, 88
        %v6022 = vpop.permute.xlu0 %6021
        %6023 = vrot.lane.b32.xlu0 %v5583, 88
        %v6024 = vpop.permute.xlu0 %6023
        %6025 = vrot.lane.b32.xlu0 %v5584, 88
        %v6026 = vpop.permute.xlu0 %6025
        %6027 = vrot.lane.b32.xlu0 %v5585, 88
        %v6028 = vpop.permute.xlu0 %6027
        %6029 = vrot.lane.b32.xlu0 %v5586, 88
        %v6030 = vpop.permute.xlu0 %6029
        %6031 = vrot.lane.b32.xlu0 %v5587, 88
        %v6032 = vpop.permute.xlu0 %6031
        %6033 = vrot.lane.b32.xlu0 %v5588, 88
        %v6034 = vpop.permute.xlu0 %6033
        %6035 = vrot.lane.b32.xlu0 %v5589, 88
        %v6036 = vpop.permute.xlu0 %6035
        %6037 = vrot.lane.b32.xlu0 %v5590, 88
        %v6038 = vpop.permute.xlu0 %6037
        %6039 = vrot.lane.b32.xlu0 %v5591, 88
        %v6040 = vpop.permute.xlu0 %6039
        %6057 = vmatprep.subr.mxu0 0.0
        %6058 = vmatpush1.msra.mxu0 %v6040
        %6059 = vmatprep.subr.mxu0 0.0
        %6060 = vmatpush1.msra.mxu0 %v6038
        %6061 = vmatprep.subr.mxu0 0.0
        %6062 = vmatpush1.msra.mxu0 %v6036
        %6063 = vmatprep.subr.mxu0 0.0
        %6064 = vmatpush1.msra.mxu0 %v6034
        %6065 = vmatprep.subr.mxu0 0.0
        %6066 = vmatpush1.msra.mxu0 %v6032
        %6067 = vmatprep.subr.mxu0 0.0
        %6068 = vmatpush1.msra.mxu0 %v6030
        %6069 = vmatprep.subr.mxu0 0.0
        %6070 = vmatpush1.msra.mxu0 %v6028
        %6071 = vmatprep.subr.mxu0 0.0
        %6072 = vmatpush1.msra.mxu0 %v6026
        %6073 = vmatprep.subr.mxu0 0.0
        %6074 = vmatpush1.msra.mxu0 %v6024
        %6075 = vmatprep.subr.mxu0 0.0
        %6076 = vmatpush1.msra.mxu0 %v6022
        %6077 = vmatprep.subr.mxu0 0.0
        %6078 = vmatpush1.msra.mxu0 %v6020
        %6079 = vmatprep.subr.mxu0 0.0
        %6080 = vmatpush1.msra.mxu0 %v6018
        %6081 = vmatprep.subr.mxu0 0.0
        %6082 = vmatpush1.msra.mxu0 %v6016
        %6083 = vmatprep.subr.mxu0 0.0
        %6084 = vmatpush1.msra.mxu0 %v6014
        %6085 = vmatprep.subr.mxu0 0.0
        %6086 = vmatpush1.msra.mxu0 %v6012
        %6087 = vmatprep.subr.mxu0 0.0
        %6088 = vmatpush1.msra.mxu0 %v6010
        %6089 = vmatprep.subr.mxu0 0.0
        %6090 = vmatpush2.msra.mxu0 0.0
        %6091 = vmatprep.subr.mxu0 0.0
        %6092 = vmatpush2.msra.mxu0 0.0
        %6093 = vmatprep.subr.mxu0 0.0
        %6094 = vmatpush2.msra.mxu0 0.0
        %6095 = vmatprep.subr.mxu0 0.0
        %6096 = vmatpush2.msra.mxu0 0.0
        %6097 = vmatprep.subr.mxu0 0.0
        %6098 = vmatpush2.msra.mxu0 0.0
        %6099 = vmatprep.subr.mxu0 0.0
        %6100 = vmatpush2.msra.mxu0 0.0
        %6101 = vmatprep.subr.mxu0 0.0
        %6102 = vmatpush2.msra.mxu0 0.0
        %6103 = vmatprep.subr.mxu0 0.0
        %6104 = vmatpush2.msra.mxu0 0.0
        %6105 = vmatprep.subr.mxu0 0.0
        %6106 = vmatpush2.msra.mxu0 0.0
        %6107 = vmatprep.subr.mxu0 0.0
        %6108 = vmatpush2.msra.mxu0 0.0
        %6109 = vmatprep.subr.mxu0 0.0
        %6110 = vmatpush2.msra.mxu0 0.0
        %6111 = vmatprep.subr.mxu0 0.0
        %6112 = vmatpush2.msra.mxu0 0.0
        %6113 = vmatprep.subr.mxu0 0.0
        %6114 = vmatpush2.msra.mxu0 0.0
        %6115 = vmatprep.subr.mxu0 0.0
        %6116 = vmatpush2.msra.mxu0 0.0
        %6117 = vmatprep.subr.mxu0 0.0
        %6118 = vmatpush2.msra.mxu0 0.0
        %6119 = vmatprep.subr.mxu0 0.0
        %6120 = vmatpush2.msra.mxu0 0.0
        %6121 = vmatprep.mubr.f32.mxu0 0.0
        %6122 = vmatmul.mubr.f32.gmra.mxu0 %v5930
        %v6123 = vpop.f32.mrf.mxu0
        %v6124 = vadd.f32 0.0, %v6123
        %v6125 = vpop.f32.mrf.mxu0
        %6126 = vmatprep.mubr.f32.mxu0 0.0
        %6127 = vmatmul.mubr.f32.gmra.mxu0 %v5932
        %v6128 = vpop.f32.mrf.mxu0
        %v6129 = vadd.f32 0.0, %v6128
        %v6130 = vpop.f32.mrf.mxu0
        %6131 = vmatprep.mubr.f32.mxu0 0.0
        %6132 = vmatmul.mubr.f32.gmra.mxu0 %v5934
        %v6133 = vpop.f32.mrf.mxu0
        %v6134 = vadd.f32 0.0, %v6133
        %v6135 = vpop.f32.mrf.mxu0
        %6136 = vmatprep.mubr.f32.mxu0 0.0
        %6137 = vmatmul.mubr.f32.gmra.mxu0 %v5936
        %v6138 = vpop.f32.mrf.mxu0
        %v6139 = vadd.f32 0.0, %v6138
        %v6140 = vpop.f32.mrf.mxu0
        %6141 = vmatprep.mubr.f32.mxu0 0.0
        %6142 = vmatmul.mubr.f32.gmra.mxu0 %v5938
        %v6143 = vpop.f32.mrf.mxu0
        %v6144 = vadd.f32 0.0, %v6143
        %v6145 = vpop.f32.mrf.mxu0
        %6146 = vmatprep.mubr.f32.mxu0 0.0
        %6147 = vmatmul.mubr.f32.gmra.mxu0 %v5940
        %v6148 = vpop.f32.mrf.mxu0
        %v6149 = vadd.f32 0.0, %v6148
        %v6150 = vpop.f32.mrf.mxu0
        %6151 = vmatprep.mubr.f32.mxu0 0.0
        %6152 = vmatmul.mubr.f32.gmra.mxu0 %v5942
        %v6153 = vpop.f32.mrf.mxu0
        %v6154 = vadd.f32 0.0, %v6153
        %v6155 = vpop.f32.mrf.mxu0
        %6156 = vmatprep.mubr.f32.mxu0 0.0
        %6157 = vmatmul.mubr.f32.gmra.mxu0 %v5944
        %v6158 = vpop.f32.mrf.mxu0
        %v6159 = vadd.f32 0.0, %v6158
        %v6160 = vpop.f32.mrf.mxu0
        %6161 = vmatprep.mubr.f32.mxu0 0.0
        %6162 = vmatmul.mubr.f32.gmra.mxu0 %v5946
        %v6163 = vpop.f32.mrf.mxu0
        %v6164 = vadd.f32 0.0, %v6163
        %v6165 = vpop.f32.mrf.mxu0
        %6166 = vmatprep.mubr.f32.mxu0 0.0
        %6167 = vmatmul.mubr.f32.gmra.mxu0 %v5948
        %v6168 = vpop.f32.mrf.mxu0
        %v6169 = vadd.f32 0.0, %v6168
        %v6170 = vpop.f32.mrf.mxu0
        %6171 = vmatprep.mubr.f32.mxu0 0.0
        %6172 = vmatmul.mubr.f32.gmra.mxu0 %v5950
        %v6173 = vpop.f32.mrf.mxu0
        %v6174 = vadd.f32 0.0, %v6173
        %v6175 = vpop.f32.mrf.mxu0
        %6176 = vmatprep.mubr.f32.mxu0 0.0
        %6177 = vmatmul.mubr.f32.gmra.mxu0 %v5952
        %v6178 = vpop.f32.mrf.mxu0
        %v6179 = vadd.f32 0.0, %v6178
        %v6180 = vpop.f32.mrf.mxu0
        %6181 = vmatprep.mubr.f32.mxu0 0.0
        %6182 = vmatmul.mubr.f32.gmra.mxu0 %v5954
        %v6183 = vpop.f32.mrf.mxu0
        %v6184 = vadd.f32 0.0, %v6183
        %v6185 = vpop.f32.mrf.mxu0
        %6186 = vmatprep.mubr.f32.mxu0 0.0
        %6187 = vmatmul.mubr.f32.gmra.mxu0 %v5956
        %v6188 = vpop.f32.mrf.mxu0
        %v6189 = vadd.f32 0.0, %v6188
        %v6190 = vpop.f32.mrf.mxu0
        %6191 = vmatprep.mubr.f32.mxu0 0.0
        %6192 = vmatmul.mubr.f32.gmra.mxu0 %v5958
        %v6193 = vpop.f32.mrf.mxu0
        %v6194 = vadd.f32 0.0, %v6193
        %v6195 = vpop.f32.mrf.mxu0
        %6196 = vmatprep.mubr.f32.mxu0 0.0
        %6197 = vmatmul.mubr.f32.gmra.mxu0 %v5960
        %v6198 = vpop.f32.mrf.mxu0
        %v6199 = vadd.f32 0.0, %v6198
        %v6200 = vpop.f32.mrf.mxu0
        %6201 = vdwg.mxu0
        %v6202 = vrcp.pop %v5962
        %v6203 = vrcp.pop %v5964
        %v6204 = vrcp.pop %v5966
        %v6205 = vrcp.pop %v5968
        %v6206 = vrcp.pop %v5970
        %v6207 = vrcp.pop %v5972
        %v6208 = vrcp.pop %v5974
        %v6209 = vrcp.pop %v5976
        %v6210 = vrcp.pop %v5978
        %v6211 = vrcp.pop %v5980
        %v6212 = vrcp.pop %v5982
        %v6213 = vrcp.pop %v5984
        %v6214 = vrcp.pop %v5986
        %v6215 = vrcp.pop %v5988
        %v6216 = vrcp.pop %v5990
        %v6217 = vrcp.pop %v5992
        %v6218 = vmul.f32 %v6124, %v6202
        %v6219 = vmul.f32 %v6129, %v6203
        %v6220 = vmul.f32 %v6134, %v6204
        %v6221 = vmul.f32 %v6139, %v6205
        %v6222 = vmul.f32 %v6144, %v6206
        %v6223 = vmul.f32 %v6149, %v6207
        %v6224 = vmul.f32 %v6154, %v6208
        %v6225 = vmul.f32 %v6159, %v6209
        %v6226 = vmul.f32 %v6164, %v6210
        %v6227 = vmul.f32 %v6169, %v6211
        %v6228 = vmul.f32 %v6174, %v6212
        %v6229 = vmul.f32 %v6179, %v6213
        %v6230 = vmul.f32 %v6184, %v6214
        %v6231 = vmul.f32 %v6189, %v6215
        %v6232 = vmul.f32 %v6194, %v6216
        %v6233 = vmul.f32 %v6199, %v6217
        %6250 = vrot.lane.b32.xlu0 %v6218, 40
        %v6251 = vpop.permute.xlu0 %6250
        %6252 = vrot.lane.b32.xlu0 %v6219, 40
        %v6253 = vpop.permute.xlu0 %6252
        %6254 = vrot.lane.b32.xlu0 %v6220, 40
        %v6255 = vpop.permute.xlu0 %6254
        %6256 = vrot.lane.b32.xlu0 %v6221, 40
        %v6257 = vpop.permute.xlu0 %6256
        %6258 = vrot.lane.b32.xlu0 %v6222, 40
        %v6259 = vpop.permute.xlu0 %6258
        %6260 = vrot.lane.b32.xlu0 %v6223, 40
        %v6261 = vpop.permute.xlu0 %6260
        %6262 = vrot.lane.b32.xlu0 %v6224, 40
        %v6263 = vpop.permute.xlu0 %6262
        %6264 = vrot.lane.b32.xlu0 %v6225, 40
        %v6265 = vpop.permute.xlu0 %6264
        %6266 = vrot.lane.b32.xlu0 %v6226, 40
        %v6267 = vpop.permute.xlu0 %6266
        %6268 = vrot.lane.b32.xlu0 %v6227, 40
        %v6269 = vpop.permute.xlu0 %6268
        %6270 = vrot.lane.b32.xlu0 %v6228, 40
        %v6271 = vpop.permute.xlu0 %6270
        %6272 = vrot.lane.b32.xlu0 %v6229, 40
        %v6273 = vpop.permute.xlu0 %6272
        %6274 = vrot.lane.b32.xlu0 %v6230, 40
        %v6275 = vpop.permute.xlu0 %6274
        %6276 = vrot.lane.b32.xlu0 %v6231, 40
        %v6277 = vpop.permute.xlu0 %6276
        %6278 = vrot.lane.b32.xlu0 %v6232, 40
        %v6279 = vpop.permute.xlu0 %6278
        %6280 = vrot.lane.b32.xlu0 %v6233, 40
        %v6281 = vpop.permute.xlu0 %6280
        %vm6298 = vcmask 392512
        %6299 = vst.msk [vmem:[%s2523] sm:$0xff] %vm6298, %v6251
        %6300 = vst.msk [vmem:[%s2523 + $0x8] sm:$0xff] %vm6298, %v6253
        %6301 = vst.msk [vmem:[%s2523 + $0x10] sm:$0xff] %vm6298, %v6255
        %6302 = vst.msk [vmem:[%s2523 + $0x18] sm:$0xff] %vm6298, %v6257
        %6303 = vst.msk [vmem:[%s2523 + $0x20] sm:$0xff] %vm6298, %v6259
        %6304 = vst.msk [vmem:[%s2523 + $0x28] sm:$0xff] %vm6298, %v6261
        %6305 = vst.msk [vmem:[%s2523 + $0x30] sm:$0xff] %vm6298, %v6263
        %6306 = vst.msk [vmem:[%s2523 + $0x38] sm:$0xff] %vm6298, %v6265
        %6307 = vst.msk [vmem:[%s2523 + $0x40] sm:$0xff] %vm6298, %v6267
        %6308 = vst.msk [vmem:[%s2523 + $0x48] sm:$0xff] %vm6298, %v6269
        %6309 = vst.msk [vmem:[%s2523 + $0x50] sm:$0xff] %vm6298, %v6271
        %6310 = vst.msk [vmem:[%s2523 + $0x58] sm:$0xff] %vm6298, %v6273
        %6311 = vst.msk [vmem:[%s2523 + $0x60] sm:$0xff] %vm6298, %v6275
        %6312 = vst.msk [vmem:[%s2523 + $0x68] sm:$0xff] %vm6298, %v6277
        %6313 = vst.msk [vmem:[%s2523 + $0x70] sm:$0xff] %vm6298, %v6279
        %6314 = vst.msk [vmem:[%s2523 + $0x78] sm:$0xff] %vm6298, %v6281
        %v6315 = vld [vmem:[%s1942] sm:$0xff]
        %v6316 = vld [vmem:[%s1942 + $0x10] sm:$0xff]
        %v6317 = vld [vmem:[%s1942 + $0x20] sm:$0xff]
        %v6318 = vld [vmem:[%s1942 + $0x30] sm:$0xff]
        %v6319 = vld [vmem:[%s1942 + $0x40] sm:$0xff]
        %v6320 = vld [vmem:[%s1942 + $0x50] sm:$0xff]
        %v6321 = vld [vmem:[%s1942 + $0x60] sm:$0xff]
        %v6322 = vld [vmem:[%s1942 + $0x70] sm:$0xff]
        %v6323 = vld [vmem:[%s1942 + $0x80] sm:$0xff]
        %v6324 = vld [vmem:[%s1942 + $0x90] sm:$0xff]
        %v6325 = vld [vmem:[%s1942 + $0xa0] sm:$0xff]
        %v6326 = vld [vmem:[%s1942 + $0xb0] sm:$0xff]
        %v6327 = vld [vmem:[%s1942 + $0xc0] sm:$0xff]
        %v6328 = vld [vmem:[%s1942 + $0xd0] sm:$0xff]
        %v6329 = vld [vmem:[%s1942 + $0xe0] sm:$0xff]
        %v6330 = vld [vmem:[%s1942 + $0xf0] sm:$0xff]
        %v6331 = vld [vmem:[%s1942 + $0x8] sm:$0xff]
        %v6332 = vld [vmem:[%s1942 + $0x18] sm:$0xff]
        %v6333 = vld [vmem:[%s1942 + $0x28] sm:$0xff]
        %v6334 = vld [vmem:[%s1942 + $0x38] sm:$0xff]
        %v6335 = vld [vmem:[%s1942 + $0x48] sm:$0xff]
        %v6336 = vld [vmem:[%s1942 + $0x58] sm:$0xff]
        %v6337 = vld [vmem:[%s1942 + $0x68] sm:$0xff]
        %v6338 = vld [vmem:[%s1942 + $0x78] sm:$0xff]
        %v6339 = vld [vmem:[%s1942 + $0x88] sm:$0xff]
        %v6340 = vld [vmem:[%s1942 + $0x98] sm:$0xff]
        %v6341 = vld [vmem:[%s1942 + $0xa8] sm:$0xff]
        %v6342 = vld [vmem:[%s1942 + $0xb8] sm:$0xff]
        %v6343 = vld [vmem:[%s1942 + $0xc8] sm:$0xff]
        %v6344 = vld [vmem:[%s1942 + $0xd8] sm:$0xff]
        %v6345 = vld [vmem:[%s1942 + $0xe8] sm:$0xff]
        %v6346 = vld [vmem:[%s1942 + $0xf8] sm:$0xff]
        %6363 = vrot.lane.b32.xlu0 %v6315, 80
        %v6364 = vpop.permute.xlu0 %6363
        %6365 = vrot.lane.b32.xlu0 %v6316, 80
        %v6366 = vpop.permute.xlu0 %6365
        %6367 = vrot.lane.b32.xlu0 %v6317, 80
        %v6368 = vpop.permute.xlu0 %6367
        %6369 = vrot.lane.b32.xlu0 %v6318, 80
        %v6370 = vpop.permute.xlu0 %6369
        %6371 = vrot.lane.b32.xlu0 %v6319, 80
        %v6372 = vpop.permute.xlu0 %6371
        %6373 = vrot.lane.b32.xlu0 %v6320, 80
        %v6374 = vpop.permute.xlu0 %6373
        %6375 = vrot.lane.b32.xlu0 %v6321, 80
        %v6376 = vpop.permute.xlu0 %6375
        %6377 = vrot.lane.b32.xlu0 %v6322, 80
        %v6378 = vpop.permute.xlu0 %6377
        %6379 = vrot.lane.b32.xlu0 %v6323, 80
        %v6380 = vpop.permute.xlu0 %6379
        %6381 = vrot.lane.b32.xlu0 %v6324, 80
        %v6382 = vpop.permute.xlu0 %6381
        %6383 = vrot.lane.b32.xlu0 %v6325, 80
        %v6384 = vpop.permute.xlu0 %6383
        %6385 = vrot.lane.b32.xlu0 %v6326, 80
        %v6386 = vpop.permute.xlu0 %6385
        %6387 = vrot.lane.b32.xlu0 %v6327, 80
        %v6388 = vpop.permute.xlu0 %6387
        %6389 = vrot.lane.b32.xlu0 %v6328, 80
        %v6390 = vpop.permute.xlu0 %6389
        %6391 = vrot.lane.b32.xlu0 %v6329, 80
        %v6392 = vpop.permute.xlu0 %6391
        %6393 = vrot.lane.b32.xlu0 %v6330, 80
        %v6394 = vpop.permute.xlu0 %6393
        %6395 = vrot.lane.b32.xlu0 %v6315, 16
        %v6396 = vpop.permute.xlu0 %6395
        %6397 = vrot.lane.b32.xlu0 %v6316, 16
        %v6398 = vpop.permute.xlu0 %6397
        %6399 = vrot.lane.b32.xlu0 %v6317, 16
        %v6400 = vpop.permute.xlu0 %6399
        %6401 = vrot.lane.b32.xlu0 %v6318, 16
        %v6402 = vpop.permute.xlu0 %6401
        %6403 = vrot.lane.b32.xlu0 %v6319, 16
        %v6404 = vpop.permute.xlu0 %6403
        %6405 = vrot.lane.b32.xlu0 %v6320, 16
        %v6406 = vpop.permute.xlu0 %6405
        %6407 = vrot.lane.b32.xlu0 %v6321, 16
        %v6408 = vpop.permute.xlu0 %6407
        %6409 = vrot.lane.b32.xlu0 %v6322, 16
        %v6410 = vpop.permute.xlu0 %6409
        %6411 = vrot.lane.b32.xlu0 %v6323, 16
        %v6412 = vpop.permute.xlu0 %6411
        %6413 = vrot.lane.b32.xlu0 %v6324, 16
        %v6414 = vpop.permute.xlu0 %6413
        %6415 = vrot.lane.b32.xlu0 %v6325, 16
        %v6416 = vpop.permute.xlu0 %6415
        %6417 = vrot.lane.b32.xlu0 %v6326, 16
        %v6418 = vpop.permute.xlu0 %6417
        %6419 = vrot.lane.b32.xlu0 %v6327, 16
        %v6420 = vpop.permute.xlu0 %6419
        %6421 = vrot.lane.b32.xlu0 %v6328, 16
        %v6422 = vpop.permute.xlu0 %6421
        %6423 = vrot.lane.b32.xlu0 %v6329, 16
        %v6424 = vpop.permute.xlu0 %6423
        %6425 = vrot.lane.b32.xlu0 %v6330, 16
        %v6426 = vpop.permute.xlu0 %6425
        %v6427 = vsel %vm2023, %v6364, 0
        %v6429 = vsel %vm2023, %v6366, 0
        %v6431 = vsel %vm2023, %v6368, 0
        %v6433 = vsel %vm2023, %v6370, 0
        %v6435 = vsel %vm2023, %v6372, 0
        %v6437 = vsel %vm2023, %v6374, 0
        %v6439 = vsel %vm2023, %v6376, 0
        %v6441 = vsel %vm2023, %v6378, 0
        %v6443 = vsel %vm2023, %v6380, 0
        %v6445 = vsel %vm2023, %v6382, 0
        %v6447 = vsel %vm2023, %v6384, 0
        %v6449 = vsel %vm2023, %v6386, 0
        %v6451 = vsel %vm2023, %v6388, 0
        %v6453 = vsel %vm2023, %v6390, 0
        %v6455 = vsel %vm2023, %v6392, 0
        %v6457 = vsel %vm2023, %v6394, 0
        %v6459 = vsel %vm2023, %v6396, 0
        %v6461 = vsel %vm2023, %v6398, 0
        %v6463 = vsel %vm2023, %v6400, 0
        %v6465 = vsel %vm2023, %v6402, 0
        %v6467 = vsel %vm2023, %v6404, 0
        %v6469 = vsel %vm2023, %v6406, 0
        %v6471 = vsel %vm2023, %v6408, 0
        %v6473 = vsel %vm2023, %v6410, 0
        %v6475 = vsel %vm2023, %v6412, 0
        %v6477 = vsel %vm2023, %v6414, 0
        %v6479 = vsel %vm2023, %v6416, 0
        %v6481 = vsel %vm2023, %v6418, 0
        %v6483 = vsel %vm2023, %v6420, 0
        %v6485 = vsel %vm2023, %v6422, 0
        %v6487 = vsel %vm2023, %v6424, 0
        %v6489 = vsel %vm2023, %v6426, 0
        %6491 = vmatprep.subr.mxu0 0.0
        %6492 = vmatpush1.xpose.msra.mxu0 %v6489
        %6493 = vmatprep.subr.mxu0 0.0
        %6494 = vmatpush1.xpose.msra.mxu0 %v6487
        %6495 = vmatprep.subr.mxu0 0.0
        %6496 = vmatpush1.xpose.msra.mxu0 %v6485
        %6497 = vmatprep.subr.mxu0 0.0
        %6498 = vmatpush1.xpose.msra.mxu0 %v6483
        %6499 = vmatprep.subr.mxu0 0.0
        %6500 = vmatpush1.xpose.msra.mxu0 %v6481
        %6501 = vmatprep.subr.mxu0 0.0
        %6502 = vmatpush1.xpose.msra.mxu0 %v6479
        %6503 = vmatprep.subr.mxu0 0.0
        %6504 = vmatpush1.xpose.msra.mxu0 %v6477
        %6505 = vmatprep.subr.mxu0 0.0
        %6506 = vmatpush1.xpose.msra.mxu0 %v6475
        %6507 = vmatprep.subr.mxu0 0.0
        %6508 = vmatpush1.xpose.msra.mxu0 %v6473
        %6509 = vmatprep.subr.mxu0 0.0
        %6510 = vmatpush1.xpose.msra.mxu0 %v6471
        %6511 = vmatprep.subr.mxu0 0.0
        %6512 = vmatpush1.xpose.msra.mxu0 %v6469
        %6513 = vmatprep.subr.mxu0 0.0
        %6514 = vmatpush1.xpose.msra.mxu0 %v6467
        %6515 = vmatprep.subr.mxu0 0.0
        %6516 = vmatpush1.xpose.msra.mxu0 %v6465
        %6517 = vmatprep.subr.mxu0 0.0
        %6518 = vmatpush1.xpose.msra.mxu0 %v6463
        %6519 = vmatprep.subr.mxu0 0.0
        %6520 = vmatpush1.xpose.msra.mxu0 %v6461
        %6521 = vmatprep.subr.mxu0 0.0
        %6522 = vmatpush1.xpose.msra.mxu0 %v6459
        %6523 = vmatprep.subr.mxu0 0.0
        %6524 = vmatpush2.xpose.msra.mxu0 0.0
        %6525 = vmatprep.subr.mxu0 0.0
        %6526 = vmatpush2.xpose.msra.mxu0 0.0
        %6527 = vmatprep.subr.mxu0 0.0
        %6528 = vmatpush2.xpose.msra.mxu0 0.0
        %6529 = vmatprep.subr.mxu0 0.0
        %6530 = vmatpush2.xpose.msra.mxu0 0.0
        %6531 = vmatprep.subr.mxu0 0.0
        %6532 = vmatpush2.xpose.msra.mxu0 0.0
        %6533 = vmatprep.subr.mxu0 0.0
        %6534 = vmatpush2.xpose.msra.mxu0 0.0
        %6535 = vmatprep.subr.mxu0 0.0
        %6536 = vmatpush2.xpose.msra.mxu0 0.0
        %6537 = vmatprep.subr.mxu0 0.0
        %6538 = vmatpush2.xpose.msra.mxu0 0.0
        %6539 = vmatprep.subr.mxu0 0.0
        %6540 = vmatpush2.xpose.msra.mxu0 0.0
        %6541 = vmatprep.subr.mxu0 0.0
        %6542 = vmatpush2.xpose.msra.mxu0 0.0
        %6543 = vmatprep.subr.mxu0 0.0
        %6544 = vmatpush2.xpose.msra.mxu0 0.0
        %6545 = vmatprep.subr.mxu0 0.0
        %6546 = vmatpush2.xpose.msra.mxu0 0.0
        %6547 = vmatprep.subr.mxu0 0.0
        %6548 = vmatpush2.xpose.msra.mxu0 0.0
        %6549 = vmatprep.subr.mxu0 0.0
        %6550 = vmatpush2.xpose.msra.mxu0 0.0
        %6551 = vmatprep.subr.mxu0 0.0
        %6552 = vmatpush2.xpose.msra.mxu0 0.0
        %6553 = vmatprep.subr.mxu0 0.0
        %6554 = vmatpush2.xpose.msra.mxu0 0.0
        %6555 = vmatprep.mubr.f32.mxu0 0.0
        %6556 = vmatmul.mubr.f32.gmra.mxu0 %v6427
        %v6557 = vpop.f32.mrf.mxu0
        %v6558 = vadd.f32 0.0, %v6557
        %v6559 = vpop.f32.mrf.mxu0
        %6560 = vmatprep.mubr.f32.mxu0 0.0
        %6561 = vmatmul.mubr.f32.gmra.mxu0 %v6429
        %v6562 = vpop.f32.mrf.mxu0
        %v6563 = vadd.f32 0.0, %v6562
        %v6564 = vpop.f32.mrf.mxu0
        %6565 = vmatprep.mubr.f32.mxu0 0.0
        %6566 = vmatmul.mubr.f32.gmra.mxu0 %v6431
        %v6567 = vpop.f32.mrf.mxu0
        %v6568 = vadd.f32 0.0, %v6567
        %v6569 = vpop.f32.mrf.mxu0
        %6570 = vmatprep.mubr.f32.mxu0 0.0
        %6571 = vmatmul.mubr.f32.gmra.mxu0 %v6433
        %v6572 = vpop.f32.mrf.mxu0
        %v6573 = vadd.f32 0.0, %v6572
        %v6574 = vpop.f32.mrf.mxu0
        %6575 = vmatprep.mubr.f32.mxu0 0.0
        %6576 = vmatmul.mubr.f32.gmra.mxu0 %v6435
        %v6577 = vpop.f32.mrf.mxu0
        %v6578 = vadd.f32 0.0, %v6577
        %v6579 = vpop.f32.mrf.mxu0
        %6580 = vmatprep.mubr.f32.mxu0 0.0
        %6581 = vmatmul.mubr.f32.gmra.mxu0 %v6437
        %v6582 = vpop.f32.mrf.mxu0
        %v6583 = vadd.f32 0.0, %v6582
        %v6584 = vpop.f32.mrf.mxu0
        %6585 = vmatprep.mubr.f32.mxu0 0.0
        %6586 = vmatmul.mubr.f32.gmra.mxu0 %v6439
        %v6587 = vpop.f32.mrf.mxu0
        %v6588 = vadd.f32 0.0, %v6587
        %v6589 = vpop.f32.mrf.mxu0
        %6590 = vmatprep.mubr.f32.mxu0 0.0
        %6591 = vmatmul.mubr.f32.gmra.mxu0 %v6441
        %v6592 = vpop.f32.mrf.mxu0
        %v6593 = vadd.f32 0.0, %v6592
        %v6594 = vpop.f32.mrf.mxu0
        %6595 = vmatprep.mubr.f32.mxu0 0.0
        %6596 = vmatmul.mubr.f32.gmra.mxu0 %v6443
        %v6597 = vpop.f32.mrf.mxu0
        %v6598 = vadd.f32 0.0, %v6597
        %v6599 = vpop.f32.mrf.mxu0
        %6600 = vmatprep.mubr.f32.mxu0 0.0
        %6601 = vmatmul.mubr.f32.gmra.mxu0 %v6445
        %v6602 = vpop.f32.mrf.mxu0
        %v6603 = vadd.f32 0.0, %v6602
        %v6604 = vpop.f32.mrf.mxu0
        %6605 = vmatprep.mubr.f32.mxu0 0.0
        %6606 = vmatmul.mubr.f32.gmra.mxu0 %v6447
        %v6607 = vpop.f32.mrf.mxu0
        %v6608 = vadd.f32 0.0, %v6607
        %v6609 = vpop.f32.mrf.mxu0
        %6610 = vmatprep.mubr.f32.mxu0 0.0
        %6611 = vmatmul.mubr.f32.gmra.mxu0 %v6449
        %v6612 = vpop.f32.mrf.mxu0
        %v6613 = vadd.f32 0.0, %v6612
        %v6614 = vpop.f32.mrf.mxu0
        %6615 = vmatprep.mubr.f32.mxu0 0.0
        %6616 = vmatmul.mubr.f32.gmra.mxu0 %v6451
        %v6617 = vpop.f32.mrf.mxu0
        %v6618 = vadd.f32 0.0, %v6617
        %v6619 = vpop.f32.mrf.mxu0
        %6620 = vmatprep.mubr.f32.mxu0 0.0
        %6621 = vmatmul.mubr.f32.gmra.mxu0 %v6453
        %v6622 = vpop.f32.mrf.mxu0
        %v6623 = vadd.f32 0.0, %v6622
        %v6624 = vpop.f32.mrf.mxu0
        %6625 = vmatprep.mubr.f32.mxu0 0.0
        %6626 = vmatmul.mubr.f32.gmra.mxu0 %v6455
        %v6627 = vpop.f32.mrf.mxu0
        %v6628 = vadd.f32 0.0, %v6627
        %v6629 = vpop.f32.mrf.mxu0
        %6630 = vmatprep.mubr.f32.mxu0 0.0
        %6631 = vmatmul.mubr.f32.gmra.mxu0 %v6457
        %v6632 = vpop.f32.mrf.mxu0
        %v6633 = vadd.f32 0.0, %v6632
        %v6634 = vpop.f32.mrf.mxu0
        %6635 = vdwg.mxu0
        %6636 = vmax.xlane.f32.xlu0 %v6558
        %v6637 = vpop.xlane.xlu0 %6636
        %6638 = vmax.xlane.f32.xlu0 %v6563
        %v6639 = vpop.xlane.xlu0 %6638
        %6640 = vmax.xlane.f32.xlu0 %v6568
        %v6641 = vpop.xlane.xlu0 %6640
        %6642 = vmax.xlane.f32.xlu0 %v6573
        %v6643 = vpop.xlane.xlu0 %6642
        %6644 = vmax.xlane.f32.xlu0 %v6578
        %v6645 = vpop.xlane.xlu0 %6644
        %6646 = vmax.xlane.f32.xlu0 %v6583
        %v6647 = vpop.xlane.xlu0 %6646
        %6648 = vmax.xlane.f32.xlu0 %v6588
        %v6649 = vpop.xlane.xlu0 %6648
        %6650 = vmax.xlane.f32.xlu0 %v6593
        %v6651 = vpop.xlane.xlu0 %6650
        %6652 = vmax.xlane.f32.xlu0 %v6598
        %v6653 = vpop.xlane.xlu0 %6652
        %6654 = vmax.xlane.f32.xlu0 %v6603
        %v6655 = vpop.xlane.xlu0 %6654
        %6656 = vmax.xlane.f32.xlu0 %v6608
        %v6657 = vpop.xlane.xlu0 %6656
        %6658 = vmax.xlane.f32.xlu0 %v6613
        %v6659 = vpop.xlane.xlu0 %6658
        %6660 = vmax.xlane.f32.xlu0 %v6618
        %v6661 = vpop.xlane.xlu0 %6660
        %6662 = vmax.xlane.f32.xlu0 %v6623
        %v6663 = vpop.xlane.xlu0 %6662
        %6664 = vmax.xlane.f32.xlu0 %v6628
        %v6665 = vpop.xlane.xlu0 %6664
        %6666 = vmax.xlane.f32.xlu0 %v6633
        %v6667 = vpop.xlane.xlu0 %6666
        %v6668 = vsub.f32 %v6558, %v6637
        %v6669 = vsub.f32 %v6563, %v6639
        %v6670 = vsub.f32 %v6568, %v6641
        %v6671 = vsub.f32 %v6573, %v6643
        %v6672 = vsub.f32 %v6578, %v6645
        %v6673 = vsub.f32 %v6583, %v6647
        %v6674 = vsub.f32 %v6588, %v6649
        %v6675 = vsub.f32 %v6593, %v6651
        %v6676 = vsub.f32 %v6598, %v6653
        %v6677 = vsub.f32 %v6603, %v6655
        %v6678 = vsub.f32 %v6608, %v6657
        %v6679 = vsub.f32 %v6613, %v6659
        %v6680 = vsub.f32 %v6618, %v6661
        %v6681 = vsub.f32 %v6623, %v6663
        %v6682 = vsub.f32 %v6628, %v6665
        %v6683 = vsub.f32 %v6633, %v6667
        %v6684 = vmul.f32 %v6668, 1.442695
        %v6685 = vpow.pop %v6684
        %v6686 = vmul.f32 %v6669, 1.442695
        %v6687 = vpow.pop %v6686
        %v6688 = vmul.f32 %v6670, 1.442695
        %v6689 = vpow.pop %v6688
        %v6690 = vmul.f32 %v6671, 1.442695
        %v6691 = vpow.pop %v6690
        %v6692 = vmul.f32 %v6672, 1.442695
        %v6693 = vpow.pop %v6692
        %v6694 = vmul.f32 %v6673, 1.442695
        %v6695 = vpow.pop %v6694
        %v6696 = vmul.f32 %v6674, 1.442695
        %v6697 = vpow.pop %v6696
        %v6698 = vmul.f32 %v6675, 1.442695
        %v6699 = vpow.pop %v6698
        %v6700 = vmul.f32 %v6676, 1.442695
        %v6701 = vpow.pop %v6700
        %v6702 = vmul.f32 %v6677, 1.442695
        %v6703 = vpow.pop %v6702
        %v6704 = vmul.f32 %v6678, 1.442695
        %v6705 = vpow.pop %v6704
        %v6706 = vmul.f32 %v6679, 1.442695
        %v6707 = vpow.pop %v6706
        %v6708 = vmul.f32 %v6680, 1.442695
        %v6709 = vpow.pop %v6708
        %v6710 = vmul.f32 %v6681, 1.442695
        %v6711 = vpow.pop %v6710
        %v6712 = vmul.f32 %v6682, 1.442695
        %v6713 = vpow.pop %v6712
        %v6714 = vmul.f32 %v6683, 1.442695
        %v6715 = vpow.pop %v6714
        %6716 = vadd.xlane.f32.xlu0 %v6685
        %v6717 = vpop.xlane.xlu0 %6716
        %6718 = vadd.xlane.f32.xlu0 %v6687
        %v6719 = vpop.xlane.xlu0 %6718
        %6720 = vadd.xlane.f32.xlu0 %v6689
        %v6721 = vpop.xlane.xlu0 %6720
        %6722 = vadd.xlane.f32.xlu0 %v6691
        %v6723 = vpop.xlane.xlu0 %6722
        %6724 = vadd.xlane.f32.xlu0 %v6693
        %v6725 = vpop.xlane.xlu0 %6724
        %6726 = vadd.xlane.f32.xlu0 %v6695
        %v6727 = vpop.xlane.xlu0 %6726
        %6728 = vadd.xlane.f32.xlu0 %v6697
        %v6729 = vpop.xlane.xlu0 %6728
        %6730 = vadd.xlane.f32.xlu0 %v6699
        %v6731 = vpop.xlane.xlu0 %6730
        %6732 = vadd.xlane.f32.xlu0 %v6701
        %v6733 = vpop.xlane.xlu0 %6732
        %6734 = vadd.xlane.f32.xlu0 %v6703
        %v6735 = vpop.xlane.xlu0 %6734
        %6736 = vadd.xlane.f32.xlu0 %v6705
        %v6737 = vpop.xlane.xlu0 %6736
        %6738 = vadd.xlane.f32.xlu0 %v6707
        %v6739 = vpop.xlane.xlu0 %6738
        %6740 = vadd.xlane.f32.xlu0 %v6709
        %v6741 = vpop.xlane.xlu0 %6740
        %6742 = vadd.xlane.f32.xlu0 %v6711
        %v6743 = vpop.xlane.xlu0 %6742
        %6744 = vadd.xlane.f32.xlu0 %v6713
        %v6745 = vpop.xlane.xlu0 %6744
        %6746 = vadd.xlane.f32.xlu0 %v6715
        %v6747 = vpop.xlane.xlu0 %6746
        %6764 = vrot.lane.b32.xlu0 %v6331, 80
        %v6765 = vpop.permute.xlu0 %6764
        %6766 = vrot.lane.b32.xlu0 %v6332, 80
        %v6767 = vpop.permute.xlu0 %6766
        %6768 = vrot.lane.b32.xlu0 %v6333, 80
        %v6769 = vpop.permute.xlu0 %6768
        %6770 = vrot.lane.b32.xlu0 %v6334, 80
        %v6771 = vpop.permute.xlu0 %6770
        %6772 = vrot.lane.b32.xlu0 %v6335, 80
        %v6773 = vpop.permute.xlu0 %6772
        %6774 = vrot.lane.b32.xlu0 %v6336, 80
        %v6775 = vpop.permute.xlu0 %6774
        %6776 = vrot.lane.b32.xlu0 %v6337, 80
        %v6777 = vpop.permute.xlu0 %6776
        %6778 = vrot.lane.b32.xlu0 %v6338, 80
        %v6779 = vpop.permute.xlu0 %6778
        %6780 = vrot.lane.b32.xlu0 %v6339, 80
        %v6781 = vpop.permute.xlu0 %6780
        %6782 = vrot.lane.b32.xlu0 %v6340, 80
        %v6783 = vpop.permute.xlu0 %6782
        %6784 = vrot.lane.b32.xlu0 %v6341, 80
        %v6785 = vpop.permute.xlu0 %6784
        %6786 = vrot.lane.b32.xlu0 %v6342, 80
        %v6787 = vpop.permute.xlu0 %6786
        %6788 = vrot.lane.b32.xlu0 %v6343, 80
        %v6789 = vpop.permute.xlu0 %6788
        %6790 = vrot.lane.b32.xlu0 %v6344, 80
        %v6791 = vpop.permute.xlu0 %6790
        %6792 = vrot.lane.b32.xlu0 %v6345, 80
        %v6793 = vpop.permute.xlu0 %6792
        %6794 = vrot.lane.b32.xlu0 %v6346, 80
        %v6795 = vpop.permute.xlu0 %6794
        %6812 = vmatprep.subr.mxu0 0.0
        %6813 = vmatpush1.msra.mxu0 %v6795
        %6814 = vmatprep.subr.mxu0 0.0
        %6815 = vmatpush1.msra.mxu0 %v6793
        %6816 = vmatprep.subr.mxu0 0.0
        %6817 = vmatpush1.msra.mxu0 %v6791
        %6818 = vmatprep.subr.mxu0 0.0
        %6819 = vmatpush1.msra.mxu0 %v6789
        %6820 = vmatprep.subr.mxu0 0.0
        %6821 = vmatpush1.msra.mxu0 %v6787
        %6822 = vmatprep.subr.mxu0 0.0
        %6823 = vmatpush1.msra.mxu0 %v6785
        %6824 = vmatprep.subr.mxu0 0.0
        %6825 = vmatpush1.msra.mxu0 %v6783
        %6826 = vmatprep.subr.mxu0 0.0
        %6827 = vmatpush1.msra.mxu0 %v6781
        %6828 = vmatprep.subr.mxu0 0.0
        %6829 = vmatpush1.msra.mxu0 %v6779
        %6830 = vmatprep.subr.mxu0 0.0
        %6831 = vmatpush1.msra.mxu0 %v6777
        %6832 = vmatprep.subr.mxu0 0.0
        %6833 = vmatpush1.msra.mxu0 %v6775
        %6834 = vmatprep.subr.mxu0 0.0
        %6835 = vmatpush1.msra.mxu0 %v6773
        %6836 = vmatprep.subr.mxu0 0.0
        %6837 = vmatpush1.msra.mxu0 %v6771
        %6838 = vmatprep.subr.mxu0 0.0
        %6839 = vmatpush1.msra.mxu0 %v6769
        %6840 = vmatprep.subr.mxu0 0.0
        %6841 = vmatpush1.msra.mxu0 %v6767
        %6842 = vmatprep.subr.mxu0 0.0
        %6843 = vmatpush1.msra.mxu0 %v6765
        %6844 = vmatprep.subr.mxu0 0.0
        %6845 = vmatpush2.msra.mxu0 0.0
        %6846 = vmatprep.subr.mxu0 0.0
        %6847 = vmatpush2.msra.mxu0 0.0
        %6848 = vmatprep.subr.mxu0 0.0
        %6849 = vmatpush2.msra.mxu0 0.0
        %6850 = vmatprep.subr.mxu0 0.0
        %6851 = vmatpush2.msra.mxu0 0.0
        %6852 = vmatprep.subr.mxu0 0.0
        %6853 = vmatpush2.msra.mxu0 0.0
        %6854 = vmatprep.subr.mxu0 0.0
        %6855 = vmatpush2.msra.mxu0 0.0
        %6856 = vmatprep.subr.mxu0 0.0
        %6857 = vmatpush2.msra.mxu0 0.0
        %6858 = vmatprep.subr.mxu0 0.0
        %6859 = vmatpush2.msra.mxu0 0.0
        %6860 = vmatprep.subr.mxu0 0.0
        %6861 = vmatpush2.msra.mxu0 0.0
        %6862 = vmatprep.subr.mxu0 0.0
        %6863 = vmatpush2.msra.mxu0 0.0
        %6864 = vmatprep.subr.mxu0 0.0
        %6865 = vmatpush2.msra.mxu0 0.0
        %6866 = vmatprep.subr.mxu0 0.0
        %6867 = vmatpush2.msra.mxu0 0.0
        %6868 = vmatprep.subr.mxu0 0.0
        %6869 = vmatpush2.msra.mxu0 0.0
        %6870 = vmatprep.subr.mxu0 0.0
        %6871 = vmatpush2.msra.mxu0 0.0
        %6872 = vmatprep.subr.mxu0 0.0
        %6873 = vmatpush2.msra.mxu0 0.0
        %6874 = vmatprep.subr.mxu0 0.0
        %6875 = vmatpush2.msra.mxu0 0.0
        %6876 = vmatprep.mubr.f32.mxu0 0.0
        %6877 = vmatmul.mubr.f32.gmra.mxu0 %v6685
        %v6878 = vpop.f32.mrf.mxu0
        %v6879 = vadd.f32 0.0, %v6878
        %v6880 = vpop.f32.mrf.mxu0
        %6881 = vmatprep.mubr.f32.mxu0 0.0
        %6882 = vmatmul.mubr.f32.gmra.mxu0 %v6687
        %v6883 = vpop.f32.mrf.mxu0
        %v6884 = vadd.f32 0.0, %v6883
        %v6885 = vpop.f32.mrf.mxu0
        %6886 = vmatprep.mubr.f32.mxu0 0.0
        %6887 = vmatmul.mubr.f32.gmra.mxu0 %v6689
        %v6888 = vpop.f32.mrf.mxu0
        %v6889 = vadd.f32 0.0, %v6888
        %v6890 = vpop.f32.mrf.mxu0
        %6891 = vmatprep.mubr.f32.mxu0 0.0
        %6892 = vmatmul.mubr.f32.gmra.mxu0 %v6691
        %v6893 = vpop.f32.mrf.mxu0
        %v6894 = vadd.f32 0.0, %v6893
        %v6895 = vpop.f32.mrf.mxu0
        %6896 = vmatprep.mubr.f32.mxu0 0.0
        %6897 = vmatmul.mubr.f32.gmra.mxu0 %v6693
        %v6898 = vpop.f32.mrf.mxu0
        %v6899 = vadd.f32 0.0, %v6898
        %v6900 = vpop.f32.mrf.mxu0
        %6901 = vmatprep.mubr.f32.mxu0 0.0
        %6902 = vmatmul.mubr.f32.gmra.mxu0 %v6695
        %v6903 = vpop.f32.mrf.mxu0
        %v6904 = vadd.f32 0.0, %v6903
        %v6905 = vpop.f32.mrf.mxu0
        %6906 = vmatprep.mubr.f32.mxu0 0.0
        %6907 = vmatmul.mubr.f32.gmra.mxu0 %v6697
        %v6908 = vpop.f32.mrf.mxu0
        %v6909 = vadd.f32 0.0, %v6908
        %v6910 = vpop.f32.mrf.mxu0
        %6911 = vmatprep.mubr.f32.mxu0 0.0
        %6912 = vmatmul.mubr.f32.gmra.mxu0 %v6699
        %v6913 = vpop.f32.mrf.mxu0
        %v6914 = vadd.f32 0.0, %v6913
        %v6915 = vpop.f32.mrf.mxu0
        %6916 = vmatprep.mubr.f32.mxu0 0.0
        %6917 = vmatmul.mubr.f32.gmra.mxu0 %v6701
        %v6918 = vpop.f32.mrf.mxu0
        %v6919 = vadd.f32 0.0, %v6918
        %v6920 = vpop.f32.mrf.mxu0
        %6921 = vmatprep.mubr.f32.mxu0 0.0
        %6922 = vmatmul.mubr.f32.gmra.mxu0 %v6703
        %v6923 = vpop.f32.mrf.mxu0
        %v6924 = vadd.f32 0.0, %v6923
        %v6925 = vpop.f32.mrf.mxu0
        %6926 = vmatprep.mubr.f32.mxu0 0.0
        %6927 = vmatmul.mubr.f32.gmra.mxu0 %v6705
        %v6928 = vpop.f32.mrf.mxu0
        %v6929 = vadd.f32 0.0, %v6928
        %v6930 = vpop.f32.mrf.mxu0
        %6931 = vmatprep.mubr.f32.mxu0 0.0
        %6932 = vmatmul.mubr.f32.gmra.mxu0 %v6707
        %v6933 = vpop.f32.mrf.mxu0
        %v6934 = vadd.f32 0.0, %v6933
        %v6935 = vpop.f32.mrf.mxu0
        %6936 = vmatprep.mubr.f32.mxu0 0.0
        %6937 = vmatmul.mubr.f32.gmra.mxu0 %v6709
        %v6938 = vpop.f32.mrf.mxu0
        %v6939 = vadd.f32 0.0, %v6938
        %v6940 = vpop.f32.mrf.mxu0
        %6941 = vmatprep.mubr.f32.mxu0 0.0
        %6942 = vmatmul.mubr.f32.gmra.mxu0 %v6711
        %v6943 = vpop.f32.mrf.mxu0
        %v6944 = vadd.f32 0.0, %v6943
        %v6945 = vpop.f32.mrf.mxu0
        %6946 = vmatprep.mubr.f32.mxu0 0.0
        %6947 = vmatmul.mubr.f32.gmra.mxu0 %v6713
        %v6948 = vpop.f32.mrf.mxu0
        %v6949 = vadd.f32 0.0, %v6948
        %v6950 = vpop.f32.mrf.mxu0
        %6951 = vmatprep.mubr.f32.mxu0 0.0
        %6952 = vmatmul.mubr.f32.gmra.mxu0 %v6715
        %v6953 = vpop.f32.mrf.mxu0
        %v6954 = vadd.f32 0.0, %v6953
        %v6955 = vpop.f32.mrf.mxu0
        %6956 = vdwg.mxu0
        %v6957 = vrcp.pop %v6717
        %v6958 = vrcp.pop %v6719
        %v6959 = vrcp.pop %v6721
        %v6960 = vrcp.pop %v6723
        %v6961 = vrcp.pop %v6725
        %v6962 = vrcp.pop %v6727
        %v6963 = vrcp.pop %v6729
        %v6964 = vrcp.pop %v6731
        %v6965 = vrcp.pop %v6733
        %v6966 = vrcp.pop %v6735
        %v6967 = vrcp.pop %v6737
        %v6968 = vrcp.pop %v6739
        %v6969 = vrcp.pop %v6741
        %v6970 = vrcp.pop %v6743
        %v6971 = vrcp.pop %v6745
        %v6972 = vrcp.pop %v6747
        %v6973 = vmul.f32 %v6879, %v6957
        %v6974 = vmul.f32 %v6884, %v6958
        %v6975 = vmul.f32 %v6889, %v6959
        %v6976 = vmul.f32 %v6894, %v6960
        %v6977 = vmul.f32 %v6899, %v6961
        %v6978 = vmul.f32 %v6904, %v6962
        %v6979 = vmul.f32 %v6909, %v6963
        %v6980 = vmul.f32 %v6914, %v6964
        %v6981 = vmul.f32 %v6919, %v6965
        %v6982 = vmul.f32 %v6924, %v6966
        %v6983 = vmul.f32 %v6929, %v6967
        %v6984 = vmul.f32 %v6934, %v6968
        %v6985 = vmul.f32 %v6939, %v6969
        %v6986 = vmul.f32 %v6944, %v6970
        %v6987 = vmul.f32 %v6949, %v6971
        %v6988 = vmul.f32 %v6954, %v6972
        %7005 = vrot.lane.b32.xlu0 %v6973, 48
        %v7006 = vpop.permute.xlu0 %7005
        %7007 = vrot.lane.b32.xlu0 %v6974, 48
        %v7008 = vpop.permute.xlu0 %7007
        %7009 = vrot.lane.b32.xlu0 %v6975, 48
        %v7010 = vpop.permute.xlu0 %7009
        %7011 = vrot.lane.b32.xlu0 %v6976, 48
        %v7012 = vpop.permute.xlu0 %7011
        %7013 = vrot.lane.b32.xlu0 %v6977, 48
        %v7014 = vpop.permute.xlu0 %7013
        %7015 = vrot.lane.b32.xlu0 %v6978, 48
        %v7016 = vpop.permute.xlu0 %7015
        %7017 = vrot.lane.b32.xlu0 %v6979, 48
        %v7018 = vpop.permute.xlu0 %7017
        %7019 = vrot.lane.b32.xlu0 %v6980, 48
        %v7020 = vpop.permute.xlu0 %7019
        %7021 = vrot.lane.b32.xlu0 %v6981, 48
        %v7022 = vpop.permute.xlu0 %7021
        %7023 = vrot.lane.b32.xlu0 %v6982, 48
        %v7024 = vpop.permute.xlu0 %7023
        %7025 = vrot.lane.b32.xlu0 %v6983, 48
        %v7026 = vpop.permute.xlu0 %7025
        %7027 = vrot.lane.b32.xlu0 %v6984, 48
        %v7028 = vpop.permute.xlu0 %7027
        %7029 = vrot.lane.b32.xlu0 %v6985, 48
        %v7030 = vpop.permute.xlu0 %7029
        %7031 = vrot.lane.b32.xlu0 %v6986, 48
        %v7032 = vpop.permute.xlu0 %7031
        %7033 = vrot.lane.b32.xlu0 %v6987, 48
        %v7034 = vpop.permute.xlu0 %7033
        %7035 = vrot.lane.b32.xlu0 %v6988, 48
        %v7036 = vpop.permute.xlu0 %7035
        %vm7053 = vcmask 458112
        %7054 = vst.msk [vmem:[%s2523] sm:$0xff] %vm7053, %v7006
        %7055 = vst.msk [vmem:[%s2523 + $0x8] sm:$0xff] %vm7053, %v7008
        %7056 = vst.msk [vmem:[%s2523 + $0x10] sm:$0xff] %vm7053, %v7010
        %7057 = vst.msk [vmem:[%s2523 + $0x18] sm:$0xff] %vm7053, %v7012
        %7058 = vst.msk [vmem:[%s2523 + $0x20] sm:$0xff] %vm7053, %v7014
        %7059 = vst.msk [vmem:[%s2523 + $0x28] sm:$0xff] %vm7053, %v7016
        %7060 = vst.msk [vmem:[%s2523 + $0x30] sm:$0xff] %vm7053, %v7018
        %7061 = vst.msk [vmem:[%s2523 + $0x38] sm:$0xff] %vm7053, %v7020
        %7062 = vst.msk [vmem:[%s2523 + $0x40] sm:$0xff] %vm7053, %v7022
        %7063 = vst.msk [vmem:[%s2523 + $0x48] sm:$0xff] %vm7053, %v7024
        %7064 = vst.msk [vmem:[%s2523 + $0x50] sm:$0xff] %vm7053, %v7026
        %7065 = vst.msk [vmem:[%s2523 + $0x58] sm:$0xff] %vm7053, %v7028
        %7066 = vst.msk [vmem:[%s2523 + $0x60] sm:$0xff] %vm7053, %v7030
        %7067 = vst.msk [vmem:[%s2523 + $0x68] sm:$0xff] %vm7053, %v7032
        %7068 = vst.msk [vmem:[%s2523 + $0x70] sm:$0xff] %vm7053, %v7034
        %7069 = vst.msk [vmem:[%s2523 + $0x78] sm:$0xff] %vm7053, %v7036
        %v7070 = vld [vmem:[%s1942] sm:$0xff]
        %v7071 = vld [vmem:[%s1942 + $0x10] sm:$0xff]
        %v7072 = vld [vmem:[%s1942 + $0x20] sm:$0xff]
        %v7073 = vld [vmem:[%s1942 + $0x30] sm:$0xff]
        %v7074 = vld [vmem:[%s1942 + $0x40] sm:$0xff]
        %v7075 = vld [vmem:[%s1942 + $0x50] sm:$0xff]
        %v7076 = vld [vmem:[%s1942 + $0x60] sm:$0xff]
        %v7077 = vld [vmem:[%s1942 + $0x70] sm:$0xff]
        %v7078 = vld [vmem:[%s1942 + $0x80] sm:$0xff]
        %v7079 = vld [vmem:[%s1942 + $0x90] sm:$0xff]
        %v7080 = vld [vmem:[%s1942 + $0xa0] sm:$0xff]
        %v7081 = vld [vmem:[%s1942 + $0xb0] sm:$0xff]
        %v7082 = vld [vmem:[%s1942 + $0xc0] sm:$0xff]
        %v7083 = vld [vmem:[%s1942 + $0xd0] sm:$0xff]
        %v7084 = vld [vmem:[%s1942 + $0xe0] sm:$0xff]
        %v7085 = vld [vmem:[%s1942 + $0xf0] sm:$0xff]
        %v7086 = vld [vmem:[%s1942 + $0x8] sm:$0xff]
        %v7087 = vld [vmem:[%s1942 + $0x18] sm:$0xff]
        %v7088 = vld [vmem:[%s1942 + $0x28] sm:$0xff]
        %v7089 = vld [vmem:[%s1942 + $0x38] sm:$0xff]
        %v7090 = vld [vmem:[%s1942 + $0x48] sm:$0xff]
        %v7091 = vld [vmem:[%s1942 + $0x58] sm:$0xff]
        %v7092 = vld [vmem:[%s1942 + $0x68] sm:$0xff]
        %v7093 = vld [vmem:[%s1942 + $0x78] sm:$0xff]
        %v7094 = vld [vmem:[%s1942 + $0x88] sm:$0xff]
        %v7095 = vld [vmem:[%s1942 + $0x98] sm:$0xff]
        %v7096 = vld [vmem:[%s1942 + $0xa8] sm:$0xff]
        %v7097 = vld [vmem:[%s1942 + $0xb8] sm:$0xff]
        %v7098 = vld [vmem:[%s1942 + $0xc8] sm:$0xff]
        %v7099 = vld [vmem:[%s1942 + $0xd8] sm:$0xff]
        %v7100 = vld [vmem:[%s1942 + $0xe8] sm:$0xff]
        %v7101 = vld [vmem:[%s1942 + $0xf8] sm:$0xff]
        %7118 = vrot.lane.b32.xlu0 %v7070, 72
        %v7119 = vpop.permute.xlu0 %7118
        %7120 = vrot.lane.b32.xlu0 %v7071, 72
        %v7121 = vpop.permute.xlu0 %7120
        %7122 = vrot.lane.b32.xlu0 %v7072, 72
        %v7123 = vpop.permute.xlu0 %7122
        %7124 = vrot.lane.b32.xlu0 %v7073, 72
        %v7125 = vpop.permute.xlu0 %7124
        %7126 = vrot.lane.b32.xlu0 %v7074, 72
        %v7127 = vpop.permute.xlu0 %7126
        %7128 = vrot.lane.b32.xlu0 %v7075, 72
        %v7129 = vpop.permute.xlu0 %7128
        %7130 = vrot.lane.b32.xlu0 %v7076, 72
        %v7131 = vpop.permute.xlu0 %7130
        %7132 = vrot.lane.b32.xlu0 %v7077, 72
        %v7133 = vpop.permute.xlu0 %7132
        %7134 = vrot.lane.b32.xlu0 %v7078, 72
        %v7135 = vpop.permute.xlu0 %7134
        %7136 = vrot.lane.b32.xlu0 %v7079, 72
        %v7137 = vpop.permute.xlu0 %7136
        %7138 = vrot.lane.b32.xlu0 %v7080, 72
        %v7139 = vpop.permute.xlu0 %7138
        %7140 = vrot.lane.b32.xlu0 %v7081, 72
        %v7141 = vpop.permute.xlu0 %7140
        %7142 = vrot.lane.b32.xlu0 %v7082, 72
        %v7143 = vpop.permute.xlu0 %7142
        %7144 = vrot.lane.b32.xlu0 %v7083, 72
        %v7145 = vpop.permute.xlu0 %7144
        %7146 = vrot.lane.b32.xlu0 %v7084, 72
        %v7147 = vpop.permute.xlu0 %7146
        %7148 = vrot.lane.b32.xlu0 %v7085, 72
        %v7149 = vpop.permute.xlu0 %7148
        %7150 = vrot.lane.b32.xlu0 %v7070, 8
        %v7151 = vpop.permute.xlu0 %7150
        %7152 = vrot.lane.b32.xlu0 %v7071, 8
        %v7153 = vpop.permute.xlu0 %7152
        %7154 = vrot.lane.b32.xlu0 %v7072, 8
        %v7155 = vpop.permute.xlu0 %7154
        %7156 = vrot.lane.b32.xlu0 %v7073, 8
        %v7157 = vpop.permute.xlu0 %7156
        %7158 = vrot.lane.b32.xlu0 %v7074, 8
        %v7159 = vpop.permute.xlu0 %7158
        %7160 = vrot.lane.b32.xlu0 %v7075, 8
        %v7161 = vpop.permute.xlu0 %7160
        %7162 = vrot.lane.b32.xlu0 %v7076, 8
        %v7163 = vpop.permute.xlu0 %7162
        %7164 = vrot.lane.b32.xlu0 %v7077, 8
        %v7165 = vpop.permute.xlu0 %7164
        %7166 = vrot.lane.b32.xlu0 %v7078, 8
        %v7167 = vpop.permute.xlu0 %7166
        %7168 = vrot.lane.b32.xlu0 %v7079, 8
        %v7169 = vpop.permute.xlu0 %7168
        %7170 = vrot.lane.b32.xlu0 %v7080, 8
        %v7171 = vpop.permute.xlu0 %7170
        %7172 = vrot.lane.b32.xlu0 %v7081, 8
        %v7173 = vpop.permute.xlu0 %7172
        %7174 = vrot.lane.b32.xlu0 %v7082, 8
        %v7175 = vpop.permute.xlu0 %7174
        %7176 = vrot.lane.b32.xlu0 %v7083, 8
        %v7177 = vpop.permute.xlu0 %7176
        %7178 = vrot.lane.b32.xlu0 %v7084, 8
        %v7179 = vpop.permute.xlu0 %7178
        %7180 = vrot.lane.b32.xlu0 %v7085, 8
        %v7181 = vpop.permute.xlu0 %7180
        %v7182 = vsel %vm2023, %v7119, 0
        %v7184 = vsel %vm2023, %v7121, 0
        %v7186 = vsel %vm2023, %v7123, 0
        %v7188 = vsel %vm2023, %v7125, 0
        %v7190 = vsel %vm2023, %v7127, 0
        %v7192 = vsel %vm2023, %v7129, 0
        %v7194 = vsel %vm2023, %v7131, 0
        %v7196 = vsel %vm2023, %v7133, 0
        %v7198 = vsel %vm2023, %v7135, 0
        %v7200 = vsel %vm2023, %v7137, 0
        %v7202 = vsel %vm2023, %v7139, 0
        %v7204 = vsel %vm2023, %v7141, 0
        %v7206 = vsel %vm2023, %v7143, 0
        %v7208 = vsel %vm2023, %v7145, 0
        %v7210 = vsel %vm2023, %v7147, 0
        %v7212 = vsel %vm2023, %v7149, 0
        %v7214 = vsel %vm2023, %v7151, 0
        %v7216 = vsel %vm2023, %v7153, 0
        %v7218 = vsel %vm2023, %v7155, 0
        %v7220 = vsel %vm2023, %v7157, 0
        %v7222 = vsel %vm2023, %v7159, 0
        %v7224 = vsel %vm2023, %v7161, 0
        %v7226 = vsel %vm2023, %v7163, 0
        %v7228 = vsel %vm2023, %v7165, 0
        %v7230 = vsel %vm2023, %v7167, 0
        %v7232 = vsel %vm2023, %v7169, 0
        %v7234 = vsel %vm2023, %v7171, 0
        %v7236 = vsel %vm2023, %v7173, 0
        %v7238 = vsel %vm2023, %v7175, 0
        %v7240 = vsel %vm2023, %v7177, 0
        %v7242 = vsel %vm2023, %v7179, 0
        %v7244 = vsel %vm2023, %v7181, 0
        %7246 = vmatprep.subr.mxu0 0.0
        %7247 = vmatpush1.xpose.msra.mxu0 %v7244
        %7248 = vmatprep.subr.mxu0 0.0
        %7249 = vmatpush1.xpose.msra.mxu0 %v7242
        %7250 = vmatprep.subr.mxu0 0.0
        %7251 = vmatpush1.xpose.msra.mxu0 %v7240
        %7252 = vmatprep.subr.mxu0 0.0
        %7253 = vmatpush1.xpose.msra.mxu0 %v7238
        %7254 = vmatprep.subr.mxu0 0.0
        %7255 = vmatpush1.xpose.msra.mxu0 %v7236
        %7256 = vmatprep.subr.mxu0 0.0
        %7257 = vmatpush1.xpose.msra.mxu0 %v7234
        %7258 = vmatprep.subr.mxu0 0.0
        %7259 = vmatpush1.xpose.msra.mxu0 %v7232
        %7260 = vmatprep.subr.mxu0 0.0
        %7261 = vmatpush1.xpose.msra.mxu0 %v7230
        %7262 = vmatprep.subr.mxu0 0.0
        %7263 = vmatpush1.xpose.msra.mxu0 %v7228
        %7264 = vmatprep.subr.mxu0 0.0
        %7265 = vmatpush1.xpose.msra.mxu0 %v7226
        %7266 = vmatprep.subr.mxu0 0.0
        %7267 = vmatpush1.xpose.msra.mxu0 %v7224
        %7268 = vmatprep.subr.mxu0 0.0
        %7269 = vmatpush1.xpose.msra.mxu0 %v7222
        %7270 = vmatprep.subr.mxu0 0.0
        %7271 = vmatpush1.xpose.msra.mxu0 %v7220
        %7272 = vmatprep.subr.mxu0 0.0
        %7273 = vmatpush1.xpose.msra.mxu0 %v7218
        %7274 = vmatprep.subr.mxu0 0.0
        %7275 = vmatpush1.xpose.msra.mxu0 %v7216
        %7276 = vmatprep.subr.mxu0 0.0
        %7277 = vmatpush1.xpose.msra.mxu0 %v7214
        %7278 = vmatprep.subr.mxu0 0.0
        %7279 = vmatpush2.xpose.msra.mxu0 0.0
        %7280 = vmatprep.subr.mxu0 0.0
        %7281 = vmatpush2.xpose.msra.mxu0 0.0
        %7282 = vmatprep.subr.mxu0 0.0
        %7283 = vmatpush2.xpose.msra.mxu0 0.0
        %7284 = vmatprep.subr.mxu0 0.0
        %7285 = vmatpush2.xpose.msra.mxu0 0.0
        %7286 = vmatprep.subr.mxu0 0.0
        %7287 = vmatpush2.xpose.msra.mxu0 0.0
        %7288 = vmatprep.subr.mxu0 0.0
        %7289 = vmatpush2.xpose.msra.mxu0 0.0
        %7290 = vmatprep.subr.mxu0 0.0
        %7291 = vmatpush2.xpose.msra.mxu0 0.0
        %7292 = vmatprep.subr.mxu0 0.0
        %7293 = vmatpush2.xpose.msra.mxu0 0.0
        %7294 = vmatprep.subr.mxu0 0.0
        %7295 = vmatpush2.xpose.msra.mxu0 0.0
        %7296 = vmatprep.subr.mxu0 0.0
        %7297 = vmatpush2.xpose.msra.mxu0 0.0
        %7298 = vmatprep.subr.mxu0 0.0
        %7299 = vmatpush2.xpose.msra.mxu0 0.0
        %7300 = vmatprep.subr.mxu0 0.0
        %7301 = vmatpush2.xpose.msra.mxu0 0.0
        %7302 = vmatprep.subr.mxu0 0.0
        %7303 = vmatpush2.xpose.msra.mxu0 0.0
        %7304 = vmatprep.subr.mxu0 0.0
        %7305 = vmatpush2.xpose.msra.mxu0 0.0
        %7306 = vmatprep.subr.mxu0 0.0
        %7307 = vmatpush2.xpose.msra.mxu0 0.0
        %7308 = vmatprep.subr.mxu0 0.0
        %7309 = vmatpush2.xpose.msra.mxu0 0.0
        %7310 = vmatprep.mubr.f32.mxu0 0.0
        %7311 = vmatmul.mubr.f32.gmra.mxu0 %v7182
        %v7312 = vpop.f32.mrf.mxu0
        %v7313 = vadd.f32 0.0, %v7312
        %v7314 = vpop.f32.mrf.mxu0
        %7315 = vmatprep.mubr.f32.mxu0 0.0
        %7316 = vmatmul.mubr.f32.gmra.mxu0 %v7184
        %v7317 = vpop.f32.mrf.mxu0
        %v7318 = vadd.f32 0.0, %v7317
        %v7319 = vpop.f32.mrf.mxu0
        %7320 = vmatprep.mubr.f32.mxu0 0.0
        %7321 = vmatmul.mubr.f32.gmra.mxu0 %v7186
        %v7322 = vpop.f32.mrf.mxu0
        %v7323 = vadd.f32 0.0, %v7322
        %v7324 = vpop.f32.mrf.mxu0
        %7325 = vmatprep.mubr.f32.mxu0 0.0
        %7326 = vmatmul.mubr.f32.gmra.mxu0 %v7188
        %v7327 = vpop.f32.mrf.mxu0
        %v7328 = vadd.f32 0.0, %v7327
        %v7329 = vpop.f32.mrf.mxu0
        %7330 = vmatprep.mubr.f32.mxu0 0.0
        %7331 = vmatmul.mubr.f32.gmra.mxu0 %v7190
        %v7332 = vpop.f32.mrf.mxu0
        %v7333 = vadd.f32 0.0, %v7332
        %v7334 = vpop.f32.mrf.mxu0
        %7335 = vmatprep.mubr.f32.mxu0 0.0
        %7336 = vmatmul.mubr.f32.gmra.mxu0 %v7192
        %v7337 = vpop.f32.mrf.mxu0
        %v7338 = vadd.f32 0.0, %v7337
        %v7339 = vpop.f32.mrf.mxu0
        %7340 = vmatprep.mubr.f32.mxu0 0.0
        %7341 = vmatmul.mubr.f32.gmra.mxu0 %v7194
        %v7342 = vpop.f32.mrf.mxu0
        %v7343 = vadd.f32 0.0, %v7342
        %v7344 = vpop.f32.mrf.mxu0
        %7345 = vmatprep.mubr.f32.mxu0 0.0
        %7346 = vmatmul.mubr.f32.gmra.mxu0 %v7196
        %v7347 = vpop.f32.mrf.mxu0
        %v7348 = vadd.f32 0.0, %v7347
        %v7349 = vpop.f32.mrf.mxu0
        %7350 = vmatprep.mubr.f32.mxu0 0.0
        %7351 = vmatmul.mubr.f32.gmra.mxu0 %v7198
        %v7352 = vpop.f32.mrf.mxu0
        %v7353 = vadd.f32 0.0, %v7352
        %v7354 = vpop.f32.mrf.mxu0
        %7355 = vmatprep.mubr.f32.mxu0 0.0
        %7356 = vmatmul.mubr.f32.gmra.mxu0 %v7200
        %v7357 = vpop.f32.mrf.mxu0
        %v7358 = vadd.f32 0.0, %v7357
        %v7359 = vpop.f32.mrf.mxu0
        %7360 = vmatprep.mubr.f32.mxu0 0.0
        %7361 = vmatmul.mubr.f32.gmra.mxu0 %v7202
        %v7362 = vpop.f32.mrf.mxu0
        %v7363 = vadd.f32 0.0, %v7362
        %v7364 = vpop.f32.mrf.mxu0
        %7365 = vmatprep.mubr.f32.mxu0 0.0
        %7366 = vmatmul.mubr.f32.gmra.mxu0 %v7204
        %v7367 = vpop.f32.mrf.mxu0
        %v7368 = vadd.f32 0.0, %v7367
        %v7369 = vpop.f32.mrf.mxu0
        %7370 = vmatprep.mubr.f32.mxu0 0.0
        %7371 = vmatmul.mubr.f32.gmra.mxu0 %v7206
        %v7372 = vpop.f32.mrf.mxu0
        %v7373 = vadd.f32 0.0, %v7372
        %v7374 = vpop.f32.mrf.mxu0
        %7375 = vmatprep.mubr.f32.mxu0 0.0
        %7376 = vmatmul.mubr.f32.gmra.mxu0 %v7208
        %v7377 = vpop.f32.mrf.mxu0
        %v7378 = vadd.f32 0.0, %v7377
        %v7379 = vpop.f32.mrf.mxu0
        %7380 = vmatprep.mubr.f32.mxu0 0.0
        %7381 = vmatmul.mubr.f32.gmra.mxu0 %v7210
        %v7382 = vpop.f32.mrf.mxu0
        %v7383 = vadd.f32 0.0, %v7382
        %v7384 = vpop.f32.mrf.mxu0
        %7385 = vmatprep.mubr.f32.mxu0 0.0
        %7386 = vmatmul.mubr.f32.gmra.mxu0 %v7212
        %v7387 = vpop.f32.mrf.mxu0
        %v7388 = vadd.f32 0.0, %v7387
        %v7389 = vpop.f32.mrf.mxu0
        %7390 = vdwg.mxu0
        %7391 = vmax.xlane.f32.xlu0 %v7313
        %v7392 = vpop.xlane.xlu0 %7391
        %7393 = vmax.xlane.f32.xlu0 %v7318
        %v7394 = vpop.xlane.xlu0 %7393
        %7395 = vmax.xlane.f32.xlu0 %v7323
        %v7396 = vpop.xlane.xlu0 %7395
        %7397 = vmax.xlane.f32.xlu0 %v7328
        %v7398 = vpop.xlane.xlu0 %7397
        %7399 = vmax.xlane.f32.xlu0 %v7333
        %v7400 = vpop.xlane.xlu0 %7399
        %7401 = vmax.xlane.f32.xlu0 %v7338
        %v7402 = vpop.xlane.xlu0 %7401
        %7403 = vmax.xlane.f32.xlu0 %v7343
        %v7404 = vpop.xlane.xlu0 %7403
        %7405 = vmax.xlane.f32.xlu0 %v7348
        %v7406 = vpop.xlane.xlu0 %7405
        %7407 = vmax.xlane.f32.xlu0 %v7353
        %v7408 = vpop.xlane.xlu0 %7407
        %7409 = vmax.xlane.f32.xlu0 %v7358
        %v7410 = vpop.xlane.xlu0 %7409
        %7411 = vmax.xlane.f32.xlu0 %v7363
        %v7412 = vpop.xlane.xlu0 %7411
        %7413 = vmax.xlane.f32.xlu0 %v7368
        %v7414 = vpop.xlane.xlu0 %7413
        %7415 = vmax.xlane.f32.xlu0 %v7373
        %v7416 = vpop.xlane.xlu0 %7415
        %7417 = vmax.xlane.f32.xlu0 %v7378
        %v7418 = vpop.xlane.xlu0 %7417
        %7419 = vmax.xlane.f32.xlu0 %v7383
        %v7420 = vpop.xlane.xlu0 %7419
        %7421 = vmax.xlane.f32.xlu0 %v7388
        %v7422 = vpop.xlane.xlu0 %7421
        %v7423 = vsub.f32 %v7313, %v7392
        %v7424 = vsub.f32 %v7318, %v7394
        %v7425 = vsub.f32 %v7323, %v7396
        %v7426 = vsub.f32 %v7328, %v7398
        %v7427 = vsub.f32 %v7333, %v7400
        %v7428 = vsub.f32 %v7338, %v7402
        %v7429 = vsub.f32 %v7343, %v7404
        %v7430 = vsub.f32 %v7348, %v7406
        %v7431 = vsub.f32 %v7353, %v7408
        %v7432 = vsub.f32 %v7358, %v7410
        %v7433 = vsub.f32 %v7363, %v7412
        %v7434 = vsub.f32 %v7368, %v7414
        %v7435 = vsub.f32 %v7373, %v7416
        %v7436 = vsub.f32 %v7378, %v7418
        %v7437 = vsub.f32 %v7383, %v7420
        %v7438 = vsub.f32 %v7388, %v7422
        %v7439 = vmul.f32 %v7423, 1.442695
        %v7440 = vpow.pop %v7439
        %v7441 = vmul.f32 %v7424, 1.442695
        %v7442 = vpow.pop %v7441
        %v7443 = vmul.f32 %v7425, 1.442695
        %v7444 = vpow.pop %v7443
        %v7445 = vmul.f32 %v7426, 1.442695
        %v7446 = vpow.pop %v7445
        %v7447 = vmul.f32 %v7427, 1.442695
        %v7448 = vpow.pop %v7447
        %v7449 = vmul.f32 %v7428, 1.442695
        %v7450 = vpow.pop %v7449
        %v7451 = vmul.f32 %v7429, 1.442695
        %v7452 = vpow.pop %v7451
        %v7453 = vmul.f32 %v7430, 1.442695
        %v7454 = vpow.pop %v7453
        %v7455 = vmul.f32 %v7431, 1.442695
        %v7456 = vpow.pop %v7455
        %v7457 = vmul.f32 %v7432, 1.442695
        %v7458 = vpow.pop %v7457
        %v7459 = vmul.f32 %v7433, 1.442695
        %v7460 = vpow.pop %v7459
        %v7461 = vmul.f32 %v7434, 1.442695
        %v7462 = vpow.pop %v7461
        %v7463 = vmul.f32 %v7435, 1.442695
        %v7464 = vpow.pop %v7463
        %v7465 = vmul.f32 %v7436, 1.442695
        %v7466 = vpow.pop %v7465
        %v7467 = vmul.f32 %v7437, 1.442695
        %v7468 = vpow.pop %v7467
        %v7469 = vmul.f32 %v7438, 1.442695
        %v7470 = vpow.pop %v7469
        %7471 = vadd.xlane.f32.xlu0 %v7440
        %v7472 = vpop.xlane.xlu0 %7471
        %7473 = vadd.xlane.f32.xlu0 %v7442
        %v7474 = vpop.xlane.xlu0 %7473
        %7475 = vadd.xlane.f32.xlu0 %v7444
        %v7476 = vpop.xlane.xlu0 %7475
        %7477 = vadd.xlane.f32.xlu0 %v7446
        %v7478 = vpop.xlane.xlu0 %7477
        %7479 = vadd.xlane.f32.xlu0 %v7448
        %v7480 = vpop.xlane.xlu0 %7479
        %7481 = vadd.xlane.f32.xlu0 %v7450
        %v7482 = vpop.xlane.xlu0 %7481
        %7483 = vadd.xlane.f32.xlu0 %v7452
        %v7484 = vpop.xlane.xlu0 %7483
        %7485 = vadd.xlane.f32.xlu0 %v7454
        %v7486 = vpop.xlane.xlu0 %7485
        %7487 = vadd.xlane.f32.xlu0 %v7456
        %v7488 = vpop.xlane.xlu0 %7487
        %7489 = vadd.xlane.f32.xlu0 %v7458
        %v7490 = vpop.xlane.xlu0 %7489
        %7491 = vadd.xlane.f32.xlu0 %v7460
        %v7492 = vpop.xlane.xlu0 %7491
        %7493 = vadd.xlane.f32.xlu0 %v7462
        %v7494 = vpop.xlane.xlu0 %7493
        %7495 = vadd.xlane.f32.xlu0 %v7464
        %v7496 = vpop.xlane.xlu0 %7495
        %7497 = vadd.xlane.f32.xlu0 %v7466
        %v7498 = vpop.xlane.xlu0 %7497
        %7499 = vadd.xlane.f32.xlu0 %v7468
        %v7500 = vpop.xlane.xlu0 %7499
        %7501 = vadd.xlane.f32.xlu0 %v7470
        %v7502 = vpop.xlane.xlu0 %7501
        %7519 = vrot.lane.b32.xlu0 %v7086, 72
        %v7520 = vpop.permute.xlu0 %7519
        %7521 = vrot.lane.b32.xlu0 %v7087, 72
        %v7522 = vpop.permute.xlu0 %7521
        %7523 = vrot.lane.b32.xlu0 %v7088, 72
        %v7524 = vpop.permute.xlu0 %7523
        %7525 = vrot.lane.b32.xlu0 %v7089, 72
        %v7526 = vpop.permute.xlu0 %7525
        %7527 = vrot.lane.b32.xlu0 %v7090, 72
        %v7528 = vpop.permute.xlu0 %7527
        %7529 = vrot.lane.b32.xlu0 %v7091, 72
        %v7530 = vpop.permute.xlu0 %7529
        %7531 = vrot.lane.b32.xlu0 %v7092, 72
        %v7532 = vpop.permute.xlu0 %7531
        %7533 = vrot.lane.b32.xlu0 %v7093, 72
        %v7534 = vpop.permute.xlu0 %7533
        %7535 = vrot.lane.b32.xlu0 %v7094, 72
        %v7536 = vpop.permute.xlu0 %7535
        %7537 = vrot.lane.b32.xlu0 %v7095, 72
        %v7538 = vpop.permute.xlu0 %7537
        %7539 = vrot.lane.b32.xlu0 %v7096, 72
        %v7540 = vpop.permute.xlu0 %7539
        %7541 = vrot.lane.b32.xlu0 %v7097, 72
        %v7542 = vpop.permute.xlu0 %7541
        %7543 = vrot.lane.b32.xlu0 %v7098, 72
        %v7544 = vpop.permute.xlu0 %7543
        %7545 = vrot.lane.b32.xlu0 %v7099, 72
        %v7546 = vpop.permute.xlu0 %7545
        %7547 = vrot.lane.b32.xlu0 %v7100, 72
        %v7548 = vpop.permute.xlu0 %7547
        %7549 = vrot.lane.b32.xlu0 %v7101, 72
        %v7550 = vpop.permute.xlu0 %7549
        %7567 = vmatprep.subr.mxu0 0.0
        %7568 = vmatpush1.msra.mxu0 %v7550
        %7569 = vmatprep.subr.mxu0 0.0
        %7570 = vmatpush1.msra.mxu0 %v7548
        %7571 = vmatprep.subr.mxu0 0.0
        %7572 = vmatpush1.msra.mxu0 %v7546
        %7573 = vmatprep.subr.mxu0 0.0
        %7574 = vmatpush1.msra.mxu0 %v7544
        %7575 = vmatprep.subr.mxu0 0.0
        %7576 = vmatpush1.msra.mxu0 %v7542
        %7577 = vmatprep.subr.mxu0 0.0
        %7578 = vmatpush1.msra.mxu0 %v7540
        %7579 = vmatprep.subr.mxu0 0.0
        %7580 = vmatpush1.msra.mxu0 %v7538
        %7581 = vmatprep.subr.mxu0 0.0
        %7582 = vmatpush1.msra.mxu0 %v7536
        %7583 = vmatprep.subr.mxu0 0.0
        %7584 = vmatpush1.msra.mxu0 %v7534
        %7585 = vmatprep.subr.mxu0 0.0
        %7586 = vmatpush1.msra.mxu0 %v7532
        %7587 = vmatprep.subr.mxu0 0.0
        %7588 = vmatpush1.msra.mxu0 %v7530
        %7589 = vmatprep.subr.mxu0 0.0
        %7590 = vmatpush1.msra.mxu0 %v7528
        %7591 = vmatprep.subr.mxu0 0.0
        %7592 = vmatpush1.msra.mxu0 %v7526
        %7593 = vmatprep.subr.mxu0 0.0
        %7594 = vmatpush1.msra.mxu0 %v7524
        %7595 = vmatprep.subr.mxu0 0.0
        %7596 = vmatpush1.msra.mxu0 %v7522
        %7597 = vmatprep.subr.mxu0 0.0
        %7598 = vmatpush1.msra.mxu0 %v7520
        %7599 = vmatprep.subr.mxu0 0.0
        %7600 = vmatpush2.msra.mxu0 0.0
        %7601 = vmatprep.subr.mxu0 0.0
        %7602 = vmatpush2.msra.mxu0 0.0
        %7603 = vmatprep.subr.mxu0 0.0
        %7604 = vmatpush2.msra.mxu0 0.0
        %7605 = vmatprep.subr.mxu0 0.0
        %7606 = vmatpush2.msra.mxu0 0.0
        %7607 = vmatprep.subr.mxu0 0.0
        %7608 = vmatpush2.msra.mxu0 0.0
        %7609 = vmatprep.subr.mxu0 0.0
        %7610 = vmatpush2.msra.mxu0 0.0
        %7611 = vmatprep.subr.mxu0 0.0
        %7612 = vmatpush2.msra.mxu0 0.0
        %7613 = vmatprep.subr.mxu0 0.0
        %7614 = vmatpush2.msra.mxu0 0.0
        %7615 = vmatprep.subr.mxu0 0.0
        %7616 = vmatpush2.msra.mxu0 0.0
        %7617 = vmatprep.subr.mxu0 0.0
        %7618 = vmatpush2.msra.mxu0 0.0
        %7619 = vmatprep.subr.mxu0 0.0
        %7620 = vmatpush2.msra.mxu0 0.0
        %7621 = vmatprep.subr.mxu0 0.0
        %7622 = vmatpush2.msra.mxu0 0.0
        %7623 = vmatprep.subr.mxu0 0.0
        %7624 = vmatpush2.msra.mxu0 0.0
        %7625 = vmatprep.subr.mxu0 0.0
        %7626 = vmatpush2.msra.mxu0 0.0
        %7627 = vmatprep.subr.mxu0 0.0
        %7628 = vmatpush2.msra.mxu0 0.0
        %7629 = vmatprep.subr.mxu0 0.0
        %7630 = vmatpush2.msra.mxu0 0.0
        %7631 = vmatprep.mubr.f32.mxu0 0.0
        %7632 = vmatmul.mubr.f32.gmra.mxu0 %v7440
        %v7633 = vpop.f32.mrf.mxu0
        %v7634 = vadd.f32 0.0, %v7633
        %v7635 = vpop.f32.mrf.mxu0
        %7636 = vmatprep.mubr.f32.mxu0 0.0
        %7637 = vmatmul.mubr.f32.gmra.mxu0 %v7442
        %v7638 = vpop.f32.mrf.mxu0
        %v7639 = vadd.f32 0.0, %v7638
        %v7640 = vpop.f32.mrf.mxu0
        %7641 = vmatprep.mubr.f32.mxu0 0.0
        %7642 = vmatmul.mubr.f32.gmra.mxu0 %v7444
        %v7643 = vpop.f32.mrf.mxu0
        %v7644 = vadd.f32 0.0, %v7643
        %v7645 = vpop.f32.mrf.mxu0
        %7646 = vmatprep.mubr.f32.mxu0 0.0
        %7647 = vmatmul.mubr.f32.gmra.mxu0 %v7446
        %v7648 = vpop.f32.mrf.mxu0
        %v7649 = vadd.f32 0.0, %v7648
        %v7650 = vpop.f32.mrf.mxu0
        %7651 = vmatprep.mubr.f32.mxu0 0.0
        %7652 = vmatmul.mubr.f32.gmra.mxu0 %v7448
        %v7653 = vpop.f32.mrf.mxu0
        %v7654 = vadd.f32 0.0, %v7653
        %v7655 = vpop.f32.mrf.mxu0
        %7656 = vmatprep.mubr.f32.mxu0 0.0
        %7657 = vmatmul.mubr.f32.gmra.mxu0 %v7450
        %v7658 = vpop.f32.mrf.mxu0
        %v7659 = vadd.f32 0.0, %v7658
        %v7660 = vpop.f32.mrf.mxu0
        %7661 = vmatprep.mubr.f32.mxu0 0.0
        %7662 = vmatmul.mubr.f32.gmra.mxu0 %v7452
        %v7663 = vpop.f32.mrf.mxu0
        %v7664 = vadd.f32 0.0, %v7663
        %v7665 = vpop.f32.mrf.mxu0
        %7666 = vmatprep.mubr.f32.mxu0 0.0
        %7667 = vmatmul.mubr.f32.gmra.mxu0 %v7454
        %v7668 = vpop.f32.mrf.mxu0
        %v7669 = vadd.f32 0.0, %v7668
        %v7670 = vpop.f32.mrf.mxu0
        %7671 = vmatprep.mubr.f32.mxu0 0.0
        %7672 = vmatmul.mubr.f32.gmra.mxu0 %v7456
        %v7673 = vpop.f32.mrf.mxu0
        %v7674 = vadd.f32 0.0, %v7673
        %v7675 = vpop.f32.mrf.mxu0
        %7676 = vmatprep.mubr.f32.mxu0 0.0
        %7677 = vmatmul.mubr.f32.gmra.mxu0 %v7458
        %v7678 = vpop.f32.mrf.mxu0
        %v7679 = vadd.f32 0.0, %v7678
        %v7680 = vpop.f32.mrf.mxu0
        %7681 = vmatprep.mubr.f32.mxu0 0.0
        %7682 = vmatmul.mubr.f32.gmra.mxu0 %v7460
        %v7683 = vpop.f32.mrf.mxu0
        %v7684 = vadd.f32 0.0, %v7683
        %v7685 = vpop.f32.mrf.mxu0
        %7686 = vmatprep.mubr.f32.mxu0 0.0
        %7687 = vmatmul.mubr.f32.gmra.mxu0 %v7462
        %v7688 = vpop.f32.mrf.mxu0
        %v7689 = vadd.f32 0.0, %v7688
        %v7690 = vpop.f32.mrf.mxu0
        %7691 = vmatprep.mubr.f32.mxu0 0.0
        %7692 = vmatmul.mubr.f32.gmra.mxu0 %v7464
        %v7693 = vpop.f32.mrf.mxu0
        %v7694 = vadd.f32 0.0, %v7693
        %v7695 = vpop.f32.mrf.mxu0
        %7696 = vmatprep.mubr.f32.mxu0 0.0
        %7697 = vmatmul.mubr.f32.gmra.mxu0 %v7466
        %v7698 = vpop.f32.mrf.mxu0
        %v7699 = vadd.f32 0.0, %v7698
        %v7700 = vpop.f32.mrf.mxu0
        %7701 = vmatprep.mubr.f32.mxu0 0.0
        %7702 = vmatmul.mubr.f32.gmra.mxu0 %v7468
        %v7703 = vpop.f32.mrf.mxu0
        %v7704 = vadd.f32 0.0, %v7703
        %v7705 = vpop.f32.mrf.mxu0
        %7706 = vmatprep.mubr.f32.mxu0 0.0
        %7707 = vmatmul.mubr.f32.gmra.mxu0 %v7470
        %v7708 = vpop.f32.mrf.mxu0
        %v7709 = vadd.f32 0.0, %v7708
        %v7710 = vpop.f32.mrf.mxu0
        %7711 = vdwg.mxu0
        %v7712 = vrcp.pop %v7472
        %v7713 = vrcp.pop %v7474
        %v7714 = vrcp.pop %v7476
        %v7715 = vrcp.pop %v7478
        %v7716 = vrcp.pop %v7480
        %v7717 = vrcp.pop %v7482
        %v7718 = vrcp.pop %v7484
        %v7719 = vrcp.pop %v7486
        %v7720 = vrcp.pop %v7488
        %v7721 = vrcp.pop %v7490
        %v7722 = vrcp.pop %v7492
        %v7723 = vrcp.pop %v7494
        %v7724 = vrcp.pop %v7496
        %v7725 = vrcp.pop %v7498
        %v7726 = vrcp.pop %v7500
        %v7727 = vrcp.pop %v7502
        %v7728 = vmul.f32 %v7634, %v7712
        %v7729 = vmul.f32 %v7639, %v7713
        %v7730 = vmul.f32 %v7644, %v7714
        %v7731 = vmul.f32 %v7649, %v7715
        %v7732 = vmul.f32 %v7654, %v7716
        %v7733 = vmul.f32 %v7659, %v7717
        %v7734 = vmul.f32 %v7664, %v7718
        %v7735 = vmul.f32 %v7669, %v7719
        %v7736 = vmul.f32 %v7674, %v7720
        %v7737 = vmul.f32 %v7679, %v7721
        %v7738 = vmul.f32 %v7684, %v7722
        %v7739 = vmul.f32 %v7689, %v7723
        %v7740 = vmul.f32 %v7694, %v7724
        %v7741 = vmul.f32 %v7699, %v7725
        %v7742 = vmul.f32 %v7704, %v7726
        %v7743 = vmul.f32 %v7709, %v7727
        %7760 = vrot.lane.b32.xlu0 %v7728, 56
        %v7761 = vpop.permute.xlu0 %7760
        %7762 = vrot.lane.b32.xlu0 %v7729, 56
        %v7763 = vpop.permute.xlu0 %7762
        %7764 = vrot.lane.b32.xlu0 %v7730, 56
        %v7765 = vpop.permute.xlu0 %7764
        %7766 = vrot.lane.b32.xlu0 %v7731, 56
        %v7767 = vpop.permute.xlu0 %7766
        %7768 = vrot.lane.b32.xlu0 %v7732, 56
        %v7769 = vpop.permute.xlu0 %7768
        %7770 = vrot.lane.b32.xlu0 %v7733, 56
        %v7771 = vpop.permute.xlu0 %7770
        %7772 = vrot.lane.b32.xlu0 %v7734, 56
        %v7773 = vpop.permute.xlu0 %7772
        %7774 = vrot.lane.b32.xlu0 %v7735, 56
        %v7775 = vpop.permute.xlu0 %7774
        %7776 = vrot.lane.b32.xlu0 %v7736, 56
        %v7777 = vpop.permute.xlu0 %7776
        %7778 = vrot.lane.b32.xlu0 %v7737, 56
        %v7779 = vpop.permute.xlu0 %7778
        %7780 = vrot.lane.b32.xlu0 %v7738, 56
        %v7781 = vpop.permute.xlu0 %7780
        %7782 = vrot.lane.b32.xlu0 %v7739, 56
        %v7783 = vpop.permute.xlu0 %7782
        %7784 = vrot.lane.b32.xlu0 %v7740, 56
        %v7785 = vpop.permute.xlu0 %7784
        %7786 = vrot.lane.b32.xlu0 %v7741, 56
        %v7787 = vpop.permute.xlu0 %7786
        %7788 = vrot.lane.b32.xlu0 %v7742, 56
        %v7789 = vpop.permute.xlu0 %7788
        %7790 = vrot.lane.b32.xlu0 %v7743, 56
        %v7791 = vpop.permute.xlu0 %7790
        %vm7808 = vcmask 523712
        %7809 = vst.msk [vmem:[%s2523] sm:$0xff] %vm7808, %v7761
        %7810 = vst.msk [vmem:[%s2523 + $0x8] sm:$0xff] %vm7808, %v7763
        %7811 = vst.msk [vmem:[%s2523 + $0x10] sm:$0xff] %vm7808, %v7765
        %7812 = vst.msk [vmem:[%s2523 + $0x18] sm:$0xff] %vm7808, %v7767
        %7813 = vst.msk [vmem:[%s2523 + $0x20] sm:$0xff] %vm7808, %v7769
        %7814 = vst.msk [vmem:[%s2523 + $0x28] sm:$0xff] %vm7808, %v7771
        %7815 = vst.msk [vmem:[%s2523 + $0x30] sm:$0xff] %vm7808, %v7773
        %7816 = vst.msk [vmem:[%s2523 + $0x38] sm:$0xff] %vm7808, %v7775
        %7817 = vst.msk [vmem:[%s2523 + $0x40] sm:$0xff] %vm7808, %v7777
        %7818 = vst.msk [vmem:[%s2523 + $0x48] sm:$0xff] %vm7808, %v7779
        %7819 = vst.msk [vmem:[%s2523 + $0x50] sm:$0xff] %vm7808, %v7781
        %7820 = vst.msk [vmem:[%s2523 + $0x58] sm:$0xff] %vm7808, %v7783
        %7821 = vst.msk [vmem:[%s2523 + $0x60] sm:$0xff] %vm7808, %v7785
        %7822 = vst.msk [vmem:[%s2523 + $0x68] sm:$0xff] %vm7808, %v7787
        %7823 = vst.msk [vmem:[%s2523 + $0x70] sm:$0xff] %vm7808, %v7789
        %7824 = vst.msk [vmem:[%s2523 + $0x78] sm:$0xff] %vm7808, %v7791
      $region97: #{transformer_net_forward.1} parent=87 // loop_footer
        %s1939 = sadd.s32 1, %s1935
      $region98: #{transformer_net_forward.1} parent=87 // loop_footer_branch
        %1934 = sbr.rel target = $region94
      $region99: #{transformer_net_forward.1} parent=87 // loop_exit
        _
      %v7825 = vld [vmem:[#allocation4] sm:$0xff]
      %v7826 = vld [vmem:[#allocation4 + $0x8] sm:$0xff]
      %v7827 = vld [vmem:[#allocation4 + $0x10] sm:$0xff]
      %v7828 = vld [vmem:[#allocation4 + $0x18] sm:$0xff]
      %v7829 = vld [vmem:[#allocation4 + $0x20] sm:$0xff]
      %v7830 = vld [vmem:[#allocation4 + $0x28] sm:$0xff]
      %v7831 = vld [vmem:[#allocation4 + $0x30] sm:$0xff]
      %v7832 = vld [vmem:[#allocation4 + $0x38] sm:$0xff]
      %v7833 = vld [vmem:[#allocation4 + $0x40] sm:$0xff]
      %v7834 = vld [vmem:[#allocation4 + $0x48] sm:$0xff]
      %v7835 = vld [vmem:[#allocation4 + $0x50] sm:$0xff]
      %v7836 = vld [vmem:[#allocation4 + $0x58] sm:$0xff]
      %v7837 = vld [vmem:[#allocation4 + $0x60] sm:$0xff]
      %v7838 = vld [vmem:[#allocation4 + $0x68] sm:$0xff]
      %v7839 = vld [vmem:[#allocation4 + $0x70] sm:$0xff]
      %v7840 = vld [vmem:[#allocation4 + $0x78] sm:$0xff]
      %v7841 = vld [vmem:[#allocation4 + $0x80] sm:$0xff]
      %v7842 = vld [vmem:[#allocation4 + $0x88] sm:$0xff]
      %v7843 = vld [vmem:[#allocation4 + $0x90] sm:$0xff]
      %v7844 = vld [vmem:[#allocation4 + $0x98] sm:$0xff]
      %v7845 = vld [vmem:[#allocation4 + $0xa0] sm:$0xff]
      %v7846 = vld [vmem:[#allocation4 + $0xa8] sm:$0xff]
      %v7847 = vld [vmem:[#allocation4 + $0xb0] sm:$0xff]
      %v7848 = vld [vmem:[#allocation4 + $0xb8] sm:$0xff]
      %v7849 = vld [vmem:[#allocation4 + $0xc0] sm:$0xff]
      %v7850 = vld [vmem:[#allocation4 + $0xc8] sm:$0xff]
      %v7851 = vld [vmem:[#allocation4 + $0xd0] sm:$0xff]
      %v7852 = vld [vmem:[#allocation4 + $0xd8] sm:$0xff]
      %v7853 = vld [vmem:[#allocation4 + $0xe0] sm:$0xff]
      %v7854 = vld [vmem:[#allocation4 + $0xe8] sm:$0xff]
      %v7855 = vld [vmem:[#allocation4 + $0xf0] sm:$0xff]
      %v7856 = vld [vmem:[#allocation4 + $0xf8] sm:$0xff]
      %s7857 = smul.u32 %s35, 64
      %s7858 = scalar_lea.vmem %s7, %s7857
      %v7859 = vld [vmem:[%s7858] sm:$0xff]
      %v7860 = vld [vmem:[%s7858 + $0x8] sm:$0xff]
      %v7861 = vld [vmem:[%s7858 + $0x10] sm:$0xff]
      %v7862 = vld [vmem:[%s7858 + $0x18] sm:$0xff]
      %v7863 = vld [vmem:[%s7858 + $0x20] sm:$0xff]
      %v7864 = vld [vmem:[%s7858 + $0x28] sm:$0xff]
      %v7865 = vld [vmem:[%s7858 + $0x30] sm:$0xff]
      %v7866 = vld [vmem:[%s7858 + $0x38] sm:$0xff]
      %s7867 = scalar_lea.vmem %s8, %s35
      %v7868 = vld [vmem:[%s7867] sm:$0x1]
      %v7870 = vlaneseq
      %v7871 = vshrl.u32 %v7870, 7
      %v7872 = vsub.s32 0, %v7871
      %v7873 = vrot.slane %v7868, %v7872
      %v7876 = vsel %vm973, %v7825, 0
      %v7879 = vsel %vm973, %v7826, 0
      %v7882 = vsel %vm973, %v7827, 0
      %v7885 = vsel %vm973, %v7828, 0
      %v7888 = vsel %vm973, %v7829, 0
      %v7891 = vsel %vm973, %v7830, 0
      %v7894 = vsel %vm973, %v7831, 0
      %v7897 = vsel %vm973, %v7832, 0
      %v7900 = vsel %vm973, %v7833, 0
      %v7903 = vsel %vm973, %v7834, 0
      %v7906 = vsel %vm973, %v7835, 0
      %v7909 = vsel %vm973, %v7836, 0
      %v7912 = vsel %vm973, %v7837, 0
      %v7915 = vsel %vm973, %v7838, 0
      %v7918 = vsel %vm973, %v7839, 0
      %v7921 = vsel %vm973, %v7840, 0
      %v7924 = vsel %vm973, %v7841, 0
      %v7927 = vsel %vm973, %v7842, 0
      %v7930 = vsel %vm973, %v7843, 0
      %v7933 = vsel %vm973, %v7844, 0
      %v7936 = vsel %vm973, %v7845, 0
      %v7939 = vsel %vm973, %v7846, 0
      %v7942 = vsel %vm973, %v7847, 0
      %v7945 = vsel %vm973, %v7848, 0
      %v7948 = vsel %vm973, %v7849, 0
      %v7951 = vsel %vm973, %v7850, 0
      %v7954 = vsel %vm973, %v7851, 0
      %v7957 = vsel %vm973, %v7852, 0
      %v7960 = vsel %vm973, %v7853, 0
      %v7963 = vsel %vm973, %v7854, 0
      %v7966 = vsel %vm973, %v7855, 0
      %v7969 = vsel %vm973, %v7856, 0
      %7971 = vmatprep.subr.mxu0 0.0
      %7972 = vmatpush1.msra.mxu0 0.0
      %7973 = vmatprep.subr.mxu0 0.0
      %7974 = vmatpush1.msra.mxu0 0.0
      %7975 = vmatprep.subr.mxu0 0.0
      %7976 = vmatpush1.msra.mxu0 0.0
      %7977 = vmatprep.subr.mxu0 0.0
      %7978 = vmatpush1.msra.mxu0 0.0
      %7979 = vmatprep.subr.mxu0 0.0
      %7980 = vmatpush1.msra.mxu0 0.0
      %7981 = vmatprep.subr.mxu0 0.0
      %7982 = vmatpush1.msra.mxu0 0.0
      %7983 = vmatprep.subr.mxu0 0.0
      %7984 = vmatpush1.msra.mxu0 0.0
      %7985 = vmatprep.subr.mxu0 0.0
      %7986 = vmatpush1.msra.mxu0 0.0
      %7987 = vmatprep.subr.mxu0 0.0
      %7988 = vmatpush1.msra.mxu0 %v7866
      %7989 = vmatprep.subr.mxu0 0.0
      %7990 = vmatpush1.msra.mxu0 %v7865
      %7991 = vmatprep.subr.mxu0 0.0
      %7992 = vmatpush1.msra.mxu0 %v7864
      %7993 = vmatprep.subr.mxu0 0.0
      %7994 = vmatpush1.msra.mxu0 %v7863
      %7995 = vmatprep.subr.mxu0 0.0
      %7996 = vmatpush1.msra.mxu0 %v7862
      %7997 = vmatprep.subr.mxu0 0.0
      %7998 = vmatpush1.msra.mxu0 %v7861
      %7999 = vmatprep.subr.mxu0 0.0
      %8000 = vmatpush1.msra.mxu0 %v7860
      %8001 = vmatprep.subr.mxu0 0.0
      %8002 = vmatpush1.msra.mxu0 %v7859
      %8003 = vmatprep.subr.mxu0 0.0
      %8004 = vmatpush2.msra.mxu0 0.0
      %8005 = vmatprep.subr.mxu0 0.0
      %8006 = vmatpush2.msra.mxu0 0.0
      %8007 = vmatprep.subr.mxu0 0.0
      %8008 = vmatpush2.msra.mxu0 0.0
      %8009 = vmatprep.subr.mxu0 0.0
      %8010 = vmatpush2.msra.mxu0 0.0
      %8011 = vmatprep.subr.mxu0 0.0
      %8012 = vmatpush2.msra.mxu0 0.0
      %8013 = vmatprep.subr.mxu0 0.0
      %8014 = vmatpush2.msra.mxu0 0.0
      %8015 = vmatprep.subr.mxu0 0.0
      %8016 = vmatpush2.msra.mxu0 0.0
      %8017 = vmatprep.subr.mxu0 0.0
      %8018 = vmatpush2.msra.mxu0 0.0
      %8019 = vmatprep.subr.mxu0 0.0
      %8020 = vmatpush2.msra.mxu0 0.0
      %8021 = vmatprep.subr.mxu0 0.0
      %8022 = vmatpush2.msra.mxu0 0.0
      %8023 = vmatprep.subr.mxu0 0.0
      %8024 = vmatpush2.msra.mxu0 0.0
      %8025 = vmatprep.subr.mxu0 0.0
      %8026 = vmatpush2.msra.mxu0 0.0
      %8027 = vmatprep.subr.mxu0 0.0
      %8028 = vmatpush2.msra.mxu0 0.0
      %8029 = vmatprep.subr.mxu0 0.0
      %8030 = vmatpush2.msra.mxu0 0.0
      %8031 = vmatprep.subr.mxu0 0.0
      %8032 = vmatpush2.msra.mxu0 0.0
      %8033 = vmatprep.subr.mxu0 0.0
      %8034 = vmatpush2.msra.mxu0 0.0
      %8035 = vmatprep.mubr.f32.mxu0 0.0
      %8036 = vmatmul.mubr.f32.gmra.mxu0 %v7876
      %v8037 = vpop.f32.mrf.mxu0
      %v8038 = vadd.f32 %v7873, %v8037
      %v8039 = vpop.f32.mrf.mxu0
      %8040 = vmatprep.mubr.f32.mxu0 0.0
      %8041 = vmatmul.mubr.f32.gmra.mxu0 %v7879
      %v8042 = vpop.f32.mrf.mxu0
      %v8043 = vadd.f32 %v7873, %v8042
      %v8044 = vpop.f32.mrf.mxu0
      %8045 = vmatprep.mubr.f32.mxu0 0.0
      %8046 = vmatmul.mubr.f32.gmra.mxu0 %v7882
      %v8047 = vpop.f32.mrf.mxu0
      %v8048 = vadd.f32 %v7873, %v8047
      %v8049 = vpop.f32.mrf.mxu0
      %8050 = vmatprep.mubr.f32.mxu0 0.0
      %8051 = vmatmul.mubr.f32.gmra.mxu0 %v7885
      %v8052 = vpop.f32.mrf.mxu0
      %v8053 = vadd.f32 %v7873, %v8052
      %v8054 = vpop.f32.mrf.mxu0
      %8055 = vmatprep.mubr.f32.mxu0 0.0
      %8056 = vmatmul.mubr.f32.gmra.mxu0 %v7888
      %v8057 = vpop.f32.mrf.mxu0
      %v8058 = vadd.f32 %v7873, %v8057
      %v8059 = vpop.f32.mrf.mxu0
      %8060 = vmatprep.mubr.f32.mxu0 0.0
      %8061 = vmatmul.mubr.f32.gmra.mxu0 %v7891
      %v8062 = vpop.f32.mrf.mxu0
      %v8063 = vadd.f32 %v7873, %v8062
      %v8064 = vpop.f32.mrf.mxu0
      %8065 = vmatprep.mubr.f32.mxu0 0.0
      %8066 = vmatmul.mubr.f32.gmra.mxu0 %v7894
      %v8067 = vpop.f32.mrf.mxu0
      %v8068 = vadd.f32 %v7873, %v8067
      %v8069 = vpop.f32.mrf.mxu0
      %8070 = vmatprep.mubr.f32.mxu0 0.0
      %8071 = vmatmul.mubr.f32.gmra.mxu0 %v7897
      %v8072 = vpop.f32.mrf.mxu0
      %v8073 = vadd.f32 %v7873, %v8072
      %v8074 = vpop.f32.mrf.mxu0
      %8075 = vmatprep.mubr.f32.mxu0 0.0
      %8076 = vmatmul.mubr.f32.gmra.mxu0 %v7900
      %v8077 = vpop.f32.mrf.mxu0
      %v8078 = vadd.f32 %v7873, %v8077
      %v8079 = vpop.f32.mrf.mxu0
      %8080 = vmatprep.mubr.f32.mxu0 0.0
      %8081 = vmatmul.mubr.f32.gmra.mxu0 %v7903
      %v8082 = vpop.f32.mrf.mxu0
      %v8083 = vadd.f32 %v7873, %v8082
      %v8084 = vpop.f32.mrf.mxu0
      %8085 = vmatprep.mubr.f32.mxu0 0.0
      %8086 = vmatmul.mubr.f32.gmra.mxu0 %v7906
      %v8087 = vpop.f32.mrf.mxu0
      %v8088 = vadd.f32 %v7873, %v8087
      %v8089 = vpop.f32.mrf.mxu0
      %8090 = vmatprep.mubr.f32.mxu0 0.0
      %8091 = vmatmul.mubr.f32.gmra.mxu0 %v7909
      %v8092 = vpop.f32.mrf.mxu0
      %v8093 = vadd.f32 %v7873, %v8092
      %v8094 = vpop.f32.mrf.mxu0
      %8095 = vmatprep.mubr.f32.mxu0 0.0
      %8096 = vmatmul.mubr.f32.gmra.mxu0 %v7912
      %v8097 = vpop.f32.mrf.mxu0
      %v8098 = vadd.f32 %v7873, %v8097
      %v8099 = vpop.f32.mrf.mxu0
      %8100 = vmatprep.mubr.f32.mxu0 0.0
      %8101 = vmatmul.mubr.f32.gmra.mxu0 %v7915
      %v8102 = vpop.f32.mrf.mxu0
      %v8103 = vadd.f32 %v7873, %v8102
      %v8104 = vpop.f32.mrf.mxu0
      %8105 = vmatprep.mubr.f32.mxu0 0.0
      %8106 = vmatmul.mubr.f32.gmra.mxu0 %v7918
      %v8107 = vpop.f32.mrf.mxu0
      %v8108 = vadd.f32 %v7873, %v8107
      %v8109 = vpop.f32.mrf.mxu0
      %8110 = vmatprep.mubr.f32.mxu0 0.0
      %8111 = vmatmul.mubr.f32.gmra.mxu0 %v7921
      %v8112 = vpop.f32.mrf.mxu0
      %v8113 = vadd.f32 %v7873, %v8112
      %v8114 = vpop.f32.mrf.mxu0
      %8115 = vmatprep.mubr.f32.mxu0 0.0
      %8116 = vmatmul.mubr.f32.gmra.mxu0 %v7924
      %v8117 = vpop.f32.mrf.mxu0
      %v8118 = vadd.f32 %v7873, %v8117
      %v8119 = vpop.f32.mrf.mxu0
      %8120 = vmatprep.mubr.f32.mxu0 0.0
      %8121 = vmatmul.mubr.f32.gmra.mxu0 %v7927
      %v8122 = vpop.f32.mrf.mxu0
      %v8123 = vadd.f32 %v7873, %v8122
      %v8124 = vpop.f32.mrf.mxu0
      %8125 = vmatprep.mubr.f32.mxu0 0.0
      %8126 = vmatmul.mubr.f32.gmra.mxu0 %v7930
      %v8127 = vpop.f32.mrf.mxu0
      %v8128 = vadd.f32 %v7873, %v8127
      %v8129 = vpop.f32.mrf.mxu0
      %8130 = vmatprep.mubr.f32.mxu0 0.0
      %8131 = vmatmul.mubr.f32.gmra.mxu0 %v7933
      %v8132 = vpop.f32.mrf.mxu0
      %v8133 = vadd.f32 %v7873, %v8132
      %v8134 = vpop.f32.mrf.mxu0
      %8135 = vmatprep.mubr.f32.mxu0 0.0
      %8136 = vmatmul.mubr.f32.gmra.mxu0 %v7936
      %v8137 = vpop.f32.mrf.mxu0
      %v8138 = vadd.f32 %v7873, %v8137
      %v8139 = vpop.f32.mrf.mxu0
      %8140 = vmatprep.mubr.f32.mxu0 0.0
      %8141 = vmatmul.mubr.f32.gmra.mxu0 %v7939
      %v8142 = vpop.f32.mrf.mxu0
      %v8143 = vadd.f32 %v7873, %v8142
      %v8144 = vpop.f32.mrf.mxu0
      %8145 = vmatprep.mubr.f32.mxu0 0.0
      %8146 = vmatmul.mubr.f32.gmra.mxu0 %v7942
      %v8147 = vpop.f32.mrf.mxu0
      %v8148 = vadd.f32 %v7873, %v8147
      %v8149 = vpop.f32.mrf.mxu0
      %8150 = vmatprep.mubr.f32.mxu0 0.0
      %8151 = vmatmul.mubr.f32.gmra.mxu0 %v7945
      %v8152 = vpop.f32.mrf.mxu0
      %v8153 = vadd.f32 %v7873, %v8152
      %v8154 = vpop.f32.mrf.mxu0
      %8155 = vmatprep.mubr.f32.mxu0 0.0
      %8156 = vmatmul.mubr.f32.gmra.mxu0 %v7948
      %v8157 = vpop.f32.mrf.mxu0
      %v8158 = vadd.f32 %v7873, %v8157
      %v8159 = vpop.f32.mrf.mxu0
      %8160 = vmatprep.mubr.f32.mxu0 0.0
      %8161 = vmatmul.mubr.f32.gmra.mxu0 %v7951
      %v8162 = vpop.f32.mrf.mxu0
      %v8163 = vadd.f32 %v7873, %v8162
      %v8164 = vpop.f32.mrf.mxu0
      %8165 = vmatprep.mubr.f32.mxu0 0.0
      %8166 = vmatmul.mubr.f32.gmra.mxu0 %v7954
      %v8167 = vpop.f32.mrf.mxu0
      %v8168 = vadd.f32 %v7873, %v8167
      %v8169 = vpop.f32.mrf.mxu0
      %8170 = vmatprep.mubr.f32.mxu0 0.0
      %8171 = vmatmul.mubr.f32.gmra.mxu0 %v7957
      %v8172 = vpop.f32.mrf.mxu0
      %v8173 = vadd.f32 %v7873, %v8172
      %v8174 = vpop.f32.mrf.mxu0
      %8175 = vmatprep.mubr.f32.mxu0 0.0
      %8176 = vmatmul.mubr.f32.gmra.mxu0 %v7960
      %v8177 = vpop.f32.mrf.mxu0
      %v8178 = vadd.f32 %v7873, %v8177
      %v8179 = vpop.f32.mrf.mxu0
      %8180 = vmatprep.mubr.f32.mxu0 0.0
      %8181 = vmatmul.mubr.f32.gmra.mxu0 %v7963
      %v8182 = vpop.f32.mrf.mxu0
      %v8183 = vadd.f32 %v7873, %v8182
      %v8184 = vpop.f32.mrf.mxu0
      %8185 = vmatprep.mubr.f32.mxu0 0.0
      %8186 = vmatmul.mubr.f32.gmra.mxu0 %v7966
      %v8187 = vpop.f32.mrf.mxu0
      %v8188 = vadd.f32 %v7873, %v8187
      %v8189 = vpop.f32.mrf.mxu0
      %8190 = vmatprep.mubr.f32.mxu0 0.0
      %8191 = vmatmul.mubr.f32.gmra.mxu0 %v7969
      %v8192 = vpop.f32.mrf.mxu0
      %v8193 = vadd.f32 %v7873, %v8192
      %v8194 = vpop.f32.mrf.mxu0
      %8195 = vdwg.mxu0
      %v8196 = vld [vmem:[#allocation2] sm:$0xff]
      %v8197 = vld [vmem:[#allocation2 + $0x8] sm:$0xff]
      %v8198 = vld [vmem:[#allocation2 + $0x10] sm:$0xff]
      %v8199 = vld [vmem:[#allocation2 + $0x18] sm:$0xff]
      %v8200 = vld [vmem:[#allocation2 + $0x20] sm:$0xff]
      %v8201 = vld [vmem:[#allocation2 + $0x28] sm:$0xff]
      %v8202 = vld [vmem:[#allocation2 + $0x30] sm:$0xff]
      %v8203 = vld [vmem:[#allocation2 + $0x38] sm:$0xff]
      %v8204 = vld [vmem:[#allocation2 + $0x40] sm:$0xff]
      %v8205 = vld [vmem:[#allocation2 + $0x48] sm:$0xff]
      %v8206 = vld [vmem:[#allocation2 + $0x50] sm:$0xff]
      %v8207 = vld [vmem:[#allocation2 + $0x58] sm:$0xff]
      %v8208 = vld [vmem:[#allocation2 + $0x60] sm:$0xff]
      %v8209 = vld [vmem:[#allocation2 + $0x68] sm:$0xff]
      %v8210 = vld [vmem:[#allocation2 + $0x70] sm:$0xff]
      %v8211 = vld [vmem:[#allocation2 + $0x78] sm:$0xff]
      %v8212 = vld [vmem:[#allocation2 + $0x80] sm:$0xff]
      %v8213 = vld [vmem:[#allocation2 + $0x88] sm:$0xff]
      %v8214 = vld [vmem:[#allocation2 + $0x90] sm:$0xff]
      %v8215 = vld [vmem:[#allocation2 + $0x98] sm:$0xff]
      %v8216 = vld [vmem:[#allocation2 + $0xa0] sm:$0xff]
      %v8217 = vld [vmem:[#allocation2 + $0xa8] sm:$0xff]
      %v8218 = vld [vmem:[#allocation2 + $0xb0] sm:$0xff]
      %v8219 = vld [vmem:[#allocation2 + $0xb8] sm:$0xff]
      %v8220 = vld [vmem:[#allocation2 + $0xc0] sm:$0xff]
      %v8221 = vld [vmem:[#allocation2 + $0xc8] sm:$0xff]
      %v8222 = vld [vmem:[#allocation2 + $0xd0] sm:$0xff]
      %v8223 = vld [vmem:[#allocation2 + $0xd8] sm:$0xff]
      %v8224 = vld [vmem:[#allocation2 + $0xe0] sm:$0xff]
      %v8225 = vld [vmem:[#allocation2 + $0xe8] sm:$0xff]
      %v8226 = vld [vmem:[#allocation2 + $0xf0] sm:$0xff]
      %v8227 = vld [vmem:[#allocation2 + $0xf8] sm:$0xff]
      %v8228 = vadd.f32 %v8038, %v8196
      %v8229 = vadd.f32 %v8043, %v8197
      %v8230 = vadd.f32 %v8048, %v8198
      %v8231 = vadd.f32 %v8053, %v8199
      %v8232 = vadd.f32 %v8058, %v8200
      %v8233 = vadd.f32 %v8063, %v8201
      %v8234 = vadd.f32 %v8068, %v8202
      %v8235 = vadd.f32 %v8073, %v8203
      %v8236 = vadd.f32 %v8078, %v8204
      %v8237 = vadd.f32 %v8083, %v8205
      %v8238 = vadd.f32 %v8088, %v8206
      %v8239 = vadd.f32 %v8093, %v8207
      %v8240 = vadd.f32 %v8098, %v8208
      %v8241 = vadd.f32 %v8103, %v8209
      %v8242 = vadd.f32 %v8108, %v8210
      %v8243 = vadd.f32 %v8113, %v8211
      %v8244 = vadd.f32 %v8118, %v8212
      %v8245 = vadd.f32 %v8123, %v8213
      %v8246 = vadd.f32 %v8128, %v8214
      %v8247 = vadd.f32 %v8133, %v8215
      %v8248 = vadd.f32 %v8138, %v8216
      %v8249 = vadd.f32 %v8143, %v8217
      %v8250 = vadd.f32 %v8148, %v8218
      %v8251 = vadd.f32 %v8153, %v8219
      %v8252 = vadd.f32 %v8158, %v8220
      %v8253 = vadd.f32 %v8163, %v8221
      %v8254 = vadd.f32 %v8168, %v8222
      %v8255 = vadd.f32 %v8173, %v8223
      %v8256 = vadd.f32 %v8178, %v8224
      %v8257 = vadd.f32 %v8183, %v8225
      %v8258 = vadd.f32 %v8188, %v8226
      %v8259 = vadd.f32 %v8193, %v8227
      %s8260 = scalar_lea.vmem %s9, %s938
      %v8261 = vld [vmem:[%s8260] sm:$0xff]
      %v8262 = vld [vmem:[%s8260 + $0x8] sm:$0xff]
      %v8263 = vld [vmem:[%s8260 + $0x10] sm:$0xff]
      %v8264 = vld [vmem:[%s8260 + $0x18] sm:$0xff]
      %v8265 = vld [vmem:[%s8260 + $0x20] sm:$0xff]
      %v8266 = vld [vmem:[%s8260 + $0x28] sm:$0xff]
      %v8267 = vld [vmem:[%s8260 + $0x30] sm:$0xff]
      %v8268 = vld [vmem:[%s8260 + $0x38] sm:$0xff]
      %v8269 = vld [vmem:[%s8260 + $0x40] sm:$0xff]
      %v8270 = vld [vmem:[%s8260 + $0x48] sm:$0xff]
      %v8271 = vld [vmem:[%s8260 + $0x50] sm:$0xff]
      %v8272 = vld [vmem:[%s8260 + $0x58] sm:$0xff]
      %v8273 = vld [vmem:[%s8260 + $0x60] sm:$0xff]
      %v8274 = vld [vmem:[%s8260 + $0x68] sm:$0xff]
      %v8275 = vld [vmem:[%s8260 + $0x70] sm:$0xff]
      %v8276 = vld [vmem:[%s8260 + $0x78] sm:$0xff]
      %s8277 = scalar_lea.vmem %s10, %s938
      %v8278 = vld [vmem:[%s8277] sm:$0xff]
      %v8279 = vld [vmem:[%s8277 + $0x8] sm:$0xff]
      %v8280 = vld [vmem:[%s8277 + $0x10] sm:$0xff]
      %v8281 = vld [vmem:[%s8277 + $0x18] sm:$0xff]
      %v8282 = vld [vmem:[%s8277 + $0x20] sm:$0xff]
      %v8283 = vld [vmem:[%s8277 + $0x28] sm:$0xff]
      %v8284 = vld [vmem:[%s8277 + $0x30] sm:$0xff]
      %v8285 = vld [vmem:[%s8277 + $0x38] sm:$0xff]
      %v8286 = vld [vmem:[%s8277 + $0x40] sm:$0xff]
      %v8287 = vld [vmem:[%s8277 + $0x48] sm:$0xff]
      %v8288 = vld [vmem:[%s8277 + $0x50] sm:$0xff]
      %v8289 = vld [vmem:[%s8277 + $0x58] sm:$0xff]
      %v8290 = vld [vmem:[%s8277 + $0x60] sm:$0xff]
      %v8291 = vld [vmem:[%s8277 + $0x68] sm:$0xff]
      %v8292 = vld [vmem:[%s8277 + $0x70] sm:$0xff]
      %v8293 = vld [vmem:[%s8277 + $0x78] sm:$0xff]
      %v8294 = vsel %vm973, %v8228, 0.0
      %8295 = vadd.xlane.f32.xlu0 %v8294
      %v8296 = vpop.xlane.xlu0 %8295
      %v8297 = vsel %vm973, %v8229, 0.0
      %8298 = vadd.xlane.f32.xlu0 %v8297
      %v8299 = vpop.xlane.xlu0 %8298
      %v8300 = vsel %vm973, %v8230, 0.0
      %8301 = vadd.xlane.f32.xlu0 %v8300
      %v8302 = vpop.xlane.xlu0 %8301
      %v8303 = vsel %vm973, %v8231, 0.0
      %8304 = vadd.xlane.f32.xlu0 %v8303
      %v8305 = vpop.xlane.xlu0 %8304
      %v8306 = vsel %vm973, %v8232, 0.0
      %8307 = vadd.xlane.f32.xlu0 %v8306
      %v8308 = vpop.xlane.xlu0 %8307
      %v8309 = vsel %vm973, %v8233, 0.0
      %8310 = vadd.xlane.f32.xlu0 %v8309
      %v8311 = vpop.xlane.xlu0 %8310
      %v8312 = vsel %vm973, %v8234, 0.0
      %8313 = vadd.xlane.f32.xlu0 %v8312
      %v8314 = vpop.xlane.xlu0 %8313
      %v8315 = vsel %vm973, %v8235, 0.0
      %8316 = vadd.xlane.f32.xlu0 %v8315
      %v8317 = vpop.xlane.xlu0 %8316
      %v8318 = vsel %vm973, %v8236, 0.0
      %8319 = vadd.xlane.f32.xlu0 %v8318
      %v8320 = vpop.xlane.xlu0 %8319
      %v8321 = vsel %vm973, %v8237, 0.0
      %8322 = vadd.xlane.f32.xlu0 %v8321
      %v8323 = vpop.xlane.xlu0 %8322
      %v8324 = vsel %vm973, %v8238, 0.0
      %8325 = vadd.xlane.f32.xlu0 %v8324
      %v8326 = vpop.xlane.xlu0 %8325
      %v8327 = vsel %vm973, %v8239, 0.0
      %8328 = vadd.xlane.f32.xlu0 %v8327
      %v8329 = vpop.xlane.xlu0 %8328
      %v8330 = vsel %vm973, %v8240, 0.0
      %8331 = vadd.xlane.f32.xlu0 %v8330
      %v8332 = vpop.xlane.xlu0 %8331
      %v8333 = vsel %vm973, %v8241, 0.0
      %8334 = vadd.xlane.f32.xlu0 %v8333
      %v8335 = vpop.xlane.xlu0 %8334
      %v8336 = vsel %vm973, %v8242, 0.0
      %8337 = vadd.xlane.f32.xlu0 %v8336
      %v8338 = vpop.xlane.xlu0 %8337
      %v8339 = vsel %vm973, %v8243, 0.0
      %8340 = vadd.xlane.f32.xlu0 %v8339
      %v8341 = vpop.xlane.xlu0 %8340
      %v8342 = vsel %vm973, %v8244, 0.0
      %8343 = vadd.xlane.f32.xlu0 %v8342
      %v8344 = vpop.xlane.xlu0 %8343
      %v8345 = vsel %vm973, %v8245, 0.0
      %8346 = vadd.xlane.f32.xlu0 %v8345
      %v8347 = vpop.xlane.xlu0 %8346
      %v8348 = vsel %vm973, %v8246, 0.0
      %8349 = vadd.xlane.f32.xlu0 %v8348
      %v8350 = vpop.xlane.xlu0 %8349
      %v8351 = vsel %vm973, %v8247, 0.0
      %8352 = vadd.xlane.f32.xlu0 %v8351
      %v8353 = vpop.xlane.xlu0 %8352
      %v8354 = vsel %vm973, %v8248, 0.0
      %8355 = vadd.xlane.f32.xlu0 %v8354
      %v8356 = vpop.xlane.xlu0 %8355
      %v8357 = vsel %vm973, %v8249, 0.0
      %8358 = vadd.xlane.f32.xlu0 %v8357
      %v8359 = vpop.xlane.xlu0 %8358
      %v8360 = vsel %vm973, %v8250, 0.0
      %8361 = vadd.xlane.f32.xlu0 %v8360
      %v8362 = vpop.xlane.xlu0 %8361
      %v8363 = vsel %vm973, %v8251, 0.0
      %8364 = vadd.xlane.f32.xlu0 %v8363
      %v8365 = vpop.xlane.xlu0 %8364
      %v8366 = vsel %vm973, %v8252, 0.0
      %8367 = vadd.xlane.f32.xlu0 %v8366
      %v8368 = vpop.xlane.xlu0 %8367
      %v8369 = vsel %vm973, %v8253, 0.0
      %8370 = vadd.xlane.f32.xlu0 %v8369
      %v8371 = vpop.xlane.xlu0 %8370
      %v8372 = vsel %vm973, %v8254, 0.0
      %8373 = vadd.xlane.f32.xlu0 %v8372
      %v8374 = vpop.xlane.xlu0 %8373
      %v8375 = vsel %vm973, %v8255, 0.0
      %8376 = vadd.xlane.f32.xlu0 %v8375
      %v8377 = vpop.xlane.xlu0 %8376
      %v8378 = vsel %vm973, %v8256, 0.0
      %8379 = vadd.xlane.f32.xlu0 %v8378
      %v8380 = vpop.xlane.xlu0 %8379
      %v8381 = vsel %vm973, %v8257, 0.0
      %8382 = vadd.xlane.f32.xlu0 %v8381
      %v8383 = vpop.xlane.xlu0 %8382
      %v8384 = vsel %vm973, %v8258, 0.0
      %8385 = vadd.xlane.f32.xlu0 %v8384
      %v8386 = vpop.xlane.xlu0 %8385
      %v8387 = vsel %vm973, %v8259, 0.0
      %8388 = vadd.xlane.f32.xlu0 %v8387
      %v8389 = vpop.xlane.xlu0 %8388
      %v8390 = vmul.f32 %v8296, %v1070
      %v8391 = vmul.f32 %v8299, %v1070
      %v8392 = vmul.f32 %v8302, %v1070
      %v8393 = vmul.f32 %v8305, %v1070
      %v8394 = vmul.f32 %v8308, %v1070
      %v8395 = vmul.f32 %v8311, %v1070
      %v8396 = vmul.f32 %v8314, %v1070
      %v8397 = vmul.f32 %v8317, %v1070
      %v8398 = vmul.f32 %v8320, %v1070
      %v8399 = vmul.f32 %v8323, %v1070
      %v8400 = vmul.f32 %v8326, %v1070
      %v8401 = vmul.f32 %v8329, %v1070
      %v8402 = vmul.f32 %v8332, %v1070
      %v8403 = vmul.f32 %v8335, %v1070
      %v8404 = vmul.f32 %v8338, %v1070
      %v8405 = vmul.f32 %v8341, %v1070
      %v8406 = vmul.f32 %v8344, %v1070
      %v8407 = vmul.f32 %v8347, %v1070
      %v8408 = vmul.f32 %v8350, %v1070
      %v8409 = vmul.f32 %v8353, %v1070
      %v8410 = vmul.f32 %v8356, %v1070
      %v8411 = vmul.f32 %v8359, %v1070
      %v8412 = vmul.f32 %v8362, %v1070
      %v8413 = vmul.f32 %v8365, %v1070
      %v8414 = vmul.f32 %v8368, %v1070
      %v8415 = vmul.f32 %v8371, %v1070
      %v8416 = vmul.f32 %v8374, %v1070
      %v8417 = vmul.f32 %v8377, %v1070
      %v8418 = vmul.f32 %v8380, %v1070
      %v8419 = vmul.f32 %v8383, %v1070
      %v8420 = vmul.f32 %v8386, %v1070
      %v8421 = vmul.f32 %v8389, %v1070
      %v8422 = vadd.f32 %v8390, %v8391
      %v8423 = vadd.f32 %v8422, %v8392
      %v8424 = vadd.f32 %v8423, %v8393
      %v8425 = vadd.f32 %v8424, %v8394
      %v8426 = vadd.f32 %v8425, %v8395
      %v8427 = vadd.f32 %v8426, %v8396
      %v8428 = vadd.f32 %v8427, %v8397
      %v8429 = vadd.f32 %v8428, %v8398
      %v8430 = vadd.f32 %v8429, %v8399
      %v8431 = vadd.f32 %v8430, %v8400
      %v8432 = vadd.f32 %v8431, %v8401
      %v8433 = vadd.f32 %v8432, %v8402
      %v8434 = vadd.f32 %v8433, %v8403
      %v8435 = vadd.f32 %v8434, %v8404
      %v8436 = vadd.f32 %v8435, %v8405
      %v8437 = vrot.slane %v8436, 4
      %v8438 = vadd.f32 %v8436, %v8437
      %v8439 = vrot.slane %v8438, 2
      %v8440 = vadd.f32 %v8438, %v8439
      %v8441 = vrot.slane %v8440, 1
      %v8442 = vadd.f32 %v8440, %v8441
      %v8443 = vadd.f32 %v8406, %v8407
      %v8444 = vadd.f32 %v8443, %v8408
      %v8445 = vadd.f32 %v8444, %v8409
      %v8446 = vadd.f32 %v8445, %v8410
      %v8447 = vadd.f32 %v8446, %v8411
      %v8448 = vadd.f32 %v8447, %v8412
      %v8449 = vadd.f32 %v8448, %v8413
      %v8450 = vadd.f32 %v8449, %v8414
      %v8451 = vadd.f32 %v8450, %v8415
      %v8452 = vadd.f32 %v8451, %v8416
      %v8453 = vadd.f32 %v8452, %v8417
      %v8454 = vadd.f32 %v8453, %v8418
      %v8455 = vadd.f32 %v8454, %v8419
      %v8456 = vadd.f32 %v8455, %v8420
      %v8457 = vadd.f32 %v8456, %v8421
      %v8458 = vrot.slane %v8457, 4
      %v8459 = vadd.f32 %v8457, %v8458
      %v8460 = vrot.slane %v8459, 2
      %v8461 = vadd.f32 %v8459, %v8460
      %v8462 = vrot.slane %v8461, 1
      %v8463 = vadd.f32 %v8461, %v8462
      %v8464 = vmul.f32 %v8442, %v1145
      %v8465 = vmul.f32 %v8463, %v1145
      %v8466 = vsub.f32 %v8228, %v8464
      %v8467 = vsub.f32 %v8229, %v8464
      %v8468 = vsub.f32 %v8230, %v8464
      %v8469 = vsub.f32 %v8231, %v8464
      %v8470 = vsub.f32 %v8232, %v8464
      %v8471 = vsub.f32 %v8233, %v8464
      %v8472 = vsub.f32 %v8234, %v8464
      %v8473 = vsub.f32 %v8235, %v8464
      %v8474 = vsub.f32 %v8236, %v8464
      %v8475 = vsub.f32 %v8237, %v8464
      %v8476 = vsub.f32 %v8238, %v8464
      %v8477 = vsub.f32 %v8239, %v8464
      %v8478 = vsub.f32 %v8240, %v8464
      %v8479 = vsub.f32 %v8241, %v8464
      %v8480 = vsub.f32 %v8242, %v8464
      %v8481 = vsub.f32 %v8243, %v8464
      %v8482 = vsub.f32 %v8244, %v8465
      %v8483 = vsub.f32 %v8245, %v8465
      %v8484 = vsub.f32 %v8246, %v8465
      %v8485 = vsub.f32 %v8247, %v8465
      %v8486 = vsub.f32 %v8248, %v8465
      %v8487 = vsub.f32 %v8249, %v8465
      %v8488 = vsub.f32 %v8250, %v8465
      %v8489 = vsub.f32 %v8251, %v8465
      %v8490 = vsub.f32 %v8252, %v8465
      %v8491 = vsub.f32 %v8253, %v8465
      %v8492 = vsub.f32 %v8254, %v8465
      %v8493 = vsub.f32 %v8255, %v8465
      %v8494 = vsub.f32 %v8256, %v8465
      %v8495 = vsub.f32 %v8257, %v8465
      %v8496 = vsub.f32 %v8258, %v8465
      %v8497 = vsub.f32 %v8259, %v8465
      %v8498 = vmul.f32 %v8466, %v8466
      %v8499 = vmul.f32 %v8467, %v8467
      %v8500 = vmul.f32 %v8468, %v8468
      %v8501 = vmul.f32 %v8469, %v8469
      %v8502 = vmul.f32 %v8470, %v8470
      %v8503 = vmul.f32 %v8471, %v8471
      %v8504 = vmul.f32 %v8472, %v8472
      %v8505 = vmul.f32 %v8473, %v8473
      %v8506 = vmul.f32 %v8474, %v8474
      %v8507 = vmul.f32 %v8475, %v8475
      %v8508 = vmul.f32 %v8476, %v8476
      %v8509 = vmul.f32 %v8477, %v8477
      %v8510 = vmul.f32 %v8478, %v8478
      %v8511 = vmul.f32 %v8479, %v8479
      %v8512 = vmul.f32 %v8480, %v8480
      %v8513 = vmul.f32 %v8481, %v8481
      %v8514 = vmul.f32 %v8482, %v8482
      %v8515 = vmul.f32 %v8483, %v8483
      %v8516 = vmul.f32 %v8484, %v8484
      %v8517 = vmul.f32 %v8485, %v8485
      %v8518 = vmul.f32 %v8486, %v8486
      %v8519 = vmul.f32 %v8487, %v8487
      %v8520 = vmul.f32 %v8488, %v8488
      %v8521 = vmul.f32 %v8489, %v8489
      %v8522 = vmul.f32 %v8490, %v8490
      %v8523 = vmul.f32 %v8491, %v8491
      %v8524 = vmul.f32 %v8492, %v8492
      %v8525 = vmul.f32 %v8493, %v8493
      %v8526 = vmul.f32 %v8494, %v8494
      %v8527 = vmul.f32 %v8495, %v8495
      %v8528 = vmul.f32 %v8496, %v8496
      %v8529 = vmul.f32 %v8497, %v8497
      %v8530 = vsel %vm973, %v8498, 0.0
      %8531 = vadd.xlane.f32.xlu0 %v8530
      %v8532 = vpop.xlane.xlu0 %8531
      %v8533 = vsel %vm973, %v8499, 0.0
      %8534 = vadd.xlane.f32.xlu0 %v8533
      %v8535 = vpop.xlane.xlu0 %8534
      %v8536 = vsel %vm973, %v8500, 0.0
      %8537 = vadd.xlane.f32.xlu0 %v8536
      %v8538 = vpop.xlane.xlu0 %8537
      %v8539 = vsel %vm973, %v8501, 0.0
      %8540 = vadd.xlane.f32.xlu0 %v8539
      %v8541 = vpop.xlane.xlu0 %8540
      %v8542 = vsel %vm973, %v8502, 0.0
      %8543 = vadd.xlane.f32.xlu0 %v8542
      %v8544 = vpop.xlane.xlu0 %8543
      %v8545 = vsel %vm973, %v8503, 0.0
      %8546 = vadd.xlane.f32.xlu0 %v8545
      %v8547 = vpop.xlane.xlu0 %8546
      %v8548 = vsel %vm973, %v8504, 0.0
      %8549 = vadd.xlane.f32.xlu0 %v8548
      %v8550 = vpop.xlane.xlu0 %8549
      %v8551 = vsel %vm973, %v8505, 0.0
      %8552 = vadd.xlane.f32.xlu0 %v8551
      %v8553 = vpop.xlane.xlu0 %8552
      %v8554 = vsel %vm973, %v8506, 0.0
      %8555 = vadd.xlane.f32.xlu0 %v8554
      %v8556 = vpop.xlane.xlu0 %8555
      %v8557 = vsel %vm973, %v8507, 0.0
      %8558 = vadd.xlane.f32.xlu0 %v8557
      %v8559 = vpop.xlane.xlu0 %8558
      %v8560 = vsel %vm973, %v8508, 0.0
      %8561 = vadd.xlane.f32.xlu0 %v8560
      %v8562 = vpop.xlane.xlu0 %8561
      %v8563 = vsel %vm973, %v8509, 0.0
      %8564 = vadd.xlane.f32.xlu0 %v8563
      %v8565 = vpop.xlane.xlu0 %8564
      %v8566 = vsel %vm973, %v8510, 0.0
      %8567 = vadd.xlane.f32.xlu0 %v8566
      %v8568 = vpop.xlane.xlu0 %8567
      %v8569 = vsel %vm973, %v8511, 0.0
      %8570 = vadd.xlane.f32.xlu0 %v8569
      %v8571 = vpop.xlane.xlu0 %8570
      %v8572 = vsel %vm973, %v8512, 0.0
      %8573 = vadd.xlane.f32.xlu0 %v8572
      %v8574 = vpop.xlane.xlu0 %8573
      %v8575 = vsel %vm973, %v8513, 0.0
      %8576 = vadd.xlane.f32.xlu0 %v8575
      %v8577 = vpop.xlane.xlu0 %8576
      %v8578 = vsel %vm973, %v8514, 0.0
      %8579 = vadd.xlane.f32.xlu0 %v8578
      %v8580 = vpop.xlane.xlu0 %8579
      %v8581 = vsel %vm973, %v8515, 0.0
      %8582 = vadd.xlane.f32.xlu0 %v8581
      %v8583 = vpop.xlane.xlu0 %8582
      %v8584 = vsel %vm973, %v8516, 0.0
      %8585 = vadd.xlane.f32.xlu0 %v8584
      %v8586 = vpop.xlane.xlu0 %8585
      %v8587 = vsel %vm973, %v8517, 0.0
      %8588 = vadd.xlane.f32.xlu0 %v8587
      %v8589 = vpop.xlane.xlu0 %8588
      %v8590 = vsel %vm973, %v8518, 0.0
      %8591 = vadd.xlane.f32.xlu0 %v8590
      %v8592 = vpop.xlane.xlu0 %8591
      %v8593 = vsel %vm973, %v8519, 0.0
      %8594 = vadd.xlane.f32.xlu0 %v8593
      %v8595 = vpop.xlane.xlu0 %8594
      %v8596 = vsel %vm973, %v8520, 0.0
      %8597 = vadd.xlane.f32.xlu0 %v8596
      %v8598 = vpop.xlane.xlu0 %8597
      %v8599 = vsel %vm973, %v8521, 0.0
      %8600 = vadd.xlane.f32.xlu0 %v8599
      %v8601 = vpop.xlane.xlu0 %8600
      %v8602 = vsel %vm973, %v8522, 0.0
      %8603 = vadd.xlane.f32.xlu0 %v8602
      %v8604 = vpop.xlane.xlu0 %8603
      %v8605 = vsel %vm973, %v8523, 0.0
      %8606 = vadd.xlane.f32.xlu0 %v8605
      %v8607 = vpop.xlane.xlu0 %8606
      %v8608 = vsel %vm973, %v8524, 0.0
      %8609 = vadd.xlane.f32.xlu0 %v8608
      %v8610 = vpop.xlane.xlu0 %8609
      %v8611 = vsel %vm973, %v8525, 0.0
      %8612 = vadd.xlane.f32.xlu0 %v8611
      %v8613 = vpop.xlane.xlu0 %8612
      %v8614 = vsel %vm973, %v8526, 0.0
      %8615 = vadd.xlane.f32.xlu0 %v8614
      %v8616 = vpop.xlane.xlu0 %8615
      %v8617 = vsel %vm973, %v8527, 0.0
      %8618 = vadd.xlane.f32.xlu0 %v8617
      %v8619 = vpop.xlane.xlu0 %8618
      %v8620 = vsel %vm973, %v8528, 0.0
      %8621 = vadd.xlane.f32.xlu0 %v8620
      %v8622 = vpop.xlane.xlu0 %8621
      %v8623 = vsel %vm973, %v8529, 0.0
      %8624 = vadd.xlane.f32.xlu0 %v8623
      %v8625 = vpop.xlane.xlu0 %8624
      %v8626 = vmul.f32 %v8532, %v1070
      %v8627 = vmul.f32 %v8535, %v1070
      %v8628 = vmul.f32 %v8538, %v1070
      %v8629 = vmul.f32 %v8541, %v1070
      %v8630 = vmul.f32 %v8544, %v1070
      %v8631 = vmul.f32 %v8547, %v1070
      %v8632 = vmul.f32 %v8550, %v1070
      %v8633 = vmul.f32 %v8553, %v1070
      %v8634 = vmul.f32 %v8556, %v1070
      %v8635 = vmul.f32 %v8559, %v1070
      %v8636 = vmul.f32 %v8562, %v1070
      %v8637 = vmul.f32 %v8565, %v1070
      %v8638 = vmul.f32 %v8568, %v1070
      %v8639 = vmul.f32 %v8571, %v1070
      %v8640 = vmul.f32 %v8574, %v1070
      %v8641 = vmul.f32 %v8577, %v1070
      %v8642 = vmul.f32 %v8580, %v1070
      %v8643 = vmul.f32 %v8583, %v1070
      %v8644 = vmul.f32 %v8586, %v1070
      %v8645 = vmul.f32 %v8589, %v1070
      %v8646 = vmul.f32 %v8592, %v1070
      %v8647 = vmul.f32 %v8595, %v1070
      %v8648 = vmul.f32 %v8598, %v1070
      %v8649 = vmul.f32 %v8601, %v1070
      %v8650 = vmul.f32 %v8604, %v1070
      %v8651 = vmul.f32 %v8607, %v1070
      %v8652 = vmul.f32 %v8610, %v1070
      %v8653 = vmul.f32 %v8613, %v1070
      %v8654 = vmul.f32 %v8616, %v1070
      %v8655 = vmul.f32 %v8619, %v1070
      %v8656 = vmul.f32 %v8622, %v1070
      %v8657 = vmul.f32 %v8625, %v1070
      %v8658 = vadd.f32 %v8626, %v8627
      %v8659 = vadd.f32 %v8658, %v8628
      %v8660 = vadd.f32 %v8659, %v8629
      %v8661 = vadd.f32 %v8660, %v8630
      %v8662 = vadd.f32 %v8661, %v8631
      %v8663 = vadd.f32 %v8662, %v8632
      %v8664 = vadd.f32 %v8663, %v8633
      %v8665 = vadd.f32 %v8664, %v8634
      %v8666 = vadd.f32 %v8665, %v8635
      %v8667 = vadd.f32 %v8666, %v8636
      %v8668 = vadd.f32 %v8667, %v8637
      %v8669 = vadd.f32 %v8668, %v8638
      %v8670 = vadd.f32 %v8669, %v8639
      %v8671 = vadd.f32 %v8670, %v8640
      %v8672 = vadd.f32 %v8671, %v8641
      %v8673 = vrot.slane %v8672, 4
      %v8674 = vadd.f32 %v8672, %v8673
      %v8675 = vrot.slane %v8674, 2
      %v8676 = vadd.f32 %v8674, %v8675
      %v8677 = vrot.slane %v8676, 1
      %v8678 = vadd.f32 %v8676, %v8677
      %v8679 = vadd.f32 %v8642, %v8643
      %v8680 = vadd.f32 %v8679, %v8644
      %v8681 = vadd.f32 %v8680, %v8645
      %v8682 = vadd.f32 %v8681, %v8646
      %v8683 = vadd.f32 %v8682, %v8647
      %v8684 = vadd.f32 %v8683, %v8648
      %v8685 = vadd.f32 %v8684, %v8649
      %v8686 = vadd.f32 %v8685, %v8650
      %v8687 = vadd.f32 %v8686, %v8651
      %v8688 = vadd.f32 %v8687, %v8652
      %v8689 = vadd.f32 %v8688, %v8653
      %v8690 = vadd.f32 %v8689, %v8654
      %v8691 = vadd.f32 %v8690, %v8655
      %v8692 = vadd.f32 %v8691, %v8656
      %v8693 = vadd.f32 %v8692, %v8657
      %v8694 = vrot.slane %v8693, 4
      %v8695 = vadd.f32 %v8693, %v8694
      %v8696 = vrot.slane %v8695, 2
      %v8697 = vadd.f32 %v8695, %v8696
      %v8698 = vrot.slane %v8697, 1
      %v8699 = vadd.f32 %v8697, %v8698
      %v8700 = vmul.f32 %v8678, %v1145
      %v8701 = vmul.f32 %v8699, %v1145
      %v8702 = vadd.f32 %v8700, 1e-06
      %v8703 = vadd.f32 %v8701, 1e-06
      %v8704 = vrsqrt.pop %v8702
      %v8705 = vrsqrt.pop %v8703
      %v8706 = vmul.f32 %v8466, %v8704
      %v8707 = vmul.f32 %v8467, %v8704
      %v8708 = vmul.f32 %v8468, %v8704
      %v8709 = vmul.f32 %v8469, %v8704
      %v8710 = vmul.f32 %v8470, %v8704
      %v8711 = vmul.f32 %v8471, %v8704
      %v8712 = vmul.f32 %v8472, %v8704
      %v8713 = vmul.f32 %v8473, %v8704
      %v8714 = vmul.f32 %v8474, %v8704
      %v8715 = vmul.f32 %v8475, %v8704
      %v8716 = vmul.f32 %v8476, %v8704
      %v8717 = vmul.f32 %v8477, %v8704
      %v8718 = vmul.f32 %v8478, %v8704
      %v8719 = vmul.f32 %v8479, %v8704
      %v8720 = vmul.f32 %v8480, %v8704
      %v8721 = vmul.f32 %v8481, %v8704
      %v8722 = vmul.f32 %v8482, %v8705
      %v8723 = vmul.f32 %v8483, %v8705
      %v8724 = vmul.f32 %v8484, %v8705
      %v8725 = vmul.f32 %v8485, %v8705
      %v8726 = vmul.f32 %v8486, %v8705
      %v8727 = vmul.f32 %v8487, %v8705
      %v8728 = vmul.f32 %v8488, %v8705
      %v8729 = vmul.f32 %v8489, %v8705
      %v8730 = vmul.f32 %v8490, %v8705
      %v8731 = vmul.f32 %v8491, %v8705
      %v8732 = vmul.f32 %v8492, %v8705
      %v8733 = vmul.f32 %v8493, %v8705
      %v8734 = vmul.f32 %v8494, %v8705
      %v8735 = vmul.f32 %v8495, %v8705
      %v8736 = vmul.f32 %v8496, %v8705
      %v8737 = vmul.f32 %v8497, %v8705
      %v8738 = vmul.f32 %v8706, %v8261
      %v8739 = vmul.f32 %v8707, %v8262
      %v8740 = vmul.f32 %v8708, %v8263
      %v8741 = vmul.f32 %v8709, %v8264
      %v8742 = vmul.f32 %v8710, %v8265
      %v8743 = vmul.f32 %v8711, %v8266
      %v8744 = vmul.f32 %v8712, %v8267
      %v8745 = vmul.f32 %v8713, %v8268
      %v8746 = vmul.f32 %v8714, %v8269
      %v8747 = vmul.f32 %v8715, %v8270
      %v8748 = vmul.f32 %v8716, %v8271
      %v8749 = vmul.f32 %v8717, %v8272
      %v8750 = vmul.f32 %v8718, %v8273
      %v8751 = vmul.f32 %v8719, %v8274
      %v8752 = vmul.f32 %v8720, %v8275
      %v8753 = vmul.f32 %v8721, %v8276
      %v8754 = vmul.f32 %v8722, %v8261
      %v8755 = vmul.f32 %v8723, %v8262
      %v8756 = vmul.f32 %v8724, %v8263
      %v8757 = vmul.f32 %v8725, %v8264
      %v8758 = vmul.f32 %v8726, %v8265
      %v8759 = vmul.f32 %v8727, %v8266
      %v8760 = vmul.f32 %v8728, %v8267
      %v8761 = vmul.f32 %v8729, %v8268
      %v8762 = vmul.f32 %v8730, %v8269
      %v8763 = vmul.f32 %v8731, %v8270
      %v8764 = vmul.f32 %v8732, %v8271
      %v8765 = vmul.f32 %v8733, %v8272
      %v8766 = vmul.f32 %v8734, %v8273
      %v8767 = vmul.f32 %v8735, %v8274
      %v8768 = vmul.f32 %v8736, %v8275
      %v8769 = vmul.f32 %v8737, %v8276
      %v8770 = vadd.f32 %v8738, %v8278
      %v8771 = vadd.f32 %v8739, %v8279
      %v8772 = vadd.f32 %v8740, %v8280
      %v8773 = vadd.f32 %v8741, %v8281
      %v8774 = vadd.f32 %v8742, %v8282
      %v8775 = vadd.f32 %v8743, %v8283
      %v8776 = vadd.f32 %v8744, %v8284
      %v8777 = vadd.f32 %v8745, %v8285
      %v8778 = vadd.f32 %v8746, %v8286
      %v8779 = vadd.f32 %v8747, %v8287
      %v8780 = vadd.f32 %v8748, %v8288
      %v8781 = vadd.f32 %v8749, %v8289
      %v8782 = vadd.f32 %v8750, %v8290
      %v8783 = vadd.f32 %v8751, %v8291
      %v8784 = vadd.f32 %v8752, %v8292
      %v8785 = vadd.f32 %v8753, %v8293
      %v8786 = vadd.f32 %v8754, %v8278
      %v8787 = vadd.f32 %v8755, %v8279
      %v8788 = vadd.f32 %v8756, %v8280
      %v8789 = vadd.f32 %v8757, %v8281
      %v8790 = vadd.f32 %v8758, %v8282
      %v8791 = vadd.f32 %v8759, %v8283
      %v8792 = vadd.f32 %v8760, %v8284
      %v8793 = vadd.f32 %v8761, %v8285
      %v8794 = vadd.f32 %v8762, %v8286
      %v8795 = vadd.f32 %v8763, %v8287
      %v8796 = vadd.f32 %v8764, %v8288
      %v8797 = vadd.f32 %v8765, %v8289
      %v8798 = vadd.f32 %v8766, %v8290
      %v8799 = vadd.f32 %v8767, %v8291
      %v8800 = vadd.f32 %v8768, %v8292
      %v8801 = vadd.f32 %v8769, %v8293
      %8802 = vst.msk [vmem:[#allocation2] sm:$0xff] %vm973, %v8228
      %8803 = vst.msk [vmem:[#allocation2 + $0x8] sm:$0xff] %vm973, %v8229
      %8804 = vst.msk [vmem:[#allocation2 + $0x10] sm:$0xff] %vm973, %v8230
      %8805 = vst.msk [vmem:[#allocation2 + $0x18] sm:$0xff] %vm973, %v8231
      %8806 = vst.msk [vmem:[#allocation2 + $0x20] sm:$0xff] %vm973, %v8232
      %8807 = vst.msk [vmem:[#allocation2 + $0x28] sm:$0xff] %vm973, %v8233
      %8808 = vst.msk [vmem:[#allocation2 + $0x30] sm:$0xff] %vm973, %v8234
      %8809 = vst.msk [vmem:[#allocation2 + $0x38] sm:$0xff] %vm973, %v8235
      %8810 = vst.msk [vmem:[#allocation2 + $0x40] sm:$0xff] %vm973, %v8236
      %8811 = vst.msk [vmem:[#allocation2 + $0x48] sm:$0xff] %vm973, %v8237
      %8812 = vst.msk [vmem:[#allocation2 + $0x50] sm:$0xff] %vm973, %v8238
      %8813 = vst.msk [vmem:[#allocation2 + $0x58] sm:$0xff] %vm973, %v8239
      %8814 = vst.msk [vmem:[#allocation2 + $0x60] sm:$0xff] %vm973, %v8240
      %8815 = vst.msk [vmem:[#allocation2 + $0x68] sm:$0xff] %vm973, %v8241
      %8816 = vst.msk [vmem:[#allocation2 + $0x70] sm:$0xff] %vm973, %v8242
      %8817 = vst.msk [vmem:[#allocation2 + $0x78] sm:$0xff] %vm973, %v8243
      %8818 = vst.msk [vmem:[#allocation2 + $0x80] sm:$0xff] %vm973, %v8244
      %8819 = vst.msk [vmem:[#allocation2 + $0x88] sm:$0xff] %vm973, %v8245
      %8820 = vst.msk [vmem:[#allocation2 + $0x90] sm:$0xff] %vm973, %v8246
      %8821 = vst.msk [vmem:[#allocation2 + $0x98] sm:$0xff] %vm973, %v8247
      %8822 = vst.msk [vmem:[#allocation2 + $0xa0] sm:$0xff] %vm973, %v8248
      %8823 = vst.msk [vmem:[#allocation2 + $0xa8] sm:$0xff] %vm973, %v8249
      %8824 = vst.msk [vmem:[#allocation2 + $0xb0] sm:$0xff] %vm973, %v8250
      %8825 = vst.msk [vmem:[#allocation2 + $0xb8] sm:$0xff] %vm973, %v8251
      %8826 = vst.msk [vmem:[#allocation2 + $0xc0] sm:$0xff] %vm973, %v8252
      %8827 = vst.msk [vmem:[#allocation2 + $0xc8] sm:$0xff] %vm973, %v8253
      %8828 = vst.msk [vmem:[#allocation2 + $0xd0] sm:$0xff] %vm973, %v8254
      %8829 = vst.msk [vmem:[#allocation2 + $0xd8] sm:$0xff] %vm973, %v8255
      %8830 = vst.msk [vmem:[#allocation2 + $0xe0] sm:$0xff] %vm973, %v8256
      %8831 = vst.msk [vmem:[#allocation2 + $0xe8] sm:$0xff] %vm973, %v8257
      %8832 = vst.msk [vmem:[#allocation2 + $0xf0] sm:$0xff] %vm973, %v8258
      %8833 = vst.msk [vmem:[#allocation2 + $0xf8] sm:$0xff] %vm973, %v8259
      %s8834 = scalar_lea.vmem %s11, %s7857
      %v8835 = vld [vmem:[%s8834] sm:$0xff]
      %v8836 = vld [vmem:[%s8834 + $0x8] sm:$0xff]
      %v8837 = vld [vmem:[%s8834 + $0x10] sm:$0xff]
      %v8838 = vld [vmem:[%s8834 + $0x18] sm:$0xff]
      %v8839 = vld [vmem:[%s8834 + $0x20] sm:$0xff]
      %v8840 = vld [vmem:[%s8834 + $0x28] sm:$0xff]
      %v8841 = vld [vmem:[%s8834 + $0x30] sm:$0xff]
      %v8842 = vld [vmem:[%s8834 + $0x38] sm:$0xff]
      %s8843 = scalar_lea.vmem %s12, %s35
      %v8844 = vld [vmem:[%s8843] sm:$0x1]
      %v8846 = vlaneseq
      %v8847 = vshrl.u32 %v8846, 7
      %v8848 = vsub.s32 0, %v8847
      %v8849 = vrot.slane %v8844, %v8848
      %v8852 = vsel %vm973, %v8770, 0
      %v8855 = vsel %vm973, %v8771, 0
      %v8858 = vsel %vm973, %v8772, 0
      %v8861 = vsel %vm973, %v8773, 0
      %v8864 = vsel %vm973, %v8774, 0
      %v8867 = vsel %vm973, %v8775, 0
      %v8870 = vsel %vm973, %v8776, 0
      %v8873 = vsel %vm973, %v8777, 0
      %v8876 = vsel %vm973, %v8778, 0
      %v8879 = vsel %vm973, %v8779, 0
      %v8882 = vsel %vm973, %v8780, 0
      %v8885 = vsel %vm973, %v8781, 0
      %v8888 = vsel %vm973, %v8782, 0
      %v8891 = vsel %vm973, %v8783, 0
      %v8894 = vsel %vm973, %v8784, 0
      %v8897 = vsel %vm973, %v8785, 0
      %v8900 = vsel %vm973, %v8786, 0
      %v8903 = vsel %vm973, %v8787, 0
      %v8906 = vsel %vm973, %v8788, 0
      %v8909 = vsel %vm973, %v8789, 0
      %v8912 = vsel %vm973, %v8790, 0
      %v8915 = vsel %vm973, %v8791, 0
      %v8918 = vsel %vm973, %v8792, 0
      %v8921 = vsel %vm973, %v8793, 0
      %v8924 = vsel %vm973, %v8794, 0
      %v8927 = vsel %vm973, %v8795, 0
      %v8930 = vsel %vm973, %v8796, 0
      %v8933 = vsel %vm973, %v8797, 0
      %v8936 = vsel %vm973, %v8798, 0
      %v8939 = vsel %vm973, %v8799, 0
      %v8942 = vsel %vm973, %v8800, 0
      %v8945 = vsel %vm973, %v8801, 0
      %8947 = vmatprep.subr.mxu0 0.0
      %8948 = vmatpush1.msra.mxu0 0.0
      %8949 = vmatprep.subr.mxu0 0.0
      %8950 = vmatpush1.msra.mxu0 0.0
      %8951 = vmatprep.subr.mxu0 0.0
      %8952 = vmatpush1.msra.mxu0 0.0
      %8953 = vmatprep.subr.mxu0 0.0
      %8954 = vmatpush1.msra.mxu0 0.0
      %8955 = vmatprep.subr.mxu0 0.0
      %8956 = vmatpush1.msra.mxu0 0.0
      %8957 = vmatprep.subr.mxu0 0.0
      %8958 = vmatpush1.msra.mxu0 0.0
      %8959 = vmatprep.subr.mxu0 0.0
      %8960 = vmatpush1.msra.mxu0 0.0
      %8961 = vmatprep.subr.mxu0 0.0
      %8962 = vmatpush1.msra.mxu0 0.0
      %8963 = vmatprep.subr.mxu0 0.0
      %8964 = vmatpush1.msra.mxu0 %v8842
      %8965 = vmatprep.subr.mxu0 0.0
      %8966 = vmatpush1.msra.mxu0 %v8841
      %8967 = vmatprep.subr.mxu0 0.0
      %8968 = vmatpush1.msra.mxu0 %v8840
      %8969 = vmatprep.subr.mxu0 0.0
      %8970 = vmatpush1.msra.mxu0 %v8839
      %8971 = vmatprep.subr.mxu0 0.0
      %8972 = vmatpush1.msra.mxu0 %v8838
      %8973 = vmatprep.subr.mxu0 0.0
      %8974 = vmatpush1.msra.mxu0 %v8837
      %8975 = vmatprep.subr.mxu0 0.0
      %8976 = vmatpush1.msra.mxu0 %v8836
      %8977 = vmatprep.subr.mxu0 0.0
      %8978 = vmatpush1.msra.mxu0 %v8835
      %8979 = vmatprep.subr.mxu0 0.0
      %8980 = vmatpush2.msra.mxu0 0.0
      %8981 = vmatprep.subr.mxu0 0.0
      %8982 = vmatpush2.msra.mxu0 0.0
      %8983 = vmatprep.subr.mxu0 0.0
      %8984 = vmatpush2.msra.mxu0 0.0
      %8985 = vmatprep.subr.mxu0 0.0
      %8986 = vmatpush2.msra.mxu0 0.0
      %8987 = vmatprep.subr.mxu0 0.0
      %8988 = vmatpush2.msra.mxu0 0.0
      %8989 = vmatprep.subr.mxu0 0.0
      %8990 = vmatpush2.msra.mxu0 0.0
      %8991 = vmatprep.subr.mxu0 0.0
      %8992 = vmatpush2.msra.mxu0 0.0
      %8993 = vmatprep.subr.mxu0 0.0
      %8994 = vmatpush2.msra.mxu0 0.0
      %8995 = vmatprep.subr.mxu0 0.0
      %8996 = vmatpush2.msra.mxu0 0.0
      %8997 = vmatprep.subr.mxu0 0.0
      %8998 = vmatpush2.msra.mxu0 0.0
      %8999 = vmatprep.subr.mxu0 0.0
      %9000 = vmatpush2.msra.mxu0 0.0
      %9001 = vmatprep.subr.mxu0 0.0
      %9002 = vmatpush2.msra.mxu0 0.0
      %9003 = vmatprep.subr.mxu0 0.0
      %9004 = vmatpush2.msra.mxu0 0.0
      %9005 = vmatprep.subr.mxu0 0.0
      %9006 = vmatpush2.msra.mxu0 0.0
      %9007 = vmatprep.subr.mxu0 0.0
      %9008 = vmatpush2.msra.mxu0 0.0
      %9009 = vmatprep.subr.mxu0 0.0
      %9010 = vmatpush2.msra.mxu0 0.0
      %9011 = vmatprep.mubr.f32.mxu0 0.0
      %9012 = vmatmul.mubr.f32.gmra.mxu0 %v8852
      %v9013 = vpop.f32.mrf.mxu0
      %v9014 = vadd.f32 %v8849, %v9013
      %v9015 = vpop.f32.mrf.mxu0
      %9016 = vmatprep.mubr.f32.mxu0 0.0
      %9017 = vmatmul.mubr.f32.gmra.mxu0 %v8855
      %v9018 = vpop.f32.mrf.mxu0
      %v9019 = vadd.f32 %v8849, %v9018
      %v9020 = vpop.f32.mrf.mxu0
      %9021 = vmatprep.mubr.f32.mxu0 0.0
      %9022 = vmatmul.mubr.f32.gmra.mxu0 %v8858
      %v9023 = vpop.f32.mrf.mxu0
      %v9024 = vadd.f32 %v8849, %v9023
      %v9025 = vpop.f32.mrf.mxu0
      %9026 = vmatprep.mubr.f32.mxu0 0.0
      %9027 = vmatmul.mubr.f32.gmra.mxu0 %v8861
      %v9028 = vpop.f32.mrf.mxu0
      %v9029 = vadd.f32 %v8849, %v9028
      %v9030 = vpop.f32.mrf.mxu0
      %9031 = vmatprep.mubr.f32.mxu0 0.0
      %9032 = vmatmul.mubr.f32.gmra.mxu0 %v8864
      %v9033 = vpop.f32.mrf.mxu0
      %v9034 = vadd.f32 %v8849, %v9033
      %v9035 = vpop.f32.mrf.mxu0
      %9036 = vmatprep.mubr.f32.mxu0 0.0
      %9037 = vmatmul.mubr.f32.gmra.mxu0 %v8867
      %v9038 = vpop.f32.mrf.mxu0
      %v9039 = vadd.f32 %v8849, %v9038
      %v9040 = vpop.f32.mrf.mxu0
      %9041 = vmatprep.mubr.f32.mxu0 0.0
      %9042 = vmatmul.mubr.f32.gmra.mxu0 %v8870
      %v9043 = vpop.f32.mrf.mxu0
      %v9044 = vadd.f32 %v8849, %v9043
      %v9045 = vpop.f32.mrf.mxu0
      %9046 = vmatprep.mubr.f32.mxu0 0.0
      %9047 = vmatmul.mubr.f32.gmra.mxu0 %v8873
      %v9048 = vpop.f32.mrf.mxu0
      %v9049 = vadd.f32 %v8849, %v9048
      %v9050 = vpop.f32.mrf.mxu0
      %9051 = vmatprep.mubr.f32.mxu0 0.0
      %9052 = vmatmul.mubr.f32.gmra.mxu0 %v8876
      %v9053 = vpop.f32.mrf.mxu0
      %v9054 = vadd.f32 %v8849, %v9053
      %v9055 = vpop.f32.mrf.mxu0
      %9056 = vmatprep.mubr.f32.mxu0 0.0
      %9057 = vmatmul.mubr.f32.gmra.mxu0 %v8879
      %v9058 = vpop.f32.mrf.mxu0
      %v9059 = vadd.f32 %v8849, %v9058
      %v9060 = vpop.f32.mrf.mxu0
      %9061 = vmatprep.mubr.f32.mxu0 0.0
      %9062 = vmatmul.mubr.f32.gmra.mxu0 %v8882
      %v9063 = vpop.f32.mrf.mxu0
      %v9064 = vadd.f32 %v8849, %v9063
      %v9065 = vpop.f32.mrf.mxu0
      %9066 = vmatprep.mubr.f32.mxu0 0.0
      %9067 = vmatmul.mubr.f32.gmra.mxu0 %v8885
      %v9068 = vpop.f32.mrf.mxu0
      %v9069 = vadd.f32 %v8849, %v9068
      %v9070 = vpop.f32.mrf.mxu0
      %9071 = vmatprep.mubr.f32.mxu0 0.0
      %9072 = vmatmul.mubr.f32.gmra.mxu0 %v8888
      %v9073 = vpop.f32.mrf.mxu0
      %v9074 = vadd.f32 %v8849, %v9073
      %v9075 = vpop.f32.mrf.mxu0
      %9076 = vmatprep.mubr.f32.mxu0 0.0
      %9077 = vmatmul.mubr.f32.gmra.mxu0 %v8891
      %v9078 = vpop.f32.mrf.mxu0
      %v9079 = vadd.f32 %v8849, %v9078
      %v9080 = vpop.f32.mrf.mxu0
      %9081 = vmatprep.mubr.f32.mxu0 0.0
      %9082 = vmatmul.mubr.f32.gmra.mxu0 %v8894
      %v9083 = vpop.f32.mrf.mxu0
      %v9084 = vadd.f32 %v8849, %v9083
      %v9085 = vpop.f32.mrf.mxu0
      %9086 = vmatprep.mubr.f32.mxu0 0.0
      %9087 = vmatmul.mubr.f32.gmra.mxu0 %v8897
      %v9088 = vpop.f32.mrf.mxu0
      %v9089 = vadd.f32 %v8849, %v9088
      %v9090 = vpop.f32.mrf.mxu0
      %9091 = vmatprep.mubr.f32.mxu0 0.0
      %9092 = vmatmul.mubr.f32.gmra.mxu0 %v8900
      %v9093 = vpop.f32.mrf.mxu0
      %v9094 = vadd.f32 %v8849, %v9093
      %v9095 = vpop.f32.mrf.mxu0
      %9096 = vmatprep.mubr.f32.mxu0 0.0
      %9097 = vmatmul.mubr.f32.gmra.mxu0 %v8903
      %v9098 = vpop.f32.mrf.mxu0
      %v9099 = vadd.f32 %v8849, %v9098
      %v9100 = vpop.f32.mrf.mxu0
      %9101 = vmatprep.mubr.f32.mxu0 0.0
      %9102 = vmatmul.mubr.f32.gmra.mxu0 %v8906
      %v9103 = vpop.f32.mrf.mxu0
      %v9104 = vadd.f32 %v8849, %v9103
      %v9105 = vpop.f32.mrf.mxu0
      %9106 = vmatprep.mubr.f32.mxu0 0.0
      %9107 = vmatmul.mubr.f32.gmra.mxu0 %v8909
      %v9108 = vpop.f32.mrf.mxu0
      %v9109 = vadd.f32 %v8849, %v9108
      %v9110 = vpop.f32.mrf.mxu0
      %9111 = vmatprep.mubr.f32.mxu0 0.0
      %9112 = vmatmul.mubr.f32.gmra.mxu0 %v8912
      %v9113 = vpop.f32.mrf.mxu0
      %v9114 = vadd.f32 %v8849, %v9113
      %v9115 = vpop.f32.mrf.mxu0
      %9116 = vmatprep.mubr.f32.mxu0 0.0
      %9117 = vmatmul.mubr.f32.gmra.mxu0 %v8915
      %v9118 = vpop.f32.mrf.mxu0
      %v9119 = vadd.f32 %v8849, %v9118
      %v9120 = vpop.f32.mrf.mxu0
      %9121 = vmatprep.mubr.f32.mxu0 0.0
      %9122 = vmatmul.mubr.f32.gmra.mxu0 %v8918
      %v9123 = vpop.f32.mrf.mxu0
      %v9124 = vadd.f32 %v8849, %v9123
      %v9125 = vpop.f32.mrf.mxu0
      %9126 = vmatprep.mubr.f32.mxu0 0.0
      %9127 = vmatmul.mubr.f32.gmra.mxu0 %v8921
      %v9128 = vpop.f32.mrf.mxu0
      %v9129 = vadd.f32 %v8849, %v9128
      %v9130 = vpop.f32.mrf.mxu0
      %9131 = vmatprep.mubr.f32.mxu0 0.0
      %9132 = vmatmul.mubr.f32.gmra.mxu0 %v8924
      %v9133 = vpop.f32.mrf.mxu0
      %v9134 = vadd.f32 %v8849, %v9133
      %v9135 = vpop.f32.mrf.mxu0
      %9136 = vmatprep.mubr.f32.mxu0 0.0
      %9137 = vmatmul.mubr.f32.gmra.mxu0 %v8927
      %v9138 = vpop.f32.mrf.mxu0
      %v9139 = vadd.f32 %v8849, %v9138
      %v9140 = vpop.f32.mrf.mxu0
      %9141 = vmatprep.mubr.f32.mxu0 0.0
      %9142 = vmatmul.mubr.f32.gmra.mxu0 %v8930
      %v9143 = vpop.f32.mrf.mxu0
      %v9144 = vadd.f32 %v8849, %v9143
      %v9145 = vpop.f32.mrf.mxu0
      %9146 = vmatprep.mubr.f32.mxu0 0.0
      %9147 = vmatmul.mubr.f32.gmra.mxu0 %v8933
      %v9148 = vpop.f32.mrf.mxu0
      %v9149 = vadd.f32 %v8849, %v9148
      %v9150 = vpop.f32.mrf.mxu0
      %9151 = vmatprep.mubr.f32.mxu0 0.0
      %9152 = vmatmul.mubr.f32.gmra.mxu0 %v8936
      %v9153 = vpop.f32.mrf.mxu0
      %v9154 = vadd.f32 %v8849, %v9153
      %v9155 = vpop.f32.mrf.mxu0
      %9156 = vmatprep.mubr.f32.mxu0 0.0
      %9157 = vmatmul.mubr.f32.gmra.mxu0 %v8939
      %v9158 = vpop.f32.mrf.mxu0
      %v9159 = vadd.f32 %v8849, %v9158
      %v9160 = vpop.f32.mrf.mxu0
      %9161 = vmatprep.mubr.f32.mxu0 0.0
      %9162 = vmatmul.mubr.f32.gmra.mxu0 %v8942
      %v9163 = vpop.f32.mrf.mxu0
      %v9164 = vadd.f32 %v8849, %v9163
      %v9165 = vpop.f32.mrf.mxu0
      %9166 = vmatprep.mubr.f32.mxu0 0.0
      %9167 = vmatmul.mubr.f32.gmra.mxu0 %v8945
      %v9168 = vpop.f32.mrf.mxu0
      %v9169 = vadd.f32 %v8849, %v9168
      %v9170 = vpop.f32.mrf.mxu0
      %9171 = vdwg.mxu0
      %v9172 = vmax.f32 %v9014, 0.0
      %v9173 = vmax.f32 %v9019, 0.0
      %v9174 = vmax.f32 %v9024, 0.0
      %v9175 = vmax.f32 %v9029, 0.0
      %v9176 = vmax.f32 %v9034, 0.0
      %v9177 = vmax.f32 %v9039, 0.0
      %v9178 = vmax.f32 %v9044, 0.0
      %v9179 = vmax.f32 %v9049, 0.0
      %v9180 = vmax.f32 %v9054, 0.0
      %v9181 = vmax.f32 %v9059, 0.0
      %v9182 = vmax.f32 %v9064, 0.0
      %v9183 = vmax.f32 %v9069, 0.0
      %v9184 = vmax.f32 %v9074, 0.0
      %v9185 = vmax.f32 %v9079, 0.0
      %v9186 = vmax.f32 %v9084, 0.0
      %v9187 = vmax.f32 %v9089, 0.0
      %v9188 = vmax.f32 %v9094, 0.0
      %v9189 = vmax.f32 %v9099, 0.0
      %v9190 = vmax.f32 %v9104, 0.0
      %v9191 = vmax.f32 %v9109, 0.0
      %v9192 = vmax.f32 %v9114, 0.0
      %v9193 = vmax.f32 %v9119, 0.0
      %v9194 = vmax.f32 %v9124, 0.0
      %v9195 = vmax.f32 %v9129, 0.0
      %v9196 = vmax.f32 %v9134, 0.0
      %v9197 = vmax.f32 %v9139, 0.0
      %v9198 = vmax.f32 %v9144, 0.0
      %v9199 = vmax.f32 %v9149, 0.0
      %v9200 = vmax.f32 %v9154, 0.0
      %v9201 = vmax.f32 %v9159, 0.0
      %v9202 = vmax.f32 %v9164, 0.0
      %v9203 = vmax.f32 %v9169, 0.0
      %9204 = vst [vmem:[#allocation5] sm:$0xff] %v9172
      %9205 = vst [vmem:[#allocation5 + $0x8] sm:$0xff] %v9173
      %9206 = vst [vmem:[#allocation5 + $0x10] sm:$0xff] %v9174
      %9207 = vst [vmem:[#allocation5 + $0x18] sm:$0xff] %v9175
      %9208 = vst [vmem:[#allocation5 + $0x20] sm:$0xff] %v9176
      %9209 = vst [vmem:[#allocation5 + $0x28] sm:$0xff] %v9177
      %9210 = vst [vmem:[#allocation5 + $0x30] sm:$0xff] %v9178
      %9211 = vst [vmem:[#allocation5 + $0x38] sm:$0xff] %v9179
      %9212 = vst [vmem:[#allocation5 + $0x40] sm:$0xff] %v9180
      %9213 = vst [vmem:[#allocation5 + $0x48] sm:$0xff] %v9181
      %9214 = vst [vmem:[#allocation5 + $0x50] sm:$0xff] %v9182
      %9215 = vst [vmem:[#allocation5 + $0x58] sm:$0xff] %v9183
      %9216 = vst [vmem:[#allocation5 + $0x60] sm:$0xff] %v9184
      %9217 = vst [vmem:[#allocation5 + $0x68] sm:$0xff] %v9185
      %9218 = vst [vmem:[#allocation5 + $0x70] sm:$0xff] %v9186
      %9219 = vst [vmem:[#allocation5 + $0x78] sm:$0xff] %v9187
      %9220 = vst [vmem:[#allocation5 + $0x80] sm:$0xff] %v9188
      %9221 = vst [vmem:[#allocation5 + $0x88] sm:$0xff] %v9189
      %9222 = vst [vmem:[#allocation5 + $0x90] sm:$0xff] %v9190
      %9223 = vst [vmem:[#allocation5 + $0x98] sm:$0xff] %v9191
      %9224 = vst [vmem:[#allocation5 + $0xa0] sm:$0xff] %v9192
      %9225 = vst [vmem:[#allocation5 + $0xa8] sm:$0xff] %v9193
      %9226 = vst [vmem:[#allocation5 + $0xb0] sm:$0xff] %v9194
      %9227 = vst [vmem:[#allocation5 + $0xb8] sm:$0xff] %v9195
      %9228 = vst [vmem:[#allocation5 + $0xc0] sm:$0xff] %v9196
      %9229 = vst [vmem:[#allocation5 + $0xc8] sm:$0xff] %v9197
      %9230 = vst [vmem:[#allocation5 + $0xd0] sm:$0xff] %v9198
      %9231 = vst [vmem:[#allocation5 + $0xd8] sm:$0xff] %v9199
      %9232 = vst [vmem:[#allocation5 + $0xe0] sm:$0xff] %v9200
      %9233 = vst [vmem:[#allocation5 + $0xe8] sm:$0xff] %v9201
      %9234 = vst [vmem:[#allocation5 + $0xf0] sm:$0xff] %v9202
      %9235 = vst [vmem:[#allocation5 + $0xf8] sm:$0xff] %v9203
      %v9236 = vld [vmem:[#allocation5] sm:$0xff]
      %v9237 = vld [vmem:[#allocation5 + $0x8] sm:$0xff]
      %v9238 = vld [vmem:[#allocation5 + $0x10] sm:$0xff]
      %v9239 = vld [vmem:[#allocation5 + $0x18] sm:$0xff]
      %v9240 = vld [vmem:[#allocation5 + $0x20] sm:$0xff]
      %v9241 = vld [vmem:[#allocation5 + $0x28] sm:$0xff]
      %v9242 = vld [vmem:[#allocation5 + $0x30] sm:$0xff]
      %v9243 = vld [vmem:[#allocation5 + $0x38] sm:$0xff]
      %v9244 = vld [vmem:[#allocation5 + $0x40] sm:$0xff]
      %v9245 = vld [vmem:[#allocation5 + $0x48] sm:$0xff]
      %v9246 = vld [vmem:[#allocation5 + $0x50] sm:$0xff]
      %v9247 = vld [vmem:[#allocation5 + $0x58] sm:$0xff]
      %v9248 = vld [vmem:[#allocation5 + $0x60] sm:$0xff]
      %v9249 = vld [vmem:[#allocation5 + $0x68] sm:$0xff]
      %v9250 = vld [vmem:[#allocation5 + $0x70] sm:$0xff]
      %v9251 = vld [vmem:[#allocation5 + $0x78] sm:$0xff]
      %v9252 = vld [vmem:[#allocation5 + $0x80] sm:$0xff]
      %v9253 = vld [vmem:[#allocation5 + $0x88] sm:$0xff]
      %v9254 = vld [vmem:[#allocation5 + $0x90] sm:$0xff]
      %v9255 = vld [vmem:[#allocation5 + $0x98] sm:$0xff]
      %v9256 = vld [vmem:[#allocation5 + $0xa0] sm:$0xff]
      %v9257 = vld [vmem:[#allocation5 + $0xa8] sm:$0xff]
      %v9258 = vld [vmem:[#allocation5 + $0xb0] sm:$0xff]
      %v9259 = vld [vmem:[#allocation5 + $0xb8] sm:$0xff]
      %v9260 = vld [vmem:[#allocation5 + $0xc0] sm:$0xff]
      %v9261 = vld [vmem:[#allocation5 + $0xc8] sm:$0xff]
      %v9262 = vld [vmem:[#allocation5 + $0xd0] sm:$0xff]
      %v9263 = vld [vmem:[#allocation5 + $0xd8] sm:$0xff]
      %v9264 = vld [vmem:[#allocation5 + $0xe0] sm:$0xff]
      %v9265 = vld [vmem:[#allocation5 + $0xe8] sm:$0xff]
      %v9266 = vld [vmem:[#allocation5 + $0xf0] sm:$0xff]
      %v9267 = vld [vmem:[#allocation5 + $0xf8] sm:$0xff]
      %s9268 = scalar_lea.vmem %s13, %s938
      %v9269 = vld [vmem:[%s9268] sm:$0xff]
      %v9270 = vld [vmem:[%s9268 + $0x8] sm:$0xff]
      %v9271 = vld [vmem:[%s9268 + $0x10] sm:$0xff]
      %v9272 = vld [vmem:[%s9268 + $0x18] sm:$0xff]
      %v9273 = vld [vmem:[%s9268 + $0x20] sm:$0xff]
      %v9274 = vld [vmem:[%s9268 + $0x28] sm:$0xff]
      %v9275 = vld [vmem:[%s9268 + $0x30] sm:$0xff]
      %v9276 = vld [vmem:[%s9268 + $0x38] sm:$0xff]
      %v9277 = vld [vmem:[%s9268 + $0x40] sm:$0xff]
      %v9278 = vld [vmem:[%s9268 + $0x48] sm:$0xff]
      %v9279 = vld [vmem:[%s9268 + $0x50] sm:$0xff]
      %v9280 = vld [vmem:[%s9268 + $0x58] sm:$0xff]
      %v9281 = vld [vmem:[%s9268 + $0x60] sm:$0xff]
      %v9282 = vld [vmem:[%s9268 + $0x68] sm:$0xff]
      %v9283 = vld [vmem:[%s9268 + $0x70] sm:$0xff]
      %v9284 = vld [vmem:[%s9268 + $0x78] sm:$0xff]
      %s9285 = scalar_lea.vmem %s14, %s35
      %v9286 = vld [vmem:[%s9285] sm:$0x1]
      %v9288 = vlaneseq
      %v9289 = vshrl.u32 %v9288, 7
      %v9290 = vsub.s32 0, %v9289
      %v9291 = vrot.slane %v9286, %v9290
      %9293 = vmatprep.subr.mxu0 0.0
      %9294 = vmatpush1.msra.mxu0 %v9284
      %9295 = vmatprep.subr.mxu0 0.0
      %9296 = vmatpush1.msra.mxu0 %v9283
      %9297 = vmatprep.subr.mxu0 0.0
      %9298 = vmatpush1.msra.mxu0 %v9282
      %9299 = vmatprep.subr.mxu0 0.0
      %9300 = vmatpush1.msra.mxu0 %v9281
      %9301 = vmatprep.subr.mxu0 0.0
      %9302 = vmatpush1.msra.mxu0 %v9280
      %9303 = vmatprep.subr.mxu0 0.0
      %9304 = vmatpush1.msra.mxu0 %v9279
      %9305 = vmatprep.subr.mxu0 0.0
      %9306 = vmatpush1.msra.mxu0 %v9278
      %9307 = vmatprep.subr.mxu0 0.0
      %9308 = vmatpush1.msra.mxu0 %v9277
      %9309 = vmatprep.subr.mxu0 0.0
      %9310 = vmatpush1.msra.mxu0 %v9276
      %9311 = vmatprep.subr.mxu0 0.0
      %9312 = vmatpush1.msra.mxu0 %v9275
      %9313 = vmatprep.subr.mxu0 0.0
      %9314 = vmatpush1.msra.mxu0 %v9274
      %9315 = vmatprep.subr.mxu0 0.0
      %9316 = vmatpush1.msra.mxu0 %v9273
      %9317 = vmatprep.subr.mxu0 0.0
      %9318 = vmatpush1.msra.mxu0 %v9272
      %9319 = vmatprep.subr.mxu0 0.0
      %9320 = vmatpush1.msra.mxu0 %v9271
      %9321 = vmatprep.subr.mxu0 0.0
      %9322 = vmatpush1.msra.mxu0 %v9270
      %9323 = vmatprep.subr.mxu0 0.0
      %9324 = vmatpush1.msra.mxu0 %v9269
      %9325 = vmatprep.subr.mxu0 0.0
      %9326 = vmatpush2.msra.mxu0 0.0
      %9327 = vmatprep.subr.mxu0 0.0
      %9328 = vmatpush2.msra.mxu0 0.0
      %9329 = vmatprep.subr.mxu0 0.0
      %9330 = vmatpush2.msra.mxu0 0.0
      %9331 = vmatprep.subr.mxu0 0.0
      %9332 = vmatpush2.msra.mxu0 0.0
      %9333 = vmatprep.subr.mxu0 0.0
      %9334 = vmatpush2.msra.mxu0 0.0
      %9335 = vmatprep.subr.mxu0 0.0
      %9336 = vmatpush2.msra.mxu0 0.0
      %9337 = vmatprep.subr.mxu0 0.0
      %9338 = vmatpush2.msra.mxu0 0.0
      %9339 = vmatprep.subr.mxu0 0.0
      %9340 = vmatpush2.msra.mxu0 0.0
      %9341 = vmatprep.subr.mxu0 0.0
      %9342 = vmatpush2.msra.mxu0 0.0
      %9343 = vmatprep.subr.mxu0 0.0
      %9344 = vmatpush2.msra.mxu0 0.0
      %9345 = vmatprep.subr.mxu0 0.0
      %9346 = vmatpush2.msra.mxu0 0.0
      %9347 = vmatprep.subr.mxu0 0.0
      %9348 = vmatpush2.msra.mxu0 0.0
      %9349 = vmatprep.subr.mxu0 0.0
      %9350 = vmatpush2.msra.mxu0 0.0
      %9351 = vmatprep.subr.mxu0 0.0
      %9352 = vmatpush2.msra.mxu0 0.0
      %9353 = vmatprep.subr.mxu0 0.0
      %9354 = vmatpush2.msra.mxu0 0.0
      %9355 = vmatprep.subr.mxu0 0.0
      %9356 = vmatpush2.msra.mxu0 0.0
      %9357 = vmatprep.mubr.f32.mxu0 0.0
      %9358 = vmatmul.mubr.f32.gmra.mxu0 %v9236
      %v9359 = vpop.f32.mrf.mxu0
      %v9360 = vadd.f32 %v9291, %v9359
      %v9361 = vpop.f32.mrf.mxu0
      %9362 = vmatprep.mubr.f32.mxu0 0.0
      %9363 = vmatmul.mubr.f32.gmra.mxu0 %v9237
      %v9364 = vpop.f32.mrf.mxu0
      %v9365 = vadd.f32 %v9291, %v9364
      %v9366 = vpop.f32.mrf.mxu0
      %9367 = vmatprep.mubr.f32.mxu0 0.0
      %9368 = vmatmul.mubr.f32.gmra.mxu0 %v9238
      %v9369 = vpop.f32.mrf.mxu0
      %v9370 = vadd.f32 %v9291, %v9369
      %v9371 = vpop.f32.mrf.mxu0
      %9372 = vmatprep.mubr.f32.mxu0 0.0
      %9373 = vmatmul.mubr.f32.gmra.mxu0 %v9239
      %v9374 = vpop.f32.mrf.mxu0
      %v9375 = vadd.f32 %v9291, %v9374
      %v9376 = vpop.f32.mrf.mxu0
      %9377 = vmatprep.mubr.f32.mxu0 0.0
      %9378 = vmatmul.mubr.f32.gmra.mxu0 %v9240
      %v9379 = vpop.f32.mrf.mxu0
      %v9380 = vadd.f32 %v9291, %v9379
      %v9381 = vpop.f32.mrf.mxu0
      %9382 = vmatprep.mubr.f32.mxu0 0.0
      %9383 = vmatmul.mubr.f32.gmra.mxu0 %v9241
      %v9384 = vpop.f32.mrf.mxu0
      %v9385 = vadd.f32 %v9291, %v9384
      %v9386 = vpop.f32.mrf.mxu0
      %9387 = vmatprep.mubr.f32.mxu0 0.0
      %9388 = vmatmul.mubr.f32.gmra.mxu0 %v9242
      %v9389 = vpop.f32.mrf.mxu0
      %v9390 = vadd.f32 %v9291, %v9389
      %v9391 = vpop.f32.mrf.mxu0
      %9392 = vmatprep.mubr.f32.mxu0 0.0
      %9393 = vmatmul.mubr.f32.gmra.mxu0 %v9243
      %v9394 = vpop.f32.mrf.mxu0
      %v9395 = vadd.f32 %v9291, %v9394
      %v9396 = vpop.f32.mrf.mxu0
      %9397 = vmatprep.mubr.f32.mxu0 0.0
      %9398 = vmatmul.mubr.f32.gmra.mxu0 %v9244
      %v9399 = vpop.f32.mrf.mxu0
      %v9400 = vadd.f32 %v9291, %v9399
      %v9401 = vpop.f32.mrf.mxu0
      %9402 = vmatprep.mubr.f32.mxu0 0.0
      %9403 = vmatmul.mubr.f32.gmra.mxu0 %v9245
      %v9404 = vpop.f32.mrf.mxu0
      %v9405 = vadd.f32 %v9291, %v9404
      %v9406 = vpop.f32.mrf.mxu0
      %9407 = vmatprep.mubr.f32.mxu0 0.0
      %9408 = vmatmul.mubr.f32.gmra.mxu0 %v9246
      %v9409 = vpop.f32.mrf.mxu0
      %v9410 = vadd.f32 %v9291, %v9409
      %v9411 = vpop.f32.mrf.mxu0
      %9412 = vmatprep.mubr.f32.mxu0 0.0
      %9413 = vmatmul.mubr.f32.gmra.mxu0 %v9247
      %v9414 = vpop.f32.mrf.mxu0
      %v9415 = vadd.f32 %v9291, %v9414
      %v9416 = vpop.f32.mrf.mxu0
      %9417 = vmatprep.mubr.f32.mxu0 0.0
      %9418 = vmatmul.mubr.f32.gmra.mxu0 %v9248
      %v9419 = vpop.f32.mrf.mxu0
      %v9420 = vadd.f32 %v9291, %v9419
      %v9421 = vpop.f32.mrf.mxu0
      %9422 = vmatprep.mubr.f32.mxu0 0.0
      %9423 = vmatmul.mubr.f32.gmra.mxu0 %v9249
      %v9424 = vpop.f32.mrf.mxu0
      %v9425 = vadd.f32 %v9291, %v9424
      %v9426 = vpop.f32.mrf.mxu0
      %9427 = vmatprep.mubr.f32.mxu0 0.0
      %9428 = vmatmul.mubr.f32.gmra.mxu0 %v9250
      %v9429 = vpop.f32.mrf.mxu0
      %v9430 = vadd.f32 %v9291, %v9429
      %v9431 = vpop.f32.mrf.mxu0
      %9432 = vmatprep.mubr.f32.mxu0 0.0
      %9433 = vmatmul.mubr.f32.gmra.mxu0 %v9251
      %v9434 = vpop.f32.mrf.mxu0
      %v9435 = vadd.f32 %v9291, %v9434
      %v9436 = vpop.f32.mrf.mxu0
      %9437 = vmatprep.mubr.f32.mxu0 0.0
      %9438 = vmatmul.mubr.f32.gmra.mxu0 %v9252
      %v9439 = vpop.f32.mrf.mxu0
      %v9440 = vadd.f32 %v9291, %v9439
      %v9441 = vpop.f32.mrf.mxu0
      %9442 = vmatprep.mubr.f32.mxu0 0.0
      %9443 = vmatmul.mubr.f32.gmra.mxu0 %v9253
      %v9444 = vpop.f32.mrf.mxu0
      %v9445 = vadd.f32 %v9291, %v9444
      %v9446 = vpop.f32.mrf.mxu0
      %9447 = vmatprep.mubr.f32.mxu0 0.0
      %9448 = vmatmul.mubr.f32.gmra.mxu0 %v9254
      %v9449 = vpop.f32.mrf.mxu0
      %v9450 = vadd.f32 %v9291, %v9449
      %v9451 = vpop.f32.mrf.mxu0
      %9452 = vmatprep.mubr.f32.mxu0 0.0
      %9453 = vmatmul.mubr.f32.gmra.mxu0 %v9255
      %v9454 = vpop.f32.mrf.mxu0
      %v9455 = vadd.f32 %v9291, %v9454
      %v9456 = vpop.f32.mrf.mxu0
      %9457 = vmatprep.mubr.f32.mxu0 0.0
      %9458 = vmatmul.mubr.f32.gmra.mxu0 %v9256
      %v9459 = vpop.f32.mrf.mxu0
      %v9460 = vadd.f32 %v9291, %v9459
      %v9461 = vpop.f32.mrf.mxu0
      %9462 = vmatprep.mubr.f32.mxu0 0.0
      %9463 = vmatmul.mubr.f32.gmra.mxu0 %v9257
      %v9464 = vpop.f32.mrf.mxu0
      %v9465 = vadd.f32 %v9291, %v9464
      %v9466 = vpop.f32.mrf.mxu0
      %9467 = vmatprep.mubr.f32.mxu0 0.0
      %9468 = vmatmul.mubr.f32.gmra.mxu0 %v9258
      %v9469 = vpop.f32.mrf.mxu0
      %v9470 = vadd.f32 %v9291, %v9469
      %v9471 = vpop.f32.mrf.mxu0
      %9472 = vmatprep.mubr.f32.mxu0 0.0
      %9473 = vmatmul.mubr.f32.gmra.mxu0 %v9259
      %v9474 = vpop.f32.mrf.mxu0
      %v9475 = vadd.f32 %v9291, %v9474
      %v9476 = vpop.f32.mrf.mxu0
      %9477 = vmatprep.mubr.f32.mxu0 0.0
      %9478 = vmatmul.mubr.f32.gmra.mxu0 %v9260
      %v9479 = vpop.f32.mrf.mxu0
      %v9480 = vadd.f32 %v9291, %v9479
      %v9481 = vpop.f32.mrf.mxu0
      %9482 = vmatprep.mubr.f32.mxu0 0.0
      %9483 = vmatmul.mubr.f32.gmra.mxu0 %v9261
      %v9484 = vpop.f32.mrf.mxu0
      %v9485 = vadd.f32 %v9291, %v9484
      %v9486 = vpop.f32.mrf.mxu0
      %9487 = vmatprep.mubr.f32.mxu0 0.0
      %9488 = vmatmul.mubr.f32.gmra.mxu0 %v9262
      %v9489 = vpop.f32.mrf.mxu0
      %v9490 = vadd.f32 %v9291, %v9489
      %v9491 = vpop.f32.mrf.mxu0
      %9492 = vmatprep.mubr.f32.mxu0 0.0
      %9493 = vmatmul.mubr.f32.gmra.mxu0 %v9263
      %v9494 = vpop.f32.mrf.mxu0
      %v9495 = vadd.f32 %v9291, %v9494
      %v9496 = vpop.f32.mrf.mxu0
      %9497 = vmatprep.mubr.f32.mxu0 0.0
      %9498 = vmatmul.mubr.f32.gmra.mxu0 %v9264
      %v9499 = vpop.f32.mrf.mxu0
      %v9500 = vadd.f32 %v9291, %v9499
      %v9501 = vpop.f32.mrf.mxu0
      %9502 = vmatprep.mubr.f32.mxu0 0.0
      %9503 = vmatmul.mubr.f32.gmra.mxu0 %v9265
      %v9504 = vpop.f32.mrf.mxu0
      %v9505 = vadd.f32 %v9291, %v9504
      %v9506 = vpop.f32.mrf.mxu0
      %9507 = vmatprep.mubr.f32.mxu0 0.0
      %9508 = vmatmul.mubr.f32.gmra.mxu0 %v9266
      %v9509 = vpop.f32.mrf.mxu0
      %v9510 = vadd.f32 %v9291, %v9509
      %v9511 = vpop.f32.mrf.mxu0
      %9512 = vmatprep.mubr.f32.mxu0 0.0
      %9513 = vmatmul.mubr.f32.gmra.mxu0 %v9267
      %v9514 = vpop.f32.mrf.mxu0
      %v9515 = vadd.f32 %v9291, %v9514
      %v9516 = vpop.f32.mrf.mxu0
      %9517 = vdwg.mxu0
      %v9518 = vld [vmem:[#allocation2] sm:$0xff]
      %v9519 = vld [vmem:[#allocation2 + $0x8] sm:$0xff]
      %v9520 = vld [vmem:[#allocation2 + $0x10] sm:$0xff]
      %v9521 = vld [vmem:[#allocation2 + $0x18] sm:$0xff]
      %v9522 = vld [vmem:[#allocation2 + $0x20] sm:$0xff]
      %v9523 = vld [vmem:[#allocation2 + $0x28] sm:$0xff]
      %v9524 = vld [vmem:[#allocation2 + $0x30] sm:$0xff]
      %v9525 = vld [vmem:[#allocation2 + $0x38] sm:$0xff]
      %v9526 = vld [vmem:[#allocation2 + $0x40] sm:$0xff]
      %v9527 = vld [vmem:[#allocation2 + $0x48] sm:$0xff]
      %v9528 = vld [vmem:[#allocation2 + $0x50] sm:$0xff]
      %v9529 = vld [vmem:[#allocation2 + $0x58] sm:$0xff]
      %v9530 = vld [vmem:[#allocation2 + $0x60] sm:$0xff]
      %v9531 = vld [vmem:[#allocation2 + $0x68] sm:$0xff]
      %v9532 = vld [vmem:[#allocation2 + $0x70] sm:$0xff]
      %v9533 = vld [vmem:[#allocation2 + $0x78] sm:$0xff]
      %v9534 = vld [vmem:[#allocation2 + $0x80] sm:$0xff]
      %v9535 = vld [vmem:[#allocation2 + $0x88] sm:$0xff]
      %v9536 = vld [vmem:[#allocation2 + $0x90] sm:$0xff]
      %v9537 = vld [vmem:[#allocation2 + $0x98] sm:$0xff]
      %v9538 = vld [vmem:[#allocation2 + $0xa0] sm:$0xff]
      %v9539 = vld [vmem:[#allocation2 + $0xa8] sm:$0xff]
      %v9540 = vld [vmem:[#allocation2 + $0xb0] sm:$0xff]
      %v9541 = vld [vmem:[#allocation2 + $0xb8] sm:$0xff]
      %v9542 = vld [vmem:[#allocation2 + $0xc0] sm:$0xff]
      %v9543 = vld [vmem:[#allocation2 + $0xc8] sm:$0xff]
      %v9544 = vld [vmem:[#allocation2 + $0xd0] sm:$0xff]
      %v9545 = vld [vmem:[#allocation2 + $0xd8] sm:$0xff]
      %v9546 = vld [vmem:[#allocation2 + $0xe0] sm:$0xff]
      %v9547 = vld [vmem:[#allocation2 + $0xe8] sm:$0xff]
      %v9548 = vld [vmem:[#allocation2 + $0xf0] sm:$0xff]
      %v9549 = vld [vmem:[#allocation2 + $0xf8] sm:$0xff]
      %v9550 = vadd.f32 %v9518, %v9360
      %v9551 = vadd.f32 %v9519, %v9365
      %v9552 = vadd.f32 %v9520, %v9370
      %v9553 = vadd.f32 %v9521, %v9375
      %v9554 = vadd.f32 %v9522, %v9380
      %v9555 = vadd.f32 %v9523, %v9385
      %v9556 = vadd.f32 %v9524, %v9390
      %v9557 = vadd.f32 %v9525, %v9395
      %v9558 = vadd.f32 %v9526, %v9400
      %v9559 = vadd.f32 %v9527, %v9405
      %v9560 = vadd.f32 %v9528, %v9410
      %v9561 = vadd.f32 %v9529, %v9415
      %v9562 = vadd.f32 %v9530, %v9420
      %v9563 = vadd.f32 %v9531, %v9425
      %v9564 = vadd.f32 %v9532, %v9430
      %v9565 = vadd.f32 %v9533, %v9435
      %v9566 = vadd.f32 %v9534, %v9440
      %v9567 = vadd.f32 %v9535, %v9445
      %v9568 = vadd.f32 %v9536, %v9450
      %v9569 = vadd.f32 %v9537, %v9455
      %v9570 = vadd.f32 %v9538, %v9460
      %v9571 = vadd.f32 %v9539, %v9465
      %v9572 = vadd.f32 %v9540, %v9470
      %v9573 = vadd.f32 %v9541, %v9475
      %v9574 = vadd.f32 %v9542, %v9480
      %v9575 = vadd.f32 %v9543, %v9485
      %v9576 = vadd.f32 %v9544, %v9490
      %v9577 = vadd.f32 %v9545, %v9495
      %v9578 = vadd.f32 %v9546, %v9500
      %v9579 = vadd.f32 %v9547, %v9505
      %v9580 = vadd.f32 %v9548, %v9510
      %v9581 = vadd.f32 %v9549, %v9515
      %9582 = vst.msk [vmem:[#allocation2] sm:$0xff] %vm973, %v9550
      %9583 = vst.msk [vmem:[#allocation2 + $0x8] sm:$0xff] %vm973, %v9551
      %9584 = vst.msk [vmem:[#allocation2 + $0x10] sm:$0xff] %vm973, %v9552
      %9585 = vst.msk [vmem:[#allocation2 + $0x18] sm:$0xff] %vm973, %v9553
      %9586 = vst.msk [vmem:[#allocation2 + $0x20] sm:$0xff] %vm973, %v9554
      %9587 = vst.msk [vmem:[#allocation2 + $0x28] sm:$0xff] %vm973, %v9555
      %9588 = vst.msk [vmem:[#allocation2 + $0x30] sm:$0xff] %vm973, %v9556
      %9589 = vst.msk [vmem:[#allocation2 + $0x38] sm:$0xff] %vm973, %v9557
      %9590 = vst.msk [vmem:[#allocation2 + $0x40] sm:$0xff] %vm973, %v9558
      %9591 = vst.msk [vmem:[#allocation2 + $0x48] sm:$0xff] %vm973, %v9559
      %9592 = vst.msk [vmem:[#allocation2 + $0x50] sm:$0xff] %vm973, %v9560
      %9593 = vst.msk [vmem:[#allocation2 + $0x58] sm:$0xff] %vm973, %v9561
      %9594 = vst.msk [vmem:[#allocation2 + $0x60] sm:$0xff] %vm973, %v9562
      %9595 = vst.msk [vmem:[#allocation2 + $0x68] sm:$0xff] %vm973, %v9563
      %9596 = vst.msk [vmem:[#allocation2 + $0x70] sm:$0xff] %vm973, %v9564
      %9597 = vst.msk [vmem:[#allocation2 + $0x78] sm:$0xff] %vm973, %v9565
      %9598 = vst.msk [vmem:[#allocation2 + $0x80] sm:$0xff] %vm973, %v9566
      %9599 = vst.msk [vmem:[#allocation2 + $0x88] sm:$0xff] %vm973, %v9567
      %9600 = vst.msk [vmem:[#allocation2 + $0x90] sm:$0xff] %vm973, %v9568
      %9601 = vst.msk [vmem:[#allocation2 + $0x98] sm:$0xff] %vm973, %v9569
      %9602 = vst.msk [vmem:[#allocation2 + $0xa0] sm:$0xff] %vm973, %v9570
      %9603 = vst.msk [vmem:[#allocation2 + $0xa8] sm:$0xff] %vm973, %v9571
      %9604 = vst.msk [vmem:[#allocation2 + $0xb0] sm:$0xff] %vm973, %v9572
      %9605 = vst.msk [vmem:[#allocation2 + $0xb8] sm:$0xff] %vm973, %v9573
      %9606 = vst.msk [vmem:[#allocation2 + $0xc0] sm:$0xff] %vm973, %v9574
      %9607 = vst.msk [vmem:[#allocation2 + $0xc8] sm:$0xff] %vm973, %v9575
      %9608 = vst.msk [vmem:[#allocation2 + $0xd0] sm:$0xff] %vm973, %v9576
      %9609 = vst.msk [vmem:[#allocation2 + $0xd8] sm:$0xff] %vm973, %v9577
      %9610 = vst.msk [vmem:[#allocation2 + $0xe0] sm:$0xff] %vm973, %v9578
      %9611 = vst.msk [vmem:[#allocation2 + $0xe8] sm:$0xff] %vm973, %v9579
      %9612 = vst.msk [vmem:[#allocation2 + $0xf0] sm:$0xff] %vm973, %v9580
      %9613 = vst.msk [vmem:[#allocation2 + $0xf8] sm:$0xff] %vm973, %v9581
      %p9614 = scmp.eq.s32.totalorder %s35, 1
      // Predicated region
      $region100: #{transformer_net_forward.1} parent=87 // pred_check
        %p9615 = pneg %p9614
      $region101: #{transformer_net_forward.1} parent=87 // pred_check_branch
        %9617 = sbr.rel (%p9615) target = $region103
      $region102: #{transformer_net_forward.1} parent=87 // pred_region
        %v9618 = vld [vmem:[#allocation2] sm:$0xff]
        %v9619 = vld [vmem:[#allocation2 + $0x8] sm:$0xff]
        %v9620 = vld [vmem:[#allocation2 + $0x10] sm:$0xff]
        %v9621 = vld [vmem:[#allocation2 + $0x18] sm:$0xff]
        %v9622 = vld [vmem:[#allocation2 + $0x20] sm:$0xff]
        %v9623 = vld [vmem:[#allocation2 + $0x28] sm:$0xff]
        %v9624 = vld [vmem:[#allocation2 + $0x30] sm:$0xff]
        %v9625 = vld [vmem:[#allocation2 + $0x38] sm:$0xff]
        %v9626 = vld [vmem:[#allocation2 + $0x40] sm:$0xff]
        %v9627 = vld [vmem:[#allocation2 + $0x48] sm:$0xff]
        %v9628 = vld [vmem:[#allocation2 + $0x50] sm:$0xff]
        %v9629 = vld [vmem:[#allocation2 + $0x58] sm:$0xff]
        %v9630 = vld [vmem:[#allocation2 + $0x60] sm:$0xff]
        %v9631 = vld [vmem:[#allocation2 + $0x68] sm:$0xff]
        %v9632 = vld [vmem:[#allocation2 + $0x70] sm:$0xff]
        %v9633 = vld [vmem:[#allocation2 + $0x78] sm:$0xff]
        %v9634 = vld [vmem:[#allocation2 + $0x80] sm:$0xff]
        %v9635 = vld [vmem:[#allocation2 + $0x88] sm:$0xff]
        %v9636 = vld [vmem:[#allocation2 + $0x90] sm:$0xff]
        %v9637 = vld [vmem:[#allocation2 + $0x98] sm:$0xff]
        %v9638 = vld [vmem:[#allocation2 + $0xa0] sm:$0xff]
        %v9639 = vld [vmem:[#allocation2 + $0xa8] sm:$0xff]
        %v9640 = vld [vmem:[#allocation2 + $0xb0] sm:$0xff]
        %v9641 = vld [vmem:[#allocation2 + $0xb8] sm:$0xff]
        %v9642 = vld [vmem:[#allocation2 + $0xc0] sm:$0xff]
        %v9643 = vld [vmem:[#allocation2 + $0xc8] sm:$0xff]
        %v9644 = vld [vmem:[#allocation2 + $0xd0] sm:$0xff]
        %v9645 = vld [vmem:[#allocation2 + $0xd8] sm:$0xff]
        %v9646 = vld [vmem:[#allocation2 + $0xe0] sm:$0xff]
        %v9647 = vld [vmem:[#allocation2 + $0xe8] sm:$0xff]
        %v9648 = vld [vmem:[#allocation2 + $0xf0] sm:$0xff]
        %v9649 = vld [vmem:[#allocation2 + $0xf8] sm:$0xff]
        %v9650 = vsel %vm973, %v9618, 0.0
        %9651 = vadd.xlane.f32.xlu0 %v9650
        %v9652 = vpop.xlane.xlu0 %9651
        %v9653 = vsel %vm973, %v9619, 0.0
        %9654 = vadd.xlane.f32.xlu0 %v9653
        %v9655 = vpop.xlane.xlu0 %9654
        %v9656 = vsel %vm973, %v9620, 0.0
        %9657 = vadd.xlane.f32.xlu0 %v9656
        %v9658 = vpop.xlane.xlu0 %9657
        %v9659 = vsel %vm973, %v9621, 0.0
        %9660 = vadd.xlane.f32.xlu0 %v9659
        %v9661 = vpop.xlane.xlu0 %9660
        %v9662 = vsel %vm973, %v9622, 0.0
        %9663 = vadd.xlane.f32.xlu0 %v9662
        %v9664 = vpop.xlane.xlu0 %9663
        %v9665 = vsel %vm973, %v9623, 0.0
        %9666 = vadd.xlane.f32.xlu0 %v9665
        %v9667 = vpop.xlane.xlu0 %9666
        %v9668 = vsel %vm973, %v9624, 0.0
        %9669 = vadd.xlane.f32.xlu0 %v9668
        %v9670 = vpop.xlane.xlu0 %9669
        %v9671 = vsel %vm973, %v9625, 0.0
        %9672 = vadd.xlane.f32.xlu0 %v9671
        %v9673 = vpop.xlane.xlu0 %9672
        %v9674 = vsel %vm973, %v9626, 0.0
        %9675 = vadd.xlane.f32.xlu0 %v9674
        %v9676 = vpop.xlane.xlu0 %9675
        %v9677 = vsel %vm973, %v9627, 0.0
        %9678 = vadd.xlane.f32.xlu0 %v9677
        %v9679 = vpop.xlane.xlu0 %9678
        %v9680 = vsel %vm973, %v9628, 0.0
        %9681 = vadd.xlane.f32.xlu0 %v9680
        %v9682 = vpop.xlane.xlu0 %9681
        %v9683 = vsel %vm973, %v9629, 0.0
        %9684 = vadd.xlane.f32.xlu0 %v9683
        %v9685 = vpop.xlane.xlu0 %9684
        %v9686 = vsel %vm973, %v9630, 0.0
        %9687 = vadd.xlane.f32.xlu0 %v9686
        %v9688 = vpop.xlane.xlu0 %9687
        %v9689 = vsel %vm973, %v9631, 0.0
        %9690 = vadd.xlane.f32.xlu0 %v9689
        %v9691 = vpop.xlane.xlu0 %9690
        %v9692 = vsel %vm973, %v9632, 0.0
        %9693 = vadd.xlane.f32.xlu0 %v9692
        %v9694 = vpop.xlane.xlu0 %9693
        %v9695 = vsel %vm973, %v9633, 0.0
        %9696 = vadd.xlane.f32.xlu0 %v9695
        %v9697 = vpop.xlane.xlu0 %9696
        %v9698 = vsel %vm973, %v9634, 0.0
        %9699 = vadd.xlane.f32.xlu0 %v9698
        %v9700 = vpop.xlane.xlu0 %9699
        %v9701 = vsel %vm973, %v9635, 0.0
        %9702 = vadd.xlane.f32.xlu0 %v9701
        %v9703 = vpop.xlane.xlu0 %9702
        %v9704 = vsel %vm973, %v9636, 0.0
        %9705 = vadd.xlane.f32.xlu0 %v9704
        %v9706 = vpop.xlane.xlu0 %9705
        %v9707 = vsel %vm973, %v9637, 0.0
        %9708 = vadd.xlane.f32.xlu0 %v9707
        %v9709 = vpop.xlane.xlu0 %9708
        %v9710 = vsel %vm973, %v9638, 0.0
        %9711 = vadd.xlane.f32.xlu0 %v9710
        %v9712 = vpop.xlane.xlu0 %9711
        %v9713 = vsel %vm973, %v9639, 0.0
        %9714 = vadd.xlane.f32.xlu0 %v9713
        %v9715 = vpop.xlane.xlu0 %9714
        %v9716 = vsel %vm973, %v9640, 0.0
        %9717 = vadd.xlane.f32.xlu0 %v9716
        %v9718 = vpop.xlane.xlu0 %9717
        %v9719 = vsel %vm973, %v9641, 0.0
        %9720 = vadd.xlane.f32.xlu0 %v9719
        %v9721 = vpop.xlane.xlu0 %9720
        %v9722 = vsel %vm973, %v9642, 0.0
        %9723 = vadd.xlane.f32.xlu0 %v9722
        %v9724 = vpop.xlane.xlu0 %9723
        %v9725 = vsel %vm973, %v9643, 0.0
        %9726 = vadd.xlane.f32.xlu0 %v9725
        %v9727 = vpop.xlane.xlu0 %9726
        %v9728 = vsel %vm973, %v9644, 0.0
        %9729 = vadd.xlane.f32.xlu0 %v9728
        %v9730 = vpop.xlane.xlu0 %9729
        %v9731 = vsel %vm973, %v9645, 0.0
        %9732 = vadd.xlane.f32.xlu0 %v9731
        %v9733 = vpop.xlane.xlu0 %9732
        %v9734 = vsel %vm973, %v9646, 0.0
        %9735 = vadd.xlane.f32.xlu0 %v9734
        %v9736 = vpop.xlane.xlu0 %9735
        %v9737 = vsel %vm973, %v9647, 0.0
        %9738 = vadd.xlane.f32.xlu0 %v9737
        %v9739 = vpop.xlane.xlu0 %9738
        %v9740 = vsel %vm973, %v9648, 0.0
        %9741 = vadd.xlane.f32.xlu0 %v9740
        %v9742 = vpop.xlane.xlu0 %9741
        %v9743 = vsel %vm973, %v9649, 0.0
        %9744 = vadd.xlane.f32.xlu0 %v9743
        %v9745 = vpop.xlane.xlu0 %9744
        %v9746 = vmul.f32 %v9652, %v1070
        %v9747 = vmul.f32 %v9655, %v1070
        %v9748 = vmul.f32 %v9658, %v1070
        %v9749 = vmul.f32 %v9661, %v1070
        %v9750 = vmul.f32 %v9664, %v1070
        %v9751 = vmul.f32 %v9667, %v1070
        %v9752 = vmul.f32 %v9670, %v1070
        %v9753 = vmul.f32 %v9673, %v1070
        %v9754 = vmul.f32 %v9676, %v1070
        %v9755 = vmul.f32 %v9679, %v1070
        %v9756 = vmul.f32 %v9682, %v1070
        %v9757 = vmul.f32 %v9685, %v1070
        %v9758 = vmul.f32 %v9688, %v1070
        %v9759 = vmul.f32 %v9691, %v1070
        %v9760 = vmul.f32 %v9694, %v1070
        %v9761 = vmul.f32 %v9697, %v1070
        %v9762 = vmul.f32 %v9700, %v1070
        %v9763 = vmul.f32 %v9703, %v1070
        %v9764 = vmul.f32 %v9706, %v1070
        %v9765 = vmul.f32 %v9709, %v1070
        %v9766 = vmul.f32 %v9712, %v1070
        %v9767 = vmul.f32 %v9715, %v1070
        %v9768 = vmul.f32 %v9718, %v1070
        %v9769 = vmul.f32 %v9721, %v1070
        %v9770 = vmul.f32 %v9724, %v1070
        %v9771 = vmul.f32 %v9727, %v1070
        %v9772 = vmul.f32 %v9730, %v1070
        %v9773 = vmul.f32 %v9733, %v1070
        %v9774 = vmul.f32 %v9736, %v1070
        %v9775 = vmul.f32 %v9739, %v1070
        %v9776 = vmul.f32 %v9742, %v1070
        %v9777 = vmul.f32 %v9745, %v1070
        %v9778 = vld [vmem:[%s15] sm:$0xff]
        %v9779 = vld [vmem:[%s15 + $0x8] sm:$0xff]
        %v9780 = vld [vmem:[%s15 + $0x10] sm:$0xff]
        %v9781 = vld [vmem:[%s15 + $0x18] sm:$0xff]
        %v9782 = vld [vmem:[%s15 + $0x20] sm:$0xff]
        %v9783 = vld [vmem:[%s15 + $0x28] sm:$0xff]
        %v9784 = vld [vmem:[%s15 + $0x30] sm:$0xff]
        %v9785 = vld [vmem:[%s15 + $0x38] sm:$0xff]
        %v9786 = vld [vmem:[%s15 + $0x40] sm:$0xff]
        %v9787 = vld [vmem:[%s15 + $0x48] sm:$0xff]
        %v9788 = vld [vmem:[%s15 + $0x50] sm:$0xff]
        %v9789 = vld [vmem:[%s15 + $0x58] sm:$0xff]
        %v9790 = vld [vmem:[%s15 + $0x60] sm:$0xff]
        %v9791 = vld [vmem:[%s15 + $0x68] sm:$0xff]
        %v9792 = vld [vmem:[%s15 + $0x70] sm:$0xff]
        %v9793 = vld [vmem:[%s15 + $0x78] sm:$0xff]
        %v9794 = vmul.f32 %v9746, %v9778
        %v9795 = vmul.f32 %v9747, %v9779
        %v9796 = vmul.f32 %v9748, %v9780
        %v9797 = vmul.f32 %v9749, %v9781
        %v9798 = vmul.f32 %v9750, %v9782
        %v9799 = vmul.f32 %v9751, %v9783
        %v9800 = vmul.f32 %v9752, %v9784
        %v9801 = vmul.f32 %v9753, %v9785
        %v9802 = vmul.f32 %v9754, %v9786
        %v9803 = vmul.f32 %v9755, %v9787
        %v9804 = vmul.f32 %v9756, %v9788
        %v9805 = vmul.f32 %v9757, %v9789
        %v9806 = vmul.f32 %v9758, %v9790
        %v9807 = vmul.f32 %v9759, %v9791
        %v9808 = vmul.f32 %v9760, %v9792
        %v9809 = vmul.f32 %v9761, %v9793
        %v9810 = vmul.f32 %v9762, %v9778
        %v9811 = vmul.f32 %v9763, %v9779
        %v9812 = vmul.f32 %v9764, %v9780
        %v9813 = vmul.f32 %v9765, %v9781
        %v9814 = vmul.f32 %v9766, %v9782
        %v9815 = vmul.f32 %v9767, %v9783
        %v9816 = vmul.f32 %v9768, %v9784
        %v9817 = vmul.f32 %v9769, %v9785
        %v9818 = vmul.f32 %v9770, %v9786
        %v9819 = vmul.f32 %v9771, %v9787
        %v9820 = vmul.f32 %v9772, %v9788
        %v9821 = vmul.f32 %v9773, %v9789
        %v9822 = vmul.f32 %v9774, %v9790
        %v9823 = vmul.f32 %v9775, %v9791
        %v9824 = vmul.f32 %v9776, %v9792
        %v9825 = vmul.f32 %v9777, %v9793
        %vm9826 = vcmask 7168
        %v9827 = vsel %vm9826, %v9794, 0.0
        %v9828 = vsel %vm9826, %v9795, 0.0
        %v9829 = vadd.f32 %v9827, %v9828
        %v9830 = vsel %vm9826, %v9796, 0.0
        %v9831 = vadd.f32 %v9829, %v9830
        %v9832 = vsel %vm9826, %v9797, 0.0
        %v9833 = vadd.f32 %v9831, %v9832
        %v9834 = vsel %vm9826, %v9798, 0.0
        %v9835 = vadd.f32 %v9833, %v9834
        %v9836 = vsel %vm9826, %v9799, 0.0
        %v9837 = vadd.f32 %v9835, %v9836
        %v9838 = vsel %vm9826, %v9800, 0.0
        %v9839 = vadd.f32 %v9837, %v9838
        %v9840 = vsel %vm9826, %v9801, 0.0
        %v9841 = vadd.f32 %v9839, %v9840
        %v9842 = vsel %vm9826, %v9802, 0.0
        %v9843 = vadd.f32 %v9841, %v9842
        %v9844 = vsel %vm9826, %v9803, 0.0
        %v9845 = vadd.f32 %v9843, %v9844
        %v9846 = vsel %vm9826, %v9804, 0.0
        %v9847 = vadd.f32 %v9845, %v9846
        %v9848 = vsel %vm9826, %v9805, 0.0
        %v9849 = vadd.f32 %v9847, %v9848
        %v9850 = vsel %vm9826, %v9806, 0.0
        %v9851 = vadd.f32 %v9849, %v9850
        %v9852 = vsel %vm9826, %v9807, 0.0
        %v9853 = vadd.f32 %v9851, %v9852
        %v9854 = vsel %vm9826, %v9808, 0.0
        %v9855 = vadd.f32 %v9853, %v9854
        %v9856 = vsel %vm9826, %v9809, 0.0
        %v9857 = vadd.f32 %v9855, %v9856
        %v9858 = vrot.slane %v9857, 4
        %v9859 = vadd.f32 %v9857, %v9858
        %v9860 = vrot.slane %v9859, 2
        %v9861 = vadd.f32 %v9859, %v9860
        %v9862 = vrot.slane %v9861, 1
        %v9863 = vadd.f32 %v9861, %v9862
        %v9864 = vsel %vm9826, %v9810, 0.0
        %v9865 = vsel %vm9826, %v9811, 0.0
        %v9866 = vadd.f32 %v9864, %v9865
        %v9867 = vsel %vm9826, %v9812, 0.0
        %v9868 = vadd.f32 %v9866, %v9867
        %v9869 = vsel %vm9826, %v9813, 0.0
        %v9870 = vadd.f32 %v9868, %v9869
        %v9871 = vsel %vm9826, %v9814, 0.0
        %v9872 = vadd.f32 %v9870, %v9871
        %v9873 = vsel %vm9826, %v9815, 0.0
        %v9874 = vadd.f32 %v9872, %v9873
        %v9875 = vsel %vm9826, %v9816, 0.0
        %v9876 = vadd.f32 %v9874, %v9875
        %v9877 = vsel %vm9826, %v9817, 0.0
        %v9878 = vadd.f32 %v9876, %v9877
        %v9879 = vsel %vm9826, %v9818, 0.0
        %v9880 = vadd.f32 %v9878, %v9879
        %v9881 = vsel %vm9826, %v9819, 0.0
        %v9882 = vadd.f32 %v9880, %v9881
        %v9883 = vsel %vm9826, %v9820, 0.0
        %v9884 = vadd.f32 %v9882, %v9883
        %v9885 = vsel %vm9826, %v9821, 0.0
        %v9886 = vadd.f32 %v9884, %v9885
        %v9887 = vsel %vm9826, %v9822, 0.0
        %v9888 = vadd.f32 %v9886, %v9887
        %v9889 = vsel %vm9826, %v9823, 0.0
        %v9890 = vadd.f32 %v9888, %v9889
        %v9891 = vsel %vm9826, %v9824, 0.0
        %v9892 = vadd.f32 %v9890, %v9891
        %v9893 = vsel %vm9826, %v9825, 0.0
        %v9894 = vadd.f32 %v9892, %v9893
        %v9895 = vrot.slane %v9894, 4
        %v9896 = vadd.f32 %v9894, %v9895
        %v9897 = vrot.slane %v9896, 2
        %v9898 = vadd.f32 %v9896, %v9897
        %v9899 = vrot.slane %v9898, 1
        %v9900 = vadd.f32 %v9898, %v9899
        %v9901 = vld [vmem:[#allocation6] sm:$0x1]
        %v9902 = vadd.f32 %v9863, %v9901
        %v9903 = vadd.f32 %v9900, %v9901
        %vm9904 = vcmask 0
        %9905 = vst.msk [vmem:[%s565] sm:$0x1] %vm9904, %v9902
        %9906 = vst.msk [vmem:[%s565 + $0x1] sm:$0x1] %vm9904, %v9903
      $region103: #{transformer_net_forward.1} parent=87 // pred_fallthru
        _
      %s9907 = smul.u32 2, %s34
      %p9908 = scmp.lt.s32.totalorder %s9907, 1
      %s9909 = scalar_select %p9908, %s9907, 1
      %s9910 = scalar_lea.vmem %s17, %s9909
      // Predicated region
      $region104: #{transformer_net_forward.1} parent=87 // pred_check
        %p9911 = pneg %p422
      $region105: #{transformer_net_forward.1} parent=87 // pred_check_branch
        %9913 = sbr.rel (%p9911) target = $region107
      $region106: #{transformer_net_forward.1} parent=87 // pred_region
        %s9914 = smul.u32 2, %s34
      $region107: #{transformer_net_forward.1} parent=87 // pred_fallthru
        _
      // Predicated region
      $region108: #{transformer_net_forward.1} parent=87 // pred_check
        %p9915 = pneg %p422
      $region109: #{transformer_net_forward.1} parent=87 // pred_check_branch
        %9917 = sbr.rel (%p9915) target = $region111
      $region110: #{transformer_net_forward.1} parent=87 // pred_region
        %s9918 = smul.u32 2, %s34
        %p9919 = scmp.lt.s32.totalorder %s9918, 1
        %s9920 = scalar_select %p9919, %s9918, 1
        %s9921 = scalar_lea.vmem %s17, %s9920
      $region111: #{transformer_net_forward.1} parent=87 // pred_fallthru
        _
    $region88: #{transformer_net_forward.1} parent=5 // pred_fallthru
      _
    %p9922 = scmp.le.s32.totalorder 2, %s25
    // Predicated region
    $region112: #{transformer_net_forward.1} parent=5 // pred_check
      %p9923 = pneg %p9922
    $region113: #{transformer_net_forward.1} parent=5 // pred_check_branch
      %9925 = sbr.rel (%p9923) target = $region115
    $region114: #{transformer_net_forward.1} parent=5 // pred_region
      %s9926 = ssub.s32 %s25, 2
    $region115: #{transformer_net_forward.1} parent=5 // pred_fallthru
      _
  $region6: #{transformer_net_forward.1} parent=0 // loop_footer
    %s29 = sadd.s32 1, %s25
  $region7: #{transformer_net_forward.1} parent=0 // loop_footer_branch
    %24 = sbr.rel target = $region3
  $region8: #{transformer_net_forward.1} parent=0 // loop_exit
    _

</llo_original>
